<compile_context>
chip_gen: v5e
topology: v5e:2x2
jax: 0.10.0
libtpu: 0.0.40
codegen_flags: <defaults>
</compile_context>

<pallas_src>
import jax
import jax.numpy as jnp
from jax.experimental import pallas as pl
from jax.experimental.pallas import tpu as pltpu


def _decoder_fused_kernel(x_ref,        # (T, H)   gathered embedding rows (f32)
                          h0_ref,       # (1, H)   initial hidden state (f32)
                          w_irz_ref,    # (H, 2H)  W_ih^T[:, :2H] (bf16)
                          w_hrz_ref,    # (H, 2H)  W_hh^T[:, :2H] (bf16)
                          b_rz_ref,     # (1, 2H)  b_ih[:2H] + b_hh[:2H] (f32)
                          w_in_ref,     # (H, H)   W_ih^T[:, 2H:] (bf16)
                          w_hn_ref,     # (H, H)   W_hh^T[:, 2H:] (bf16)
                          b_in_ref,     # (1, H)   b_ih[2H:] (f32)
                          b_hn_ref,     # (1, H)   b_hh[2H:] (f32)
                          w_out_ref,    # (H, V)   W_out^T (bf16)
                          b_out_ref,    # (1, V)   b_out (f32)
                          logp_ref,     # out: (T, V) log-probs (f32)
                          hout_ref,     # out: (1, H) final hidden (f32)
                          hs_sc):       # scratch: (T, H) all hidden states (f32)
    T, H = x_ref.shape
    h = h0_ref[...]                      # (1, H) f32

    # Fully unrolled recurrence (T is small & static) -> maximum scheduler
    # visibility; per-step work is two H-deep gate dots + two H-deep
    # candidate dots, all f32-accumulated.
    for t in range(T):
        # output = F.relu(embedding(input))
        x = jnp.maximum(x_ref[pl.ds(t, 1), :], 0.0)      # (1, H) f32
        xb = x.astype(jnp.bfloat16)
        hb = h.astype(jnp.bfloat16)

        # Reset/update gates: sigmoid(x@W_irz + h@W_hrz + b_rz)
        rz = jax.nn.sigmoid(
            jnp.dot(xb, w_irz_ref[...], preferred_element_type=jnp.float32)
            + jnp.dot(hb, w_hrz_ref[...], preferred_element_type=jnp.float32)
            + b_rz_ref[...])
        r = rz[:, 0:H]
        z = rz[:, H:2 * H]

        # Candidate: n = tanh(i_n + r * h_n)
        i_n = jnp.dot(xb, w_in_ref[...],
                      preferred_element_type=jnp.float32) + b_in_ref[...]
        h_n = jnp.dot(hb, w_hn_ref[...],
                      preferred_element_type=jnp.float32) + b_hn_ref[...]
        n = jnp.tanh(i_n + r * h_n)

        # GRU blend (PyTorch convention): h' = (1 - z) * n + z * h
        h = (1.0 - z) * n + z * h
        hs_sc[pl.ds(t, 1), :] = h        # stash row t for batched projection

    # Final hidden written once (off the per-step critical path).
    hout_ref[...] = h

    # Batched output projection + row-wise log-softmax over all T steps:
    # one (T,H)@(H,V) MXU call instead of T (1,H)@(H,V) calls.
    h_all = hs_sc[...].astype(jnp.bfloat16)              # (T, H)
    logits = jnp.dot(h_all, w_out_ref[...],
                     preferred_element_type=jnp.float32) + b_out_ref[...]
    m = jnp.max(logits, axis=-1, keepdims=True)
    shifted = logits - m
    lse = jnp.log(jnp.sum(jnp.exp(shifted), axis=-1, keepdims=True))
    logp_ref[...] = shifted - lse


def prepare_params(params, weight_dtype=jnp.bfloat16):
    """Pre-transpose / split / quantize the PyTorch-layout parameters."""
    emb, w_ih, w_hh, b_ih, b_hh, w_out, b_out = params
    V, H = emb.shape
    wih_t = w_ih.T                                        # (H, 3H)
    whh_t = w_hh.T                                        # (H, 3H)
    w_irz = wih_t[:, :2 * H].astype(weight_dtype)         # (H, 2H)
    w_hrz = whh_t[:, :2 * H].astype(weight_dtype)         # (H, 2H)
    b_rz = (b_ih[:2 * H] + b_hh[:2 * H]).reshape(1, 2 * H).astype(jnp.float32)
    w_in = wih_t[:, 2 * H:].astype(weight_dtype)          # (H, H)
    w_hn = whh_t[:, 2 * H:].astype(weight_dtype)          # (H, H)
    b_in = b_ih[2 * H:].reshape(1, H).astype(jnp.float32)
    b_hn = b_hh[2 * H:].reshape(1, H).astype(jnp.float32)
    w_out_t = w_out.T.astype(weight_dtype)                # (H, V)
    b_out2 = b_out.reshape(1, V).astype(jnp.float32)
    return (emb.astype(jnp.float32), w_irz, w_hrz, b_rz,
            w_in, w_hn, b_in, b_hn, w_out_t, b_out2)


def decoder_rnn_decode(tokens, hidden, params):
    """Run T decoder steps (token ids given) inside ONE kernel call.

    tokens: int32 (T,);  hidden: f32 (1, 1, H)
    returns (logp (T, V), final hidden (1, 1, H))
    """
    (emb, w_irz, w_hrz, b_rz, w_in, w_hn, b_in, b_hn,
     w_out_t, b_out) = prepare_params(params)
    V, H = emb.shape
    T = int(tokens.shape[0])
    assert H % 128 == 0 and V % 128 == 0, "H and V must be multiples of 128"

    # Pre-gather all T embedding rows in the wrapper (one contiguous block
    # into the kernel instead of T per-step gather DMAs).
    x_all = jnp.take(emb, tokens.astype(jnp.int32), axis=0)   # (T, H) f32
    h0 = hidden.reshape(1, H).astype(jnp.float32)

    vmem = pl.BlockSpec(memory_space=pltpu.MemorySpace.VMEM)

    logp, h_final = pl.pallas_call(
        _decoder_fused_kernel,
        out_shape=(jax.ShapeDtypeStruct((T, V), jnp.float32),
                   jax.ShapeDtypeStruct((1, H), jnp.float32)),
        in_specs=[vmem] * 11,
        out_specs=(vmem, vmem),
        scratch_shapes=[pltpu.VMEM((T, H), jnp.float32)],   # all hidden states
    )(x_all, h0, w_irz, w_hrz, b_rz, w_in, w_hn, b_in, b_hn, w_out_t, b_out)

    return logp, h_final.reshape(1, 1, H)


def decoder_rnn_forward(token, hidden, params):
    """Single-step forward matching DecoderRNN.forward(input, hidden)."""
    logp, h = decoder_rnn_decode(token.reshape(1).astype(jnp.int32), hidden, params)
    return logp, h


# ----------------------------- references ----------------------------------

def reference_decode_f32(tokens, hidden, params):
    """Pure-f32, PyTorch-faithful GRU decoder loop (semantics reference)."""
    emb, w_ih, w_hh, b_ih, b_hh, w_out, b_out = params
    H = hidden.shape[-1]
    h = hidden.reshape(1, H)
    logps = []
    for t in range(int(tokens.shape[0])):
        x = jnp.maximum(emb[tokens[t]][None, :], 0.0)
        gi = x @ w_ih.T + b_ih
        gh = h @ w_hh.T + b_hh
        i_r, i_z, i_n = gi[:, :H], gi[:, H:2 * H], gi[:, 2 * H:]
        h_r, h_z, h_n = gh[:, :H], gh[:, H:2 * H], gh[:, 2 * H:]
        r = jax.nn.sigmoid(i_r + h_r)
        z = jax.nn.sigmoid(i_z + h_z)
        n = jnp.tanh(i_n + r * h_n)
        h = (1.0 - z) * n + z * h
        logits = h @ w_out.T + b_out
        logps.append(jax.nn.log_softmax(logits, axis=-1))
    return jnp.concatenate(logps, axis=0), h.reshape(1, 1, H)


def reference_decode_quantized(tokens, hidden, params):
    """Same algorithm/quantization as the kernel (bf16 weights, f32 accum)."""
    (emb, w_irz, w_hrz, b_rz, w_in, w_hn, b_in, b_hn,
     w_out_t, b_out) = prepare_params(params)
    V, H = emb.shape
    h = hidden.reshape(1, H).astype(jnp.float32)
    logps = []
    for t in range(int(tokens.shape[0])):
        x = jnp.maximum(emb[tokens[t]][None, :], 0.0)
        xb = x.astype(jnp.bfloat16)
        hb = h.astype(jnp.bfloat16)
        rz = jax.nn.sigmoid(
            jnp.dot(xb, w_irz, preferred_element_type=jnp.float32)
            + jnp.dot(hb, w_hrz, preferred_element_type=jnp.float32) + b_rz)
        r, z = rz[:, :H], rz[:, H:]
        i_n = jnp.dot(xb, w_in, preferred_element_type=jnp.float32) + b_in
        h_n = jnp.dot(hb, w_hn, preferred_element_type=jnp.float32) + b_hn
        n = jnp.tanh(i_n + r * h_n)
        h = (1.0 - z) * n + z * h
        logits = jnp.dot(h.astype(jnp.bfloat16), w_out_t,
                         preferred_element_type=jnp.float32) + b_out
        logps.append(jax.nn.log_softmax(logits, axis=-1))
    return jnp.concatenate(logps, axis=0), h.reshape(1, 1, H)


def init_params(key, hidden_size, output_size):
    ks = jax.random.split(key, 7)
    s = 0.1
    emb = jax.random.normal(ks[0], (output_size, hidden_size), jnp.float32) * s
    w_ih = jax.random.normal(ks[1], (3 * hidden_size, hidden_size), jnp.float32) * s
    w_hh = jax.random.normal(ks[2], (3 * hidden_size, hidden_size), jnp.float32) * s
    b_ih = jax.random.normal(ks[3], (3 * hidden_size,), jnp.float32) * s
    b_hh = jax.random.normal(ks[4], (3 * hidden_size,), jnp.float32) * s
    w_out = jax.random.normal(ks[5], (output_size, hidden_size), jnp.float32) * s
    b_out = jax.random.normal(ks[6], (output_size,), jnp.float32) * s
    return (emb, w_ih, w_hh, b_ih, b_hh, w_out, b_out)


if __name__ == "__main__":
    hidden_size = 256   # module default; 256-deep contraction fills the v6e/v7x MXU
    output_size = 512   # vocabulary size (multiple of 128, kept small for the demo)
    T = 8               # decode steps fused into one kernel call

    key = jax.random.PRNGKey(0)
    params = init_params(key, hidden_size, output_size)

    tokens = jax.random.randint(jax.random.PRNGKey(0), (T,), 0, output_size,
                                dtype=jnp.int32)
    hidden = jnp.zeros((1, 1, hidden_size), dtype=jnp.float32)   # initHidden()

    logp, h_new = decoder_rnn_decode(tokens, hidden, params)
    jax.block_until_ready((logp, h_new))
    assert logp.shape == (T, output_size) and h_new.shape == (1, 1, hidden_size)

    # Tight check vs a JAX reference with identical bf16 weight quantization.
    ref_q_logp, ref_q_h = reference_decode_quantized(tokens, hidden, params)
    assert jnp.allclose(logp, ref_q_logp, atol=2e-3, rtol=2e-3), \
        float(jnp.max(jnp.abs(logp - ref_q_logp)))
    assert jnp.allclose(h_new, ref_q_h, atol=2e-3, rtol=2e-3)

    # Looser check vs the full-f32 PyTorch-faithful reference (bf16 error budget).
    ref_logp, ref_h = reference_decode_f32(tokens, hidden, params)
    assert jnp.allclose(logp, ref_logp, atol=3e-2, rtol=3e-2), \
        float(jnp.max(jnp.abs(logp - ref_logp)))
    assert jnp.allclose(h_new, ref_h, atol=3e-2, rtol=3e-2)

    # Single-step call matching DecoderRNN.forward(input, hidden).
    logp1, h1 = decoder_rnn_forward(tokens[:1], hidden, params)
    jax.block_until_ready((logp1, h1))
    assert jnp.allclose(logp1, ref_logp[:1], atol=3e-2, rtol=3e-2)

    print("KERNEL_OK")
</pallas_src>

<mosaic_0001>
module attributes {stable_mosaic.version = 11 : i64} {
  func.func @_decoder_fused_kernel(%arg0: memref<8x256xf32, #tpu.memory_space<vmem>>, %arg1: memref<1x256xf32, #tpu.memory_space<vmem>>, %arg2: memref<256x512xbf16, #tpu.memory_space<vmem>>, %arg3: memref<256x512xbf16, #tpu.memory_space<vmem>>, %arg4: memref<1x512xf32, #tpu.memory_space<vmem>>, %arg5: memref<256x256xbf16, #tpu.memory_space<vmem>>, %arg6: memref<256x256xbf16, #tpu.memory_space<vmem>>, %arg7: memref<1x256xf32, #tpu.memory_space<vmem>>, %arg8: memref<1x256xf32, #tpu.memory_space<vmem>>, %arg9: memref<256x512xbf16, #tpu.memory_space<vmem>>, %arg10: memref<1x512xf32, #tpu.memory_space<vmem>>, %arg11: memref<8x512xf32, #tpu.memory_space<vmem>>, %arg12: memref<1x256xf32, #tpu.memory_space<vmem>>, %arg13: memref<8x256xf32, #tpu.memory_space<vmem>>) attributes {dimension_semantics = [], scalar_prefetch = 0 : i64, scratch_operands = 1 : i64, tpu.core_type = #tpu.core_type<tc>} {
    %c0 = arith.constant 0 : index
    %c0_0 = arith.constant 0 : index
    %0 = vector.load %arg1[%c0, %c0_0] : memref<1x256xf32, #tpu.memory_space<vmem>>, vector<1x256xf32>
    %c0_1 = arith.constant 0 : index
    %c0_2 = arith.constant 0 : index
    %1 = vector.load %arg0[%c0_1, %c0_2] : memref<8x256xf32, #tpu.memory_space<vmem>>, vector<1x256xf32>
    %cst = arith.constant 0.000000e+00 : f32
    %2 = vector.broadcast %cst : f32 to vector<1x256xf32>
    %3 = arith.maximumf %1, %2 : vector<1x256xf32>
    %4 = arith.truncf %3 : vector<1x256xf32> to vector<1x256xbf16>
    %5 = arith.truncf %0 : vector<1x256xf32> to vector<1x256xbf16>
    %c0_3 = arith.constant 0 : index
    %c0_4 = arith.constant 0 : index
    %6 = vector.load %arg2[%c0_3, %c0_4] : memref<256x512xbf16, #tpu.memory_space<vmem>>, vector<256x512xbf16>
    %cst_5 = arith.constant dense<0.000000e+00> : vector<1x512xf32>
    %7 = tpu.matmul %4, %6, %cst_5 {dimension_numbers = #tpu.dot_dimension_numbers<[1], [0], [0], [1], [0, 0, 1, 1], [], []>} : vector<1x256xbf16>, vector<256x512xbf16>, vector<1x512xf32> -> vector<1x512xf32>
    %c0_6 = arith.constant 0 : index
    %c0_7 = arith.constant 0 : index
    %8 = vector.load %arg3[%c0_6, %c0_7] : memref<256x512xbf16, #tpu.memory_space<vmem>>, vector<256x512xbf16>
    %cst_8 = arith.constant dense<0.000000e+00> : vector<1x512xf32>
    %9 = tpu.matmul %5, %8, %cst_8 {dimension_numbers = #tpu.dot_dimension_numbers<[1], [0], [0], [1], [0, 0, 1, 1], [], []>} : vector<1x256xbf16>, vector<256x512xbf16>, vector<1x512xf32> -> vector<1x512xf32>
    %10 = arith.addf %7, %9 : vector<1x512xf32>
    %c0_9 = arith.constant 0 : index
    %c0_10 = arith.constant 0 : index
    %11 = vector.load %arg4[%c0_9, %c0_10] : memref<1x512xf32, #tpu.memory_space<vmem>>, vector<1x512xf32>
    %12 = arith.addf %10, %11 : vector<1x512xf32>
    %13 = arith.negf %12 : vector<1x512xf32>
    %14 = math.exp %13 : vector<1x512xf32>
    %cst_11 = arith.constant 1.000000e+00 : f32
    %15 = vector.broadcast %cst_11 : f32 to vector<1x512xf32>
    %16 = arith.addf %15, %14 : vector<1x512xf32>
    %17 = arith.divf %15, %16 : vector<1x512xf32>
    %18 = vector.extract_strided_slice %17 {offsets = [0, 0], sizes = [1, 256], strides = [1, 1]} : vector<1x512xf32> to vector<1x256xf32>
    %19 = vector.extract_strided_slice %17 {offsets = [0, 256], sizes = [1, 256], strides = [1, 1]} : vector<1x512xf32> to vector<1x256xf32>
    %c0_12 = arith.constant 0 : index
    %c0_13 = arith.constant 0 : index
    %20 = vector.load %arg5[%c0_12, %c0_13] : memref<256x256xbf16, #tpu.memory_space<vmem>>, vector<256x256xbf16>
    %cst_14 = arith.constant dense<0.000000e+00> : vector<1x256xf32>
    %21 = tpu.matmul %4, %20, %cst_14 {dimension_numbers = #tpu.dot_dimension_numbers<[1], [0], [0], [1], [0, 0, 1, 1], [], []>} : vector<1x256xbf16>, vector<256x256xbf16>, vector<1x256xf32> -> vector<1x256xf32>
    %c0_15 = arith.constant 0 : index
    %c0_16 = arith.constant 0 : index
    %22 = vector.load %arg7[%c0_15, %c0_16] : memref<1x256xf32, #tpu.memory_space<vmem>>, vector<1x256xf32>
    %23 = arith.addf %21, %22 : vector<1x256xf32>
    %c0_17 = arith.constant 0 : index
    %c0_18 = arith.constant 0 : index
    %24 = vector.load %arg6[%c0_17, %c0_18] : memref<256x256xbf16, #tpu.memory_space<vmem>>, vector<256x256xbf16>
    %cst_19 = arith.constant dense<0.000000e+00> : vector<1x256xf32>
    %25 = tpu.matmul %5, %24, %cst_19 {dimension_numbers = #tpu.dot_dimension_numbers<[1], [0], [0], [1], [0, 0, 1, 1], [], []>} : vector<1x256xbf16>, vector<256x256xbf16>, vector<1x256xf32> -> vector<1x256xf32>
    %c0_20 = arith.constant 0 : index
    %c0_21 = arith.constant 0 : index
    %26 = vector.load %arg8[%c0_20, %c0_21] : memref<1x256xf32, #tpu.memory_space<vmem>>, vector<1x256xf32>
    %27 = arith.addf %25, %26 : vector<1x256xf32>
    %28 = arith.mulf %18, %27 : vector<1x256xf32>
    %29 = arith.addf %23, %28 : vector<1x256xf32>
    %30 = math.tanh %29 : vector<1x256xf32>
    %cst_22 = arith.constant 1.000000e+00 : f32
    %31 = vector.broadcast %cst_22 : f32 to vector<1x256xf32>
    %32 = arith.subf %31, %19 : vector<1x256xf32>
    %33 = arith.mulf %32, %30 : vector<1x256xf32>
    %34 = arith.mulf %19, %0 : vector<1x256xf32>
    %35 = arith.addf %33, %34 : vector<1x256xf32>
    %c0_23 = arith.constant 0 : index
    %c0_24 = arith.constant 0 : index
    %36 = vector.load %arg13[%c0_23, %c0_24] : memref<8x256xf32, #tpu.memory_space<vmem>>, vector<1x256xf32>
    tpu.vector_store %arg13[%c0_23, %c0_24], %35 {strides = array<i32>} : memref<8x256xf32, #tpu.memory_space<vmem>>, vector<1x256xf32>,
    %c1 = arith.constant 1 : index
    %c0_25 = arith.constant 0 : index
    %37 = vector.load %arg0[%c1, %c0_25] : memref<8x256xf32, #tpu.memory_space<vmem>>, vector<1x256xf32>
    %cst_26 = arith.constant 0.000000e+00 : f32
    %38 = vector.broadcast %cst_26 : f32 to vector<1x256xf32>
    %39 = arith.maximumf %37, %38 : vector<1x256xf32>
    %40 = arith.truncf %39 : vector<1x256xf32> to vector<1x256xbf16>
    %41 = arith.truncf %35 : vector<1x256xf32> to vector<1x256xbf16>
    %c0_27 = arith.constant 0 : index
    %c0_28 = arith.constant 0 : index
    %42 = vector.load %arg2[%c0_27, %c0_28] : memref<256x512xbf16, #tpu.memory_space<vmem>>, vector<256x512xbf16>
    %cst_29 = arith.constant dense<0.000000e+00> : vector<1x512xf32>
    %43 = tpu.matmul %40, %42, %cst_29 {dimension_numbers = #tpu.dot_dimension_numbers<[1], [0], [0], [1], [0, 0, 1, 1], [], []>} : vector<1x256xbf16>, vector<256x512xbf16>, vector<1x512xf32> -> vector<1x512xf32>
    %c0_30 = arith.constant 0 : index
    %c0_31 = arith.constant 0 : index
    %44 = vector.load %arg3[%c0_30, %c0_31] : memref<256x512xbf16, #tpu.memory_space<vmem>>, vector<256x512xbf16>
    %cst_32 = arith.constant dense<0.000000e+00> : vector<1x512xf32>
    %45 = tpu.matmul %41, %44, %cst_32 {dimension_numbers = #tpu.dot_dimension_numbers<[1], [0], [0], [1], [0, 0, 1, 1], [], []>} : vector<1x256xbf16>, vector<256x512xbf16>, vector<1x512xf32> -> vector<1x512xf32>
    %46 = arith.addf %43, %45 : vector<1x512xf32>
    %c0_33 = arith.constant 0 : index
    %c0_34 = arith.constant 0 : index
    %47 = vector.load %arg4[%c0_33, %c0_34] : memref<1x512xf32, #tpu.memory_space<vmem>>, vector<1x512xf32>
    %48 = arith.addf %46, %47 : vector<1x512xf32>
    %49 = arith.negf %48 : vector<1x512xf32>
    %50 = math.exp %49 : vector<1x512xf32>
    %cst_35 = arith.constant 1.000000e+00 : f32
    %51 = vector.broadcast %cst_35 : f32 to vector<1x512xf32>
    %52 = arith.addf %51, %50 : vector<1x512xf32>
    %53 = arith.divf %51, %52 : vector<1x512xf32>
    %54 = vector.extract_strided_slice %53 {offsets = [0, 0], sizes = [1, 256], strides = [1, 1]} : vector<1x512xf32> to vector<1x256xf32>
    %55 = vector.extract_strided_slice %53 {offsets = [0, 256], sizes = [1, 256], strides = [1, 1]} : vector<1x512xf32> to vector<1x256xf32>
    %c0_36 = arith.constant 0 : index
    %c0_37 = arith.constant 0 : index
    %56 = vector.load %arg5[%c0_36, %c0_37] : memref<256x256xbf16, #tpu.memory_space<vmem>>, vector<256x256xbf16>
    %cst_38 = arith.constant dense<0.000000e+00> : vector<1x256xf32>
    %57 = tpu.matmul %40, %56, %cst_38 {dimension_numbers = #tpu.dot_dimension_numbers<[1], [0], [0], [1], [0, 0, 1, 1], [], []>} : vector<1x256xbf16>, vector<256x256xbf16>, vector<1x256xf32> -> vector<1x256xf32>
    %c0_39 = arith.constant 0 : index
    %c0_40 = arith.constant 0 : index
    %58 = vector.load %arg7[%c0_39, %c0_40] : memref<1x256xf32, #tpu.memory_space<vmem>>, vector<1x256xf32>
    %59 = arith.addf %57, %58 : vector<1x256xf32>
    %c0_41 = arith.constant 0 : index
    %c0_42 = arith.constant 0 : index
    %60 = vector.load %arg6[%c0_41, %c0_42] : memref<256x256xbf16, #tpu.memory_space<vmem>>, vector<256x256xbf16>
    %cst_43 = arith.constant dense<0.000000e+00> : vector<1x256xf32>
    %61 = tpu.matmul %41, %60, %cst_43 {dimension_numbers = #tpu.dot_dimension_numbers<[1], [0], [0], [1], [0, 0, 1, 1], [], []>} : vector<1x256xbf16>, vector<256x256xbf16>, vector<1x256xf32> -> vector<1x256xf32>
    %c0_44 = arith.constant 0 : index
    %c0_45 = arith.constant 0 : index
    %62 = vector.load %arg8[%c0_44, %c0_45] : memref<1x256xf32, #tpu.memory_space<vmem>>, vector<1x256xf32>
    %63 = arith.addf %61, %62 : vector<1x256xf32>
    %64 = arith.mulf %54, %63 : vector<1x256xf32>
    %65 = arith.addf %59, %64 : vector<1x256xf32>
    %66 = math.tanh %65 : vector<1x256xf32>
    %cst_46 = arith.constant 1.000000e+00 : f32
    %67 = vector.broadcast %cst_46 : f32 to vector<1x256xf32>
    %68 = arith.subf %67, %55 : vector<1x256xf32>
    %69 = arith.mulf %68, %66 : vector<1x256xf32>
    %70 = arith.mulf %55, %35 : vector<1x256xf32>
    %71 = arith.addf %69, %70 : vector<1x256xf32>
    %c1_47 = arith.constant 1 : index
    %c0_48 = arith.constant 0 : index
    %72 = vector.load %arg13[%c1_47, %c0_48] : memref<8x256xf32, #tpu.memory_space<vmem>>, vector<1x256xf32>
    tpu.vector_store %arg13[%c1_47, %c0_48], %71 {strides = array<i32>} : memref<8x256xf32, #tpu.memory_space<vmem>>, vector<1x256xf32>,
    %c2 = arith.constant 2 : index
    %c0_49 = arith.constant 0 : index
    %73 = vector.load %arg0[%c2, %c0_49] : memref<8x256xf32, #tpu.memory_space<vmem>>, vector<1x256xf32>
    %cst_50 = arith.constant 0.000000e+00 : f32
    %74 = vector.broadcast %cst_50 : f32 to vector<1x256xf32>
    %75 = arith.maximumf %73, %74 : vector<1x256xf32>
    %76 = arith.truncf %75 : vector<1x256xf32> to vector<1x256xbf16>
    %77 = arith.truncf %71 : vector<1x256xf32> to vector<1x256xbf16>
    %c0_51 = arith.constant 0 : index
    %c0_52 = arith.constant 0 : index
    %78 = vector.load %arg2[%c0_51, %c0_52] : memref<256x512xbf16, #tpu.memory_space<vmem>>, vector<256x512xbf16>
    %cst_53 = arith.constant dense<0.000000e+00> : vector<1x512xf32>
    %79 = tpu.matmul %76, %78, %cst_53 {dimension_numbers = #tpu.dot_dimension_numbers<[1], [0], [0], [1], [0, 0, 1, 1], [], []>} : vector<1x256xbf16>, vector<256x512xbf16>, vector<1x512xf32> -> vector<1x512xf32>
    %c0_54 = arith.constant 0 : index
    %c0_55 = arith.constant 0 : index
    %80 = vector.load %arg3[%c0_54, %c0_55] : memref<256x512xbf16, #tpu.memory_space<vmem>>, vector<256x512xbf16>
    %cst_56 = arith.constant dense<0.000000e+00> : vector<1x512xf32>
    %81 = tpu.matmul %77, %80, %cst_56 {dimension_numbers = #tpu.dot_dimension_numbers<[1], [0], [0], [1], [0, 0, 1, 1], [], []>} : vector<1x256xbf16>, vector<256x512xbf16>, vector<1x512xf32> -> vector<1x512xf32>
    %82 = arith.addf %79, %81 : vector<1x512xf32>
    %c0_57 = arith.constant 0 : index
    %c0_58 = arith.constant 0 : index
    %83 = vector.load %arg4[%c0_57, %c0_58] : memref<1x512xf32, #tpu.memory_space<vmem>>, vector<1x512xf32>
    %84 = arith.addf %82, %83 : vector<1x512xf32>
    %85 = arith.negf %84 : vector<1x512xf32>
    %86 = math.exp %85 : vector<1x512xf32>
    %cst_59 = arith.constant 1.000000e+00 : f32
    %87 = vector.broadcast %cst_59 : f32 to vector<1x512xf32>
    %88 = arith.addf %87, %86 : vector<1x512xf32>
    %89 = arith.divf %87, %88 : vector<1x512xf32>
    %90 = vector.extract_strided_slice %89 {offsets = [0, 0], sizes = [1, 256], strides = [1, 1]} : vector<1x512xf32> to vector<1x256xf32>
    %91 = vector.extract_strided_slice %89 {offsets = [0, 256], sizes = [1, 256], strides = [1, 1]} : vector<1x512xf32> to vector<1x256xf32>
    %c0_60 = arith.constant 0 : index
    %c0_61 = arith.constant 0 : index
    %92 = vector.load %arg5[%c0_60, %c0_61] : memref<256x256xbf16, #tpu.memory_space<vmem>>, vector<256x256xbf16>
    %cst_62 = arith.constant dense<0.000000e+00> : vector<1x256xf32>
    %93 = tpu.matmul %76, %92, %cst_62 {dimension_numbers = #tpu.dot_dimension_numbers<[1], [0], [0], [1], [0, 0, 1, 1], [], []>} : vector<1x256xbf16>, vector<256x256xbf16>, vector<1x256xf32> -> vector<1x256xf32>
    %c0_63 = arith.constant 0 : index
    %c0_64 = arith.constant 0 : index
    %94 = vector.load %arg7[%c0_63, %c0_64] : memref<1x256xf32, #tpu.memory_space<vmem>>, vector<1x256xf32>
    %95 = arith.addf %93, %94 : vector<1x256xf32>
    %c0_65 = arith.constant 0 : index
    %c0_66 = arith.constant 0 : index
    %96 = vector.load %arg6[%c0_65, %c0_66] : memref<256x256xbf16, #tpu.memory_space<vmem>>, vector<256x256xbf16>
    %cst_67 = arith.constant dense<0.000000e+00> : vector<1x256xf32>
    %97 = tpu.matmul %77, %96, %cst_67 {dimension_numbers = #tpu.dot_dimension_numbers<[1], [0], [0], [1], [0, 0, 1, 1], [], []>} : vector<1x256xbf16>, vector<256x256xbf16>, vector<1x256xf32> -> vector<1x256xf32>
    %c0_68 = arith.constant 0 : index
    %c0_69 = arith.constant 0 : index
    %98 = vector.load %arg8[%c0_68, %c0_69] : memref<1x256xf32, #tpu.memory_space<vmem>>, vector<1x256xf32>
    %99 = arith.addf %97, %98 : vector<1x256xf32>
    %100 = arith.mulf %90, %99 : vector<1x256xf32>
    %101 = arith.addf %95, %100 : vector<1x256xf32>
    %102 = math.tanh %101 : vector<1x256xf32>
    %cst_70 = arith.constant 1.000000e+00 : f32
    %103 = vector.broadcast %cst_70 : f32 to vector<1x256xf32>
    %104 = arith.subf %103, %91 : vector<1x256xf32>
    %105 = arith.mulf %104, %102 : vector<1x256xf32>
    %106 = arith.mulf %91, %71 : vector<1x256xf32>
    %107 = arith.addf %105, %106 : vector<1x256xf32>
    %c2_71 = arith.constant 2 : index
    %c0_72 = arith.constant 0 : index
    %108 = vector.load %arg13[%c2_71, %c0_72] : memref<8x256xf32, #tpu.memory_space<vmem>>, vector<1x256xf32>
    tpu.vector_store %arg13[%c2_71, %c0_72], %107 {strides = array<i32>} : memref<8x256xf32, #tpu.memory_space<vmem>>, vector<1x256xf32>,
    %c3 = arith.constant 3 : index
    %c0_73 = arith.constant 0 : index
    %109 = vector.load %arg0[%c3, %c0_73] : memref<8x256xf32, #tpu.memory_space<vmem>>, vector<1x256xf32>
    %cst_74 = arith.constant 0.000000e+00 : f32
    %110 = vector.broadcast %cst_74 : f32 to vector<1x256xf32>
    %111 = arith.maximumf %109, %110 : vector<1x256xf32>
    %112 = arith.truncf %111 : vector<1x256xf32> to vector<1x256xbf16>
    %113 = arith.truncf %107 : vector<1x256xf32> to vector<1x256xbf16>
    %c0_75 = arith.constant 0 : index
    %c0_76 = arith.constant 0 : index
    %114 = vector.load %arg2[%c0_75, %c0_76] : memref<256x512xbf16, #tpu.memory_space<vmem>>, vector<256x512xbf16>
    %cst_77 = arith.constant dense<0.000000e+00> : vector<1x512xf32>
    %115 = tpu.matmul %112, %114, %cst_77 {dimension_numbers = #tpu.dot_dimension_numbers<[1], [0], [0], [1], [0, 0, 1, 1], [], []>} : vector<1x256xbf16>, vector<256x512xbf16>, vector<1x512xf32> -> vector<1x512xf32>
    %c0_78 = arith.constant 0 : index
    %c0_79 = arith.constant 0 : index
    %116 = vector.load %arg3[%c0_78, %c0_79] : memref<256x512xbf16, #tpu.memory_space<vmem>>, vector<256x512xbf16>
    %cst_80 = arith.constant dense<0.000000e+00> : vector<1x512xf32>
    %117 = tpu.matmul %113, %116, %cst_80 {dimension_numbers = #tpu.dot_dimension_numbers<[1], [0], [0], [1], [0, 0, 1, 1], [], []>} : vector<1x256xbf16>, vector<256x512xbf16>, vector<1x512xf32> -> vector<1x512xf32>
    %118 = arith.addf %115, %117 : vector<1x512xf32>
    %c0_81 = arith.constant 0 : index
    %c0_82 = arith.constant 0 : index
    %119 = vector.load %arg4[%c0_81, %c0_82] : memref<1x512xf32, #tpu.memory_space<vmem>>, vector<1x512xf32>
    %120 = arith.addf %118, %119 : vector<1x512xf32>
    %121 = arith.negf %120 : vector<1x512xf32>
    %122 = math.exp %121 : vector<1x512xf32>
    %cst_83 = arith.constant 1.000000e+00 : f32
    %123 = vector.broadcast %cst_83 : f32 to vector<1x512xf32>
    %124 = arith.addf %123, %122 : vector<1x512xf32>
    %125 = arith.divf %123, %124 : vector<1x512xf32>
    %126 = vector.extract_strided_slice %125 {offsets = [0, 0], sizes = [1, 256], strides = [1, 1]} : vector<1x512xf32> to vector<1x256xf32>
    %127 = vector.extract_strided_slice %125 {offsets = [0, 256], sizes = [1, 256], strides = [1, 1]} : vector<1x512xf32> to vector<1x256xf32>
    %c0_84 = arith.constant 0 : index
    %c0_85 = arith.constant 0 : index
    %128 = vector.load %arg5[%c0_84, %c0_85] : memref<256x256xbf16, #tpu.memory_space<vmem>>, vector<256x256xbf16>
    %cst_86 = arith.constant dense<0.000000e+00> : vector<1x256xf32>
    %129 = tpu.matmul %112, %128, %cst_86 {dimension_numbers = #tpu.dot_dimension_numbers<[1], [0], [0], [1], [0, 0, 1, 1], [], []>} : vector<1x256xbf16>, vector<256x256xbf16>, vector<1x256xf32> -> vector<1x256xf32>
    %c0_87 = arith.constant 0 : index
    %c0_88 = arith.constant 0 : index
    %130 = vector.load %arg7[%c0_87, %c0_88] : memref<1x256xf32, #tpu.memory_space<vmem>>, vector<1x256xf32>
    %131 = arith.addf %129, %130 : vector<1x256xf32>
    %c0_89 = arith.constant 0 : index
    %c0_90 = arith.constant 0 : index
    %132 = vector.load %arg6[%c0_89, %c0_90] : memref<256x256xbf16, #tpu.memory_space<vmem>>, vector<256x256xbf16>
    %cst_91 = arith.constant dense<0.000000e+00> : vector<1x256xf32>
    %133 = tpu.matmul %113, %132, %cst_91 {dimension_numbers = #tpu.dot_dimension_numbers<[1], [0], [0], [1], [0, 0, 1, 1], [], []>} : vector<1x256xbf16>, vector<256x256xbf16>, vector<1x256xf32> -> vector<1x256xf32>
    %c0_92 = arith.constant 0 : index
    %c0_93 = arith.constant 0 : index
    %134 = vector.load %arg8[%c0_92, %c0_93] : memref<1x256xf32, #tpu.memory_space<vmem>>, vector<1x256xf32>
    %135 = arith.addf %133, %134 : vector<1x256xf32>
    %136 = arith.mulf %126, %135 : vector<1x256xf32>
    %137 = arith.addf %131, %136 : vector<1x256xf32>
    %138 = math.tanh %137 : vector<1x256xf32>
    %cst_94 = arith.constant 1.000000e+00 : f32
    %139 = vector.broadcast %cst_94 : f32 to vector<1x256xf32>
    %140 = arith.subf %139, %127 : vector<1x256xf32>
    %141 = arith.mulf %140, %138 : vector<1x256xf32>
    %142 = arith.mulf %127, %107 : vector<1x256xf32>
    %143 = arith.addf %141, %142 : vector<1x256xf32>
    %c3_95 = arith.constant 3 : index
    %c0_96 = arith.constant 0 : index
    %144 = vector.load %arg13[%c3_95, %c0_96] : memref<8x256xf32, #tpu.memory_space<vmem>>, vector<1x256xf32>
    tpu.vector_store %arg13[%c3_95, %c0_96], %143 {strides = array<i32>} : memref<8x256xf32, #tpu.memory_space<vmem>>, vector<1x256xf32>,
    %c4 = arith.constant 4 : index
    %c0_97 = arith.constant 0 : index
    %145 = vector.load %arg0[%c4, %c0_97] : memref<8x256xf32, #tpu.memory_space<vmem>>, vector<1x256xf32>
    %cst_98 = arith.constant 0.000000e+00 : f32
    %146 = vector.broadcast %cst_98 : f32 to vector<1x256xf32>
    %147 = arith.maximumf %145, %146 : vector<1x256xf32>
    %148 = arith.truncf %147 : vector<1x256xf32> to vector<1x256xbf16>
    %149 = arith.truncf %143 : vector<1x256xf32> to vector<1x256xbf16>
    %c0_99 = arith.constant 0 : index
    %c0_100 = arith.constant 0 : index
    %150 = vector.load %arg2[%c0_99, %c0_100] : memref<256x512xbf16, #tpu.memory_space<vmem>>, vector<256x512xbf16>
    %cst_101 = arith.constant dense<0.000000e+00> : vector<1x512xf32>
    %151 = tpu.matmul %148, %150, %cst_101 {dimension_numbers = #tpu.dot_dimension_numbers<[1], [0], [0], [1], [0, 0, 1, 1], [], []>} : vector<1x256xbf16>, vector<256x512xbf16>, vector<1x512xf32> -> vector<1x512xf32>
    %c0_102 = arith.constant 0 : index
    %c0_103 = arith.constant 0 : index
    %152 = vector.load %arg3[%c0_102, %c0_103] : memref<256x512xbf16, #tpu.memory_space<vmem>>, vector<256x512xbf16>
    %cst_104 = arith.constant dense<0.000000e+00> : vector<1x512xf32>
    %153 = tpu.matmul %149, %152, %cst_104 {dimension_numbers = #tpu.dot_dimension_numbers<[1], [0], [0], [1], [0, 0, 1, 1], [], []>} : vector<1x256xbf16>, vector<256x512xbf16>, vector<1x512xf32> -> vector<1x512xf32>
    %154 = arith.addf %151, %153 : vector<1x512xf32>
    %c0_105 = arith.constant 0 : index
    %c0_106 = arith.constant 0 : index
    %155 = vector.load %arg4[%c0_105, %c0_106] : memref<1x512xf32, #tpu.memory_space<vmem>>, vector<1x512xf32>
    %156 = arith.addf %154, %155 : vector<1x512xf32>
    %157 = arith.negf %156 : vector<1x512xf32>
    %158 = math.exp %157 : vector<1x512xf32>
    %cst_107 = arith.constant 1.000000e+00 : f32
    %159 = vector.broadcast %cst_107 : f32 to vector<1x512xf32>
    %160 = arith.addf %159, %158 : vector<1x512xf32>
    %161 = arith.divf %159, %160 : vector<1x512xf32>
    %162 = vector.extract_strided_slice %161 {offsets = [0, 0], sizes = [1, 256], strides = [1, 1]} : vector<1x512xf32> to vector<1x256xf32>
    %163 = vector.extract_strided_slice %161 {offsets = [0, 256], sizes = [1, 256], strides = [1, 1]} : vector<1x512xf32> to vector<1x256xf32>
    %c0_108 = arith.constant 0 : index
    %c0_109 = arith.constant 0 : index
    %164 = vector.load %arg5[%c0_108, %c0_109] : memref<256x256xbf16, #tpu.memory_space<vmem>>, vector<256x256xbf16>
    %cst_110 = arith.constant dense<0.000000e+00> : vector<1x256xf32>
    %165 = tpu.matmul %148, %164, %cst_110 {dimension_numbers = #tpu.dot_dimension_numbers<[1], [0], [0], [1], [0, 0, 1, 1], [], []>} : vector<1x256xbf16>, vector<256x256xbf16>, vector<1x256xf32> -> vector<1x256xf32>
    %c0_111 = arith.constant 0 : index
    %c0_112 = arith.constant 0 : index
    %166 = vector.load %arg7[%c0_111, %c0_112] : memref<1x256xf32, #tpu.memory_space<vmem>>, vector<1x256xf32>
    %167 = arith.addf %165, %166 : vector<1x256xf32>
    %c0_113 = arith.constant 0 : index
    %c0_114 = arith.constant 0 : index
    %168 = vector.load %arg6[%c0_113, %c0_114] : memref<256x256xbf16, #tpu.memory_space<vmem>>, vector<256x256xbf16>
    %cst_115 = arith.constant dense<0.000000e+00> : vector<1x256xf32>
    %169 = tpu.matmul %149, %168, %cst_115 {dimension_numbers = #tpu.dot_dimension_numbers<[1], [0], [0], [1], [0, 0, 1, 1], [], []>} : vector<1x256xbf16>, vector<256x256xbf16>, vector<1x256xf32> -> vector<1x256xf32>
    %c0_116 = arith.constant 0 : index
    %c0_117 = arith.constant 0 : index
    %170 = vector.load %arg8[%c0_116, %c0_117] : memref<1x256xf32, #tpu.memory_space<vmem>>, vector<1x256xf32>
    %171 = arith.addf %169, %170 : vector<1x256xf32>
    %172 = arith.mulf %162, %171 : vector<1x256xf32>
    %173 = arith.addf %167, %172 : vector<1x256xf32>
    %174 = math.tanh %173 : vector<1x256xf32>
    %cst_118 = arith.constant 1.000000e+00 : f32
    %175 = vector.broadcast %cst_118 : f32 to vector<1x256xf32>
    %176 = arith.subf %175, %163 : vector<1x256xf32>
    %177 = arith.mulf %176, %174 : vector<1x256xf32>
    %178 = arith.mulf %163, %143 : vector<1x256xf32>
    %179 = arith.addf %177, %178 : vector<1x256xf32>
    %c4_119 = arith.constant 4 : index
    %c0_120 = arith.constant 0 : index
    %180 = vector.load %arg13[%c4_119, %c0_120] : memref<8x256xf32, #tpu.memory_space<vmem>>, vector<1x256xf32>
    tpu.vector_store %arg13[%c4_119, %c0_120], %179 {strides = array<i32>} : memref<8x256xf32, #tpu.memory_space<vmem>>, vector<1x256xf32>,
    %c5 = arith.constant 5 : index
    %c0_121 = arith.constant 0 : index
    %181 = vector.load %arg0[%c5, %c0_121] : memref<8x256xf32, #tpu.memory_space<vmem>>, vector<1x256xf32>
    %cst_122 = arith.constant 0.000000e+00 : f32
    %182 = vector.broadcast %cst_122 : f32 to vector<1x256xf32>
    %183 = arith.maximumf %181, %182 : vector<1x256xf32>
    %184 = arith.truncf %183 : vector<1x256xf32> to vector<1x256xbf16>
    %185 = arith.truncf %179 : vector<1x256xf32> to vector<1x256xbf16>
    %c0_123 = arith.constant 0 : index
    %c0_124 = arith.constant 0 : index
    %186 = vector.load %arg2[%c0_123, %c0_124] : memref<256x512xbf16, #tpu.memory_space<vmem>>, vector<256x512xbf16>
    %cst_125 = arith.constant dense<0.000000e+00> : vector<1x512xf32>
    %187 = tpu.matmul %184, %186, %cst_125 {dimension_numbers = #tpu.dot_dimension_numbers<[1], [0], [0], [1], [0, 0, 1, 1], [], []>} : vector<1x256xbf16>, vector<256x512xbf16>, vector<1x512xf32> -> vector<1x512xf32>
    %c0_126 = arith.constant 0 : index
    %c0_127 = arith.constant 0 : index
    %188 = vector.load %arg3[%c0_126, %c0_127] : memref<256x512xbf16, #tpu.memory_space<vmem>>, vector<256x512xbf16>
    %cst_128 = arith.constant dense<0.000000e+00> : vector<1x512xf32>
    %189 = tpu.matmul %185, %188, %cst_128 {dimension_numbers = #tpu.dot_dimension_numbers<[1], [0], [0], [1], [0, 0, 1, 1], [], []>} : vector<1x256xbf16>, vector<256x512xbf16>, vector<1x512xf32> -> vector<1x512xf32>
    %190 = arith.addf %187, %189 : vector<1x512xf32>
    %c0_129 = arith.constant 0 : index
    %c0_130 = arith.constant 0 : index
    %191 = vector.load %arg4[%c0_129, %c0_130] : memref<1x512xf32, #tpu.memory_space<vmem>>, vector<1x512xf32>
    %192 = arith.addf %190, %191 : vector<1x512xf32>
    %193 = arith.negf %192 : vector<1x512xf32>
    %194 = math.exp %193 : vector<1x512xf32>
    %cst_131 = arith.constant 1.000000e+00 : f32
    %195 = vector.broadcast %cst_131 : f32 to vector<1x512xf32>
    %196 = arith.addf %195, %194 : vector<1x512xf32>
    %197 = arith.divf %195, %196 : vector<1x512xf32>
    %198 = vector.extract_strided_slice %197 {offsets = [0, 0], sizes = [1, 256], strides = [1, 1]} : vector<1x512xf32> to vector<1x256xf32>
    %199 = vector.extract_strided_slice %197 {offsets = [0, 256], sizes = [1, 256], strides = [1, 1]} : vector<1x512xf32> to vector<1x256xf32>
    %c0_132 = arith.constant 0 : index
    %c0_133 = arith.constant 0 : index
    %200 = vector.load %arg5[%c0_132, %c0_133] : memref<256x256xbf16, #tpu.memory_space<vmem>>, vector<256x256xbf16>
    %cst_134 = arith.constant dense<0.000000e+00> : vector<1x256xf32>
    %201 = tpu.matmul %184, %200, %cst_134 {dimension_numbers = #tpu.dot_dimension_numbers<[1], [0], [0], [1], [0, 0, 1, 1], [], []>} : vector<1x256xbf16>, vector<256x256xbf16>, vector<1x256xf32> -> vector<1x256xf32>
    %c0_135 = arith.constant 0 : index
    %c0_136 = arith.constant 0 : index
    %202 = vector.load %arg7[%c0_135, %c0_136] : memref<1x256xf32, #tpu.memory_space<vmem>>, vector<1x256xf32>
    %203 = arith.addf %201, %202 : vector<1x256xf32>
    %c0_137 = arith.constant 0 : index
    %c0_138 = arith.constant 0 : index
    %204 = vector.load %arg6[%c0_137, %c0_138] : memref<256x256xbf16, #tpu.memory_space<vmem>>, vector<256x256xbf16>
    %cst_139 = arith.constant dense<0.000000e+00> : vector<1x256xf32>
    %205 = tpu.matmul %185, %204, %cst_139 {dimension_numbers = #tpu.dot_dimension_numbers<[1], [0], [0], [1], [0, 0, 1, 1], [], []>} : vector<1x256xbf16>, vector<256x256xbf16>, vector<1x256xf32> -> vector<1x256xf32>
    %c0_140 = arith.constant 0 : index
    %c0_141 = arith.constant 0 : index
    %206 = vector.load %arg8[%c0_140, %c0_141] : memref<1x256xf32, #tpu.memory_space<vmem>>, vector<1x256xf32>
    %207 = arith.addf %205, %206 : vector<1x256xf32>
    %208 = arith.mulf %198, %207 : vector<1x256xf32>
    %209 = arith.addf %203, %208 : vector<1x256xf32>
    %210 = math.tanh %209 : vector<1x256xf32>
    %cst_142 = arith.constant 1.000000e+00 : f32
    %211 = vector.broadcast %cst_142 : f32 to vector<1x256xf32>
    %212 = arith.subf %211, %199 : vector<1x256xf32>
    %213 = arith.mulf %212, %210 : vector<1x256xf32>
    %214 = arith.mulf %199, %179 : vector<1x256xf32>
    %215 = arith.addf %213, %214 : vector<1x256xf32>
    %c5_143 = arith.constant 5 : index
    %c0_144 = arith.constant 0 : index
    %216 = vector.load %arg13[%c5_143, %c0_144] : memref<8x256xf32, #tpu.memory_space<vmem>>, vector<1x256xf32>
    tpu.vector_store %arg13[%c5_143, %c0_144], %215 {strides = array<i32>} : memref<8x256xf32, #tpu.memory_space<vmem>>, vector<1x256xf32>,
    %c6 = arith.constant 6 : index
    %c0_145 = arith.constant 0 : index
    %217 = vector.load %arg0[%c6, %c0_145] : memref<8x256xf32, #tpu.memory_space<vmem>>, vector<1x256xf32>
    %cst_146 = arith.constant 0.000000e+00 : f32
    %218 = vector.broadcast %cst_146 : f32 to vector<1x256xf32>
    %219 = arith.maximumf %217, %218 : vector<1x256xf32>
    %220 = arith.truncf %219 : vector<1x256xf32> to vector<1x256xbf16>
    %221 = arith.truncf %215 : vector<1x256xf32> to vector<1x256xbf16>
    %c0_147 = arith.constant 0 : index
    %c0_148 = arith.constant 0 : index
    %222 = vector.load %arg2[%c0_147, %c0_148] : memref<256x512xbf16, #tpu.memory_space<vmem>>, vector<256x512xbf16>
    %cst_149 = arith.constant dense<0.000000e+00> : vector<1x512xf32>
    %223 = tpu.matmul %220, %222, %cst_149 {dimension_numbers = #tpu.dot_dimension_numbers<[1], [0], [0], [1], [0, 0, 1, 1], [], []>} : vector<1x256xbf16>, vector<256x512xbf16>, vector<1x512xf32> -> vector<1x512xf32>
    %c0_150 = arith.constant 0 : index
    %c0_151 = arith.constant 0 : index
    %224 = vector.load %arg3[%c0_150, %c0_151] : memref<256x512xbf16, #tpu.memory_space<vmem>>, vector<256x512xbf16>
    %cst_152 = arith.constant dense<0.000000e+00> : vector<1x512xf32>
    %225 = tpu.matmul %221, %224, %cst_152 {dimension_numbers = #tpu.dot_dimension_numbers<[1], [0], [0], [1], [0, 0, 1, 1], [], []>} : vector<1x256xbf16>, vector<256x512xbf16>, vector<1x512xf32> -> vector<1x512xf32>
    %226 = arith.addf %223, %225 : vector<1x512xf32>
    %c0_153 = arith.constant 0 : index
    %c0_154 = arith.constant 0 : index
    %227 = vector.load %arg4[%c0_153, %c0_154] : memref<1x512xf32, #tpu.memory_space<vmem>>, vector<1x512xf32>
    %228 = arith.addf %226, %227 : vector<1x512xf32>
    %229 = arith.negf %228 : vector<1x512xf32>
    %230 = math.exp %229 : vector<1x512xf32>
    %cst_155 = arith.constant 1.000000e+00 : f32
    %231 = vector.broadcast %cst_155 : f32 to vector<1x512xf32>
    %232 = arith.addf %231, %230 : vector<1x512xf32>
    %233 = arith.divf %231, %232 : vector<1x512xf32>
    %234 = vector.extract_strided_slice %233 {offsets = [0, 0], sizes = [1, 256], strides = [1, 1]} : vector<1x512xf32> to vector<1x256xf32>
    %235 = vector.extract_strided_slice %233 {offsets = [0, 256], sizes = [1, 256], strides = [1, 1]} : vector<1x512xf32> to vector<1x256xf32>
    %c0_156 = arith.constant 0 : index
    %c0_157 = arith.constant 0 : index
    %236 = vector.load %arg5[%c0_156, %c0_157] : memref<256x256xbf16, #tpu.memory_space<vmem>>, vector<256x256xbf16>
    %cst_158 = arith.constant dense<0.000000e+00> : vector<1x256xf32>
    %237 = tpu.matmul %220, %236, %cst_158 {dimension_numbers = #tpu.dot_dimension_numbers<[1], [0], [0], [1], [0, 0, 1, 1], [], []>} : vector<1x256xbf16>, vector<256x256xbf16>, vector<1x256xf32> -> vector<1x256xf32>
    %c0_159 = arith.constant 0 : index
    %c0_160 = arith.constant 0 : index
    %238 = vector.load %arg7[%c0_159, %c0_160] : memref<1x256xf32, #tpu.memory_space<vmem>>, vector<1x256xf32>
    %239 = arith.addf %237, %238 : vector<1x256xf32>
    %c0_161 = arith.constant 0 : index
    %c0_162 = arith.constant 0 : index
    %240 = vector.load %arg6[%c0_161, %c0_162] : memref<256x256xbf16, #tpu.memory_space<vmem>>, vector<256x256xbf16>
    %cst_163 = arith.constant dense<0.000000e+00> : vector<1x256xf32>
    %241 = tpu.matmul %221, %240, %cst_163 {dimension_numbers = #tpu.dot_dimension_numbers<[1], [0], [0], [1], [0, 0, 1, 1], [], []>} : vector<1x256xbf16>, vector<256x256xbf16>, vector<1x256xf32> -> vector<1x256xf32>
    %c0_164 = arith.constant 0 : index
    %c0_165 = arith.constant 0 : index
    %242 = vector.load %arg8[%c0_164, %c0_165] : memref<1x256xf32, #tpu.memory_space<vmem>>, vector<1x256xf32>
    %243 = arith.addf %241, %242 : vector<1x256xf32>
    %244 = arith.mulf %234, %243 : vector<1x256xf32>
    %245 = arith.addf %239, %244 : vector<1x256xf32>
    %246 = math.tanh %245 : vector<1x256xf32>
    %cst_166 = arith.constant 1.000000e+00 : f32
    %247 = vector.broadcast %cst_166 : f32 to vector<1x256xf32>
    %248 = arith.subf %247, %235 : vector<1x256xf32>
    %249 = arith.mulf %248, %246 : vector<1x256xf32>
    %250 = arith.mulf %235, %215 : vector<1x256xf32>
    %251 = arith.addf %249, %250 : vector<1x256xf32>
    %c6_167 = arith.constant 6 : index
    %c0_168 = arith.constant 0 : index
    %252 = vector.load %arg13[%c6_167, %c0_168] : memref<8x256xf32, #tpu.memory_space<vmem>>, vector<1x256xf32>
    tpu.vector_store %arg13[%c6_167, %c0_168], %251 {strides = array<i32>} : memref<8x256xf32, #tpu.memory_space<vmem>>, vector<1x256xf32>,
    %c7 = arith.constant 7 : index
    %c0_169 = arith.constant 0 : index
    %253 = vector.load %arg0[%c7, %c0_169] : memref<8x256xf32, #tpu.memory_space<vmem>>, vector<1x256xf32>
    %cst_170 = arith.constant 0.000000e+00 : f32
    %254 = vector.broadcast %cst_170 : f32 to vector<1x256xf32>
    %255 = arith.maximumf %253, %254 : vector<1x256xf32>
    %256 = arith.truncf %255 : vector<1x256xf32> to vector<1x256xbf16>
    %257 = arith.truncf %251 : vector<1x256xf32> to vector<1x256xbf16>
    %c0_171 = arith.constant 0 : index
    %c0_172 = arith.constant 0 : index
    %258 = vector.load %arg2[%c0_171, %c0_172] : memref<256x512xbf16, #tpu.memory_space<vmem>>, vector<256x512xbf16>
    %cst_173 = arith.constant dense<0.000000e+00> : vector<1x512xf32>
    %259 = tpu.matmul %256, %258, %cst_173 {dimension_numbers = #tpu.dot_dimension_numbers<[1], [0], [0], [1], [0, 0, 1, 1], [], []>} : vector<1x256xbf16>, vector<256x512xbf16>, vector<1x512xf32> -> vector<1x512xf32>
    %c0_174 = arith.constant 0 : index
    %c0_175 = arith.constant 0 : index
    %260 = vector.load %arg3[%c0_174, %c0_175] : memref<256x512xbf16, #tpu.memory_space<vmem>>, vector<256x512xbf16>
    %cst_176 = arith.constant dense<0.000000e+00> : vector<1x512xf32>
    %261 = tpu.matmul %257, %260, %cst_176 {dimension_numbers = #tpu.dot_dimension_numbers<[1], [0], [0], [1], [0, 0, 1, 1], [], []>} : vector<1x256xbf16>, vector<256x512xbf16>, vector<1x512xf32> -> vector<1x512xf32>
    %262 = arith.addf %259, %261 : vector<1x512xf32>
    %c0_177 = arith.constant 0 : index
    %c0_178 = arith.constant 0 : index
    %263 = vector.load %arg4[%c0_177, %c0_178] : memref<1x512xf32, #tpu.memory_space<vmem>>, vector<1x512xf32>
    %264 = arith.addf %262, %263 : vector<1x512xf32>
    %265 = arith.negf %264 : vector<1x512xf32>
    %266 = math.exp %265 : vector<1x512xf32>
    %cst_179 = arith.constant 1.000000e+00 : f32
    %267 = vector.broadcast %cst_179 : f32 to vector<1x512xf32>
    %268 = arith.addf %267, %266 : vector<1x512xf32>
    %269 = arith.divf %267, %268 : vector<1x512xf32>
    %270 = vector.extract_strided_slice %269 {offsets = [0, 0], sizes = [1, 256], strides = [1, 1]} : vector<1x512xf32> to vector<1x256xf32>
    %271 = vector.extract_strided_slice %269 {offsets = [0, 256], sizes = [1, 256], strides = [1, 1]} : vector<1x512xf32> to vector<1x256xf32>
    %c0_180 = arith.constant 0 : index
    %c0_181 = arith.constant 0 : index
    %272 = vector.load %arg5[%c0_180, %c0_181] : memref<256x256xbf16, #tpu.memory_space<vmem>>, vector<256x256xbf16>
    %cst_182 = arith.constant dense<0.000000e+00> : vector<1x256xf32>
    %273 = tpu.matmul %256, %272, %cst_182 {dimension_numbers = #tpu.dot_dimension_numbers<[1], [0], [0], [1], [0, 0, 1, 1], [], []>} : vector<1x256xbf16>, vector<256x256xbf16>, vector<1x256xf32> -> vector<1x256xf32>
    %c0_183 = arith.constant 0 : index
    %c0_184 = arith.constant 0 : index
    %274 = vector.load %arg7[%c0_183, %c0_184] : memref<1x256xf32, #tpu.memory_space<vmem>>, vector<1x256xf32>
    %275 = arith.addf %273, %274 : vector<1x256xf32>
    %c0_185 = arith.constant 0 : index
    %c0_186 = arith.constant 0 : index
    %276 = vector.load %arg6[%c0_185, %c0_186] : memref<256x256xbf16, #tpu.memory_space<vmem>>, vector<256x256xbf16>
    %cst_187 = arith.constant dense<0.000000e+00> : vector<1x256xf32>
    %277 = tpu.matmul %257, %276, %cst_187 {dimension_numbers = #tpu.dot_dimension_numbers<[1], [0], [0], [1], [0, 0, 1, 1], [], []>} : vector<1x256xbf16>, vector<256x256xbf16>, vector<1x256xf32> -> vector<1x256xf32>
    %c0_188 = arith.constant 0 : index
    %c0_189 = arith.constant 0 : index
    %278 = vector.load %arg8[%c0_188, %c0_189] : memref<1x256xf32, #tpu.memory_space<vmem>>, vector<1x256xf32>
    %279 = arith.addf %277, %278 : vector<1x256xf32>
    %280 = arith.mulf %270, %279 : vector<1x256xf32>
    %281 = arith.addf %275, %280 : vector<1x256xf32>
    %282 = math.tanh %281 : vector<1x256xf32>
    %cst_190 = arith.constant 1.000000e+00 : f32
    %283 = vector.broadcast %cst_190 : f32 to vector<1x256xf32>
    %284 = arith.subf %283, %271 : vector<1x256xf32>
    %285 = arith.mulf %284, %282 : vector<1x256xf32>
    %286 = arith.mulf %271, %251 : vector<1x256xf32>
    %287 = arith.addf %285, %286 : vector<1x256xf32>
    %c7_191 = arith.constant 7 : index
    %c0_192 = arith.constant 0 : index
    %288 = vector.load %arg13[%c7_191, %c0_192] : memref<8x256xf32, #tpu.memory_space<vmem>>, vector<1x256xf32>
    tpu.vector_store %arg13[%c7_191, %c0_192], %287 {strides = array<i32>} : memref<8x256xf32, #tpu.memory_space<vmem>>, vector<1x256xf32>,
    %c0_193 = arith.constant 0 : index
    %c0_194 = arith.constant 0 : index
    %289 = vector.load %arg12[%c0_193, %c0_194] : memref<1x256xf32, #tpu.memory_space<vmem>>, vector<1x256xf32>
    tpu.vector_store %arg12[%c0_193, %c0_194], %287 {strides = array<i32>} : memref<1x256xf32, #tpu.memory_space<vmem>>, vector<1x256xf32>,
    %c0_195 = arith.constant 0 : index
    %c0_196 = arith.constant 0 : index
    %290 = vector.load %arg13[%c0_195, %c0_196] : memref<8x256xf32, #tpu.memory_space<vmem>>, vector<8x256xf32>
    %291 = arith.truncf %290 : vector<8x256xf32> to vector<8x256xbf16>
    %c0_197 = arith.constant 0 : index
    %c0_198 = arith.constant 0 : index
    %292 = vector.load %arg9[%c0_197, %c0_198] : memref<256x512xbf16, #tpu.memory_space<vmem>>, vector<256x512xbf16>
    %cst_199 = arith.constant dense<0.000000e+00> : vector<8x512xf32>
    %293 = tpu.matmul %291, %292, %cst_199 {dimension_numbers = #tpu.dot_dimension_numbers<[1], [0], [0], [1], [0, 0, 1, 1], [], []>} : vector<8x256xbf16>, vector<256x512xbf16>, vector<8x512xf32> -> vector<8x512xf32>
    %c0_200 = arith.constant 0 : index
    %c0_201 = arith.constant 0 : index
    %294 = vector.load %arg10[%c0_200, %c0_201] : memref<1x512xf32, #tpu.memory_space<vmem>>, vector<1x512xf32>
    %295 = vector.broadcast %294 : vector<1x512xf32> to vector<8x512xf32>
    %296 = arith.addf %293, %295 : vector<8x512xf32>
    %cst_202 = arith.constant dense<0xFF800000> : vector<8xf32>
    %297 = vector.multi_reduction <maximumf>, %296, %cst_202 [1] : vector<8x512xf32> to vector<8xf32>
    %298 = vector.shape_cast %297 : vector<8xf32> to vector<8x1xf32>
    %299 = vector.broadcast %298 : vector<8x1xf32> to vector<8x512xf32>
    %300 = arith.subf %296, %299 : vector<8x512xf32>
    %301 = math.exp %300 : vector<8x512xf32>
    %cst_203 = arith.constant dense<0.000000e+00> : vector<8xf32>
    %302 = vector.multi_reduction <add>, %301, %cst_203 [1] : vector<8x512xf32> to vector<8xf32>
    %303 = vector.shape_cast %302 : vector<8xf32> to vector<8x1xf32>
    %304 = math.log %303 : vector<8x1xf32>
    %305 = vector.broadcast %304 : vector<8x1xf32> to vector<8x512xf32>
    %306 = arith.subf %300, %305 : vector<8x512xf32>
    %c0_204 = arith.constant 0 : index
    %c0_205 = arith.constant 0 : index
    %307 = vector.load %arg11[%c0_204, %c0_205] : memref<8x512xf32, #tpu.memory_space<vmem>>, vector<8x512xf32>
    tpu.vector_store %arg11[%c0_204, %c0_205], %306 {strides = array<i32>} : memref<8x512xf32, #tpu.memory_space<vmem>>, vector<8x512xf32>,
    return
  }
}

</mosaic_0001>

<llo_original>
// kernel: tpu_custom_call.1
$region0: #{tpu_custom_call.1}
  #allocation0 [shape = 'u32[]', space=smem, size = 0x4, offset = 0x4, fixed_abs, tag = 'smem constant byte address 0x4 - core index']
  #allocation1 [shape = 'u32[72,128]{1,0:T(1,128)}', space=vmem, size = 0x9000, scoped, tag = 'internal scratch']
  #allocation2 [shape = 'f32[8,256]{1,0:T(8,128)}', space=vmem, size = 0x2000, scoped, tag = 'scratch operand']
  %s0 = inlined_call_operand.hbm [shape: f32[8,256], index: 0, kind: input, shape index: {}]
  %s1 = inlined_call_operand.hbm [shape: f32[1,256], index: 1, kind: input, shape index: {}]
  %s2 = inlined_call_operand.hbm [shape: bf16[256,512], index: 2, kind: input, shape index: {}]
  %s3 = inlined_call_operand.hbm [shape: bf16[256,512], index: 3, kind: input, shape index: {}]
  %s4 = inlined_call_operand.hbm [shape: f32[1,512], index: 4, kind: input, shape index: {}]
  %s5 = inlined_call_operand.hbm [shape: bf16[256,256], index: 5, kind: input, shape index: {}]
  %s6 = inlined_call_operand.hbm [shape: bf16[256,256], index: 6, kind: input, shape index: {}]
  %s7 = inlined_call_operand.vmem [shape: f32[1,256], index: 7, kind: input, shape index: {}]
  %s8 = inlined_call_operand.hbm [shape: f32[1,256], index: 8, kind: input, shape index: {}]
  %s9 = inlined_call_operand.hbm [shape: bf16[256,512], index: 9, kind: input, shape index: {}]
  %s10 = inlined_call_operand.vmem [shape: f32[1,512], index: 10, kind: input, shape index: {}]
  %s11 = inlined_call_operand.hbm [shape: f32[8,512], index: 11, kind: output, shape index: {0}]
  %s12 = inlined_call_operand.hbm [shape: f32[1,256], index: 12, kind: output, shape index: {1}]
  %13 = xla_tuple %s11, %s12
  %s14 = sld [smem:[#allocation0]]
  $region98: #{tpu_custom_call.1} parent=0
    _
  %s16 = ssub.s32 1, %s14
  %s17 = scalar_select 0, %s16, %s14
  $region1: #{tpu_custom_call.1} parent=0
    #allocation3 [shape = 'u8[8192]{0}', space=vmem, size = 0x2000, scoped, tag = 'input window, operand 0, single buffered']
    #allocation4 [shape = 's32[1]{0}', space=sflag, size = 0x4, scoped, tag = 'scoped memory for tpu_custom_call.1']
    #allocation5 [shape = 's32[1]{0}', space=sflag, size = 0x4, scoped, tag = 'scoped memory for tpu_custom_call.1']
    #allocation6 [shape = 'u8[1024]{0}', space=vmem, size = 0x400, scoped, tag = 'input window, operand 1, single buffered']
    #allocation7 [shape = 's32[1]{0}', space=sflag, size = 0x4, scoped, tag = 'scoped memory for tpu_custom_call.1']
    #allocation8 [shape = 'u8[262144]{0}', space=vmem, size = 0x40000, scoped, tag = 'input window, operand 2, single buffered']
    #allocation9 [shape = 'u8[262144]{0}', space=vmem, size = 0x40000, scoped, tag = 'input window, operand 3, single buffered']
    #allocation10 [shape = 's32[1]{0}', space=sflag, size = 0x4, scoped, tag = 'scoped memory for tpu_custom_call.1']
    #allocation11 [shape = 'u8[2048]{0}', space=vmem, size = 0x800, scoped, tag = 'input window, operand 4, single buffered']
    #allocation12 [shape = 'u8[131072]{0}', space=vmem, size = 0x20000, scoped, tag = 'input window, operand 5, single buffered']
    #allocation13 [shape = 's32[1]{0}', space=sflag, size = 0x4, scoped, tag = 'scoped memory for tpu_custom_call.1']
    #allocation14 [shape = 'u8[131072]{0}', space=vmem, size = 0x20000, scoped, tag = 'input window, operand 6, single buffered']
    #allocation15 [shape = 'u8[1024]{0}', space=vmem, size = 0x400, scoped, tag = 'input window, operand 8, single buffered']
    #allocation16 [shape = 's32[1]{0}', space=sflag, size = 0x4, scoped, tag = 'scoped memory for tpu_custom_call.1']
    #allocation17 [shape = 'u8[262144]{0}', space=vmem, size = 0x40000, scoped, tag = 'input window, operand 9, single buffered']
    #allocation18 [shape = 'u8[16384]{0}', space=vmem, size = 0x4000, scoped, tag = 'output window, operand 0, single buffered']
    #allocation19 [shape = 'u8[1024]{0}', space=vmem, size = 0x400, scoped, tag = 'output window, operand 1, single buffered']
    #allocation20 [shape = 's32[1]{0}', space=sflag, size = 0x4, scoped, tag = 'scoped memory for tpu_custom_call.1']
    %18 = vsyncpa [#allocation4], 0
    %19 = vsyncpa [#allocation7], 0
    %20 = vsyncpa [#allocation10], 0
    %21 = vsyncpa [#allocation13], 0
    %22 = vsyncpa [#allocation16], 0
    %23 = vsyncpa [#allocation5], 0
    %24 = vsyncpa [#allocation20], 0
    // Predicated region
    $region2: #{tpu_custom_call.1} parent=1 // pred_check
      _
    $region3: #{tpu_custom_call.1} parent=1 // pred_check_branch
      %26 = sbr.rel (0) target = $region5
    $region4: #{tpu_custom_call.1} parent=1 // pred_region
      %28 = vsyncadd [#allocation4], 0
      %s30 = sshll.u32 %s0, 4
      %s31 = int_to_ptr.hbm [resolvable:$true] %s30
      %s32 = sshll.u32 [#allocation3], 4
      %s33 = int_to_ptr.vmem [resolvable:$true] %s32
      %35 = dma.hbm_to_vmem [thread:$0]  %s31, 256, %s33, [#allocation4]
    $region5: #{tpu_custom_call.1} parent=1 // pred_fallthru
      _
    // Predicated region
    $region6: #{tpu_custom_call.1} parent=1 // pred_check
      _
    $region7: #{tpu_custom_call.1} parent=1 // pred_check_branch
      %37 = sbr.rel (0) target = $region9
    $region8: #{tpu_custom_call.1} parent=1 // pred_region
      %39 = vsyncadd [#allocation7], 0
      %s41 = sshll.u32 %s1, 4
      %s42 = int_to_ptr.hbm [resolvable:$true] %s41
      %s43 = sshll.u32 [#allocation6], 4
      %s44 = int_to_ptr.vmem [resolvable:$true] %s43
      %46 = dma.hbm_to_vmem [thread:$0]  %s42, 32, %s44, [#allocation7]
    $region9: #{tpu_custom_call.1} parent=1 // pred_fallthru
      _
    // Predicated region
    $region10: #{tpu_custom_call.1} parent=1 // pred_check
      _
    $region11: #{tpu_custom_call.1} parent=1 // pred_check_branch
      %48 = sbr.rel (0) target = $region13
    $region12: #{tpu_custom_call.1} parent=1 // pred_region
      %50 = vsyncadd [#allocation7], 0
      %s51 = sshll.u32 %s2, 4
      %s52 = int_to_ptr.hbm [resolvable:$true] %s51
      %s53 = sshll.u32 [#allocation8], 4
      %s54 = int_to_ptr.vmem [resolvable:$true] %s53
      %59 = dma.hbm_to_vmem [thread:$0]  %s52, 8192, %s54, [#allocation7], 256, 256, 16
    $region13: #{tpu_custom_call.1} parent=1 // pred_fallthru
      _
    // Predicated region
    $region14: #{tpu_custom_call.1} parent=1 // pred_check
      _
    $region15: #{tpu_custom_call.1} parent=1 // pred_check_branch
      %61 = sbr.rel (0) target = $region17
    $region16: #{tpu_custom_call.1} parent=1 // pred_region
      %63 = vsyncadd [#allocation10], 0
      %s64 = sshll.u32 %s3, 4
      %s65 = int_to_ptr.hbm [resolvable:$true] %s64
      %s66 = sshll.u32 [#allocation9], 4
      %s67 = int_to_ptr.vmem [resolvable:$true] %s66
      %72 = dma.hbm_to_vmem [thread:$0]  %s65, 8192, %s67, [#allocation10], 256, 256, 16
    $region17: #{tpu_custom_call.1} parent=1 // pred_fallthru
      _
    // Predicated region
    $region18: #{tpu_custom_call.1} parent=1 // pred_check
      _
    $region19: #{tpu_custom_call.1} parent=1 // pred_check_branch
      %74 = sbr.rel (0) target = $region21
    $region20: #{tpu_custom_call.1} parent=1 // pred_region
      %76 = vsyncadd [#allocation10], 0
      %s78 = sshll.u32 %s4, 4
      %s79 = int_to_ptr.hbm [resolvable:$true] %s78
      %s80 = sshll.u32 [#allocation11], 4
      %s81 = int_to_ptr.vmem [resolvable:$true] %s80
      %83 = dma.hbm_to_vmem [thread:$0]  %s79, 64, %s81, [#allocation10]
    $region21: #{tpu_custom_call.1} parent=1 // pred_fallthru
      _
    // Predicated region
    $region22: #{tpu_custom_call.1} parent=1 // pred_check
      _
    $region23: #{tpu_custom_call.1} parent=1 // pred_check_branch
      %85 = sbr.rel (0) target = $region25
    $region24: #{tpu_custom_call.1} parent=1 // pred_region
      %87 = vsyncadd [#allocation13], 0
      %s88 = sshll.u32 %s5, 4
      %s89 = int_to_ptr.hbm [resolvable:$true] %s88
      %s90 = sshll.u32 [#allocation12], 4
      %s91 = int_to_ptr.vmem [resolvable:$true] %s90
      %96 = dma.hbm_to_vmem [thread:$0]  %s89, 4096, %s91, [#allocation13], 128, 128, 8
    $region25: #{tpu_custom_call.1} parent=1 // pred_fallthru
      _
    // Predicated region
    $region26: #{tpu_custom_call.1} parent=1 // pred_check
      _
    $region27: #{tpu_custom_call.1} parent=1 // pred_check_branch
      %98 = sbr.rel (0) target = $region29
    $region28: #{tpu_custom_call.1} parent=1 // pred_region
      %100 = vsyncadd [#allocation13], 0
      %s101 = sshll.u32 %s6, 4
      %s102 = int_to_ptr.hbm [resolvable:$true] %s101
      %s103 = sshll.u32 [#allocation14], 4
      %s104 = int_to_ptr.vmem [resolvable:$true] %s103
      %109 = dma.hbm_to_vmem [thread:$0]  %s102, 4096, %s104, [#allocation13], 128, 128, 8
    $region29: #{tpu_custom_call.1} parent=1 // pred_fallthru
      _
    // Predicated region
    $region30: #{tpu_custom_call.1} parent=1 // pred_check
      _
    $region31: #{tpu_custom_call.1} parent=1 // pred_check_branch
      %111 = sbr.rel (0) target = $region33
    $region32: #{tpu_custom_call.1} parent=1 // pred_region
      _
    $region33: #{tpu_custom_call.1} parent=1 // pred_fallthru
      _
    // Predicated region
    $region34: #{tpu_custom_call.1} parent=1 // pred_check
      _
    $region35: #{tpu_custom_call.1} parent=1 // pred_check_branch
      %113 = sbr.rel (0) target = $region37
    $region36: #{tpu_custom_call.1} parent=1 // pred_region
      %115 = vsyncadd [#allocation16], 0
      %s117 = sshll.u32 %s8, 4
      %s118 = int_to_ptr.hbm [resolvable:$true] %s117
      %s119 = sshll.u32 [#allocation15], 4
      %s120 = int_to_ptr.vmem [resolvable:$true] %s119
      %122 = dma.hbm_to_vmem [thread:$0]  %s118, 32, %s120, [#allocation16]
    $region37: #{tpu_custom_call.1} parent=1 // pred_fallthru
      _
    // Predicated region
    $region38: #{tpu_custom_call.1} parent=1 // pred_check
      _
    $region39: #{tpu_custom_call.1} parent=1 // pred_check_branch
      %124 = sbr.rel (0) target = $region41
    $region40: #{tpu_custom_call.1} parent=1 // pred_region
      %126 = vsyncadd [#allocation16], 0
      %s127 = sshll.u32 %s9, 4
      %s128 = int_to_ptr.hbm [resolvable:$true] %s127
      %s129 = sshll.u32 [#allocation17], 4
      %s130 = int_to_ptr.vmem [resolvable:$true] %s129
      %135 = dma.hbm_to_vmem [thread:$0]  %s128, 8192, %s130, [#allocation16], 256, 256, 16
    $region41: #{tpu_custom_call.1} parent=1 // pred_fallthru
      _
    // Predicated region
    $region42: #{tpu_custom_call.1} parent=1 // pred_check
      _
    $region43: #{tpu_custom_call.1} parent=1 // pred_check_branch
      %137 = sbr.rel (0) target = $region45
    $region44: #{tpu_custom_call.1} parent=1 // pred_region
      _
    $region45: #{tpu_custom_call.1} parent=1 // pred_fallthru
      _
    // Predicated region
    $region46: #{tpu_custom_call.1} parent=1 // pred_check
      _
    $region47: #{tpu_custom_call.1} parent=1 // pred_check_branch
      %139 = sbr.rel (0) target = $region49
    $region48: #{tpu_custom_call.1} parent=1 // pred_region
      %141 = dma.done [#allocation4], 256
    $region49: #{tpu_custom_call.1} parent=1 // pred_fallthru
      _
    // Predicated region
    $region50: #{tpu_custom_call.1} parent=1 // pred_check
      _
    $region51: #{tpu_custom_call.1} parent=1 // pred_check_branch
      %143 = sbr.rel (0) target = $region53
    $region52: #{tpu_custom_call.1} parent=1 // pred_region
      %145 = dma.done [#allocation7], 32
    $region53: #{tpu_custom_call.1} parent=1 // pred_fallthru
      _
    // Predicated region
    $region54: #{tpu_custom_call.1} parent=1 // pred_check
      _
    $region55: #{tpu_custom_call.1} parent=1 // pred_check_branch
      %147 = sbr.rel (0) target = $region57
    $region56: #{tpu_custom_call.1} parent=1 // pred_region
      %149 = dma.done [#allocation7], 8192
    $region57: #{tpu_custom_call.1} parent=1 // pred_fallthru
      _
    // Predicated region
    $region58: #{tpu_custom_call.1} parent=1 // pred_check
      _
    $region59: #{tpu_custom_call.1} parent=1 // pred_check_branch
      %151 = sbr.rel (0) target = $region61
    $region60: #{tpu_custom_call.1} parent=1 // pred_region
      %153 = dma.done [#allocation10], 8192
    $region61: #{tpu_custom_call.1} parent=1 // pred_fallthru
      _
    // Predicated region
    $region62: #{tpu_custom_call.1} parent=1 // pred_check
      _
    $region63: #{tpu_custom_call.1} parent=1 // pred_check_branch
      %155 = sbr.rel (0) target = $region65
    $region64: #{tpu_custom_call.1} parent=1 // pred_region
      %157 = dma.done [#allocation10], 64
    $region65: #{tpu_custom_call.1} parent=1 // pred_fallthru
      _
    // Predicated region
    $region66: #{tpu_custom_call.1} parent=1 // pred_check
      _
    $region67: #{tpu_custom_call.1} parent=1 // pred_check_branch
      %159 = sbr.rel (0) target = $region69
    $region68: #{tpu_custom_call.1} parent=1 // pred_region
      %161 = dma.done [#allocation13], 4096
    $region69: #{tpu_custom_call.1} parent=1 // pred_fallthru
      _
    // Predicated region
    $region70: #{tpu_custom_call.1} parent=1 // pred_check
      _
    $region71: #{tpu_custom_call.1} parent=1 // pred_check_branch
      %163 = sbr.rel (0) target = $region73
    $region72: #{tpu_custom_call.1} parent=1 // pred_region
      %165 = dma.done [#allocation13], 4096
    $region73: #{tpu_custom_call.1} parent=1 // pred_fallthru
      _
    // Predicated region
    $region74: #{tpu_custom_call.1} parent=1 // pred_check
      _
    $region75: #{tpu_custom_call.1} parent=1 // pred_check_branch
      %167 = sbr.rel (0) target = $region77
    $region76: #{tpu_custom_call.1} parent=1 // pred_region
      %169 = dma.done [#allocation16], 32
    $region77: #{tpu_custom_call.1} parent=1 // pred_fallthru
      _
    // Predicated region
    $region78: #{tpu_custom_call.1} parent=1 // pred_check
      _
    $region79: #{tpu_custom_call.1} parent=1 // pred_check_branch
      %171 = sbr.rel (0) target = $region81
    $region80: #{tpu_custom_call.1} parent=1 // pred_region
      %173 = dma.done [#allocation16], 8192
    $region81: #{tpu_custom_call.1} parent=1 // pred_fallthru
      _
    %v174 = vld [vmem:[#allocation6] sm:$0x3]
    %v175 = vld [vmem:[#allocation3] ss:$8 sm:$0x3]
    %v176 = vmax.f32 %v175, 0.0
    %v178 = vperm.slane %v176, 0
    %v179 = vperm.slane %v176, 1
    %v182 = vpack.c.bf16 %v178, %v178
    %v183 = vpack.c.bf16 %v179, %v179
    %v185 = vperm.slane %v174, 0
    %v186 = vperm.slane %v174, 1
    %v189 = vpack.c.bf16 %v185, %v185
    %v190 = vpack.c.bf16 %v186, %v186
    %v191 = vld [vmem:[#allocation8] sm:$0xff]
    %v192 = vld [vmem:[#allocation8 + $0x8] sm:$0xff]
    %v193 = vld [vmem:[#allocation8 + $0x10] sm:$0xff]
    %v194 = vld [vmem:[#allocation8 + $0x18] sm:$0xff]
    %v195 = vld [vmem:[#allocation8 + $0x20] sm:$0xff]
    %v196 = vld [vmem:[#allocation8 + $0x28] sm:$0xff]
    %v197 = vld [vmem:[#allocation8 + $0x30] sm:$0xff]
    %v198 = vld [vmem:[#allocation8 + $0x38] sm:$0xff]
    %v199 = vld [vmem:[#allocation8 + $0x40] sm:$0xff]
    %v200 = vld [vmem:[#allocation8 + $0x48] sm:$0xff]
    %v201 = vld [vmem:[#allocation8 + $0x50] sm:$0xff]
    %v202 = vld [vmem:[#allocation8 + $0x58] sm:$0xff]
    %v203 = vld [vmem:[#allocation8 + $0x60] sm:$0xff]
    %v204 = vld [vmem:[#allocation8 + $0x68] sm:$0xff]
    %v205 = vld [vmem:[#allocation8 + $0x70] sm:$0xff]
    %v206 = vld [vmem:[#allocation8 + $0x78] sm:$0xff]
    %v207 = vld [vmem:[#allocation8 + $0x80] sm:$0xff]
    %v208 = vld [vmem:[#allocation8 + $0x88] sm:$0xff]
    %v209 = vld [vmem:[#allocation8 + $0x90] sm:$0xff]
    %v210 = vld [vmem:[#allocation8 + $0x98] sm:$0xff]
    %v211 = vld [vmem:[#allocation8 + $0xa0] sm:$0xff]
    %v212 = vld [vmem:[#allocation8 + $0xa8] sm:$0xff]
    %v213 = vld [vmem:[#allocation8 + $0xb0] sm:$0xff]
    %v214 = vld [vmem:[#allocation8 + $0xb8] sm:$0xff]
    %v215 = vld [vmem:[#allocation8 + $0xc0] sm:$0xff]
    %v216 = vld [vmem:[#allocation8 + $0xc8] sm:$0xff]
    %v217 = vld [vmem:[#allocation8 + $0xd0] sm:$0xff]
    %v218 = vld [vmem:[#allocation8 + $0xd8] sm:$0xff]
    %v219 = vld [vmem:[#allocation8 + $0xe0] sm:$0xff]
    %v220 = vld [vmem:[#allocation8 + $0xe8] sm:$0xff]
    %v221 = vld [vmem:[#allocation8 + $0xf0] sm:$0xff]
    %v222 = vld [vmem:[#allocation8 + $0xf8] sm:$0xff]
    %v223 = vld [vmem:[#allocation8 + $0x100] sm:$0xff]
    %v224 = vld [vmem:[#allocation8 + $0x108] sm:$0xff]
    %v225 = vld [vmem:[#allocation8 + $0x110] sm:$0xff]
    %v226 = vld [vmem:[#allocation8 + $0x118] sm:$0xff]
    %v227 = vld [vmem:[#allocation8 + $0x120] sm:$0xff]
    %v228 = vld [vmem:[#allocation8 + $0x128] sm:$0xff]
    %v229 = vld [vmem:[#allocation8 + $0x130] sm:$0xff]
    %v230 = vld [vmem:[#allocation8 + $0x138] sm:$0xff]
    %v231 = vld [vmem:[#allocation8 + $0x140] sm:$0xff]
    %v232 = vld [vmem:[#allocation8 + $0x148] sm:$0xff]
    %v233 = vld [vmem:[#allocation8 + $0x150] sm:$0xff]
    %v234 = vld [vmem:[#allocation8 + $0x158] sm:$0xff]
    %v235 = vld [vmem:[#allocation8 + $0x160] sm:$0xff]
    %v236 = vld [vmem:[#allocation8 + $0x168] sm:$0xff]
    %v237 = vld [vmem:[#allocation8 + $0x170] sm:$0xff]
    %v238 = vld [vmem:[#allocation8 + $0x178] sm:$0xff]
    %v239 = vld [vmem:[#allocation8 + $0x180] sm:$0xff]
    %v240 = vld [vmem:[#allocation8 + $0x188] sm:$0xff]
    %v241 = vld [vmem:[#allocation8 + $0x190] sm:$0xff]
    %v242 = vld [vmem:[#allocation8 + $0x198] sm:$0xff]
    %v243 = vld [vmem:[#allocation8 + $0x1a0] sm:$0xff]
    %v244 = vld [vmem:[#allocation8 + $0x1a8] sm:$0xff]
    %v245 = vld [vmem:[#allocation8 + $0x1b0] sm:$0xff]
    %v246 = vld [vmem:[#allocation8 + $0x1b8] sm:$0xff]
    %v247 = vld [vmem:[#allocation8 + $0x1c0] sm:$0xff]
    %v248 = vld [vmem:[#allocation8 + $0x1c8] sm:$0xff]
    %v249 = vld [vmem:[#allocation8 + $0x1d0] sm:$0xff]
    %v250 = vld [vmem:[#allocation8 + $0x1d8] sm:$0xff]
    %v251 = vld [vmem:[#allocation8 + $0x1e0] sm:$0xff]
    %v252 = vld [vmem:[#allocation8 + $0x1e8] sm:$0xff]
    %v253 = vld [vmem:[#allocation8 + $0x1f0] sm:$0xff]
    %v254 = vld [vmem:[#allocation8 + $0x1f8] sm:$0xff]
    %v255 = vld [vmem:[#allocation9] sm:$0xff]
    %v256 = vld [vmem:[#allocation9 + $0x8] sm:$0xff]
    %v257 = vld [vmem:[#allocation9 + $0x10] sm:$0xff]
    %v258 = vld [vmem:[#allocation9 + $0x18] sm:$0xff]
    %v259 = vld [vmem:[#allocation9 + $0x20] sm:$0xff]
    %v260 = vld [vmem:[#allocation9 + $0x28] sm:$0xff]
    %v261 = vld [vmem:[#allocation9 + $0x30] sm:$0xff]
    %v262 = vld [vmem:[#allocation9 + $0x38] sm:$0xff]
    %v263 = vld [vmem:[#allocation9 + $0x40] sm:$0xff]
    %v264 = vld [vmem:[#allocation9 + $0x48] sm:$0xff]
    %v265 = vld [vmem:[#allocation9 + $0x50] sm:$0xff]
    %v266 = vld [vmem:[#allocation9 + $0x58] sm:$0xff]
    %v267 = vld [vmem:[#allocation9 + $0x60] sm:$0xff]
    %v268 = vld [vmem:[#allocation9 + $0x68] sm:$0xff]
    %v269 = vld [vmem:[#allocation9 + $0x70] sm:$0xff]
    %v270 = vld [vmem:[#allocation9 + $0x78] sm:$0xff]
    %v271 = vld [vmem:[#allocation9 + $0x80] sm:$0xff]
    %v272 = vld [vmem:[#allocation9 + $0x88] sm:$0xff]
    %v273 = vld [vmem:[#allocation9 + $0x90] sm:$0xff]
    %v274 = vld [vmem:[#allocation9 + $0x98] sm:$0xff]
    %v275 = vld [vmem:[#allocation9 + $0xa0] sm:$0xff]
    %v276 = vld [vmem:[#allocation9 + $0xa8] sm:$0xff]
    %v277 = vld [vmem:[#allocation9 + $0xb0] sm:$0xff]
    %v278 = vld [vmem:[#allocation9 + $0xb8] sm:$0xff]
    %v279 = vld [vmem:[#allocation9 + $0xc0] sm:$0xff]
    %v280 = vld [vmem:[#allocation9 + $0xc8] sm:$0xff]
    %v281 = vld [vmem:[#allocation9 + $0xd0] sm:$0xff]
    %v282 = vld [vmem:[#allocation9 + $0xd8] sm:$0xff]
    %v283 = vld [vmem:[#allocation9 + $0xe0] sm:$0xff]
    %v284 = vld [vmem:[#allocation9 + $0xe8] sm:$0xff]
    %v285 = vld [vmem:[#allocation9 + $0xf0] sm:$0xff]
    %v286 = vld [vmem:[#allocation9 + $0xf8] sm:$0xff]
    %v287 = vld [vmem:[#allocation9 + $0x100] sm:$0xff]
    %v288 = vld [vmem:[#allocation9 + $0x108] sm:$0xff]
    %v289 = vld [vmem:[#allocation9 + $0x110] sm:$0xff]
    %v290 = vld [vmem:[#allocation9 + $0x118] sm:$0xff]
    %v291 = vld [vmem:[#allocation9 + $0x120] sm:$0xff]
    %v292 = vld [vmem:[#allocation9 + $0x128] sm:$0xff]
    %v293 = vld [vmem:[#allocation9 + $0x130] sm:$0xff]
    %v294 = vld [vmem:[#allocation9 + $0x138] sm:$0xff]
    %v295 = vld [vmem:[#allocation9 + $0x140] sm:$0xff]
    %v296 = vld [vmem:[#allocation9 + $0x148] sm:$0xff]
    %v297 = vld [vmem:[#allocation9 + $0x150] sm:$0xff]
    %v298 = vld [vmem:[#allocation9 + $0x158] sm:$0xff]
    %v299 = vld [vmem:[#allocation9 + $0x160] sm:$0xff]
    %v300 = vld [vmem:[#allocation9 + $0x168] sm:$0xff]
    %v301 = vld [vmem:[#allocation9 + $0x170] sm:$0xff]
    %v302 = vld [vmem:[#allocation9 + $0x178] sm:$0xff]
    %v303 = vld [vmem:[#allocation9 + $0x180] sm:$0xff]
    %v304 = vld [vmem:[#allocation9 + $0x188] sm:$0xff]
    %v305 = vld [vmem:[#allocation9 + $0x190] sm:$0xff]
    %v306 = vld [vmem:[#allocation9 + $0x198] sm:$0xff]
    %v307 = vld [vmem:[#allocation9 + $0x1a0] sm:$0xff]
    %v308 = vld [vmem:[#allocation9 + $0x1a8] sm:$0xff]
    %v309 = vld [vmem:[#allocation9 + $0x1b0] sm:$0xff]
    %v310 = vld [vmem:[#allocation9 + $0x1b8] sm:$0xff]
    %v311 = vld [vmem:[#allocation9 + $0x1c0] sm:$0xff]
    %v312 = vld [vmem:[#allocation9 + $0x1c8] sm:$0xff]
    %v313 = vld [vmem:[#allocation9 + $0x1d0] sm:$0xff]
    %v314 = vld [vmem:[#allocation9 + $0x1d8] sm:$0xff]
    %v315 = vld [vmem:[#allocation9 + $0x1e0] sm:$0xff]
    %v316 = vld [vmem:[#allocation9 + $0x1e8] sm:$0xff]
    %v317 = vld [vmem:[#allocation9 + $0x1f0] sm:$0xff]
    %v318 = vld [vmem:[#allocation9 + $0x1f8] sm:$0xff]
    %v383 = vunpack.c.l.b16 %v255
    %v384 = vunpack.c.h.b16 %v255
    %v385 = vunpack.c.l.b16 %v256
    %v386 = vunpack.c.h.b16 %v256
    %v387 = vunpack.c.l.b16 %v257
    %v388 = vunpack.c.h.b16 %v257
    %v389 = vunpack.c.l.b16 %v258
    %v390 = vunpack.c.h.b16 %v258
    %v391 = vunpack.c.l.b16 %v259
    %v392 = vunpack.c.h.b16 %v259
    %v393 = vunpack.c.l.b16 %v260
    %v394 = vunpack.c.h.b16 %v260
    %v395 = vunpack.c.l.b16 %v261
    %v396 = vunpack.c.h.b16 %v261
    %v397 = vunpack.c.l.b16 %v262
    %v398 = vunpack.c.h.b16 %v262
    %v399 = vunpack.c.l.b16 %v263
    %v400 = vunpack.c.h.b16 %v263
    %v401 = vunpack.c.l.b16 %v264
    %v402 = vunpack.c.h.b16 %v264
    %v403 = vunpack.c.l.b16 %v265
    %v404 = vunpack.c.h.b16 %v265
    %v405 = vunpack.c.l.b16 %v266
    %v406 = vunpack.c.h.b16 %v266
    %v407 = vunpack.c.l.b16 %v267
    %v408 = vunpack.c.h.b16 %v267
    %v409 = vunpack.c.l.b16 %v268
    %v410 = vunpack.c.h.b16 %v268
    %v411 = vunpack.c.l.b16 %v269
    %v412 = vunpack.c.h.b16 %v269
    %v413 = vunpack.c.l.b16 %v270
    %v414 = vunpack.c.h.b16 %v270
    %v415 = vunpack.c.l.b16 %v271
    %v416 = vunpack.c.h.b16 %v271
    %v417 = vunpack.c.l.b16 %v272
    %v418 = vunpack.c.h.b16 %v272
    %v419 = vunpack.c.l.b16 %v273
    %v420 = vunpack.c.h.b16 %v273
    %v421 = vunpack.c.l.b16 %v274
    %v422 = vunpack.c.h.b16 %v274
    %v423 = vunpack.c.l.b16 %v275
    %v424 = vunpack.c.h.b16 %v275
    %v425 = vunpack.c.l.b16 %v276
    %v426 = vunpack.c.h.b16 %v276
    %v427 = vunpack.c.l.b16 %v277
    %v428 = vunpack.c.h.b16 %v277
    %v429 = vunpack.c.l.b16 %v278
    %v430 = vunpack.c.h.b16 %v278
    %v431 = vunpack.c.l.b16 %v279
    %v432 = vunpack.c.h.b16 %v279
    %v433 = vunpack.c.l.b16 %v280
    %v434 = vunpack.c.h.b16 %v280
    %v435 = vunpack.c.l.b16 %v281
    %v436 = vunpack.c.h.b16 %v281
    %v437 = vunpack.c.l.b16 %v282
    %v438 = vunpack.c.h.b16 %v282
    %v439 = vunpack.c.l.b16 %v283
    %v440 = vunpack.c.h.b16 %v283
    %v441 = vunpack.c.l.b16 %v284
    %v442 = vunpack.c.h.b16 %v284
    %v443 = vunpack.c.l.b16 %v285
    %v444 = vunpack.c.h.b16 %v285
    %v445 = vunpack.c.l.b16 %v286
    %v446 = vunpack.c.h.b16 %v286
    %v447 = vunpack.c.l.b16 %v287
    %v448 = vunpack.c.h.b16 %v287
    %v449 = vunpack.c.l.b16 %v288
    %v450 = vunpack.c.h.b16 %v288
    %v451 = vunpack.c.l.b16 %v289
    %v452 = vunpack.c.h.b16 %v289
    %v453 = vunpack.c.l.b16 %v290
    %v454 = vunpack.c.h.b16 %v290
    %v455 = vunpack.c.l.b16 %v291
    %v456 = vunpack.c.h.b16 %v291
    %v457 = vunpack.c.l.b16 %v292
    %v458 = vunpack.c.h.b16 %v292
    %v459 = vunpack.c.l.b16 %v293
    %v460 = vunpack.c.h.b16 %v293
    %v461 = vunpack.c.l.b16 %v294
    %v462 = vunpack.c.h.b16 %v294
    %v463 = vunpack.c.l.b16 %v295
    %v464 = vunpack.c.h.b16 %v295
    %v465 = vunpack.c.l.b16 %v296
    %v466 = vunpack.c.h.b16 %v296
    %v467 = vunpack.c.l.b16 %v297
    %v468 = vunpack.c.h.b16 %v297
    %v469 = vunpack.c.l.b16 %v298
    %v470 = vunpack.c.h.b16 %v298
    %v471 = vunpack.c.l.b16 %v299
    %v472 = vunpack.c.h.b16 %v299
    %v473 = vunpack.c.l.b16 %v300
    %v474 = vunpack.c.h.b16 %v300
    %v475 = vunpack.c.l.b16 %v301
    %v476 = vunpack.c.h.b16 %v301
    %v477 = vunpack.c.l.b16 %v302
    %v478 = vunpack.c.h.b16 %v302
    %v479 = vunpack.c.l.b16 %v303
    %v480 = vunpack.c.h.b16 %v303
    %v481 = vunpack.c.l.b16 %v304
    %v482 = vunpack.c.h.b16 %v304
    %v483 = vunpack.c.l.b16 %v305
    %v484 = vunpack.c.h.b16 %v305
    %v485 = vunpack.c.l.b16 %v306
    %v486 = vunpack.c.h.b16 %v306
    %v487 = vunpack.c.l.b16 %v307
    %v488 = vunpack.c.h.b16 %v307
    %v489 = vunpack.c.l.b16 %v308
    %v490 = vunpack.c.h.b16 %v308
    %v491 = vunpack.c.l.b16 %v309
    %v492 = vunpack.c.h.b16 %v309
    %v493 = vunpack.c.l.b16 %v310
    %v494 = vunpack.c.h.b16 %v310
    %v495 = vunpack.c.l.b16 %v311
    %v496 = vunpack.c.h.b16 %v311
    %v497 = vunpack.c.l.b16 %v312
    %v498 = vunpack.c.h.b16 %v312
    %v499 = vunpack.c.l.b16 %v313
    %v500 = vunpack.c.h.b16 %v313
    %v501 = vunpack.c.l.b16 %v314
    %v502 = vunpack.c.h.b16 %v314
    %v503 = vunpack.c.l.b16 %v315
    %v504 = vunpack.c.h.b16 %v315
    %v505 = vunpack.c.l.b16 %v316
    %v506 = vunpack.c.h.b16 %v316
    %v507 = vunpack.c.l.b16 %v317
    %v508 = vunpack.c.h.b16 %v317
    %v509 = vunpack.c.l.b16 %v318
    %v510 = vunpack.c.h.b16 %v318
    %v511 = vpack.c.b16 %v387, %v383
    %v512 = vpack.c.b16 %v388, %v384
    %v513 = vpack.c.b16 %v389, %v385
    %v514 = vpack.c.b16 %v390, %v386
    %v515 = vpack.c.b16 %v395, %v391
    %v516 = vpack.c.b16 %v396, %v392
    %v517 = vpack.c.b16 %v397, %v393
    %v518 = vpack.c.b16 %v398, %v394
    %v519 = vpack.c.b16 %v403, %v399
    %v520 = vpack.c.b16 %v404, %v400
    %v521 = vpack.c.b16 %v405, %v401
    %v522 = vpack.c.b16 %v406, %v402
    %v523 = vpack.c.b16 %v411, %v407
    %v524 = vpack.c.b16 %v412, %v408
    %v525 = vpack.c.b16 %v413, %v409
    %v526 = vpack.c.b16 %v414, %v410
    %v527 = vpack.c.b16 %v419, %v415
    %v528 = vpack.c.b16 %v420, %v416
    %v529 = vpack.c.b16 %v421, %v417
    %v530 = vpack.c.b16 %v422, %v418
    %v531 = vpack.c.b16 %v427, %v423
    %v532 = vpack.c.b16 %v428, %v424
    %v533 = vpack.c.b16 %v429, %v425
    %v534 = vpack.c.b16 %v430, %v426
    %v535 = vpack.c.b16 %v435, %v431
    %v536 = vpack.c.b16 %v436, %v432
    %v537 = vpack.c.b16 %v437, %v433
    %v538 = vpack.c.b16 %v438, %v434
    %v539 = vpack.c.b16 %v443, %v439
    %v540 = vpack.c.b16 %v444, %v440
    %v541 = vpack.c.b16 %v445, %v441
    %v542 = vpack.c.b16 %v446, %v442
    %v543 = vpack.c.b16 %v451, %v447
    %v544 = vpack.c.b16 %v452, %v448
    %v545 = vpack.c.b16 %v453, %v449
    %v546 = vpack.c.b16 %v454, %v450
    %v547 = vpack.c.b16 %v459, %v455
    %v548 = vpack.c.b16 %v460, %v456
    %v549 = vpack.c.b16 %v461, %v457
    %v550 = vpack.c.b16 %v462, %v458
    %v551 = vpack.c.b16 %v467, %v463
    %v552 = vpack.c.b16 %v468, %v464
    %v553 = vpack.c.b16 %v469, %v465
    %v554 = vpack.c.b16 %v470, %v466
    %v555 = vpack.c.b16 %v475, %v471
    %v556 = vpack.c.b16 %v476, %v472
    %v557 = vpack.c.b16 %v477, %v473
    %v558 = vpack.c.b16 %v478, %v474
    %v559 = vpack.c.b16 %v483, %v479
    %v560 = vpack.c.b16 %v484, %v480
    %v561 = vpack.c.b16 %v485, %v481
    %v562 = vpack.c.b16 %v486, %v482
    %v563 = vpack.c.b16 %v491, %v487
    %v564 = vpack.c.b16 %v492, %v488
    %v565 = vpack.c.b16 %v493, %v489
    %v566 = vpack.c.b16 %v494, %v490
    %v567 = vpack.c.b16 %v499, %v495
    %v568 = vpack.c.b16 %v500, %v496
    %v569 = vpack.c.b16 %v501, %v497
    %v570 = vpack.c.b16 %v502, %v498
    %v571 = vpack.c.b16 %v507, %v503
    %v572 = vpack.c.b16 %v508, %v504
    %v573 = vpack.c.b16 %v509, %v505
    %v574 = vpack.c.b16 %v510, %v506
    %639 = vmatpush.bf16.msra.mxu0 %v539
    %640 = vmatpush.bf16.msra.mxu0 %v535
    %641 = vmatpush.bf16.msra.mxu0 %v531
    %642 = vmatpush.bf16.msra.mxu0 %v527
    %643 = vmatpush.bf16.msra.mxu0 %v523
    %644 = vmatpush.bf16.msra.mxu0 %v519
    %645 = vmatpush.bf16.msra.mxu0 %v515
    %646 = vmatpush.bf16.msra.mxu0 %v511
    %647 = vmatmul.bf16.gmra.mxu0 %v189
    %v648 = vpop.f32.mrf.mxu0
    %v649 = vadd.f32 0.0, %v648
    %v650 = vpop.f32.mrf.mxu0
    %651 = vdwg.mxu0
    %652 = vmatpush.bf16.msra.mxu0 %v571
    %653 = vmatpush.bf16.msra.mxu0 %v567
    %654 = vmatpush.bf16.msra.mxu0 %v563
    %655 = vmatpush.bf16.msra.mxu0 %v559
    %656 = vmatpush.bf16.msra.mxu0 %v555
    %657 = vmatpush.bf16.msra.mxu0 %v551
    %658 = vmatpush.bf16.msra.mxu0 %v547
    %659 = vmatpush.bf16.msra.mxu0 %v543
    %660 = vmatmul.bf16.gmra.mxu0 %v190
    %v661 = vpop.f32.mrf.mxu0
    %v662 = vadd.f32 %v649, %v661
    %v663 = vpop.f32.mrf.mxu0
    %664 = vdwg.mxu0
    %665 = vmatpush.bf16.msra.mxu0 %v540
    %666 = vmatpush.bf16.msra.mxu0 %v536
    %667 = vmatpush.bf16.msra.mxu0 %v532
    %668 = vmatpush.bf16.msra.mxu0 %v528
    %669 = vmatpush.bf16.msra.mxu0 %v524
    %670 = vmatpush.bf16.msra.mxu0 %v520
    %671 = vmatpush.bf16.msra.mxu0 %v516
    %672 = vmatpush.bf16.msra.mxu0 %v512
    %673 = vmatmul.bf16.gmra.mxu0 %v189
    %v674 = vpop.f32.mrf.mxu0
    %v675 = vadd.f32 0.0, %v674
    %v676 = vpop.f32.mrf.mxu0
    %677 = vdwg.mxu0
    %678 = vmatpush.bf16.msra.mxu0 %v572
    %679 = vmatpush.bf16.msra.mxu0 %v568
    %680 = vmatpush.bf16.msra.mxu0 %v564
    %681 = vmatpush.bf16.msra.mxu0 %v560
    %682 = vmatpush.bf16.msra.mxu0 %v556
    %683 = vmatpush.bf16.msra.mxu0 %v552
    %684 = vmatpush.bf16.msra.mxu0 %v548
    %685 = vmatpush.bf16.msra.mxu0 %v544
    %686 = vmatmul.bf16.gmra.mxu0 %v190
    %v687 = vpop.f32.mrf.mxu0
    %v688 = vadd.f32 %v675, %v687
    %v689 = vpop.f32.mrf.mxu0
    %690 = vdwg.mxu0
    %691 = vmatpush.bf16.msra.mxu0 %v541
    %692 = vmatpush.bf16.msra.mxu0 %v537
    %693 = vmatpush.bf16.msra.mxu0 %v533
    %694 = vmatpush.bf16.msra.mxu0 %v529
    %695 = vmatpush.bf16.msra.mxu0 %v525
    %696 = vmatpush.bf16.msra.mxu0 %v521
    %697 = vmatpush.bf16.msra.mxu0 %v517
    %698 = vmatpush.bf16.msra.mxu0 %v513
    %699 = vmatmul.bf16.gmra.mxu0 %v189
    %v700 = vpop.f32.mrf.mxu0
    %v701 = vadd.f32 0.0, %v700
    %v702 = vpop.f32.mrf.mxu0
    %703 = vdwg.mxu0
    %704 = vmatpush.bf16.msra.mxu0 %v573
    %705 = vmatpush.bf16.msra.mxu0 %v569
    %706 = vmatpush.bf16.msra.mxu0 %v565
    %707 = vmatpush.bf16.msra.mxu0 %v561
    %708 = vmatpush.bf16.msra.mxu0 %v557
    %709 = vmatpush.bf16.msra.mxu0 %v553
    %710 = vmatpush.bf16.msra.mxu0 %v549
    %711 = vmatpush.bf16.msra.mxu0 %v545
    %712 = vmatmul.bf16.gmra.mxu0 %v190
    %v713 = vpop.f32.mrf.mxu0
    %v714 = vadd.f32 %v701, %v713
    %v715 = vpop.f32.mrf.mxu0
    %716 = vdwg.mxu0
    %717 = vmatpush.bf16.msra.mxu0 %v542
    %718 = vmatpush.bf16.msra.mxu0 %v538
    %719 = vmatpush.bf16.msra.mxu0 %v534
    %720 = vmatpush.bf16.msra.mxu0 %v530
    %721 = vmatpush.bf16.msra.mxu0 %v526
    %722 = vmatpush.bf16.msra.mxu0 %v522
    %723 = vmatpush.bf16.msra.mxu0 %v518
    %724 = vmatpush.bf16.msra.mxu0 %v514
    %725 = vmatmul.bf16.gmra.mxu0 %v189
    %v726 = vpop.f32.mrf.mxu0
    %v727 = vadd.f32 0.0, %v726
    %v728 = vpop.f32.mrf.mxu0
    %729 = vdwg.mxu0
    %730 = vmatpush.bf16.msra.mxu0 %v574
    %731 = vmatpush.bf16.msra.mxu0 %v570
    %732 = vmatpush.bf16.msra.mxu0 %v566
    %733 = vmatpush.bf16.msra.mxu0 %v562
    %734 = vmatpush.bf16.msra.mxu0 %v558
    %735 = vmatpush.bf16.msra.mxu0 %v554
    %736 = vmatpush.bf16.msra.mxu0 %v550
    %737 = vmatpush.bf16.msra.mxu0 %v546
    %738 = vmatmul.bf16.gmra.mxu0 %v190
    %v739 = vpop.f32.mrf.mxu0
    %v740 = vadd.f32 %v727, %v739
    %v741 = vpop.f32.mrf.mxu0
    %742 = vdwg.mxu0
    %v807 = vunpack.c.l.b16 %v191
    %v808 = vunpack.c.h.b16 %v191
    %v809 = vunpack.c.l.b16 %v192
    %v810 = vunpack.c.h.b16 %v192
    %v811 = vunpack.c.l.b16 %v193
    %v812 = vunpack.c.h.b16 %v193
    %v813 = vunpack.c.l.b16 %v194
    %v814 = vunpack.c.h.b16 %v194
    %v815 = vunpack.c.l.b16 %v195
    %v816 = vunpack.c.h.b16 %v195
    %v817 = vunpack.c.l.b16 %v196
    %v818 = vunpack.c.h.b16 %v196
    %v819 = vunpack.c.l.b16 %v197
    %v820 = vunpack.c.h.b16 %v197
    %v821 = vunpack.c.l.b16 %v198
    %v822 = vunpack.c.h.b16 %v198
    %v823 = vunpack.c.l.b16 %v199
    %v824 = vunpack.c.h.b16 %v199
    %v825 = vunpack.c.l.b16 %v200
    %v826 = vunpack.c.h.b16 %v200
    %v827 = vunpack.c.l.b16 %v201
    %v828 = vunpack.c.h.b16 %v201
    %v829 = vunpack.c.l.b16 %v202
    %v830 = vunpack.c.h.b16 %v202
    %v831 = vunpack.c.l.b16 %v203
    %v832 = vunpack.c.h.b16 %v203
    %v833 = vunpack.c.l.b16 %v204
    %v834 = vunpack.c.h.b16 %v204
    %v835 = vunpack.c.l.b16 %v205
    %v836 = vunpack.c.h.b16 %v205
    %v837 = vunpack.c.l.b16 %v206
    %v838 = vunpack.c.h.b16 %v206
    %v839 = vunpack.c.l.b16 %v207
    %v840 = vunpack.c.h.b16 %v207
    %v841 = vunpack.c.l.b16 %v208
    %v842 = vunpack.c.h.b16 %v208
    %v843 = vunpack.c.l.b16 %v209
    %v844 = vunpack.c.h.b16 %v209
    %v845 = vunpack.c.l.b16 %v210
    %v846 = vunpack.c.h.b16 %v210
    %v847 = vunpack.c.l.b16 %v211
    %v848 = vunpack.c.h.b16 %v211
    %v849 = vunpack.c.l.b16 %v212
    %v850 = vunpack.c.h.b16 %v212
    %v851 = vunpack.c.l.b16 %v213
    %v852 = vunpack.c.h.b16 %v213
    %v853 = vunpack.c.l.b16 %v214
    %v854 = vunpack.c.h.b16 %v214
    %v855 = vunpack.c.l.b16 %v215
    %v856 = vunpack.c.h.b16 %v215
    %v857 = vunpack.c.l.b16 %v216
    %v858 = vunpack.c.h.b16 %v216
    %v859 = vunpack.c.l.b16 %v217
    %v860 = vunpack.c.h.b16 %v217
    %v861 = vunpack.c.l.b16 %v218
    %v862 = vunpack.c.h.b16 %v218
    %v863 = vunpack.c.l.b16 %v219
    %v864 = vunpack.c.h.b16 %v219
    %v865 = vunpack.c.l.b16 %v220
    %v866 = vunpack.c.h.b16 %v220
    %v867 = vunpack.c.l.b16 %v221
    %v868 = vunpack.c.h.b16 %v221
    %v869 = vunpack.c.l.b16 %v222
    %v870 = vunpack.c.h.b16 %v222
    %v871 = vunpack.c.l.b16 %v223
    %v872 = vunpack.c.h.b16 %v223
    %v873 = vunpack.c.l.b16 %v224
    %v874 = vunpack.c.h.b16 %v224
    %v875 = vunpack.c.l.b16 %v225
    %v876 = vunpack.c.h.b16 %v225
    %v877 = vunpack.c.l.b16 %v226
    %v878 = vunpack.c.h.b16 %v226
    %v879 = vunpack.c.l.b16 %v227
    %v880 = vunpack.c.h.b16 %v227
    %v881 = vunpack.c.l.b16 %v228
    %v882 = vunpack.c.h.b16 %v228
    %v883 = vunpack.c.l.b16 %v229
    %v884 = vunpack.c.h.b16 %v229
    %v885 = vunpack.c.l.b16 %v230
    %v886 = vunpack.c.h.b16 %v230
    %v887 = vunpack.c.l.b16 %v231
    %v888 = vunpack.c.h.b16 %v231
    %v889 = vunpack.c.l.b16 %v232
    %v890 = vunpack.c.h.b16 %v232
    %v891 = vunpack.c.l.b16 %v233
    %v892 = vunpack.c.h.b16 %v233
    %v893 = vunpack.c.l.b16 %v234
    %v894 = vunpack.c.h.b16 %v234
    %v895 = vunpack.c.l.b16 %v235
    %v896 = vunpack.c.h.b16 %v235
    %v897 = vunpack.c.l.b16 %v236
    %v898 = vunpack.c.h.b16 %v236
    %v899 = vunpack.c.l.b16 %v237
    %v900 = vunpack.c.h.b16 %v237
    %v901 = vunpack.c.l.b16 %v238
    %v902 = vunpack.c.h.b16 %v238
    %v903 = vunpack.c.l.b16 %v239
    %v904 = vunpack.c.h.b16 %v239
    %v905 = vunpack.c.l.b16 %v240
    %v906 = vunpack.c.h.b16 %v240
    %v907 = vunpack.c.l.b16 %v241
    %v908 = vunpack.c.h.b16 %v241
    %v909 = vunpack.c.l.b16 %v242
    %v910 = vunpack.c.h.b16 %v242
    %v911 = vunpack.c.l.b16 %v243
    %v912 = vunpack.c.h.b16 %v243
    %v913 = vunpack.c.l.b16 %v244
    %v914 = vunpack.c.h.b16 %v244
    %v915 = vunpack.c.l.b16 %v245
    %v916 = vunpack.c.h.b16 %v245
    %v917 = vunpack.c.l.b16 %v246
    %v918 = vunpack.c.h.b16 %v246
    %v919 = vunpack.c.l.b16 %v247
    %v920 = vunpack.c.h.b16 %v247
    %v921 = vunpack.c.l.b16 %v248
    %v922 = vunpack.c.h.b16 %v248
    %v923 = vunpack.c.l.b16 %v249
    %v924 = vunpack.c.h.b16 %v249
    %v925 = vunpack.c.l.b16 %v250
    %v926 = vunpack.c.h.b16 %v250
    %v927 = vunpack.c.l.b16 %v251
    %v928 = vunpack.c.h.b16 %v251
    %v929 = vunpack.c.l.b16 %v252
    %v930 = vunpack.c.h.b16 %v252
    %v931 = vunpack.c.l.b16 %v253
    %v932 = vunpack.c.h.b16 %v253
    %v933 = vunpack.c.l.b16 %v254
    %v934 = vunpack.c.h.b16 %v254
    %v935 = vpack.c.b16 %v811, %v807
    %v936 = vpack.c.b16 %v812, %v808
    %v937 = vpack.c.b16 %v813, %v809
    %v938 = vpack.c.b16 %v814, %v810
    %v939 = vpack.c.b16 %v819, %v815
    %v940 = vpack.c.b16 %v820, %v816
    %v941 = vpack.c.b16 %v821, %v817
    %v942 = vpack.c.b16 %v822, %v818
    %v943 = vpack.c.b16 %v827, %v823
    %v944 = vpack.c.b16 %v828, %v824
    %v945 = vpack.c.b16 %v829, %v825
    %v946 = vpack.c.b16 %v830, %v826
    %v947 = vpack.c.b16 %v835, %v831
    %v948 = vpack.c.b16 %v836, %v832
    %v949 = vpack.c.b16 %v837, %v833
    %v950 = vpack.c.b16 %v838, %v834
    %v951 = vpack.c.b16 %v843, %v839
    %v952 = vpack.c.b16 %v844, %v840
    %v953 = vpack.c.b16 %v845, %v841
    %v954 = vpack.c.b16 %v846, %v842
    %v955 = vpack.c.b16 %v851, %v847
    %v956 = vpack.c.b16 %v852, %v848
    %v957 = vpack.c.b16 %v853, %v849
    %v958 = vpack.c.b16 %v854, %v850
    %v959 = vpack.c.b16 %v859, %v855
    %v960 = vpack.c.b16 %v860, %v856
    %v961 = vpack.c.b16 %v861, %v857
    %v962 = vpack.c.b16 %v862, %v858
    %v963 = vpack.c.b16 %v867, %v863
    %v964 = vpack.c.b16 %v868, %v864
    %v965 = vpack.c.b16 %v869, %v865
    %v966 = vpack.c.b16 %v870, %v866
    %v967 = vpack.c.b16 %v875, %v871
    %v968 = vpack.c.b16 %v876, %v872
    %v969 = vpack.c.b16 %v877, %v873
    %v970 = vpack.c.b16 %v878, %v874
    %v971 = vpack.c.b16 %v883, %v879
    %v972 = vpack.c.b16 %v884, %v880
    %v973 = vpack.c.b16 %v885, %v881
    %v974 = vpack.c.b16 %v886, %v882
    %v975 = vpack.c.b16 %v891, %v887
    %v976 = vpack.c.b16 %v892, %v888
    %v977 = vpack.c.b16 %v893, %v889
    %v978 = vpack.c.b16 %v894, %v890
    %v979 = vpack.c.b16 %v899, %v895
    %v980 = vpack.c.b16 %v900, %v896
    %v981 = vpack.c.b16 %v901, %v897
    %v982 = vpack.c.b16 %v902, %v898
    %v983 = vpack.c.b16 %v907, %v903
    %v984 = vpack.c.b16 %v908, %v904
    %v985 = vpack.c.b16 %v909, %v905
    %v986 = vpack.c.b16 %v910, %v906
    %v987 = vpack.c.b16 %v915, %v911
    %v988 = vpack.c.b16 %v916, %v912
    %v989 = vpack.c.b16 %v917, %v913
    %v990 = vpack.c.b16 %v918, %v914
    %v991 = vpack.c.b16 %v923, %v919
    %v992 = vpack.c.b16 %v924, %v920
    %v993 = vpack.c.b16 %v925, %v921
    %v994 = vpack.c.b16 %v926, %v922
    %v995 = vpack.c.b16 %v931, %v927
    %v996 = vpack.c.b16 %v932, %v928
    %v997 = vpack.c.b16 %v933, %v929
    %v998 = vpack.c.b16 %v934, %v930
    %1063 = vmatpush.bf16.msra.mxu0 %v963
    %1064 = vmatpush.bf16.msra.mxu0 %v959
    %1065 = vmatpush.bf16.msra.mxu0 %v955
    %1066 = vmatpush.bf16.msra.mxu0 %v951
    %1067 = vmatpush.bf16.msra.mxu0 %v947
    %1068 = vmatpush.bf16.msra.mxu0 %v943
    %1069 = vmatpush.bf16.msra.mxu0 %v939
    %1070 = vmatpush.bf16.msra.mxu0 %v935
    %1071 = vmatmul.bf16.gmra.mxu0 %v182
    %v1072 = vpop.f32.mrf.mxu0
    %v1073 = vadd.f32 %v662, %v1072
    %v1074 = vpop.f32.mrf.mxu0
    %1075 = vdwg.mxu0
    %1076 = vmatpush.bf16.msra.mxu0 %v995
    %1077 = vmatpush.bf16.msra.mxu0 %v991
    %1078 = vmatpush.bf16.msra.mxu0 %v987
    %1079 = vmatpush.bf16.msra.mxu0 %v983
    %1080 = vmatpush.bf16.msra.mxu0 %v979
    %1081 = vmatpush.bf16.msra.mxu0 %v975
    %1082 = vmatpush.bf16.msra.mxu0 %v971
    %1083 = vmatpush.bf16.msra.mxu0 %v967
    %1084 = vmatmul.bf16.gmra.mxu0 %v183
    %v1085 = vpop.f32.mrf.mxu0
    %v1086 = vadd.f32 %v1073, %v1085
    %v1087 = vpop.f32.mrf.mxu0
    %1088 = vdwg.mxu0
    %1089 = vmatpush.bf16.msra.mxu0 %v964
    %1090 = vmatpush.bf16.msra.mxu0 %v960
    %1091 = vmatpush.bf16.msra.mxu0 %v956
    %1092 = vmatpush.bf16.msra.mxu0 %v952
    %1093 = vmatpush.bf16.msra.mxu0 %v948
    %1094 = vmatpush.bf16.msra.mxu0 %v944
    %1095 = vmatpush.bf16.msra.mxu0 %v940
    %1096 = vmatpush.bf16.msra.mxu0 %v936
    %1097 = vmatmul.bf16.gmra.mxu0 %v182
    %v1098 = vpop.f32.mrf.mxu0
    %v1099 = vadd.f32 %v688, %v1098
    %v1100 = vpop.f32.mrf.mxu0
    %1101 = vdwg.mxu0
    %1102 = vmatpush.bf16.msra.mxu0 %v996
    %1103 = vmatpush.bf16.msra.mxu0 %v992
    %1104 = vmatpush.bf16.msra.mxu0 %v988
    %1105 = vmatpush.bf16.msra.mxu0 %v984
    %1106 = vmatpush.bf16.msra.mxu0 %v980
    %1107 = vmatpush.bf16.msra.mxu0 %v976
    %1108 = vmatpush.bf16.msra.mxu0 %v972
    %1109 = vmatpush.bf16.msra.mxu0 %v968
    %1110 = vmatmul.bf16.gmra.mxu0 %v183
    %v1111 = vpop.f32.mrf.mxu0
    %v1112 = vadd.f32 %v1099, %v1111
    %v1113 = vpop.f32.mrf.mxu0
    %1114 = vdwg.mxu0
    %1115 = vmatpush.bf16.msra.mxu0 %v965
    %1116 = vmatpush.bf16.msra.mxu0 %v961
    %1117 = vmatpush.bf16.msra.mxu0 %v957
    %1118 = vmatpush.bf16.msra.mxu0 %v953
    %1119 = vmatpush.bf16.msra.mxu0 %v949
    %1120 = vmatpush.bf16.msra.mxu0 %v945
    %1121 = vmatpush.bf16.msra.mxu0 %v941
    %1122 = vmatpush.bf16.msra.mxu0 %v937
    %1123 = vmatmul.bf16.gmra.mxu0 %v182
    %v1124 = vpop.f32.mrf.mxu0
    %v1125 = vadd.f32 %v714, %v1124
    %v1126 = vpop.f32.mrf.mxu0
    %1127 = vdwg.mxu0
    %1128 = vmatpush.bf16.msra.mxu0 %v997
    %1129 = vmatpush.bf16.msra.mxu0 %v993
    %1130 = vmatpush.bf16.msra.mxu0 %v989
    %1131 = vmatpush.bf16.msra.mxu0 %v985
    %1132 = vmatpush.bf16.msra.mxu0 %v981
    %1133 = vmatpush.bf16.msra.mxu0 %v977
    %1134 = vmatpush.bf16.msra.mxu0 %v973
    %1135 = vmatpush.bf16.msra.mxu0 %v969
    %1136 = vmatmul.bf16.gmra.mxu0 %v183
    %v1137 = vpop.f32.mrf.mxu0
    %v1138 = vadd.f32 %v1125, %v1137
    %v1139 = vpop.f32.mrf.mxu0
    %1140 = vdwg.mxu0
    %1141 = vmatpush.bf16.msra.mxu0 %v966
    %1142 = vmatpush.bf16.msra.mxu0 %v962
    %1143 = vmatpush.bf16.msra.mxu0 %v958
    %1144 = vmatpush.bf16.msra.mxu0 %v954
    %1145 = vmatpush.bf16.msra.mxu0 %v950
    %1146 = vmatpush.bf16.msra.mxu0 %v946
    %1147 = vmatpush.bf16.msra.mxu0 %v942
    %1148 = vmatpush.bf16.msra.mxu0 %v938
    %1149 = vmatmul.bf16.gmra.mxu0 %v182
    %v1150 = vpop.f32.mrf.mxu0
    %v1151 = vadd.f32 %v740, %v1150
    %v1152 = vpop.f32.mrf.mxu0
    %1153 = vdwg.mxu0
    %1154 = vmatpush.bf16.msra.mxu0 %v998
    %1155 = vmatpush.bf16.msra.mxu0 %v994
    %1156 = vmatpush.bf16.msra.mxu0 %v990
    %1157 = vmatpush.bf16.msra.mxu0 %v986
    %1158 = vmatpush.bf16.msra.mxu0 %v982
    %1159 = vmatpush.bf16.msra.mxu0 %v978
    %1160 = vmatpush.bf16.msra.mxu0 %v974
    %1161 = vmatpush.bf16.msra.mxu0 %v970
    %1162 = vmatmul.bf16.gmra.mxu0 %v183
    %v1163 = vpop.f32.mrf.mxu0
    %v1164 = vadd.f32 %v1151, %v1163
    %v1165 = vpop.f32.mrf.mxu0
    %1166 = vdwg.mxu0
    %v1167 = vld [vmem:[#allocation11] sm:$0xf]
    %v1169 = vperm.slane %v1167, 0
    %v1170 = vperm.slane %v1167, 1
    %v1171 = vperm.slane %v1167, 2
    %v1172 = vperm.slane %v1167, 3
    %v1177 = vadd.f32 %v1086, %v1169
    %v1178 = vadd.f32 %v1112, %v1170
    %v1179 = vadd.f32 %v1138, %v1171
    %v1180 = vadd.f32 %v1164, %v1172
    %v1181 = vxor.u32 %v1177, 2147483648
    %v1182 = vxor.u32 %v1178, 2147483648
    %v1183 = vxor.u32 %v1179, 2147483648
    %v1184 = vxor.u32 %v1180, 2147483648
    %v1185 = vmul.f32 %v1181, 1.442695
    %v1186 = vpow.pop %v1185
    %v1187 = vmul.f32 %v1182, 1.442695
    %v1188 = vpow.pop %v1187
    %v1189 = vmul.f32 %v1183, 1.442695
    %v1190 = vpow.pop %v1189
    %v1191 = vmul.f32 %v1184, 1.442695
    %v1192 = vpow.pop %v1191
    %v1193 = vadd.f32 %v1186, 1.0
    %v1194 = vadd.f32 %v1188, 1.0
    %v1195 = vadd.f32 %v1190, 1.0
    %v1196 = vadd.f32 %v1192, 1.0
    %v1197 = vrcp.pop %v1193
    %v1198 = vmul.f32 %v1193, %v1197
    %v1199 = vsub.f32 1.0, %v1198
    %v1200 = vmul.f32 %v1197, %v1199
    %v1201 = vadd.f32 %v1197, %v1200
    %vm1202 = vweird.f32 %v1193
    %vm1203 = vweird.f32 %v1197
    %vm1204 = vmor %vm1202, %vm1203
    %v1205 = vsel %vm1204, %v1197, %v1201
    %v1206 = vand.u32 2147483647, %v1193
    %vm1207 = vcmp.eq.f32.partialorder %v1206, 8.507059e+37
    %v1208 = vand.u32 %v1193, 2147483648
    %v1209 = vor.u32 1.1754944e-38, %v1208
    %v1210 = vsel %vm1207, %v1209, %v1205
    %v1211 = vmul.f32 1.0, %v1210
    %v1212 = vrcp.pop %v1194
    %v1213 = vmul.f32 %v1194, %v1212
    %v1214 = vsub.f32 1.0, %v1213
    %v1215 = vmul.f32 %v1212, %v1214
    %v1216 = vadd.f32 %v1212, %v1215
    %vm1217 = vweird.f32 %v1194
    %vm1218 = vweird.f32 %v1212
    %vm1219 = vmor %vm1217, %vm1218
    %v1220 = vsel %vm1219, %v1212, %v1216
    %v1221 = vand.u32 2147483647, %v1194
    %vm1222 = vcmp.eq.f32.partialorder %v1221, 8.507059e+37
    %v1223 = vand.u32 %v1194, 2147483648
    %v1224 = vor.u32 1.1754944e-38, %v1223
    %v1225 = vsel %vm1222, %v1224, %v1220
    %v1226 = vmul.f32 1.0, %v1225
    %v1227 = vrcp.pop %v1195
    %v1228 = vmul.f32 %v1195, %v1227
    %v1229 = vsub.f32 1.0, %v1228
    %v1230 = vmul.f32 %v1227, %v1229
    %v1231 = vadd.f32 %v1227, %v1230
    %vm1232 = vweird.f32 %v1195
    %vm1233 = vweird.f32 %v1227
    %vm1234 = vmor %vm1232, %vm1233
    %v1235 = vsel %vm1234, %v1227, %v1231
    %v1236 = vand.u32 2147483647, %v1195
    %vm1237 = vcmp.eq.f32.partialorder %v1236, 8.507059e+37
    %v1238 = vand.u32 %v1195, 2147483648
    %v1239 = vor.u32 1.1754944e-38, %v1238
    %v1240 = vsel %vm1237, %v1239, %v1235
    %v1241 = vmul.f32 1.0, %v1240
    %v1242 = vrcp.pop %v1196
    %v1243 = vmul.f32 %v1196, %v1242
    %v1244 = vsub.f32 1.0, %v1243
    %v1245 = vmul.f32 %v1242, %v1244
    %v1246 = vadd.f32 %v1242, %v1245
    %vm1247 = vweird.f32 %v1196
    %vm1248 = vweird.f32 %v1242
    %vm1249 = vmor %vm1247, %vm1248
    %v1250 = vsel %vm1249, %v1242, %v1246
    %v1251 = vand.u32 2147483647, %v1196
    %vm1252 = vcmp.eq.f32.partialorder %v1251, 8.507059e+37
    %v1253 = vand.u32 %v1196, 2147483648
    %v1254 = vor.u32 1.1754944e-38, %v1253
    %v1255 = vsel %vm1252, %v1254, %v1250
    %v1256 = vmul.f32 1.0, %v1255
    %v1257 = vld [vmem:[#allocation12] sm:$0xff]
    %v1258 = vld [vmem:[#allocation12 + $0x8] sm:$0xff]
    %v1259 = vld [vmem:[#allocation12 + $0x10] sm:$0xff]
    %v1260 = vld [vmem:[#allocation12 + $0x18] sm:$0xff]
    %v1261 = vld [vmem:[#allocation12 + $0x20] sm:$0xff]
    %v1262 = vld [vmem:[#allocation12 + $0x28] sm:$0xff]
    %v1263 = vld [vmem:[#allocation12 + $0x30] sm:$0xff]
    %v1264 = vld [vmem:[#allocation12 + $0x38] sm:$0xff]
    %v1265 = vld [vmem:[#allocation12 + $0x40] sm:$0xff]
    %v1266 = vld [vmem:[#allocation12 + $0x48] sm:$0xff]
    %v1267 = vld [vmem:[#allocation12 + $0x50] sm:$0xff]
    %v1268 = vld [vmem:[#allocation12 + $0x58] sm:$0xff]
    %v1269 = vld [vmem:[#allocation12 + $0x60] sm:$0xff]
    %v1270 = vld [vmem:[#allocation12 + $0x68] sm:$0xff]
    %v1271 = vld [vmem:[#allocation12 + $0x70] sm:$0xff]
    %v1272 = vld [vmem:[#allocation12 + $0x78] sm:$0xff]
    %v1273 = vld [vmem:[#allocation12 + $0x80] sm:$0xff]
    %v1274 = vld [vmem:[#allocation12 + $0x88] sm:$0xff]
    %v1275 = vld [vmem:[#allocation12 + $0x90] sm:$0xff]
    %v1276 = vld [vmem:[#allocation12 + $0x98] sm:$0xff]
    %v1277 = vld [vmem:[#allocation12 + $0xa0] sm:$0xff]
    %v1278 = vld [vmem:[#allocation12 + $0xa8] sm:$0xff]
    %v1279 = vld [vmem:[#allocation12 + $0xb0] sm:$0xff]
    %v1280 = vld [vmem:[#allocation12 + $0xb8] sm:$0xff]
    %v1281 = vld [vmem:[#allocation12 + $0xc0] sm:$0xff]
    %v1282 = vld [vmem:[#allocation12 + $0xc8] sm:$0xff]
    %v1283 = vld [vmem:[#allocation12 + $0xd0] sm:$0xff]
    %v1284 = vld [vmem:[#allocation12 + $0xd8] sm:$0xff]
    %v1285 = vld [vmem:[#allocation12 + $0xe0] sm:$0xff]
    %v1286 = vld [vmem:[#allocation12 + $0xe8] sm:$0xff]
    %v1287 = vld [vmem:[#allocation12 + $0xf0] sm:$0xff]
    %v1288 = vld [vmem:[#allocation12 + $0xf8] sm:$0xff]
    %v1289 = vld [vmem:[%s7] sm:$0x3]
    %v1322 = vunpack.c.l.b16 %v1257
    %v1323 = vunpack.c.h.b16 %v1257
    %v1324 = vunpack.c.l.b16 %v1258
    %v1325 = vunpack.c.h.b16 %v1258
    %v1326 = vunpack.c.l.b16 %v1259
    %v1327 = vunpack.c.h.b16 %v1259
    %v1328 = vunpack.c.l.b16 %v1260
    %v1329 = vunpack.c.h.b16 %v1260
    %v1330 = vunpack.c.l.b16 %v1261
    %v1331 = vunpack.c.h.b16 %v1261
    %v1332 = vunpack.c.l.b16 %v1262
    %v1333 = vunpack.c.h.b16 %v1262
    %v1334 = vunpack.c.l.b16 %v1263
    %v1335 = vunpack.c.h.b16 %v1263
    %v1336 = vunpack.c.l.b16 %v1264
    %v1337 = vunpack.c.h.b16 %v1264
    %v1338 = vunpack.c.l.b16 %v1265
    %v1339 = vunpack.c.h.b16 %v1265
    %v1340 = vunpack.c.l.b16 %v1266
    %v1341 = vunpack.c.h.b16 %v1266
    %v1342 = vunpack.c.l.b16 %v1267
    %v1343 = vunpack.c.h.b16 %v1267
    %v1344 = vunpack.c.l.b16 %v1268
    %v1345 = vunpack.c.h.b16 %v1268
    %v1346 = vunpack.c.l.b16 %v1269
    %v1347 = vunpack.c.h.b16 %v1269
    %v1348 = vunpack.c.l.b16 %v1270
    %v1349 = vunpack.c.h.b16 %v1270
    %v1350 = vunpack.c.l.b16 %v1271
    %v1351 = vunpack.c.h.b16 %v1271
    %v1352 = vunpack.c.l.b16 %v1272
    %v1353 = vunpack.c.h.b16 %v1272
    %v1354 = vunpack.c.l.b16 %v1273
    %v1355 = vunpack.c.h.b16 %v1273
    %v1356 = vunpack.c.l.b16 %v1274
    %v1357 = vunpack.c.h.b16 %v1274
    %v1358 = vunpack.c.l.b16 %v1275
    %v1359 = vunpack.c.h.b16 %v1275
    %v1360 = vunpack.c.l.b16 %v1276
    %v1361 = vunpack.c.h.b16 %v1276
    %v1362 = vunpack.c.l.b16 %v1277
    %v1363 = vunpack.c.h.b16 %v1277
    %v1364 = vunpack.c.l.b16 %v1278
    %v1365 = vunpack.c.h.b16 %v1278
    %v1366 = vunpack.c.l.b16 %v1279
    %v1367 = vunpack.c.h.b16 %v1279
    %v1368 = vunpack.c.l.b16 %v1280
    %v1369 = vunpack.c.h.b16 %v1280
    %v1370 = vunpack.c.l.b16 %v1281
    %v1371 = vunpack.c.h.b16 %v1281
    %v1372 = vunpack.c.l.b16 %v1282
    %v1373 = vunpack.c.h.b16 %v1282
    %v1374 = vunpack.c.l.b16 %v1283
    %v1375 = vunpack.c.h.b16 %v1283
    %v1376 = vunpack.c.l.b16 %v1284
    %v1377 = vunpack.c.h.b16 %v1284
    %v1378 = vunpack.c.l.b16 %v1285
    %v1379 = vunpack.c.h.b16 %v1285
    %v1380 = vunpack.c.l.b16 %v1286
    %v1381 = vunpack.c.h.b16 %v1286
    %v1382 = vunpack.c.l.b16 %v1287
    %v1383 = vunpack.c.h.b16 %v1287
    %v1384 = vunpack.c.l.b16 %v1288
    %v1385 = vunpack.c.h.b16 %v1288
    %v1386 = vpack.c.b16 %v1324, %v1322
    %v1387 = vpack.c.b16 %v1325, %v1323
    %v1388 = vpack.c.b16 %v1328, %v1326
    %v1389 = vpack.c.b16 %v1329, %v1327
    %v1390 = vpack.c.b16 %v1332, %v1330
    %v1391 = vpack.c.b16 %v1333, %v1331
    %v1392 = vpack.c.b16 %v1336, %v1334
    %v1393 = vpack.c.b16 %v1337, %v1335
    %v1394 = vpack.c.b16 %v1340, %v1338
    %v1395 = vpack.c.b16 %v1341, %v1339
    %v1396 = vpack.c.b16 %v1344, %v1342
    %v1397 = vpack.c.b16 %v1345, %v1343
    %v1398 = vpack.c.b16 %v1348, %v1346
    %v1399 = vpack.c.b16 %v1349, %v1347
    %v1400 = vpack.c.b16 %v1352, %v1350
    %v1401 = vpack.c.b16 %v1353, %v1351
    %v1402 = vpack.c.b16 %v1356, %v1354
    %v1403 = vpack.c.b16 %v1357, %v1355
    %v1404 = vpack.c.b16 %v1360, %v1358
    %v1405 = vpack.c.b16 %v1361, %v1359
    %v1406 = vpack.c.b16 %v1364, %v1362
    %v1407 = vpack.c.b16 %v1365, %v1363
    %v1408 = vpack.c.b16 %v1368, %v1366
    %v1409 = vpack.c.b16 %v1369, %v1367
    %v1410 = vpack.c.b16 %v1372, %v1370
    %v1411 = vpack.c.b16 %v1373, %v1371
    %v1412 = vpack.c.b16 %v1376, %v1374
    %v1413 = vpack.c.b16 %v1377, %v1375
    %v1414 = vpack.c.b16 %v1380, %v1378
    %v1415 = vpack.c.b16 %v1381, %v1379
    %v1416 = vpack.c.b16 %v1384, %v1382
    %v1417 = vpack.c.b16 %v1385, %v1383
    %v1451 = vperm.slane %v1289, 0
    %v1452 = vperm.slane %v1289, 1
    %1455 = vmatpush.bf16.msra.mxu0 %v1400
    %1456 = vmatpush.bf16.msra.mxu0 %v1398
    %1457 = vmatpush.bf16.msra.mxu0 %v1396
    %1458 = vmatpush.bf16.msra.mxu0 %v1394
    %1459 = vmatpush.bf16.msra.mxu0 %v1392
    %1460 = vmatpush.bf16.msra.mxu0 %v1390
    %1461 = vmatpush.bf16.msra.mxu0 %v1388
    %1462 = vmatpush.bf16.msra.mxu0 %v1386
    %1463 = vmatmul.bf16.gmra.mxu0 %v182
    %v1464 = vpop.f32.mrf.mxu0
    %v1465 = vadd.f32 %v1451, %v1464
    %v1466 = vpop.f32.mrf.mxu0
    %1467 = vdwg.mxu0
    %1468 = vmatpush.bf16.msra.mxu0 %v1416
    %1469 = vmatpush.bf16.msra.mxu0 %v1414
    %1470 = vmatpush.bf16.msra.mxu0 %v1412
    %1471 = vmatpush.bf16.msra.mxu0 %v1410
    %1472 = vmatpush.bf16.msra.mxu0 %v1408
    %1473 = vmatpush.bf16.msra.mxu0 %v1406
    %1474 = vmatpush.bf16.msra.mxu0 %v1404
    %1475 = vmatpush.bf16.msra.mxu0 %v1402
    %1476 = vmatmul.bf16.gmra.mxu0 %v183
    %v1477 = vpop.f32.mrf.mxu0
    %v1478 = vadd.f32 %v1465, %v1477
    %v1479 = vpop.f32.mrf.mxu0
    %1480 = vdwg.mxu0
    %1481 = vmatpush.bf16.msra.mxu0 %v1401
    %1482 = vmatpush.bf16.msra.mxu0 %v1399
    %1483 = vmatpush.bf16.msra.mxu0 %v1397
    %1484 = vmatpush.bf16.msra.mxu0 %v1395
    %1485 = vmatpush.bf16.msra.mxu0 %v1393
    %1486 = vmatpush.bf16.msra.mxu0 %v1391
    %1487 = vmatpush.bf16.msra.mxu0 %v1389
    %1488 = vmatpush.bf16.msra.mxu0 %v1387
    %1489 = vmatmul.bf16.gmra.mxu0 %v182
    %v1490 = vpop.f32.mrf.mxu0
    %v1491 = vadd.f32 %v1452, %v1490
    %v1492 = vpop.f32.mrf.mxu0
    %1493 = vdwg.mxu0
    %1494 = vmatpush.bf16.msra.mxu0 %v1417
    %1495 = vmatpush.bf16.msra.mxu0 %v1415
    %1496 = vmatpush.bf16.msra.mxu0 %v1413
    %1497 = vmatpush.bf16.msra.mxu0 %v1411
    %1498 = vmatpush.bf16.msra.mxu0 %v1409
    %1499 = vmatpush.bf16.msra.mxu0 %v1407
    %1500 = vmatpush.bf16.msra.mxu0 %v1405
    %1501 = vmatpush.bf16.msra.mxu0 %v1403
    %1502 = vmatmul.bf16.gmra.mxu0 %v183
    %v1503 = vpop.f32.mrf.mxu0
    %v1504 = vadd.f32 %v1491, %v1503
    %v1505 = vpop.f32.mrf.mxu0
    %1506 = vdwg.mxu0
    %v1507 = vld [vmem:[#allocation14] sm:$0xff]
    %v1508 = vld [vmem:[#allocation14 + $0x8] sm:$0xff]
    %v1509 = vld [vmem:[#allocation14 + $0x10] sm:$0xff]
    %v1510 = vld [vmem:[#allocation14 + $0x18] sm:$0xff]
    %v1511 = vld [vmem:[#allocation14 + $0x20] sm:$0xff]
    %v1512 = vld [vmem:[#allocation14 + $0x28] sm:$0xff]
    %v1513 = vld [vmem:[#allocation14 + $0x30] sm:$0xff]
    %v1514 = vld [vmem:[#allocation14 + $0x38] sm:$0xff]
    %v1515 = vld [vmem:[#allocation14 + $0x40] sm:$0xff]
    %v1516 = vld [vmem:[#allocation14 + $0x48] sm:$0xff]
    %v1517 = vld [vmem:[#allocation14 + $0x50] sm:$0xff]
    %v1518 = vld [vmem:[#allocation14 + $0x58] sm:$0xff]
    %v1519 = vld [vmem:[#allocation14 + $0x60] sm:$0xff]
    %v1520 = vld [vmem:[#allocation14 + $0x68] sm:$0xff]
    %v1521 = vld [vmem:[#allocation14 + $0x70] sm:$0xff]
    %v1522 = vld [vmem:[#allocation14 + $0x78] sm:$0xff]
    %v1523 = vld [vmem:[#allocation14 + $0x80] sm:$0xff]
    %v1524 = vld [vmem:[#allocation14 + $0x88] sm:$0xff]
    %v1525 = vld [vmem:[#allocation14 + $0x90] sm:$0xff]
    %v1526 = vld [vmem:[#allocation14 + $0x98] sm:$0xff]
    %v1527 = vld [vmem:[#allocation14 + $0xa0] sm:$0xff]
    %v1528 = vld [vmem:[#allocation14 + $0xa8] sm:$0xff]
    %v1529 = vld [vmem:[#allocation14 + $0xb0] sm:$0xff]
    %v1530 = vld [vmem:[#allocation14 + $0xb8] sm:$0xff]
    %v1531 = vld [vmem:[#allocation14 + $0xc0] sm:$0xff]
    %v1532 = vld [vmem:[#allocation14 + $0xc8] sm:$0xff]
    %v1533 = vld [vmem:[#allocation14 + $0xd0] sm:$0xff]
    %v1534 = vld [vmem:[#allocation14 + $0xd8] sm:$0xff]
    %v1535 = vld [vmem:[#allocation14 + $0xe0] sm:$0xff]
    %v1536 = vld [vmem:[#allocation14 + $0xe8] sm:$0xff]
    %v1537 = vld [vmem:[#allocation14 + $0xf0] sm:$0xff]
    %v1538 = vld [vmem:[#allocation14 + $0xf8] sm:$0xff]
    %v1539 = vld [vmem:[#allocation15] sm:$0x3]
    %v1572 = vunpack.c.l.b16 %v1507
    %v1573 = vunpack.c.h.b16 %v1507
    %v1574 = vunpack.c.l.b16 %v1508
    %v1575 = vunpack.c.h.b16 %v1508
    %v1576 = vunpack.c.l.b16 %v1509
    %v1577 = vunpack.c.h.b16 %v1509
    %v1578 = vunpack.c.l.b16 %v1510
    %v1579 = vunpack.c.h.b16 %v1510
    %v1580 = vunpack.c.l.b16 %v1511
    %v1581 = vunpack.c.h.b16 %v1511
    %v1582 = vunpack.c.l.b16 %v1512
    %v1583 = vunpack.c.h.b16 %v1512
    %v1584 = vunpack.c.l.b16 %v1513
    %v1585 = vunpack.c.h.b16 %v1513
    %v1586 = vunpack.c.l.b16 %v1514
    %v1587 = vunpack.c.h.b16 %v1514
    %v1588 = vunpack.c.l.b16 %v1515
    %v1589 = vunpack.c.h.b16 %v1515
    %v1590 = vunpack.c.l.b16 %v1516
    %v1591 = vunpack.c.h.b16 %v1516
    %v1592 = vunpack.c.l.b16 %v1517
    %v1593 = vunpack.c.h.b16 %v1517
    %v1594 = vunpack.c.l.b16 %v1518
    %v1595 = vunpack.c.h.b16 %v1518
    %v1596 = vunpack.c.l.b16 %v1519
    %v1597 = vunpack.c.h.b16 %v1519
    %v1598 = vunpack.c.l.b16 %v1520
    %v1599 = vunpack.c.h.b16 %v1520
    %v1600 = vunpack.c.l.b16 %v1521
    %v1601 = vunpack.c.h.b16 %v1521
    %v1602 = vunpack.c.l.b16 %v1522
    %v1603 = vunpack.c.h.b16 %v1522
    %v1604 = vunpack.c.l.b16 %v1523
    %v1605 = vunpack.c.h.b16 %v1523
    %v1606 = vunpack.c.l.b16 %v1524
    %v1607 = vunpack.c.h.b16 %v1524
    %v1608 = vunpack.c.l.b16 %v1525
    %v1609 = vunpack.c.h.b16 %v1525
    %v1610 = vunpack.c.l.b16 %v1526
    %v1611 = vunpack.c.h.b16 %v1526
    %v1612 = vunpack.c.l.b16 %v1527
    %v1613 = vunpack.c.h.b16 %v1527
    %v1614 = vunpack.c.l.b16 %v1528
    %v1615 = vunpack.c.h.b16 %v1528
    %v1616 = vunpack.c.l.b16 %v1529
    %v1617 = vunpack.c.h.b16 %v1529
    %v1618 = vunpack.c.l.b16 %v1530
    %v1619 = vunpack.c.h.b16 %v1530
    %v1620 = vunpack.c.l.b16 %v1531
    %v1621 = vunpack.c.h.b16 %v1531
    %v1622 = vunpack.c.l.b16 %v1532
    %v1623 = vunpack.c.h.b16 %v1532
    %v1624 = vunpack.c.l.b16 %v1533
    %v1625 = vunpack.c.h.b16 %v1533
    %v1626 = vunpack.c.l.b16 %v1534
    %v1627 = vunpack.c.h.b16 %v1534
    %v1628 = vunpack.c.l.b16 %v1535
    %v1629 = vunpack.c.h.b16 %v1535
    %v1630 = vunpack.c.l.b16 %v1536
    %v1631 = vunpack.c.h.b16 %v1536
    %v1632 = vunpack.c.l.b16 %v1537
    %v1633 = vunpack.c.h.b16 %v1537
    %v1634 = vunpack.c.l.b16 %v1538
    %v1635 = vunpack.c.h.b16 %v1538
    %v1636 = vpack.c.b16 %v1574, %v1572
    %v1637 = vpack.c.b16 %v1575, %v1573
    %v1638 = vpack.c.b16 %v1578, %v1576
    %v1639 = vpack.c.b16 %v1579, %v1577
    %v1640 = vpack.c.b16 %v1582, %v1580
    %v1641 = vpack.c.b16 %v1583, %v1581
    %v1642 = vpack.c.b16 %v1586, %v1584
    %v1643 = vpack.c.b16 %v1587, %v1585
    %v1644 = vpack.c.b16 %v1590, %v1588
    %v1645 = vpack.c.b16 %v1591, %v1589
    %v1646 = vpack.c.b16 %v1594, %v1592
    %v1647 = vpack.c.b16 %v1595, %v1593
    %v1648 = vpack.c.b16 %v1598, %v1596
    %v1649 = vpack.c.b16 %v1599, %v1597
    %v1650 = vpack.c.b16 %v1602, %v1600
    %v1651 = vpack.c.b16 %v1603, %v1601
    %v1652 = vpack.c.b16 %v1606, %v1604
    %v1653 = vpack.c.b16 %v1607, %v1605
    %v1654 = vpack.c.b16 %v1610, %v1608
    %v1655 = vpack.c.b16 %v1611, %v1609
    %v1656 = vpack.c.b16 %v1614, %v1612
    %v1657 = vpack.c.b16 %v1615, %v1613
    %v1658 = vpack.c.b16 %v1618, %v1616
    %v1659 = vpack.c.b16 %v1619, %v1617
    %v1660 = vpack.c.b16 %v1622, %v1620
    %v1661 = vpack.c.b16 %v1623, %v1621
    %v1662 = vpack.c.b16 %v1626, %v1624
    %v1663 = vpack.c.b16 %v1627, %v1625
    %v1664 = vpack.c.b16 %v1630, %v1628
    %v1665 = vpack.c.b16 %v1631, %v1629
    %v1666 = vpack.c.b16 %v1634, %v1632
    %v1667 = vpack.c.b16 %v1635, %v1633
    %v1701 = vperm.slane %v1539, 0
    %v1702 = vperm.slane %v1539, 1
    %1705 = vmatpush.bf16.msra.mxu0 %v1650
    %1706 = vmatpush.bf16.msra.mxu0 %v1648
    %1707 = vmatpush.bf16.msra.mxu0 %v1646
    %1708 = vmatpush.bf16.msra.mxu0 %v1644
    %1709 = vmatpush.bf16.msra.mxu0 %v1642
    %1710 = vmatpush.bf16.msra.mxu0 %v1640
    %1711 = vmatpush.bf16.msra.mxu0 %v1638
    %1712 = vmatpush.bf16.msra.mxu0 %v1636
    %1713 = vmatmul.bf16.gmra.mxu0 %v189
    %v1714 = vpop.f32.mrf.mxu0
    %v1715 = vadd.f32 %v1701, %v1714
    %v1716 = vpop.f32.mrf.mxu0
    %1717 = vdwg.mxu0
    %1718 = vmatpush.bf16.msra.mxu0 %v1666
    %1719 = vmatpush.bf16.msra.mxu0 %v1664
    %1720 = vmatpush.bf16.msra.mxu0 %v1662
    %1721 = vmatpush.bf16.msra.mxu0 %v1660
    %1722 = vmatpush.bf16.msra.mxu0 %v1658
    %1723 = vmatpush.bf16.msra.mxu0 %v1656
    %1724 = vmatpush.bf16.msra.mxu0 %v1654
    %1725 = vmatpush.bf16.msra.mxu0 %v1652
    %1726 = vmatmul.bf16.gmra.mxu0 %v190
    %v1727 = vpop.f32.mrf.mxu0
    %v1728 = vadd.f32 %v1715, %v1727
    %v1729 = vpop.f32.mrf.mxu0
    %1730 = vdwg.mxu0
    %1731 = vmatpush.bf16.msra.mxu0 %v1651
    %1732 = vmatpush.bf16.msra.mxu0 %v1649
    %1733 = vmatpush.bf16.msra.mxu0 %v1647
    %1734 = vmatpush.bf16.msra.mxu0 %v1645
    %1735 = vmatpush.bf16.msra.mxu0 %v1643
    %1736 = vmatpush.bf16.msra.mxu0 %v1641
    %1737 = vmatpush.bf16.msra.mxu0 %v1639
    %1738 = vmatpush.bf16.msra.mxu0 %v1637
    %1739 = vmatmul.bf16.gmra.mxu0 %v189
    %v1740 = vpop.f32.mrf.mxu0
    %v1741 = vadd.f32 %v1702, %v1740
    %v1742 = vpop.f32.mrf.mxu0
    %1743 = vdwg.mxu0
    %1744 = vmatpush.bf16.msra.mxu0 %v1667
    %1745 = vmatpush.bf16.msra.mxu0 %v1665
    %1746 = vmatpush.bf16.msra.mxu0 %v1663
    %1747 = vmatpush.bf16.msra.mxu0 %v1661
    %1748 = vmatpush.bf16.msra.mxu0 %v1659
    %1749 = vmatpush.bf16.msra.mxu0 %v1657
    %1750 = vmatpush.bf16.msra.mxu0 %v1655
    %1751 = vmatpush.bf16.msra.mxu0 %v1653
    %1752 = vmatmul.bf16.gmra.mxu0 %v190
    %v1753 = vpop.f32.mrf.mxu0
    %v1754 = vadd.f32 %v1741, %v1753
    %v1755 = vpop.f32.mrf.mxu0
    %1756 = vdwg.mxu0
    %v1757 = vmul.f32 %v1211, %v1728
    %v1758 = vmul.f32 %v1226, %v1754
    %v1759 = vadd.f32 %v1478, %v1757
    %v1760 = vadd.f32 %v1504, %v1758
    %v1761 = vtanh.pop %v1759
    %v1762 = vtanh.pop %v1760
    %v1763 = vsub.f32 1.0, %v1241
    %v1764 = vsub.f32 1.0, %v1256
    %v1765 = vmul.f32 %v1763, %v1761
    %v1766 = vmul.f32 %v1764, %v1762
    %v1767 = vmul.f32 %v1241, %v185
    %v1768 = vmul.f32 %v1256, %v186
    %v1769 = vadd.f32 %v1765, %v1767
    %v1770 = vadd.f32 %v1766, %v1768
    %v1773 = vrot.slane %v1770, 7
    %vm1774 = vcmask 1040384
    %v1775 = vsel %vm1774, %v1769, %v1773
    %v1777 = vlaneseq
    %vm1778 = vcmp.ge.s32.totalorder %v1777, 0
    %vm1779 = vcmp.lt.s32.totalorder %v1777, 256
    %vm1780 = vmand %vm1778, %vm1779
    %1781 = vst.msk [vmem:[#allocation2] ss:$8 sm:$0x3] %vm1780, %v1775
    %1782 = vst.msk [vmem:[#allocation2] ss:$8 sm:$0x0] %vm1780, %v1775
    %s1783 = scalar_lea.vmem [#allocation3], 1
    %v1784 = vld [vmem:[%s1783] ss:$8 sm:$0x3]
    %v1785 = vmax.f32 %v1784, 0.0
    %v1787 = vperm.slane %v1785, 0
    %v1788 = vperm.slane %v1785, 1
    %v1791 = vpack.c.bf16 %v1787, %v1787
    %v1792 = vpack.c.bf16 %v1788, %v1788
    %v1793 = vpack.c.bf16 %v1769, %v1769
    %v1794 = vpack.c.bf16 %v1770, %v1770
    %v1795 = vld [vmem:[#allocation8] sm:$0xff]
    %v1796 = vld [vmem:[#allocation8 + $0x8] sm:$0xff]
    %v1797 = vld [vmem:[#allocation8 + $0x10] sm:$0xff]
    %v1798 = vld [vmem:[#allocation8 + $0x18] sm:$0xff]
    %v1799 = vld [vmem:[#allocation8 + $0x20] sm:$0xff]
    %v1800 = vld [vmem:[#allocation8 + $0x28] sm:$0xff]
    %v1801 = vld [vmem:[#allocation8 + $0x30] sm:$0xff]
    %v1802 = vld [vmem:[#allocation8 + $0x38] sm:$0xff]
    %v1803 = vld [vmem:[#allocation8 + $0x40] sm:$0xff]
    %v1804 = vld [vmem:[#allocation8 + $0x48] sm:$0xff]
    %v1805 = vld [vmem:[#allocation8 + $0x50] sm:$0xff]
    %v1806 = vld [vmem:[#allocation8 + $0x58] sm:$0xff]
    %v1807 = vld [vmem:[#allocation8 + $0x60] sm:$0xff]
    %v1808 = vld [vmem:[#allocation8 + $0x68] sm:$0xff]
    %v1809 = vld [vmem:[#allocation8 + $0x70] sm:$0xff]
    %v1810 = vld [vmem:[#allocation8 + $0x78] sm:$0xff]
    %v1811 = vld [vmem:[#allocation8 + $0x80] sm:$0xff]
    %v1812 = vld [vmem:[#allocation8 + $0x88] sm:$0xff]
    %v1813 = vld [vmem:[#allocation8 + $0x90] sm:$0xff]
    %v1814 = vld [vmem:[#allocation8 + $0x98] sm:$0xff]
    %v1815 = vld [vmem:[#allocation8 + $0xa0] sm:$0xff]
    %v1816 = vld [vmem:[#allocation8 + $0xa8] sm:$0xff]
    %v1817 = vld [vmem:[#allocation8 + $0xb0] sm:$0xff]
    %v1818 = vld [vmem:[#allocation8 + $0xb8] sm:$0xff]
    %v1819 = vld [vmem:[#allocation8 + $0xc0] sm:$0xff]
    %v1820 = vld [vmem:[#allocation8 + $0xc8] sm:$0xff]
    %v1821 = vld [vmem:[#allocation8 + $0xd0] sm:$0xff]
    %v1822 = vld [vmem:[#allocation8 + $0xd8] sm:$0xff]
    %v1823 = vld [vmem:[#allocation8 + $0xe0] sm:$0xff]
    %v1824 = vld [vmem:[#allocation8 + $0xe8] sm:$0xff]
    %v1825 = vld [vmem:[#allocation8 + $0xf0] sm:$0xff]
    %v1826 = vld [vmem:[#allocation8 + $0xf8] sm:$0xff]
    %v1827 = vld [vmem:[#allocation8 + $0x100] sm:$0xff]
    %v1828 = vld [vmem:[#allocation8 + $0x108] sm:$0xff]
    %v1829 = vld [vmem:[#allocation8 + $0x110] sm:$0xff]
    %v1830 = vld [vmem:[#allocation8 + $0x118] sm:$0xff]
    %v1831 = vld [vmem:[#allocation8 + $0x120] sm:$0xff]
    %v1832 = vld [vmem:[#allocation8 + $0x128] sm:$0xff]
    %v1833 = vld [vmem:[#allocation8 + $0x130] sm:$0xff]
    %v1834 = vld [vmem:[#allocation8 + $0x138] sm:$0xff]
    %v1835 = vld [vmem:[#allocation8 + $0x140] sm:$0xff]
    %v1836 = vld [vmem:[#allocation8 + $0x148] sm:$0xff]
    %v1837 = vld [vmem:[#allocation8 + $0x150] sm:$0xff]
    %v1838 = vld [vmem:[#allocation8 + $0x158] sm:$0xff]
    %v1839 = vld [vmem:[#allocation8 + $0x160] sm:$0xff]
    %v1840 = vld [vmem:[#allocation8 + $0x168] sm:$0xff]
    %v1841 = vld [vmem:[#allocation8 + $0x170] sm:$0xff]
    %v1842 = vld [vmem:[#allocation8 + $0x178] sm:$0xff]
    %v1843 = vld [vmem:[#allocation8 + $0x180] sm:$0xff]
    %v1844 = vld [vmem:[#allocation8 + $0x188] sm:$0xff]
    %v1845 = vld [vmem:[#allocation8 + $0x190] sm:$0xff]
    %v1846 = vld [vmem:[#allocation8 + $0x198] sm:$0xff]
    %v1847 = vld [vmem:[#allocation8 + $0x1a0] sm:$0xff]
    %v1848 = vld [vmem:[#allocation8 + $0x1a8] sm:$0xff]
    %v1849 = vld [vmem:[#allocation8 + $0x1b0] sm:$0xff]
    %v1850 = vld [vmem:[#allocation8 + $0x1b8] sm:$0xff]
    %v1851 = vld [vmem:[#allocation8 + $0x1c0] sm:$0xff]
    %v1852 = vld [vmem:[#allocation8 + $0x1c8] sm:$0xff]
    %v1853 = vld [vmem:[#allocation8 + $0x1d0] sm:$0xff]
    %v1854 = vld [vmem:[#allocation8 + $0x1d8] sm:$0xff]
    %v1855 = vld [vmem:[#allocation8 + $0x1e0] sm:$0xff]
    %v1856 = vld [vmem:[#allocation8 + $0x1e8] sm:$0xff]
    %v1857 = vld [vmem:[#allocation8 + $0x1f0] sm:$0xff]
    %v1858 = vld [vmem:[#allocation8 + $0x1f8] sm:$0xff]
    %v1859 = vld [vmem:[#allocation9] sm:$0xff]
    %v1860 = vld [vmem:[#allocation9 + $0x8] sm:$0xff]
    %v1861 = vld [vmem:[#allocation9 + $0x10] sm:$0xff]
    %v1862 = vld [vmem:[#allocation9 + $0x18] sm:$0xff]
    %v1863 = vld [vmem:[#allocation9 + $0x20] sm:$0xff]
    %v1864 = vld [vmem:[#allocation9 + $0x28] sm:$0xff]
    %v1865 = vld [vmem:[#allocation9 + $0x30] sm:$0xff]
    %v1866 = vld [vmem:[#allocation9 + $0x38] sm:$0xff]
    %v1867 = vld [vmem:[#allocation9 + $0x40] sm:$0xff]
    %v1868 = vld [vmem:[#allocation9 + $0x48] sm:$0xff]
    %v1869 = vld [vmem:[#allocation9 + $0x50] sm:$0xff]
    %v1870 = vld [vmem:[#allocation9 + $0x58] sm:$0xff]
    %v1871 = vld [vmem:[#allocation9 + $0x60] sm:$0xff]
    %v1872 = vld [vmem:[#allocation9 + $0x68] sm:$0xff]
    %v1873 = vld [vmem:[#allocation9 + $0x70] sm:$0xff]
    %v1874 = vld [vmem:[#allocation9 + $0x78] sm:$0xff]
    %v1875 = vld [vmem:[#allocation9 + $0x80] sm:$0xff]
    %v1876 = vld [vmem:[#allocation9 + $0x88] sm:$0xff]
    %v1877 = vld [vmem:[#allocation9 + $0x90] sm:$0xff]
    %v1878 = vld [vmem:[#allocation9 + $0x98] sm:$0xff]
    %v1879 = vld [vmem:[#allocation9 + $0xa0] sm:$0xff]
    %v1880 = vld [vmem:[#allocation9 + $0xa8] sm:$0xff]
    %v1881 = vld [vmem:[#allocation9 + $0xb0] sm:$0xff]
    %v1882 = vld [vmem:[#allocation9 + $0xb8] sm:$0xff]
    %v1883 = vld [vmem:[#allocation9 + $0xc0] sm:$0xff]
    %v1884 = vld [vmem:[#allocation9 + $0xc8] sm:$0xff]
    %v1885 = vld [vmem:[#allocation9 + $0xd0] sm:$0xff]
    %v1886 = vld [vmem:[#allocation9 + $0xd8] sm:$0xff]
    %v1887 = vld [vmem:[#allocation9 + $0xe0] sm:$0xff]
    %v1888 = vld [vmem:[#allocation9 + $0xe8] sm:$0xff]
    %v1889 = vld [vmem:[#allocation9 + $0xf0] sm:$0xff]
    %v1890 = vld [vmem:[#allocation9 + $0xf8] sm:$0xff]
    %v1891 = vld [vmem:[#allocation9 + $0x100] sm:$0xff]
    %v1892 = vld [vmem:[#allocation9 + $0x108] sm:$0xff]
    %v1893 = vld [vmem:[#allocation9 + $0x110] sm:$0xff]
    %v1894 = vld [vmem:[#allocation9 + $0x118] sm:$0xff]
    %v1895 = vld [vmem:[#allocation9 + $0x120] sm:$0xff]
    %v1896 = vld [vmem:[#allocation9 + $0x128] sm:$0xff]
    %v1897 = vld [vmem:[#allocation9 + $0x130] sm:$0xff]
    %v1898 = vld [vmem:[#allocation9 + $0x138] sm:$0xff]
    %v1899 = vld [vmem:[#allocation9 + $0x140] sm:$0xff]
    %v1900 = vld [vmem:[#allocation9 + $0x148] sm:$0xff]
    %v1901 = vld [vmem:[#allocation9 + $0x150] sm:$0xff]
    %v1902 = vld [vmem:[#allocation9 + $0x158] sm:$0xff]
    %v1903 = vld [vmem:[#allocation9 + $0x160] sm:$0xff]
    %v1904 = vld [vmem:[#allocation9 + $0x168] sm:$0xff]
    %v1905 = vld [vmem:[#allocation9 + $0x170] sm:$0xff]
    %v1906 = vld [vmem:[#allocation9 + $0x178] sm:$0xff]
    %v1907 = vld [vmem:[#allocation9 + $0x180] sm:$0xff]
    %v1908 = vld [vmem:[#allocation9 + $0x188] sm:$0xff]
    %v1909 = vld [vmem:[#allocation9 + $0x190] sm:$0xff]
    %v1910 = vld [vmem:[#allocation9 + $0x198] sm:$0xff]
    %v1911 = vld [vmem:[#allocation9 + $0x1a0] sm:$0xff]
    %v1912 = vld [vmem:[#allocation9 + $0x1a8] sm:$0xff]
    %v1913 = vld [vmem:[#allocation9 + $0x1b0] sm:$0xff]
    %v1914 = vld [vmem:[#allocation9 + $0x1b8] sm:$0xff]
    %v1915 = vld [vmem:[#allocation9 + $0x1c0] sm:$0xff]
    %v1916 = vld [vmem:[#allocation9 + $0x1c8] sm:$0xff]
    %v1917 = vld [vmem:[#allocation9 + $0x1d0] sm:$0xff]
    %v1918 = vld [vmem:[#allocation9 + $0x1d8] sm:$0xff]
    %v1919 = vld [vmem:[#allocation9 + $0x1e0] sm:$0xff]
    %v1920 = vld [vmem:[#allocation9 + $0x1e8] sm:$0xff]
    %v1921 = vld [vmem:[#allocation9 + $0x1f0] sm:$0xff]
    %v1922 = vld [vmem:[#allocation9 + $0x1f8] sm:$0xff]
    %v1987 = vunpack.c.l.b16 %v1859
    %v1988 = vunpack.c.h.b16 %v1859
    %v1989 = vunpack.c.l.b16 %v1860
    %v1990 = vunpack.c.h.b16 %v1860
    %v1991 = vunpack.c.l.b16 %v1861
    %v1992 = vunpack.c.h.b16 %v1861
    %v1993 = vunpack.c.l.b16 %v1862
    %v1994 = vunpack.c.h.b16 %v1862
    %v1995 = vunpack.c.l.b16 %v1863
    %v1996 = vunpack.c.h.b16 %v1863
    %v1997 = vunpack.c.l.b16 %v1864
    %v1998 = vunpack.c.h.b16 %v1864
    %v1999 = vunpack.c.l.b16 %v1865
    %v2000 = vunpack.c.h.b16 %v1865
    %v2001 = vunpack.c.l.b16 %v1866
    %v2002 = vunpack.c.h.b16 %v1866
    %v2003 = vunpack.c.l.b16 %v1867
    %v2004 = vunpack.c.h.b16 %v1867
    %v2005 = vunpack.c.l.b16 %v1868
    %v2006 = vunpack.c.h.b16 %v1868
    %v2007 = vunpack.c.l.b16 %v1869
    %v2008 = vunpack.c.h.b16 %v1869
    %v2009 = vunpack.c.l.b16 %v1870
    %v2010 = vunpack.c.h.b16 %v1870
    %v2011 = vunpack.c.l.b16 %v1871
    %v2012 = vunpack.c.h.b16 %v1871
    %v2013 = vunpack.c.l.b16 %v1872
    %v2014 = vunpack.c.h.b16 %v1872
    %v2015 = vunpack.c.l.b16 %v1873
    %v2016 = vunpack.c.h.b16 %v1873
    %v2017 = vunpack.c.l.b16 %v1874
    %v2018 = vunpack.c.h.b16 %v1874
    %v2019 = vunpack.c.l.b16 %v1875
    %v2020 = vunpack.c.h.b16 %v1875
    %v2021 = vunpack.c.l.b16 %v1876
    %v2022 = vunpack.c.h.b16 %v1876
    %v2023 = vunpack.c.l.b16 %v1877
    %v2024 = vunpack.c.h.b16 %v1877
    %v2025 = vunpack.c.l.b16 %v1878
    %v2026 = vunpack.c.h.b16 %v1878
    %v2027 = vunpack.c.l.b16 %v1879
    %v2028 = vunpack.c.h.b16 %v1879
    %v2029 = vunpack.c.l.b16 %v1880
    %v2030 = vunpack.c.h.b16 %v1880
    %v2031 = vunpack.c.l.b16 %v1881
    %v2032 = vunpack.c.h.b16 %v1881
    %v2033 = vunpack.c.l.b16 %v1882
    %v2034 = vunpack.c.h.b16 %v1882
    %v2035 = vunpack.c.l.b16 %v1883
    %v2036 = vunpack.c.h.b16 %v1883
    %v2037 = vunpack.c.l.b16 %v1884
    %v2038 = vunpack.c.h.b16 %v1884
    %v2039 = vunpack.c.l.b16 %v1885
    %v2040 = vunpack.c.h.b16 %v1885
    %v2041 = vunpack.c.l.b16 %v1886
    %v2042 = vunpack.c.h.b16 %v1886
    %v2043 = vunpack.c.l.b16 %v1887
    %v2044 = vunpack.c.h.b16 %v1887
    %v2045 = vunpack.c.l.b16 %v1888
    %v2046 = vunpack.c.h.b16 %v1888
    %v2047 = vunpack.c.l.b16 %v1889
    %v2048 = vunpack.c.h.b16 %v1889
    %v2049 = vunpack.c.l.b16 %v1890
    %v2050 = vunpack.c.h.b16 %v1890
    %v2051 = vunpack.c.l.b16 %v1891
    %v2052 = vunpack.c.h.b16 %v1891
    %v2053 = vunpack.c.l.b16 %v1892
    %v2054 = vunpack.c.h.b16 %v1892
    %v2055 = vunpack.c.l.b16 %v1893
    %v2056 = vunpack.c.h.b16 %v1893
    %v2057 = vunpack.c.l.b16 %v1894
    %v2058 = vunpack.c.h.b16 %v1894
    %v2059 = vunpack.c.l.b16 %v1895
    %v2060 = vunpack.c.h.b16 %v1895
    %v2061 = vunpack.c.l.b16 %v1896
    %v2062 = vunpack.c.h.b16 %v1896
    %v2063 = vunpack.c.l.b16 %v1897
    %v2064 = vunpack.c.h.b16 %v1897
    %v2065 = vunpack.c.l.b16 %v1898
    %v2066 = vunpack.c.h.b16 %v1898
    %v2067 = vunpack.c.l.b16 %v1899
    %v2068 = vunpack.c.h.b16 %v1899
    %v2069 = vunpack.c.l.b16 %v1900
    %v2070 = vunpack.c.h.b16 %v1900
    %v2071 = vunpack.c.l.b16 %v1901
    %v2072 = vunpack.c.h.b16 %v1901
    %v2073 = vunpack.c.l.b16 %v1902
    %v2074 = vunpack.c.h.b16 %v1902
    %v2075 = vunpack.c.l.b16 %v1903
    %v2076 = vunpack.c.h.b16 %v1903
    %v2077 = vunpack.c.l.b16 %v1904
    %v2078 = vunpack.c.h.b16 %v1904
    %v2079 = vunpack.c.l.b16 %v1905
    %v2080 = vunpack.c.h.b16 %v1905
    %v2081 = vunpack.c.l.b16 %v1906
    %v2082 = vunpack.c.h.b16 %v1906
    %v2083 = vunpack.c.l.b16 %v1907
    %v2084 = vunpack.c.h.b16 %v1907
    %v2085 = vunpack.c.l.b16 %v1908
    %v2086 = vunpack.c.h.b16 %v1908
    %v2087 = vunpack.c.l.b16 %v1909
    %v2088 = vunpack.c.h.b16 %v1909
    %v2089 = vunpack.c.l.b16 %v1910
    %v2090 = vunpack.c.h.b16 %v1910
    %v2091 = vunpack.c.l.b16 %v1911
    %v2092 = vunpack.c.h.b16 %v1911
    %v2093 = vunpack.c.l.b16 %v1912
    %v2094 = vunpack.c.h.b16 %v1912
    %v2095 = vunpack.c.l.b16 %v1913
    %v2096 = vunpack.c.h.b16 %v1913
    %v2097 = vunpack.c.l.b16 %v1914
    %v2098 = vunpack.c.h.b16 %v1914
    %v2099 = vunpack.c.l.b16 %v1915
    %v2100 = vunpack.c.h.b16 %v1915
    %v2101 = vunpack.c.l.b16 %v1916
    %v2102 = vunpack.c.h.b16 %v1916
    %v2103 = vunpack.c.l.b16 %v1917
    %v2104 = vunpack.c.h.b16 %v1917
    %v2105 = vunpack.c.l.b16 %v1918
    %v2106 = vunpack.c.h.b16 %v1918
    %v2107 = vunpack.c.l.b16 %v1919
    %v2108 = vunpack.c.h.b16 %v1919
    %v2109 = vunpack.c.l.b16 %v1920
    %v2110 = vunpack.c.h.b16 %v1920
    %v2111 = vunpack.c.l.b16 %v1921
    %v2112 = vunpack.c.h.b16 %v1921
    %v2113 = vunpack.c.l.b16 %v1922
    %v2114 = vunpack.c.h.b16 %v1922
    %v2115 = vpack.c.b16 %v1991, %v1987
    %v2116 = vpack.c.b16 %v1992, %v1988
    %v2117 = vpack.c.b16 %v1993, %v1989
    %v2118 = vpack.c.b16 %v1994, %v1990
    %v2119 = vpack.c.b16 %v1999, %v1995
    %v2120 = vpack.c.b16 %v2000, %v1996
    %v2121 = vpack.c.b16 %v2001, %v1997
    %v2122 = vpack.c.b16 %v2002, %v1998
    %v2123 = vpack.c.b16 %v2007, %v2003
    %v2124 = vpack.c.b16 %v2008, %v2004
    %v2125 = vpack.c.b16 %v2009, %v2005
    %v2126 = vpack.c.b16 %v2010, %v2006
    %v2127 = vpack.c.b16 %v2015, %v2011
    %v2128 = vpack.c.b16 %v2016, %v2012
    %v2129 = vpack.c.b16 %v2017, %v2013
    %v2130 = vpack.c.b16 %v2018, %v2014
    %v2131 = vpack.c.b16 %v2023, %v2019
    %v2132 = vpack.c.b16 %v2024, %v2020
    %v2133 = vpack.c.b16 %v2025, %v2021
    %v2134 = vpack.c.b16 %v2026, %v2022
    %v2135 = vpack.c.b16 %v2031, %v2027
    %v2136 = vpack.c.b16 %v2032, %v2028
    %v2137 = vpack.c.b16 %v2033, %v2029
    %v2138 = vpack.c.b16 %v2034, %v2030
    %v2139 = vpack.c.b16 %v2039, %v2035
    %v2140 = vpack.c.b16 %v2040, %v2036
    %v2141 = vpack.c.b16 %v2041, %v2037
    %v2142 = vpack.c.b16 %v2042, %v2038
    %v2143 = vpack.c.b16 %v2047, %v2043
    %v2144 = vpack.c.b16 %v2048, %v2044
    %v2145 = vpack.c.b16 %v2049, %v2045
    %v2146 = vpack.c.b16 %v2050, %v2046
    %v2147 = vpack.c.b16 %v2055, %v2051
    %v2148 = vpack.c.b16 %v2056, %v2052
    %v2149 = vpack.c.b16 %v2057, %v2053
    %v2150 = vpack.c.b16 %v2058, %v2054
    %v2151 = vpack.c.b16 %v2063, %v2059
    %v2152 = vpack.c.b16 %v2064, %v2060
    %v2153 = vpack.c.b16 %v2065, %v2061
    %v2154 = vpack.c.b16 %v2066, %v2062
    %v2155 = vpack.c.b16 %v2071, %v2067
    %v2156 = vpack.c.b16 %v2072, %v2068
    %v2157 = vpack.c.b16 %v2073, %v2069
    %v2158 = vpack.c.b16 %v2074, %v2070
    %v2159 = vpack.c.b16 %v2079, %v2075
    %v2160 = vpack.c.b16 %v2080, %v2076
    %v2161 = vpack.c.b16 %v2081, %v2077
    %v2162 = vpack.c.b16 %v2082, %v2078
    %v2163 = vpack.c.b16 %v2087, %v2083
    %v2164 = vpack.c.b16 %v2088, %v2084
    %v2165 = vpack.c.b16 %v2089, %v2085
    %v2166 = vpack.c.b16 %v2090, %v2086
    %v2167 = vpack.c.b16 %v2095, %v2091
    %v2168 = vpack.c.b16 %v2096, %v2092
    %v2169 = vpack.c.b16 %v2097, %v2093
    %v2170 = vpack.c.b16 %v2098, %v2094
    %v2171 = vpack.c.b16 %v2103, %v2099
    %v2172 = vpack.c.b16 %v2104, %v2100
    %v2173 = vpack.c.b16 %v2105, %v2101
    %v2174 = vpack.c.b16 %v2106, %v2102
    %v2175 = vpack.c.b16 %v2111, %v2107
    %v2176 = vpack.c.b16 %v2112, %v2108
    %v2177 = vpack.c.b16 %v2113, %v2109
    %v2178 = vpack.c.b16 %v2114, %v2110
    %2243 = vmatpush.bf16.msra.mxu0 %v2143
    %2244 = vmatpush.bf16.msra.mxu0 %v2139
    %2245 = vmatpush.bf16.msra.mxu0 %v2135
    %2246 = vmatpush.bf16.msra.mxu0 %v2131
    %2247 = vmatpush.bf16.msra.mxu0 %v2127
    %2248 = vmatpush.bf16.msra.mxu0 %v2123
    %2249 = vmatpush.bf16.msra.mxu0 %v2119
    %2250 = vmatpush.bf16.msra.mxu0 %v2115
    %2251 = vmatmul.bf16.gmra.mxu0 %v1793
    %v2252 = vpop.f32.mrf.mxu0
    %v2253 = vadd.f32 0.0, %v2252
    %v2254 = vpop.f32.mrf.mxu0
    %2255 = vdwg.mxu0
    %2256 = vmatpush.bf16.msra.mxu0 %v2175
    %2257 = vmatpush.bf16.msra.mxu0 %v2171
    %2258 = vmatpush.bf16.msra.mxu0 %v2167
    %2259 = vmatpush.bf16.msra.mxu0 %v2163
    %2260 = vmatpush.bf16.msra.mxu0 %v2159
    %2261 = vmatpush.bf16.msra.mxu0 %v2155
    %2262 = vmatpush.bf16.msra.mxu0 %v2151
    %2263 = vmatpush.bf16.msra.mxu0 %v2147
    %2264 = vmatmul.bf16.gmra.mxu0 %v1794
    %v2265 = vpop.f32.mrf.mxu0
    %v2266 = vadd.f32 %v2253, %v2265
    %v2267 = vpop.f32.mrf.mxu0
    %2268 = vdwg.mxu0
    %2269 = vmatpush.bf16.msra.mxu0 %v2144
    %2270 = vmatpush.bf16.msra.mxu0 %v2140
    %2271 = vmatpush.bf16.msra.mxu0 %v2136
    %2272 = vmatpush.bf16.msra.mxu0 %v2132
    %2273 = vmatpush.bf16.msra.mxu0 %v2128
    %2274 = vmatpush.bf16.msra.mxu0 %v2124
    %2275 = vmatpush.bf16.msra.mxu0 %v2120
    %2276 = vmatpush.bf16.msra.mxu0 %v2116
    %2277 = vmatmul.bf16.gmra.mxu0 %v1793
    %v2278 = vpop.f32.mrf.mxu0
    %v2279 = vadd.f32 0.0, %v2278
    %v2280 = vpop.f32.mrf.mxu0
    %2281 = vdwg.mxu0
    %2282 = vmatpush.bf16.msra.mxu0 %v2176
    %2283 = vmatpush.bf16.msra.mxu0 %v2172
    %2284 = vmatpush.bf16.msra.mxu0 %v2168
    %2285 = vmatpush.bf16.msra.mxu0 %v2164
    %2286 = vmatpush.bf16.msra.mxu0 %v2160
    %2287 = vmatpush.bf16.msra.mxu0 %v2156
    %2288 = vmatpush.bf16.msra.mxu0 %v2152
    %2289 = vmatpush.bf16.msra.mxu0 %v2148
    %2290 = vmatmul.bf16.gmra.mxu0 %v1794
    %v2291 = vpop.f32.mrf.mxu0
    %v2292 = vadd.f32 %v2279, %v2291
    %v2293 = vpop.f32.mrf.mxu0
    %2294 = vdwg.mxu0
    %2295 = vmatpush.bf16.msra.mxu0 %v2145
    %2296 = vmatpush.bf16.msra.mxu0 %v2141
    %2297 = vmatpush.bf16.msra.mxu0 %v2137
    %2298 = vmatpush.bf16.msra.mxu0 %v2133
    %2299 = vmatpush.bf16.msra.mxu0 %v2129
    %2300 = vmatpush.bf16.msra.mxu0 %v2125
    %2301 = vmatpush.bf16.msra.mxu0 %v2121
    %2302 = vmatpush.bf16.msra.mxu0 %v2117
    %2303 = vmatmul.bf16.gmra.mxu0 %v1793
    %v2304 = vpop.f32.mrf.mxu0
    %v2305 = vadd.f32 0.0, %v2304
    %v2306 = vpop.f32.mrf.mxu0
    %2307 = vdwg.mxu0
    %2308 = vmatpush.bf16.msra.mxu0 %v2177
    %2309 = vmatpush.bf16.msra.mxu0 %v2173
    %2310 = vmatpush.bf16.msra.mxu0 %v2169
    %2311 = vmatpush.bf16.msra.mxu0 %v2165
    %2312 = vmatpush.bf16.msra.mxu0 %v2161
    %2313 = vmatpush.bf16.msra.mxu0 %v2157
    %2314 = vmatpush.bf16.msra.mxu0 %v2153
    %2315 = vmatpush.bf16.msra.mxu0 %v2149
    %2316 = vmatmul.bf16.gmra.mxu0 %v1794
    %v2317 = vpop.f32.mrf.mxu0
    %v2318 = vadd.f32 %v2305, %v2317
    %v2319 = vpop.f32.mrf.mxu0
    %2320 = vdwg.mxu0
    %2321 = vmatpush.bf16.msra.mxu0 %v2146
    %2322 = vmatpush.bf16.msra.mxu0 %v2142
    %2323 = vmatpush.bf16.msra.mxu0 %v2138
    %2324 = vmatpush.bf16.msra.mxu0 %v2134
    %2325 = vmatpush.bf16.msra.mxu0 %v2130
    %2326 = vmatpush.bf16.msra.mxu0 %v2126
    %2327 = vmatpush.bf16.msra.mxu0 %v2122
    %2328 = vmatpush.bf16.msra.mxu0 %v2118
    %2329 = vmatmul.bf16.gmra.mxu0 %v1793
    %v2330 = vpop.f32.mrf.mxu0
    %v2331 = vadd.f32 0.0, %v2330
    %v2332 = vpop.f32.mrf.mxu0
    %2333 = vdwg.mxu0
    %2334 = vmatpush.bf16.msra.mxu0 %v2178
    %2335 = vmatpush.bf16.msra.mxu0 %v2174
    %2336 = vmatpush.bf16.msra.mxu0 %v2170
    %2337 = vmatpush.bf16.msra.mxu0 %v2166
    %2338 = vmatpush.bf16.msra.mxu0 %v2162
    %2339 = vmatpush.bf16.msra.mxu0 %v2158
    %2340 = vmatpush.bf16.msra.mxu0 %v2154
    %2341 = vmatpush.bf16.msra.mxu0 %v2150
    %2342 = vmatmul.bf16.gmra.mxu0 %v1794
    %v2343 = vpop.f32.mrf.mxu0
    %v2344 = vadd.f32 %v2331, %v2343
    %v2345 = vpop.f32.mrf.mxu0
    %2346 = vdwg.mxu0
    %v2411 = vunpack.c.l.b16 %v1795
    %v2412 = vunpack.c.h.b16 %v1795
    %v2413 = vunpack.c.l.b16 %v1796
    %v2414 = vunpack.c.h.b16 %v1796
    %v2415 = vunpack.c.l.b16 %v1797
    %v2416 = vunpack.c.h.b16 %v1797
    %v2417 = vunpack.c.l.b16 %v1798
    %v2418 = vunpack.c.h.b16 %v1798
    %v2419 = vunpack.c.l.b16 %v1799
    %v2420 = vunpack.c.h.b16 %v1799
    %v2421 = vunpack.c.l.b16 %v1800
    %v2422 = vunpack.c.h.b16 %v1800
    %v2423 = vunpack.c.l.b16 %v1801
    %v2424 = vunpack.c.h.b16 %v1801
    %v2425 = vunpack.c.l.b16 %v1802
    %v2426 = vunpack.c.h.b16 %v1802
    %v2427 = vunpack.c.l.b16 %v1803
    %v2428 = vunpack.c.h.b16 %v1803
    %v2429 = vunpack.c.l.b16 %v1804
    %v2430 = vunpack.c.h.b16 %v1804
    %v2431 = vunpack.c.l.b16 %v1805
    %v2432 = vunpack.c.h.b16 %v1805
    %v2433 = vunpack.c.l.b16 %v1806
    %v2434 = vunpack.c.h.b16 %v1806
    %v2435 = vunpack.c.l.b16 %v1807
    %v2436 = vunpack.c.h.b16 %v1807
    %v2437 = vunpack.c.l.b16 %v1808
    %v2438 = vunpack.c.h.b16 %v1808
    %v2439 = vunpack.c.l.b16 %v1809
    %v2440 = vunpack.c.h.b16 %v1809
    %v2441 = vunpack.c.l.b16 %v1810
    %v2442 = vunpack.c.h.b16 %v1810
    %v2443 = vunpack.c.l.b16 %v1811
    %v2444 = vunpack.c.h.b16 %v1811
    %v2445 = vunpack.c.l.b16 %v1812
    %v2446 = vunpack.c.h.b16 %v1812
    %v2447 = vunpack.c.l.b16 %v1813
    %v2448 = vunpack.c.h.b16 %v1813
    %v2449 = vunpack.c.l.b16 %v1814
    %v2450 = vunpack.c.h.b16 %v1814
    %v2451 = vunpack.c.l.b16 %v1815
    %v2452 = vunpack.c.h.b16 %v1815
    %v2453 = vunpack.c.l.b16 %v1816
    %v2454 = vunpack.c.h.b16 %v1816
    %v2455 = vunpack.c.l.b16 %v1817
    %v2456 = vunpack.c.h.b16 %v1817
    %v2457 = vunpack.c.l.b16 %v1818
    %v2458 = vunpack.c.h.b16 %v1818
    %v2459 = vunpack.c.l.b16 %v1819
    %v2460 = vunpack.c.h.b16 %v1819
    %v2461 = vunpack.c.l.b16 %v1820
    %v2462 = vunpack.c.h.b16 %v1820
    %v2463 = vunpack.c.l.b16 %v1821
    %v2464 = vunpack.c.h.b16 %v1821
    %v2465 = vunpack.c.l.b16 %v1822
    %v2466 = vunpack.c.h.b16 %v1822
    %v2467 = vunpack.c.l.b16 %v1823
    %v2468 = vunpack.c.h.b16 %v1823
    %v2469 = vunpack.c.l.b16 %v1824
    %v2470 = vunpack.c.h.b16 %v1824
    %v2471 = vunpack.c.l.b16 %v1825
    %v2472 = vunpack.c.h.b16 %v1825
    %v2473 = vunpack.c.l.b16 %v1826
    %v2474 = vunpack.c.h.b16 %v1826
    %v2475 = vunpack.c.l.b16 %v1827
    %v2476 = vunpack.c.h.b16 %v1827
    %v2477 = vunpack.c.l.b16 %v1828
    %v2478 = vunpack.c.h.b16 %v1828
    %v2479 = vunpack.c.l.b16 %v1829
    %v2480 = vunpack.c.h.b16 %v1829
    %v2481 = vunpack.c.l.b16 %v1830
    %v2482 = vunpack.c.h.b16 %v1830
    %v2483 = vunpack.c.l.b16 %v1831
    %v2484 = vunpack.c.h.b16 %v1831
    %v2485 = vunpack.c.l.b16 %v1832
    %v2486 = vunpack.c.h.b16 %v1832
    %v2487 = vunpack.c.l.b16 %v1833
    %v2488 = vunpack.c.h.b16 %v1833
    %v2489 = vunpack.c.l.b16 %v1834
    %v2490 = vunpack.c.h.b16 %v1834
    %v2491 = vunpack.c.l.b16 %v1835
    %v2492 = vunpack.c.h.b16 %v1835
    %v2493 = vunpack.c.l.b16 %v1836
    %v2494 = vunpack.c.h.b16 %v1836
    %v2495 = vunpack.c.l.b16 %v1837
    %v2496 = vunpack.c.h.b16 %v1837
    %v2497 = vunpack.c.l.b16 %v1838
    %v2498 = vunpack.c.h.b16 %v1838
    %v2499 = vunpack.c.l.b16 %v1839
    %v2500 = vunpack.c.h.b16 %v1839
    %v2501 = vunpack.c.l.b16 %v1840
    %v2502 = vunpack.c.h.b16 %v1840
    %v2503 = vunpack.c.l.b16 %v1841
    %v2504 = vunpack.c.h.b16 %v1841
    %v2505 = vunpack.c.l.b16 %v1842
    %v2506 = vunpack.c.h.b16 %v1842
    %v2507 = vunpack.c.l.b16 %v1843
    %v2508 = vunpack.c.h.b16 %v1843
    %v2509 = vunpack.c.l.b16 %v1844
    %v2510 = vunpack.c.h.b16 %v1844
    %v2511 = vunpack.c.l.b16 %v1845
    %v2512 = vunpack.c.h.b16 %v1845
    %v2513 = vunpack.c.l.b16 %v1846
    %v2514 = vunpack.c.h.b16 %v1846
    %v2515 = vunpack.c.l.b16 %v1847
    %v2516 = vunpack.c.h.b16 %v1847
    %v2517 = vunpack.c.l.b16 %v1848
    %v2518 = vunpack.c.h.b16 %v1848
    %v2519 = vunpack.c.l.b16 %v1849
    %v2520 = vunpack.c.h.b16 %v1849
    %v2521 = vunpack.c.l.b16 %v1850
    %v2522 = vunpack.c.h.b16 %v1850
    %v2523 = vunpack.c.l.b16 %v1851
    %v2524 = vunpack.c.h.b16 %v1851
    %v2525 = vunpack.c.l.b16 %v1852
    %v2526 = vunpack.c.h.b16 %v1852
    %v2527 = vunpack.c.l.b16 %v1853
    %v2528 = vunpack.c.h.b16 %v1853
    %v2529 = vunpack.c.l.b16 %v1854
    %v2530 = vunpack.c.h.b16 %v1854
    %v2531 = vunpack.c.l.b16 %v1855
    %v2532 = vunpack.c.h.b16 %v1855
    %v2533 = vunpack.c.l.b16 %v1856
    %v2534 = vunpack.c.h.b16 %v1856
    %v2535 = vunpack.c.l.b16 %v1857
    %v2536 = vunpack.c.h.b16 %v1857
    %v2537 = vunpack.c.l.b16 %v1858
    %v2538 = vunpack.c.h.b16 %v1858
    %v2539 = vpack.c.b16 %v2415, %v2411
    %v2540 = vpack.c.b16 %v2416, %v2412
    %v2541 = vpack.c.b16 %v2417, %v2413
    %v2542 = vpack.c.b16 %v2418, %v2414
    %v2543 = vpack.c.b16 %v2423, %v2419
    %v2544 = vpack.c.b16 %v2424, %v2420
    %v2545 = vpack.c.b16 %v2425, %v2421
    %v2546 = vpack.c.b16 %v2426, %v2422
    %v2547 = vpack.c.b16 %v2431, %v2427
    %v2548 = vpack.c.b16 %v2432, %v2428
    %v2549 = vpack.c.b16 %v2433, %v2429
    %v2550 = vpack.c.b16 %v2434, %v2430
    %v2551 = vpack.c.b16 %v2439, %v2435
    %v2552 = vpack.c.b16 %v2440, %v2436
    %v2553 = vpack.c.b16 %v2441, %v2437
    %v2554 = vpack.c.b16 %v2442, %v2438
    %v2555 = vpack.c.b16 %v2447, %v2443
    %v2556 = vpack.c.b16 %v2448, %v2444
    %v2557 = vpack.c.b16 %v2449, %v2445
    %v2558 = vpack.c.b16 %v2450, %v2446
    %v2559 = vpack.c.b16 %v2455, %v2451
    %v2560 = vpack.c.b16 %v2456, %v2452
    %v2561 = vpack.c.b16 %v2457, %v2453
    %v2562 = vpack.c.b16 %v2458, %v2454
    %v2563 = vpack.c.b16 %v2463, %v2459
    %v2564 = vpack.c.b16 %v2464, %v2460
    %v2565 = vpack.c.b16 %v2465, %v2461
    %v2566 = vpack.c.b16 %v2466, %v2462
    %v2567 = vpack.c.b16 %v2471, %v2467
    %v2568 = vpack.c.b16 %v2472, %v2468
    %v2569 = vpack.c.b16 %v2473, %v2469
    %v2570 = vpack.c.b16 %v2474, %v2470
    %v2571 = vpack.c.b16 %v2479, %v2475
    %v2572 = vpack.c.b16 %v2480, %v2476
    %v2573 = vpack.c.b16 %v2481, %v2477
    %v2574 = vpack.c.b16 %v2482, %v2478
    %v2575 = vpack.c.b16 %v2487, %v2483
    %v2576 = vpack.c.b16 %v2488, %v2484
    %v2577 = vpack.c.b16 %v2489, %v2485
    %v2578 = vpack.c.b16 %v2490, %v2486
    %v2579 = vpack.c.b16 %v2495, %v2491
    %v2580 = vpack.c.b16 %v2496, %v2492
    %v2581 = vpack.c.b16 %v2497, %v2493
    %v2582 = vpack.c.b16 %v2498, %v2494
    %v2583 = vpack.c.b16 %v2503, %v2499
    %v2584 = vpack.c.b16 %v2504, %v2500
    %v2585 = vpack.c.b16 %v2505, %v2501
    %v2586 = vpack.c.b16 %v2506, %v2502
    %v2587 = vpack.c.b16 %v2511, %v2507
    %v2588 = vpack.c.b16 %v2512, %v2508
    %v2589 = vpack.c.b16 %v2513, %v2509
    %v2590 = vpack.c.b16 %v2514, %v2510
    %v2591 = vpack.c.b16 %v2519, %v2515
    %v2592 = vpack.c.b16 %v2520, %v2516
    %v2593 = vpack.c.b16 %v2521, %v2517
    %v2594 = vpack.c.b16 %v2522, %v2518
    %v2595 = vpack.c.b16 %v2527, %v2523
    %v2596 = vpack.c.b16 %v2528, %v2524
    %v2597 = vpack.c.b16 %v2529, %v2525
    %v2598 = vpack.c.b16 %v2530, %v2526
    %v2599 = vpack.c.b16 %v2535, %v2531
    %v2600 = vpack.c.b16 %v2536, %v2532
    %v2601 = vpack.c.b16 %v2537, %v2533
    %v2602 = vpack.c.b16 %v2538, %v2534
    %2667 = vmatpush.bf16.msra.mxu0 %v2567
    %2668 = vmatpush.bf16.msra.mxu0 %v2563
    %2669 = vmatpush.bf16.msra.mxu0 %v2559
    %2670 = vmatpush.bf16.msra.mxu0 %v2555
    %2671 = vmatpush.bf16.msra.mxu0 %v2551
    %2672 = vmatpush.bf16.msra.mxu0 %v2547
    %2673 = vmatpush.bf16.msra.mxu0 %v2543
    %2674 = vmatpush.bf16.msra.mxu0 %v2539
    %2675 = vmatmul.bf16.gmra.mxu0 %v1791
    %v2676 = vpop.f32.mrf.mxu0
    %v2677 = vadd.f32 %v2266, %v2676
    %v2678 = vpop.f32.mrf.mxu0
    %2679 = vdwg.mxu0
    %2680 = vmatpush.bf16.msra.mxu0 %v2599
    %2681 = vmatpush.bf16.msra.mxu0 %v2595
    %2682 = vmatpush.bf16.msra.mxu0 %v2591
    %2683 = vmatpush.bf16.msra.mxu0 %v2587
    %2684 = vmatpush.bf16.msra.mxu0 %v2583
    %2685 = vmatpush.bf16.msra.mxu0 %v2579
    %2686 = vmatpush.bf16.msra.mxu0 %v2575
    %2687 = vmatpush.bf16.msra.mxu0 %v2571
    %2688 = vmatmul.bf16.gmra.mxu0 %v1792
    %v2689 = vpop.f32.mrf.mxu0
    %v2690 = vadd.f32 %v2677, %v2689
    %v2691 = vpop.f32.mrf.mxu0
    %2692 = vdwg.mxu0
    %2693 = vmatpush.bf16.msra.mxu0 %v2568
    %2694 = vmatpush.bf16.msra.mxu0 %v2564
    %2695 = vmatpush.bf16.msra.mxu0 %v2560
    %2696 = vmatpush.bf16.msra.mxu0 %v2556
    %2697 = vmatpush.bf16.msra.mxu0 %v2552
    %2698 = vmatpush.bf16.msra.mxu0 %v2548
    %2699 = vmatpush.bf16.msra.mxu0 %v2544
    %2700 = vmatpush.bf16.msra.mxu0 %v2540
    %2701 = vmatmul.bf16.gmra.mxu0 %v1791
    %v2702 = vpop.f32.mrf.mxu0
    %v2703 = vadd.f32 %v2292, %v2702
    %v2704 = vpop.f32.mrf.mxu0
    %2705 = vdwg.mxu0
    %2706 = vmatpush.bf16.msra.mxu0 %v2600
    %2707 = vmatpush.bf16.msra.mxu0 %v2596
    %2708 = vmatpush.bf16.msra.mxu0 %v2592
    %2709 = vmatpush.bf16.msra.mxu0 %v2588
    %2710 = vmatpush.bf16.msra.mxu0 %v2584
    %2711 = vmatpush.bf16.msra.mxu0 %v2580
    %2712 = vmatpush.bf16.msra.mxu0 %v2576
    %2713 = vmatpush.bf16.msra.mxu0 %v2572
    %2714 = vmatmul.bf16.gmra.mxu0 %v1792
    %v2715 = vpop.f32.mrf.mxu0
    %v2716 = vadd.f32 %v2703, %v2715
    %v2717 = vpop.f32.mrf.mxu0
    %2718 = vdwg.mxu0
    %2719 = vmatpush.bf16.msra.mxu0 %v2569
    %2720 = vmatpush.bf16.msra.mxu0 %v2565
    %2721 = vmatpush.bf16.msra.mxu0 %v2561
    %2722 = vmatpush.bf16.msra.mxu0 %v2557
    %2723 = vmatpush.bf16.msra.mxu0 %v2553
    %2724 = vmatpush.bf16.msra.mxu0 %v2549
    %2725 = vmatpush.bf16.msra.mxu0 %v2545
    %2726 = vmatpush.bf16.msra.mxu0 %v2541
    %2727 = vmatmul.bf16.gmra.mxu0 %v1791
    %v2728 = vpop.f32.mrf.mxu0
    %v2729 = vadd.f32 %v2318, %v2728
    %v2730 = vpop.f32.mrf.mxu0
    %2731 = vdwg.mxu0
    %2732 = vmatpush.bf16.msra.mxu0 %v2601
    %2733 = vmatpush.bf16.msra.mxu0 %v2597
    %2734 = vmatpush.bf16.msra.mxu0 %v2593
    %2735 = vmatpush.bf16.msra.mxu0 %v2589
    %2736 = vmatpush.bf16.msra.mxu0 %v2585
    %2737 = vmatpush.bf16.msra.mxu0 %v2581
    %2738 = vmatpush.bf16.msra.mxu0 %v2577
    %2739 = vmatpush.bf16.msra.mxu0 %v2573
    %2740 = vmatmul.bf16.gmra.mxu0 %v1792
    %v2741 = vpop.f32.mrf.mxu0
    %v2742 = vadd.f32 %v2729, %v2741
    %v2743 = vpop.f32.mrf.mxu0
    %2744 = vdwg.mxu0
    %2745 = vmatpush.bf16.msra.mxu0 %v2570
    %2746 = vmatpush.bf16.msra.mxu0 %v2566
    %2747 = vmatpush.bf16.msra.mxu0 %v2562
    %2748 = vmatpush.bf16.msra.mxu0 %v2558
    %2749 = vmatpush.bf16.msra.mxu0 %v2554
    %2750 = vmatpush.bf16.msra.mxu0 %v2550
    %2751 = vmatpush.bf16.msra.mxu0 %v2546
    %2752 = vmatpush.bf16.msra.mxu0 %v2542
    %2753 = vmatmul.bf16.gmra.mxu0 %v1791
    %v2754 = vpop.f32.mrf.mxu0
    %v2755 = vadd.f32 %v2344, %v2754
    %v2756 = vpop.f32.mrf.mxu0
    %2757 = vdwg.mxu0
    %2758 = vmatpush.bf16.msra.mxu0 %v2602
    %2759 = vmatpush.bf16.msra.mxu0 %v2598
    %2760 = vmatpush.bf16.msra.mxu0 %v2594
    %2761 = vmatpush.bf16.msra.mxu0 %v2590
    %2762 = vmatpush.bf16.msra.mxu0 %v2586
    %2763 = vmatpush.bf16.msra.mxu0 %v2582
    %2764 = vmatpush.bf16.msra.mxu0 %v2578
    %2765 = vmatpush.bf16.msra.mxu0 %v2574
    %2766 = vmatmul.bf16.gmra.mxu0 %v1792
    %v2767 = vpop.f32.mrf.mxu0
    %v2768 = vadd.f32 %v2755, %v2767
    %v2769 = vpop.f32.mrf.mxu0
    %2770 = vdwg.mxu0
    %v2771 = vld [vmem:[#allocation11] sm:$0xf]
    %v2773 = vperm.slane %v2771, 0
    %v2774 = vperm.slane %v2771, 1
    %v2775 = vperm.slane %v2771, 2
    %v2776 = vperm.slane %v2771, 3
    %v2781 = vadd.f32 %v2690, %v2773
    %v2782 = vadd.f32 %v2716, %v2774
    %v2783 = vadd.f32 %v2742, %v2775
    %v2784 = vadd.f32 %v2768, %v2776
    %v2785 = vxor.u32 %v2781, 2147483648
    %v2786 = vxor.u32 %v2782, 2147483648
    %v2787 = vxor.u32 %v2783, 2147483648
    %v2788 = vxor.u32 %v2784, 2147483648
    %v2789 = vmul.f32 %v2785, 1.442695
    %v2790 = vpow.pop %v2789
    %v2791 = vmul.f32 %v2786, 1.442695
    %v2792 = vpow.pop %v2791
    %v2793 = vmul.f32 %v2787, 1.442695
    %v2794 = vpow.pop %v2793
    %v2795 = vmul.f32 %v2788, 1.442695
    %v2796 = vpow.pop %v2795
    %v2797 = vadd.f32 %v2790, 1.0
    %v2798 = vadd.f32 %v2792, 1.0
    %v2799 = vadd.f32 %v2794, 1.0
    %v2800 = vadd.f32 %v2796, 1.0
    %v2801 = vrcp.pop %v2797
    %v2802 = vmul.f32 %v2797, %v2801
    %v2803 = vsub.f32 1.0, %v2802
    %v2804 = vmul.f32 %v2801, %v2803
    %v2805 = vadd.f32 %v2801, %v2804
    %vm2806 = vweird.f32 %v2797
    %vm2807 = vweird.f32 %v2801
    %vm2808 = vmor %vm2806, %vm2807
    %v2809 = vsel %vm2808, %v2801, %v2805
    %v2810 = vand.u32 2147483647, %v2797
    %vm2811 = vcmp.eq.f32.partialorder %v2810, 8.507059e+37
    %v2812 = vand.u32 %v2797, 2147483648
    %v2813 = vor.u32 1.1754944e-38, %v2812
    %v2814 = vsel %vm2811, %v2813, %v2809
    %v2815 = vmul.f32 1.0, %v2814
    %v2816 = vrcp.pop %v2798
    %v2817 = vmul.f32 %v2798, %v2816
    %v2818 = vsub.f32 1.0, %v2817
    %v2819 = vmul.f32 %v2816, %v2818
    %v2820 = vadd.f32 %v2816, %v2819
    %vm2821 = vweird.f32 %v2798
    %vm2822 = vweird.f32 %v2816
    %vm2823 = vmor %vm2821, %vm2822
    %v2824 = vsel %vm2823, %v2816, %v2820
    %v2825 = vand.u32 2147483647, %v2798
    %vm2826 = vcmp.eq.f32.partialorder %v2825, 8.507059e+37
    %v2827 = vand.u32 %v2798, 2147483648
    %v2828 = vor.u32 1.1754944e-38, %v2827
    %v2829 = vsel %vm2826, %v2828, %v2824
    %v2830 = vmul.f32 1.0, %v2829
    %v2831 = vrcp.pop %v2799
    %v2832 = vmul.f32 %v2799, %v2831
    %v2833 = vsub.f32 1.0, %v2832
    %v2834 = vmul.f32 %v2831, %v2833
    %v2835 = vadd.f32 %v2831, %v2834
    %vm2836 = vweird.f32 %v2799
    %vm2837 = vweird.f32 %v2831
    %vm2838 = vmor %vm2836, %vm2837
    %v2839 = vsel %vm2838, %v2831, %v2835
    %v2840 = vand.u32 2147483647, %v2799
    %vm2841 = vcmp.eq.f32.partialorder %v2840, 8.507059e+37
    %v2842 = vand.u32 %v2799, 2147483648
    %v2843 = vor.u32 1.1754944e-38, %v2842
    %v2844 = vsel %vm2841, %v2843, %v2839
    %v2845 = vmul.f32 1.0, %v2844
    %v2846 = vrcp.pop %v2800
    %v2847 = vmul.f32 %v2800, %v2846
    %v2848 = vsub.f32 1.0, %v2847
    %v2849 = vmul.f32 %v2846, %v2848
    %v2850 = vadd.f32 %v2846, %v2849
    %vm2851 = vweird.f32 %v2800
    %vm2852 = vweird.f32 %v2846
    %vm2853 = vmor %vm2851, %vm2852
    %v2854 = vsel %vm2853, %v2846, %v2850
    %v2855 = vand.u32 2147483647, %v2800
    %vm2856 = vcmp.eq.f32.partialorder %v2855, 8.507059e+37
    %v2857 = vand.u32 %v2800, 2147483648
    %v2858 = vor.u32 1.1754944e-38, %v2857
    %v2859 = vsel %vm2856, %v2858, %v2854
    %v2860 = vmul.f32 1.0, %v2859
    %v2861 = vld [vmem:[#allocation12] sm:$0xff]
    %v2862 = vld [vmem:[#allocation12 + $0x8] sm:$0xff]
    %v2863 = vld [vmem:[#allocation12 + $0x10] sm:$0xff]
    %v2864 = vld [vmem:[#allocation12 + $0x18] sm:$0xff]
    %v2865 = vld [vmem:[#allocation12 + $0x20] sm:$0xff]
    %v2866 = vld [vmem:[#allocation12 + $0x28] sm:$0xff]
    %v2867 = vld [vmem:[#allocation12 + $0x30] sm:$0xff]
    %v2868 = vld [vmem:[#allocation12 + $0x38] sm:$0xff]
    %v2869 = vld [vmem:[#allocation12 + $0x40] sm:$0xff]
    %v2870 = vld [vmem:[#allocation12 + $0x48] sm:$0xff]
    %v2871 = vld [vmem:[#allocation12 + $0x50] sm:$0xff]
    %v2872 = vld [vmem:[#allocation12 + $0x58] sm:$0xff]
    %v2873 = vld [vmem:[#allocation12 + $0x60] sm:$0xff]
    %v2874 = vld [vmem:[#allocation12 + $0x68] sm:$0xff]
    %v2875 = vld [vmem:[#allocation12 + $0x70] sm:$0xff]
    %v2876 = vld [vmem:[#allocation12 + $0x78] sm:$0xff]
    %v2877 = vld [vmem:[#allocation12 + $0x80] sm:$0xff]
    %v2878 = vld [vmem:[#allocation12 + $0x88] sm:$0xff]
    %v2879 = vld [vmem:[#allocation12 + $0x90] sm:$0xff]
    %v2880 = vld [vmem:[#allocation12 + $0x98] sm:$0xff]
    %v2881 = vld [vmem:[#allocation12 + $0xa0] sm:$0xff]
    %v2882 = vld [vmem:[#allocation12 + $0xa8] sm:$0xff]
    %v2883 = vld [vmem:[#allocation12 + $0xb0] sm:$0xff]
    %v2884 = vld [vmem:[#allocation12 + $0xb8] sm:$0xff]
    %v2885 = vld [vmem:[#allocation12 + $0xc0] sm:$0xff]
    %v2886 = vld [vmem:[#allocation12 + $0xc8] sm:$0xff]
    %v2887 = vld [vmem:[#allocation12 + $0xd0] sm:$0xff]
    %v2888 = vld [vmem:[#allocation12 + $0xd8] sm:$0xff]
    %v2889 = vld [vmem:[#allocation12 + $0xe0] sm:$0xff]
    %v2890 = vld [vmem:[#allocation12 + $0xe8] sm:$0xff]
    %v2891 = vld [vmem:[#allocation12 + $0xf0] sm:$0xff]
    %v2892 = vld [vmem:[#allocation12 + $0xf8] sm:$0xff]
    %v2893 = vld [vmem:[%s7] sm:$0x3]
    %v2926 = vunpack.c.l.b16 %v2861
    %v2927 = vunpack.c.h.b16 %v2861
    %v2928 = vunpack.c.l.b16 %v2862
    %v2929 = vunpack.c.h.b16 %v2862
    %v2930 = vunpack.c.l.b16 %v2863
    %v2931 = vunpack.c.h.b16 %v2863
    %v2932 = vunpack.c.l.b16 %v2864
    %v2933 = vunpack.c.h.b16 %v2864
    %v2934 = vunpack.c.l.b16 %v2865
    %v2935 = vunpack.c.h.b16 %v2865
    %v2936 = vunpack.c.l.b16 %v2866
    %v2937 = vunpack.c.h.b16 %v2866
    %v2938 = vunpack.c.l.b16 %v2867
    %v2939 = vunpack.c.h.b16 %v2867
    %v2940 = vunpack.c.l.b16 %v2868
    %v2941 = vunpack.c.h.b16 %v2868
    %v2942 = vunpack.c.l.b16 %v2869
    %v2943 = vunpack.c.h.b16 %v2869
    %v2944 = vunpack.c.l.b16 %v2870
    %v2945 = vunpack.c.h.b16 %v2870
    %v2946 = vunpack.c.l.b16 %v2871
    %v2947 = vunpack.c.h.b16 %v2871
    %v2948 = vunpack.c.l.b16 %v2872
    %v2949 = vunpack.c.h.b16 %v2872
    %v2950 = vunpack.c.l.b16 %v2873
    %v2951 = vunpack.c.h.b16 %v2873
    %v2952 = vunpack.c.l.b16 %v2874
    %v2953 = vunpack.c.h.b16 %v2874
    %v2954 = vunpack.c.l.b16 %v2875
    %v2955 = vunpack.c.h.b16 %v2875
    %v2956 = vunpack.c.l.b16 %v2876
    %v2957 = vunpack.c.h.b16 %v2876
    %v2958 = vunpack.c.l.b16 %v2877
    %v2959 = vunpack.c.h.b16 %v2877
    %v2960 = vunpack.c.l.b16 %v2878
    %v2961 = vunpack.c.h.b16 %v2878
    %v2962 = vunpack.c.l.b16 %v2879
    %v2963 = vunpack.c.h.b16 %v2879
    %v2964 = vunpack.c.l.b16 %v2880
    %v2965 = vunpack.c.h.b16 %v2880
    %v2966 = vunpack.c.l.b16 %v2881
    %v2967 = vunpack.c.h.b16 %v2881
    %v2968 = vunpack.c.l.b16 %v2882
    %v2969 = vunpack.c.h.b16 %v2882
    %v2970 = vunpack.c.l.b16 %v2883
    %v2971 = vunpack.c.h.b16 %v2883
    %v2972 = vunpack.c.l.b16 %v2884
    %v2973 = vunpack.c.h.b16 %v2884
    %v2974 = vunpack.c.l.b16 %v2885
    %v2975 = vunpack.c.h.b16 %v2885
    %v2976 = vunpack.c.l.b16 %v2886
    %v2977 = vunpack.c.h.b16 %v2886
    %v2978 = vunpack.c.l.b16 %v2887
    %v2979 = vunpack.c.h.b16 %v2887
    %v2980 = vunpack.c.l.b16 %v2888
    %v2981 = vunpack.c.h.b16 %v2888
    %v2982 = vunpack.c.l.b16 %v2889
    %v2983 = vunpack.c.h.b16 %v2889
    %v2984 = vunpack.c.l.b16 %v2890
    %v2985 = vunpack.c.h.b16 %v2890
    %v2986 = vunpack.c.l.b16 %v2891
    %v2987 = vunpack.c.h.b16 %v2891
    %v2988 = vunpack.c.l.b16 %v2892
    %v2989 = vunpack.c.h.b16 %v2892
    %v2990 = vpack.c.b16 %v2928, %v2926
    %v2991 = vpack.c.b16 %v2929, %v2927
    %v2992 = vpack.c.b16 %v2932, %v2930
    %v2993 = vpack.c.b16 %v2933, %v2931
    %v2994 = vpack.c.b16 %v2936, %v2934
    %v2995 = vpack.c.b16 %v2937, %v2935
    %v2996 = vpack.c.b16 %v2940, %v2938
    %v2997 = vpack.c.b16 %v2941, %v2939
    %v2998 = vpack.c.b16 %v2944, %v2942
    %v2999 = vpack.c.b16 %v2945, %v2943
    %v3000 = vpack.c.b16 %v2948, %v2946
    %v3001 = vpack.c.b16 %v2949, %v2947
    %v3002 = vpack.c.b16 %v2952, %v2950
    %v3003 = vpack.c.b16 %v2953, %v2951
    %v3004 = vpack.c.b16 %v2956, %v2954
    %v3005 = vpack.c.b16 %v2957, %v2955
    %v3006 = vpack.c.b16 %v2960, %v2958
    %v3007 = vpack.c.b16 %v2961, %v2959
    %v3008 = vpack.c.b16 %v2964, %v2962
    %v3009 = vpack.c.b16 %v2965, %v2963
    %v3010 = vpack.c.b16 %v2968, %v2966
    %v3011 = vpack.c.b16 %v2969, %v2967
    %v3012 = vpack.c.b16 %v2972, %v2970
    %v3013 = vpack.c.b16 %v2973, %v2971
    %v3014 = vpack.c.b16 %v2976, %v2974
    %v3015 = vpack.c.b16 %v2977, %v2975
    %v3016 = vpack.c.b16 %v2980, %v2978
    %v3017 = vpack.c.b16 %v2981, %v2979
    %v3018 = vpack.c.b16 %v2984, %v2982
    %v3019 = vpack.c.b16 %v2985, %v2983
    %v3020 = vpack.c.b16 %v2988, %v2986
    %v3021 = vpack.c.b16 %v2989, %v2987
    %v3055 = vperm.slane %v2893, 0
    %v3056 = vperm.slane %v2893, 1
    %3059 = vmatpush.bf16.msra.mxu0 %v3004
    %3060 = vmatpush.bf16.msra.mxu0 %v3002
    %3061 = vmatpush.bf16.msra.mxu0 %v3000
    %3062 = vmatpush.bf16.msra.mxu0 %v2998
    %3063 = vmatpush.bf16.msra.mxu0 %v2996
    %3064 = vmatpush.bf16.msra.mxu0 %v2994
    %3065 = vmatpush.bf16.msra.mxu0 %v2992
    %3066 = vmatpush.bf16.msra.mxu0 %v2990
    %3067 = vmatmul.bf16.gmra.mxu0 %v1791
    %v3068 = vpop.f32.mrf.mxu0
    %v3069 = vadd.f32 %v3055, %v3068
    %v3070 = vpop.f32.mrf.mxu0
    %3071 = vdwg.mxu0
    %3072 = vmatpush.bf16.msra.mxu0 %v3020
    %3073 = vmatpush.bf16.msra.mxu0 %v3018
    %3074 = vmatpush.bf16.msra.mxu0 %v3016
    %3075 = vmatpush.bf16.msra.mxu0 %v3014
    %3076 = vmatpush.bf16.msra.mxu0 %v3012
    %3077 = vmatpush.bf16.msra.mxu0 %v3010
    %3078 = vmatpush.bf16.msra.mxu0 %v3008
    %3079 = vmatpush.bf16.msra.mxu0 %v3006
    %3080 = vmatmul.bf16.gmra.mxu0 %v1792
    %v3081 = vpop.f32.mrf.mxu0
    %v3082 = vadd.f32 %v3069, %v3081
    %v3083 = vpop.f32.mrf.mxu0
    %3084 = vdwg.mxu0
    %3085 = vmatpush.bf16.msra.mxu0 %v3005
    %3086 = vmatpush.bf16.msra.mxu0 %v3003
    %3087 = vmatpush.bf16.msra.mxu0 %v3001
    %3088 = vmatpush.bf16.msra.mxu0 %v2999
    %3089 = vmatpush.bf16.msra.mxu0 %v2997
    %3090 = vmatpush.bf16.msra.mxu0 %v2995
    %3091 = vmatpush.bf16.msra.mxu0 %v2993
    %3092 = vmatpush.bf16.msra.mxu0 %v2991
    %3093 = vmatmul.bf16.gmra.mxu0 %v1791
    %v3094 = vpop.f32.mrf.mxu0
    %v3095 = vadd.f32 %v3056, %v3094
    %v3096 = vpop.f32.mrf.mxu0
    %3097 = vdwg.mxu0
    %3098 = vmatpush.bf16.msra.mxu0 %v3021
    %3099 = vmatpush.bf16.msra.mxu0 %v3019
    %3100 = vmatpush.bf16.msra.mxu0 %v3017
    %3101 = vmatpush.bf16.msra.mxu0 %v3015
    %3102 = vmatpush.bf16.msra.mxu0 %v3013
    %3103 = vmatpush.bf16.msra.mxu0 %v3011
    %3104 = vmatpush.bf16.msra.mxu0 %v3009
    %3105 = vmatpush.bf16.msra.mxu0 %v3007
    %3106 = vmatmul.bf16.gmra.mxu0 %v1792
    %v3107 = vpop.f32.mrf.mxu0
    %v3108 = vadd.f32 %v3095, %v3107
    %v3109 = vpop.f32.mrf.mxu0
    %3110 = vdwg.mxu0
    %v3111 = vld [vmem:[#allocation14] sm:$0xff]
    %v3112 = vld [vmem:[#allocation14 + $0x8] sm:$0xff]
    %v3113 = vld [vmem:[#allocation14 + $0x10] sm:$0xff]
    %v3114 = vld [vmem:[#allocation14 + $0x18] sm:$0xff]
    %v3115 = vld [vmem:[#allocation14 + $0x20] sm:$0xff]
    %v3116 = vld [vmem:[#allocation14 + $0x28] sm:$0xff]
    %v3117 = vld [vmem:[#allocation14 + $0x30] sm:$0xff]
    %v3118 = vld [vmem:[#allocation14 + $0x38] sm:$0xff]
    %v3119 = vld [vmem:[#allocation14 + $0x40] sm:$0xff]
    %v3120 = vld [vmem:[#allocation14 + $0x48] sm:$0xff]
    %v3121 = vld [vmem:[#allocation14 + $0x50] sm:$0xff]
    %v3122 = vld [vmem:[#allocation14 + $0x58] sm:$0xff]
    %v3123 = vld [vmem:[#allocation14 + $0x60] sm:$0xff]
    %v3124 = vld [vmem:[#allocation14 + $0x68] sm:$0xff]
    %v3125 = vld [vmem:[#allocation14 + $0x70] sm:$0xff]
    %v3126 = vld [vmem:[#allocation14 + $0x78] sm:$0xff]
    %v3127 = vld [vmem:[#allocation14 + $0x80] sm:$0xff]
    %v3128 = vld [vmem:[#allocation14 + $0x88] sm:$0xff]
    %v3129 = vld [vmem:[#allocation14 + $0x90] sm:$0xff]
    %v3130 = vld [vmem:[#allocation14 + $0x98] sm:$0xff]
    %v3131 = vld [vmem:[#allocation14 + $0xa0] sm:$0xff]
    %v3132 = vld [vmem:[#allocation14 + $0xa8] sm:$0xff]
    %v3133 = vld [vmem:[#allocation14 + $0xb0] sm:$0xff]
    %v3134 = vld [vmem:[#allocation14 + $0xb8] sm:$0xff]
    %v3135 = vld [vmem:[#allocation14 + $0xc0] sm:$0xff]
    %v3136 = vld [vmem:[#allocation14 + $0xc8] sm:$0xff]
    %v3137 = vld [vmem:[#allocation14 + $0xd0] sm:$0xff]
    %v3138 = vld [vmem:[#allocation14 + $0xd8] sm:$0xff]
    %v3139 = vld [vmem:[#allocation14 + $0xe0] sm:$0xff]
    %v3140 = vld [vmem:[#allocation14 + $0xe8] sm:$0xff]
    %v3141 = vld [vmem:[#allocation14 + $0xf0] sm:$0xff]
    %v3142 = vld [vmem:[#allocation14 + $0xf8] sm:$0xff]
    %v3143 = vld [vmem:[#allocation15] sm:$0x3]
    %v3176 = vunpack.c.l.b16 %v3111
    %v3177 = vunpack.c.h.b16 %v3111
    %v3178 = vunpack.c.l.b16 %v3112
    %v3179 = vunpack.c.h.b16 %v3112
    %v3180 = vunpack.c.l.b16 %v3113
    %v3181 = vunpack.c.h.b16 %v3113
    %v3182 = vunpack.c.l.b16 %v3114
    %v3183 = vunpack.c.h.b16 %v3114
    %v3184 = vunpack.c.l.b16 %v3115
    %v3185 = vunpack.c.h.b16 %v3115
    %v3186 = vunpack.c.l.b16 %v3116
    %v3187 = vunpack.c.h.b16 %v3116
    %v3188 = vunpack.c.l.b16 %v3117
    %v3189 = vunpack.c.h.b16 %v3117
    %v3190 = vunpack.c.l.b16 %v3118
    %v3191 = vunpack.c.h.b16 %v3118
    %v3192 = vunpack.c.l.b16 %v3119
    %v3193 = vunpack.c.h.b16 %v3119
    %v3194 = vunpack.c.l.b16 %v3120
    %v3195 = vunpack.c.h.b16 %v3120
    %v3196 = vunpack.c.l.b16 %v3121
    %v3197 = vunpack.c.h.b16 %v3121
    %v3198 = vunpack.c.l.b16 %v3122
    %v3199 = vunpack.c.h.b16 %v3122
    %v3200 = vunpack.c.l.b16 %v3123
    %v3201 = vunpack.c.h.b16 %v3123
    %v3202 = vunpack.c.l.b16 %v3124
    %v3203 = vunpack.c.h.b16 %v3124
    %v3204 = vunpack.c.l.b16 %v3125
    %v3205 = vunpack.c.h.b16 %v3125
    %v3206 = vunpack.c.l.b16 %v3126
    %v3207 = vunpack.c.h.b16 %v3126
    %v3208 = vunpack.c.l.b16 %v3127
    %v3209 = vunpack.c.h.b16 %v3127
    %v3210 = vunpack.c.l.b16 %v3128
    %v3211 = vunpack.c.h.b16 %v3128
    %v3212 = vunpack.c.l.b16 %v3129
    %v3213 = vunpack.c.h.b16 %v3129
    %v3214 = vunpack.c.l.b16 %v3130
    %v3215 = vunpack.c.h.b16 %v3130
    %v3216 = vunpack.c.l.b16 %v3131
    %v3217 = vunpack.c.h.b16 %v3131
    %v3218 = vunpack.c.l.b16 %v3132
    %v3219 = vunpack.c.h.b16 %v3132
    %v3220 = vunpack.c.l.b16 %v3133
    %v3221 = vunpack.c.h.b16 %v3133
    %v3222 = vunpack.c.l.b16 %v3134
    %v3223 = vunpack.c.h.b16 %v3134
    %v3224 = vunpack.c.l.b16 %v3135
    %v3225 = vunpack.c.h.b16 %v3135
    %v3226 = vunpack.c.l.b16 %v3136
    %v3227 = vunpack.c.h.b16 %v3136
    %v3228 = vunpack.c.l.b16 %v3137
    %v3229 = vunpack.c.h.b16 %v3137
    %v3230 = vunpack.c.l.b16 %v3138
    %v3231 = vunpack.c.h.b16 %v3138
    %v3232 = vunpack.c.l.b16 %v3139
    %v3233 = vunpack.c.h.b16 %v3139
    %v3234 = vunpack.c.l.b16 %v3140
    %v3235 = vunpack.c.h.b16 %v3140
    %v3236 = vunpack.c.l.b16 %v3141
    %v3237 = vunpack.c.h.b16 %v3141
    %v3238 = vunpack.c.l.b16 %v3142
    %v3239 = vunpack.c.h.b16 %v3142
    %v3240 = vpack.c.b16 %v3178, %v3176
    %v3241 = vpack.c.b16 %v3179, %v3177
    %v3242 = vpack.c.b16 %v3182, %v3180
    %v3243 = vpack.c.b16 %v3183, %v3181
    %v3244 = vpack.c.b16 %v3186, %v3184
    %v3245 = vpack.c.b16 %v3187, %v3185
    %v3246 = vpack.c.b16 %v3190, %v3188
    %v3247 = vpack.c.b16 %v3191, %v3189
    %v3248 = vpack.c.b16 %v3194, %v3192
    %v3249 = vpack.c.b16 %v3195, %v3193
    %v3250 = vpack.c.b16 %v3198, %v3196
    %v3251 = vpack.c.b16 %v3199, %v3197
    %v3252 = vpack.c.b16 %v3202, %v3200
    %v3253 = vpack.c.b16 %v3203, %v3201
    %v3254 = vpack.c.b16 %v3206, %v3204
    %v3255 = vpack.c.b16 %v3207, %v3205
    %v3256 = vpack.c.b16 %v3210, %v3208
    %v3257 = vpack.c.b16 %v3211, %v3209
    %v3258 = vpack.c.b16 %v3214, %v3212
    %v3259 = vpack.c.b16 %v3215, %v3213
    %v3260 = vpack.c.b16 %v3218, %v3216
    %v3261 = vpack.c.b16 %v3219, %v3217
    %v3262 = vpack.c.b16 %v3222, %v3220
    %v3263 = vpack.c.b16 %v3223, %v3221
    %v3264 = vpack.c.b16 %v3226, %v3224
    %v3265 = vpack.c.b16 %v3227, %v3225
    %v3266 = vpack.c.b16 %v3230, %v3228
    %v3267 = vpack.c.b16 %v3231, %v3229
    %v3268 = vpack.c.b16 %v3234, %v3232
    %v3269 = vpack.c.b16 %v3235, %v3233
    %v3270 = vpack.c.b16 %v3238, %v3236
    %v3271 = vpack.c.b16 %v3239, %v3237
    %v3305 = vperm.slane %v3143, 0
    %v3306 = vperm.slane %v3143, 1
    %3309 = vmatpush.bf16.msra.mxu0 %v3254
    %3310 = vmatpush.bf16.msra.mxu0 %v3252
    %3311 = vmatpush.bf16.msra.mxu0 %v3250
    %3312 = vmatpush.bf16.msra.mxu0 %v3248
    %3313 = vmatpush.bf16.msra.mxu0 %v3246
    %3314 = vmatpush.bf16.msra.mxu0 %v3244
    %3315 = vmatpush.bf16.msra.mxu0 %v3242
    %3316 = vmatpush.bf16.msra.mxu0 %v3240
    %3317 = vmatmul.bf16.gmra.mxu0 %v1793
    %v3318 = vpop.f32.mrf.mxu0
    %v3319 = vadd.f32 %v3305, %v3318
    %v3320 = vpop.f32.mrf.mxu0
    %3321 = vdwg.mxu0
    %3322 = vmatpush.bf16.msra.mxu0 %v3270
    %3323 = vmatpush.bf16.msra.mxu0 %v3268
    %3324 = vmatpush.bf16.msra.mxu0 %v3266
    %3325 = vmatpush.bf16.msra.mxu0 %v3264
    %3326 = vmatpush.bf16.msra.mxu0 %v3262
    %3327 = vmatpush.bf16.msra.mxu0 %v3260
    %3328 = vmatpush.bf16.msra.mxu0 %v3258
    %3329 = vmatpush.bf16.msra.mxu0 %v3256
    %3330 = vmatmul.bf16.gmra.mxu0 %v1794
    %v3331 = vpop.f32.mrf.mxu0
    %v3332 = vadd.f32 %v3319, %v3331
    %v3333 = vpop.f32.mrf.mxu0
    %3334 = vdwg.mxu0
    %3335 = vmatpush.bf16.msra.mxu0 %v3255
    %3336 = vmatpush.bf16.msra.mxu0 %v3253
    %3337 = vmatpush.bf16.msra.mxu0 %v3251
    %3338 = vmatpush.bf16.msra.mxu0 %v3249
    %3339 = vmatpush.bf16.msra.mxu0 %v3247
    %3340 = vmatpush.bf16.msra.mxu0 %v3245
    %3341 = vmatpush.bf16.msra.mxu0 %v3243
    %3342 = vmatpush.bf16.msra.mxu0 %v3241
    %3343 = vmatmul.bf16.gmra.mxu0 %v1793
    %v3344 = vpop.f32.mrf.mxu0
    %v3345 = vadd.f32 %v3306, %v3344
    %v3346 = vpop.f32.mrf.mxu0
    %3347 = vdwg.mxu0
    %3348 = vmatpush.bf16.msra.mxu0 %v3271
    %3349 = vmatpush.bf16.msra.mxu0 %v3269
    %3350 = vmatpush.bf16.msra.mxu0 %v3267
    %3351 = vmatpush.bf16.msra.mxu0 %v3265
    %3352 = vmatpush.bf16.msra.mxu0 %v3263
    %3353 = vmatpush.bf16.msra.mxu0 %v3261
    %3354 = vmatpush.bf16.msra.mxu0 %v3259
    %3355 = vmatpush.bf16.msra.mxu0 %v3257
    %3356 = vmatmul.bf16.gmra.mxu0 %v1794
    %v3357 = vpop.f32.mrf.mxu0
    %v3358 = vadd.f32 %v3345, %v3357
    %v3359 = vpop.f32.mrf.mxu0
    %3360 = vdwg.mxu0
    %v3361 = vmul.f32 %v2815, %v3332
    %v3362 = vmul.f32 %v2830, %v3358
    %v3363 = vadd.f32 %v3082, %v3361
    %v3364 = vadd.f32 %v3108, %v3362
    %v3365 = vtanh.pop %v3363
    %v3366 = vtanh.pop %v3364
    %v3367 = vsub.f32 1.0, %v2845
    %v3368 = vsub.f32 1.0, %v2860
    %v3369 = vmul.f32 %v3367, %v3365
    %v3370 = vmul.f32 %v3368, %v3366
    %v3371 = vmul.f32 %v2845, %v1769
    %v3372 = vmul.f32 %v2860, %v1770
    %v3373 = vadd.f32 %v3369, %v3371
    %v3374 = vadd.f32 %v3370, %v3372
    %v3377 = vrot.slane %v3374, 7
    %v3378 = vsel %vm1774, %v3373, %v3377
    %s3380 = scalar_lea.vmem [#allocation2], 1
    %3381 = vst.msk [vmem:[%s3380] ss:$8 sm:$0x3] %vm1780, %v3378
    %3382 = vst.msk [vmem:[%s3380] ss:$8 sm:$0x0] %vm1780, %v3378
    %s3383 = scalar_lea.vmem [#allocation3], 2
    %v3384 = vld [vmem:[%s3383] ss:$8 sm:$0x3]
    %v3385 = vmax.f32 %v3384, 0.0
    %v3387 = vperm.slane %v3385, 0
    %v3388 = vperm.slane %v3385, 1
    %v3391 = vpack.c.bf16 %v3387, %v3387
    %v3392 = vpack.c.bf16 %v3388, %v3388
    %v3393 = vpack.c.bf16 %v3373, %v3373
    %v3394 = vpack.c.bf16 %v3374, %v3374
    %v3395 = vld [vmem:[#allocation8] sm:$0xff]
    %v3396 = vld [vmem:[#allocation8 + $0x8] sm:$0xff]
    %v3397 = vld [vmem:[#allocation8 + $0x10] sm:$0xff]
    %v3398 = vld [vmem:[#allocation8 + $0x18] sm:$0xff]
    %v3399 = vld [vmem:[#allocation8 + $0x20] sm:$0xff]
    %v3400 = vld [vmem:[#allocation8 + $0x28] sm:$0xff]
    %v3401 = vld [vmem:[#allocation8 + $0x30] sm:$0xff]
    %v3402 = vld [vmem:[#allocation8 + $0x38] sm:$0xff]
    %v3403 = vld [vmem:[#allocation8 + $0x40] sm:$0xff]
    %v3404 = vld [vmem:[#allocation8 + $0x48] sm:$0xff]
    %v3405 = vld [vmem:[#allocation8 + $0x50] sm:$0xff]
    %v3406 = vld [vmem:[#allocation8 + $0x58] sm:$0xff]
    %v3407 = vld [vmem:[#allocation8 + $0x60] sm:$0xff]
    %v3408 = vld [vmem:[#allocation8 + $0x68] sm:$0xff]
    %v3409 = vld [vmem:[#allocation8 + $0x70] sm:$0xff]
    %v3410 = vld [vmem:[#allocation8 + $0x78] sm:$0xff]
    %v3411 = vld [vmem:[#allocation8 + $0x80] sm:$0xff]
    %v3412 = vld [vmem:[#allocation8 + $0x88] sm:$0xff]
    %v3413 = vld [vmem:[#allocation8 + $0x90] sm:$0xff]
    %v3414 = vld [vmem:[#allocation8 + $0x98] sm:$0xff]
    %v3415 = vld [vmem:[#allocation8 + $0xa0] sm:$0xff]
    %v3416 = vld [vmem:[#allocation8 + $0xa8] sm:$0xff]
    %v3417 = vld [vmem:[#allocation8 + $0xb0] sm:$0xff]
    %v3418 = vld [vmem:[#allocation8 + $0xb8] sm:$0xff]
    %v3419 = vld [vmem:[#allocation8 + $0xc0] sm:$0xff]
    %v3420 = vld [vmem:[#allocation8 + $0xc8] sm:$0xff]
    %v3421 = vld [vmem:[#allocation8 + $0xd0] sm:$0xff]
    %v3422 = vld [vmem:[#allocation8 + $0xd8] sm:$0xff]
    %v3423 = vld [vmem:[#allocation8 + $0xe0] sm:$0xff]
    %v3424 = vld [vmem:[#allocation8 + $0xe8] sm:$0xff]
    %v3425 = vld [vmem:[#allocation8 + $0xf0] sm:$0xff]
    %v3426 = vld [vmem:[#allocation8 + $0xf8] sm:$0xff]
    %v3427 = vld [vmem:[#allocation8 + $0x100] sm:$0xff]
    %v3428 = vld [vmem:[#allocation8 + $0x108] sm:$0xff]
    %v3429 = vld [vmem:[#allocation8 + $0x110] sm:$0xff]
    %v3430 = vld [vmem:[#allocation8 + $0x118] sm:$0xff]
    %v3431 = vld [vmem:[#allocation8 + $0x120] sm:$0xff]
    %v3432 = vld [vmem:[#allocation8 + $0x128] sm:$0xff]
    %v3433 = vld [vmem:[#allocation8 + $0x130] sm:$0xff]
    %v3434 = vld [vmem:[#allocation8 + $0x138] sm:$0xff]
    %v3435 = vld [vmem:[#allocation8 + $0x140] sm:$0xff]
    %v3436 = vld [vmem:[#allocation8 + $0x148] sm:$0xff]
    %v3437 = vld [vmem:[#allocation8 + $0x150] sm:$0xff]
    %v3438 = vld [vmem:[#allocation8 + $0x158] sm:$0xff]
    %v3439 = vld [vmem:[#allocation8 + $0x160] sm:$0xff]
    %v3440 = vld [vmem:[#allocation8 + $0x168] sm:$0xff]
    %v3441 = vld [vmem:[#allocation8 + $0x170] sm:$0xff]
    %v3442 = vld [vmem:[#allocation8 + $0x178] sm:$0xff]
    %v3443 = vld [vmem:[#allocation8 + $0x180] sm:$0xff]
    %v3444 = vld [vmem:[#allocation8 + $0x188] sm:$0xff]
    %v3445 = vld [vmem:[#allocation8 + $0x190] sm:$0xff]
    %v3446 = vld [vmem:[#allocation8 + $0x198] sm:$0xff]
    %v3447 = vld [vmem:[#allocation8 + $0x1a0] sm:$0xff]
    %v3448 = vld [vmem:[#allocation8 + $0x1a8] sm:$0xff]
    %v3449 = vld [vmem:[#allocation8 + $0x1b0] sm:$0xff]
    %v3450 = vld [vmem:[#allocation8 + $0x1b8] sm:$0xff]
    %v3451 = vld [vmem:[#allocation8 + $0x1c0] sm:$0xff]
    %v3452 = vld [vmem:[#allocation8 + $0x1c8] sm:$0xff]
    %v3453 = vld [vmem:[#allocation8 + $0x1d0] sm:$0xff]
    %v3454 = vld [vmem:[#allocation8 + $0x1d8] sm:$0xff]
    %v3455 = vld [vmem:[#allocation8 + $0x1e0] sm:$0xff]
    %v3456 = vld [vmem:[#allocation8 + $0x1e8] sm:$0xff]
    %v3457 = vld [vmem:[#allocation8 + $0x1f0] sm:$0xff]
    %v3458 = vld [vmem:[#allocation8 + $0x1f8] sm:$0xff]
    %v3459 = vld [vmem:[#allocation9] sm:$0xff]
    %v3460 = vld [vmem:[#allocation9 + $0x8] sm:$0xff]
    %v3461 = vld [vmem:[#allocation9 + $0x10] sm:$0xff]
    %v3462 = vld [vmem:[#allocation9 + $0x18] sm:$0xff]
    %v3463 = vld [vmem:[#allocation9 + $0x20] sm:$0xff]
    %v3464 = vld [vmem:[#allocation9 + $0x28] sm:$0xff]
    %v3465 = vld [vmem:[#allocation9 + $0x30] sm:$0xff]
    %v3466 = vld [vmem:[#allocation9 + $0x38] sm:$0xff]
    %v3467 = vld [vmem:[#allocation9 + $0x40] sm:$0xff]
    %v3468 = vld [vmem:[#allocation9 + $0x48] sm:$0xff]
    %v3469 = vld [vmem:[#allocation9 + $0x50] sm:$0xff]
    %v3470 = vld [vmem:[#allocation9 + $0x58] sm:$0xff]
    %v3471 = vld [vmem:[#allocation9 + $0x60] sm:$0xff]
    %v3472 = vld [vmem:[#allocation9 + $0x68] sm:$0xff]
    %v3473 = vld [vmem:[#allocation9 + $0x70] sm:$0xff]
    %v3474 = vld [vmem:[#allocation9 + $0x78] sm:$0xff]
    %v3475 = vld [vmem:[#allocation9 + $0x80] sm:$0xff]
    %v3476 = vld [vmem:[#allocation9 + $0x88] sm:$0xff]
    %v3477 = vld [vmem:[#allocation9 + $0x90] sm:$0xff]
    %v3478 = vld [vmem:[#allocation9 + $0x98] sm:$0xff]
    %v3479 = vld [vmem:[#allocation9 + $0xa0] sm:$0xff]
    %v3480 = vld [vmem:[#allocation9 + $0xa8] sm:$0xff]
    %v3481 = vld [vmem:[#allocation9 + $0xb0] sm:$0xff]
    %v3482 = vld [vmem:[#allocation9 + $0xb8] sm:$0xff]
    %v3483 = vld [vmem:[#allocation9 + $0xc0] sm:$0xff]
    %v3484 = vld [vmem:[#allocation9 + $0xc8] sm:$0xff]
    %v3485 = vld [vmem:[#allocation9 + $0xd0] sm:$0xff]
    %v3486 = vld [vmem:[#allocation9 + $0xd8] sm:$0xff]
    %v3487 = vld [vmem:[#allocation9 + $0xe0] sm:$0xff]
    %v3488 = vld [vmem:[#allocation9 + $0xe8] sm:$0xff]
    %v3489 = vld [vmem:[#allocation9 + $0xf0] sm:$0xff]
    %v3490 = vld [vmem:[#allocation9 + $0xf8] sm:$0xff]
    %v3491 = vld [vmem:[#allocation9 + $0x100] sm:$0xff]
    %v3492 = vld [vmem:[#allocation9 + $0x108] sm:$0xff]
    %v3493 = vld [vmem:[#allocation9 + $0x110] sm:$0xff]
    %v3494 = vld [vmem:[#allocation9 + $0x118] sm:$0xff]
    %v3495 = vld [vmem:[#allocation9 + $0x120] sm:$0xff]
    %v3496 = vld [vmem:[#allocation9 + $0x128] sm:$0xff]
    %v3497 = vld [vmem:[#allocation9 + $0x130] sm:$0xff]
    %v3498 = vld [vmem:[#allocation9 + $0x138] sm:$0xff]
    %v3499 = vld [vmem:[#allocation9 + $0x140] sm:$0xff]
    %v3500 = vld [vmem:[#allocation9 + $0x148] sm:$0xff]
    %v3501 = vld [vmem:[#allocation9 + $0x150] sm:$0xff]
    %v3502 = vld [vmem:[#allocation9 + $0x158] sm:$0xff]
    %v3503 = vld [vmem:[#allocation9 + $0x160] sm:$0xff]
    %v3504 = vld [vmem:[#allocation9 + $0x168] sm:$0xff]
    %v3505 = vld [vmem:[#allocation9 + $0x170] sm:$0xff]
    %v3506 = vld [vmem:[#allocation9 + $0x178] sm:$0xff]
    %v3507 = vld [vmem:[#allocation9 + $0x180] sm:$0xff]
    %v3508 = vld [vmem:[#allocation9 + $0x188] sm:$0xff]
    %v3509 = vld [vmem:[#allocation9 + $0x190] sm:$0xff]
    %v3510 = vld [vmem:[#allocation9 + $0x198] sm:$0xff]
    %v3511 = vld [vmem:[#allocation9 + $0x1a0] sm:$0xff]
    %v3512 = vld [vmem:[#allocation9 + $0x1a8] sm:$0xff]
    %v3513 = vld [vmem:[#allocation9 + $0x1b0] sm:$0xff]
    %v3514 = vld [vmem:[#allocation9 + $0x1b8] sm:$0xff]
    %v3515 = vld [vmem:[#allocation9 + $0x1c0] sm:$0xff]
    %v3516 = vld [vmem:[#allocation9 + $0x1c8] sm:$0xff]
    %v3517 = vld [vmem:[#allocation9 + $0x1d0] sm:$0xff]
    %v3518 = vld [vmem:[#allocation9 + $0x1d8] sm:$0xff]
    %v3519 = vld [vmem:[#allocation9 + $0x1e0] sm:$0xff]
    %v3520 = vld [vmem:[#allocation9 + $0x1e8] sm:$0xff]
    %v3521 = vld [vmem:[#allocation9 + $0x1f0] sm:$0xff]
    %v3522 = vld [vmem:[#allocation9 + $0x1f8] sm:$0xff]
    %v3587 = vunpack.c.l.b16 %v3459
    %v3588 = vunpack.c.h.b16 %v3459
    %v3589 = vunpack.c.l.b16 %v3460
    %v3590 = vunpack.c.h.b16 %v3460
    %v3591 = vunpack.c.l.b16 %v3461
    %v3592 = vunpack.c.h.b16 %v3461
    %v3593 = vunpack.c.l.b16 %v3462
    %v3594 = vunpack.c.h.b16 %v3462
    %v3595 = vunpack.c.l.b16 %v3463
    %v3596 = vunpack.c.h.b16 %v3463
    %v3597 = vunpack.c.l.b16 %v3464
    %v3598 = vunpack.c.h.b16 %v3464
    %v3599 = vunpack.c.l.b16 %v3465
    %v3600 = vunpack.c.h.b16 %v3465
    %v3601 = vunpack.c.l.b16 %v3466
    %v3602 = vunpack.c.h.b16 %v3466
    %v3603 = vunpack.c.l.b16 %v3467
    %v3604 = vunpack.c.h.b16 %v3467
    %v3605 = vunpack.c.l.b16 %v3468
    %v3606 = vunpack.c.h.b16 %v3468
    %v3607 = vunpack.c.l.b16 %v3469
    %v3608 = vunpack.c.h.b16 %v3469
    %v3609 = vunpack.c.l.b16 %v3470
    %v3610 = vunpack.c.h.b16 %v3470
    %v3611 = vunpack.c.l.b16 %v3471
    %v3612 = vunpack.c.h.b16 %v3471
    %v3613 = vunpack.c.l.b16 %v3472
    %v3614 = vunpack.c.h.b16 %v3472
    %v3615 = vunpack.c.l.b16 %v3473
    %v3616 = vunpack.c.h.b16 %v3473
    %v3617 = vunpack.c.l.b16 %v3474
    %v3618 = vunpack.c.h.b16 %v3474
    %v3619 = vunpack.c.l.b16 %v3475
    %v3620 = vunpack.c.h.b16 %v3475
    %v3621 = vunpack.c.l.b16 %v3476
    %v3622 = vunpack.c.h.b16 %v3476
    %v3623 = vunpack.c.l.b16 %v3477
    %v3624 = vunpack.c.h.b16 %v3477
    %v3625 = vunpack.c.l.b16 %v3478
    %v3626 = vunpack.c.h.b16 %v3478
    %v3627 = vunpack.c.l.b16 %v3479
    %v3628 = vunpack.c.h.b16 %v3479
    %v3629 = vunpack.c.l.b16 %v3480
    %v3630 = vunpack.c.h.b16 %v3480
    %v3631 = vunpack.c.l.b16 %v3481
    %v3632 = vunpack.c.h.b16 %v3481
    %v3633 = vunpack.c.l.b16 %v3482
    %v3634 = vunpack.c.h.b16 %v3482
    %v3635 = vunpack.c.l.b16 %v3483
    %v3636 = vunpack.c.h.b16 %v3483
    %v3637 = vunpack.c.l.b16 %v3484
    %v3638 = vunpack.c.h.b16 %v3484
    %v3639 = vunpack.c.l.b16 %v3485
    %v3640 = vunpack.c.h.b16 %v3485
    %v3641 = vunpack.c.l.b16 %v3486
    %v3642 = vunpack.c.h.b16 %v3486
    %v3643 = vunpack.c.l.b16 %v3487
    %v3644 = vunpack.c.h.b16 %v3487
    %v3645 = vunpack.c.l.b16 %v3488
    %v3646 = vunpack.c.h.b16 %v3488
    %v3647 = vunpack.c.l.b16 %v3489
    %v3648 = vunpack.c.h.b16 %v3489
    %v3649 = vunpack.c.l.b16 %v3490
    %v3650 = vunpack.c.h.b16 %v3490
    %v3651 = vunpack.c.l.b16 %v3491
    %v3652 = vunpack.c.h.b16 %v3491
    %v3653 = vunpack.c.l.b16 %v3492
    %v3654 = vunpack.c.h.b16 %v3492
    %v3655 = vunpack.c.l.b16 %v3493
    %v3656 = vunpack.c.h.b16 %v3493
    %v3657 = vunpack.c.l.b16 %v3494
    %v3658 = vunpack.c.h.b16 %v3494
    %v3659 = vunpack.c.l.b16 %v3495
    %v3660 = vunpack.c.h.b16 %v3495
    %v3661 = vunpack.c.l.b16 %v3496
    %v3662 = vunpack.c.h.b16 %v3496
    %v3663 = vunpack.c.l.b16 %v3497
    %v3664 = vunpack.c.h.b16 %v3497
    %v3665 = vunpack.c.l.b16 %v3498
    %v3666 = vunpack.c.h.b16 %v3498
    %v3667 = vunpack.c.l.b16 %v3499
    %v3668 = vunpack.c.h.b16 %v3499
    %v3669 = vunpack.c.l.b16 %v3500
    %v3670 = vunpack.c.h.b16 %v3500
    %v3671 = vunpack.c.l.b16 %v3501
    %v3672 = vunpack.c.h.b16 %v3501
    %v3673 = vunpack.c.l.b16 %v3502
    %v3674 = vunpack.c.h.b16 %v3502
    %v3675 = vunpack.c.l.b16 %v3503
    %v3676 = vunpack.c.h.b16 %v3503
    %v3677 = vunpack.c.l.b16 %v3504
    %v3678 = vunpack.c.h.b16 %v3504
    %v3679 = vunpack.c.l.b16 %v3505
    %v3680 = vunpack.c.h.b16 %v3505
    %v3681 = vunpack.c.l.b16 %v3506
    %v3682 = vunpack.c.h.b16 %v3506
    %v3683 = vunpack.c.l.b16 %v3507
    %v3684 = vunpack.c.h.b16 %v3507
    %v3685 = vunpack.c.l.b16 %v3508
    %v3686 = vunpack.c.h.b16 %v3508
    %v3687 = vunpack.c.l.b16 %v3509
    %v3688 = vunpack.c.h.b16 %v3509
    %v3689 = vunpack.c.l.b16 %v3510
    %v3690 = vunpack.c.h.b16 %v3510
    %v3691 = vunpack.c.l.b16 %v3511
    %v3692 = vunpack.c.h.b16 %v3511
    %v3693 = vunpack.c.l.b16 %v3512
    %v3694 = vunpack.c.h.b16 %v3512
    %v3695 = vunpack.c.l.b16 %v3513
    %v3696 = vunpack.c.h.b16 %v3513
    %v3697 = vunpack.c.l.b16 %v3514
    %v3698 = vunpack.c.h.b16 %v3514
    %v3699 = vunpack.c.l.b16 %v3515
    %v3700 = vunpack.c.h.b16 %v3515
    %v3701 = vunpack.c.l.b16 %v3516
    %v3702 = vunpack.c.h.b16 %v3516
    %v3703 = vunpack.c.l.b16 %v3517
    %v3704 = vunpack.c.h.b16 %v3517
    %v3705 = vunpack.c.l.b16 %v3518
    %v3706 = vunpack.c.h.b16 %v3518
    %v3707 = vunpack.c.l.b16 %v3519
    %v3708 = vunpack.c.h.b16 %v3519
    %v3709 = vunpack.c.l.b16 %v3520
    %v3710 = vunpack.c.h.b16 %v3520
    %v3711 = vunpack.c.l.b16 %v3521
    %v3712 = vunpack.c.h.b16 %v3521
    %v3713 = vunpack.c.l.b16 %v3522
    %v3714 = vunpack.c.h.b16 %v3522
    %v3715 = vpack.c.b16 %v3591, %v3587
    %v3716 = vpack.c.b16 %v3592, %v3588
    %v3717 = vpack.c.b16 %v3593, %v3589
    %v3718 = vpack.c.b16 %v3594, %v3590
    %v3719 = vpack.c.b16 %v3599, %v3595
    %v3720 = vpack.c.b16 %v3600, %v3596
    %v3721 = vpack.c.b16 %v3601, %v3597
    %v3722 = vpack.c.b16 %v3602, %v3598
    %v3723 = vpack.c.b16 %v3607, %v3603
    %v3724 = vpack.c.b16 %v3608, %v3604
    %v3725 = vpack.c.b16 %v3609, %v3605
    %v3726 = vpack.c.b16 %v3610, %v3606
    %v3727 = vpack.c.b16 %v3615, %v3611
    %v3728 = vpack.c.b16 %v3616, %v3612
    %v3729 = vpack.c.b16 %v3617, %v3613
    %v3730 = vpack.c.b16 %v3618, %v3614
    %v3731 = vpack.c.b16 %v3623, %v3619
    %v3732 = vpack.c.b16 %v3624, %v3620
    %v3733 = vpack.c.b16 %v3625, %v3621
    %v3734 = vpack.c.b16 %v3626, %v3622
    %v3735 = vpack.c.b16 %v3631, %v3627
    %v3736 = vpack.c.b16 %v3632, %v3628
    %v3737 = vpack.c.b16 %v3633, %v3629
    %v3738 = vpack.c.b16 %v3634, %v3630
    %v3739 = vpack.c.b16 %v3639, %v3635
    %v3740 = vpack.c.b16 %v3640, %v3636
    %v3741 = vpack.c.b16 %v3641, %v3637
    %v3742 = vpack.c.b16 %v3642, %v3638
    %v3743 = vpack.c.b16 %v3647, %v3643
    %v3744 = vpack.c.b16 %v3648, %v3644
    %v3745 = vpack.c.b16 %v3649, %v3645
    %v3746 = vpack.c.b16 %v3650, %v3646
    %v3747 = vpack.c.b16 %v3655, %v3651
    %v3748 = vpack.c.b16 %v3656, %v3652
    %v3749 = vpack.c.b16 %v3657, %v3653
    %v3750 = vpack.c.b16 %v3658, %v3654
    %v3751 = vpack.c.b16 %v3663, %v3659
    %v3752 = vpack.c.b16 %v3664, %v3660
    %v3753 = vpack.c.b16 %v3665, %v3661
    %v3754 = vpack.c.b16 %v3666, %v3662
    %v3755 = vpack.c.b16 %v3671, %v3667
    %v3756 = vpack.c.b16 %v3672, %v3668
    %v3757 = vpack.c.b16 %v3673, %v3669
    %v3758 = vpack.c.b16 %v3674, %v3670
    %v3759 = vpack.c.b16 %v3679, %v3675
    %v3760 = vpack.c.b16 %v3680, %v3676
    %v3761 = vpack.c.b16 %v3681, %v3677
    %v3762 = vpack.c.b16 %v3682, %v3678
    %v3763 = vpack.c.b16 %v3687, %v3683
    %v3764 = vpack.c.b16 %v3688, %v3684
    %v3765 = vpack.c.b16 %v3689, %v3685
    %v3766 = vpack.c.b16 %v3690, %v3686
    %v3767 = vpack.c.b16 %v3695, %v3691
    %v3768 = vpack.c.b16 %v3696, %v3692
    %v3769 = vpack.c.b16 %v3697, %v3693
    %v3770 = vpack.c.b16 %v3698, %v3694
    %v3771 = vpack.c.b16 %v3703, %v3699
    %v3772 = vpack.c.b16 %v3704, %v3700
    %v3773 = vpack.c.b16 %v3705, %v3701
    %v3774 = vpack.c.b16 %v3706, %v3702
    %v3775 = vpack.c.b16 %v3711, %v3707
    %v3776 = vpack.c.b16 %v3712, %v3708
    %v3777 = vpack.c.b16 %v3713, %v3709
    %v3778 = vpack.c.b16 %v3714, %v3710
    %3843 = vmatpush.bf16.msra.mxu0 %v3743
    %3844 = vmatpush.bf16.msra.mxu0 %v3739
    %3845 = vmatpush.bf16.msra.mxu0 %v3735
    %3846 = vmatpush.bf16.msra.mxu0 %v3731
    %3847 = vmatpush.bf16.msra.mxu0 %v3727
    %3848 = vmatpush.bf16.msra.mxu0 %v3723
    %3849 = vmatpush.bf16.msra.mxu0 %v3719
    %3850 = vmatpush.bf16.msra.mxu0 %v3715
    %3851 = vmatmul.bf16.gmra.mxu0 %v3393
    %v3852 = vpop.f32.mrf.mxu0
    %v3853 = vadd.f32 0.0, %v3852
    %v3854 = vpop.f32.mrf.mxu0
    %3855 = vdwg.mxu0
    %3856 = vmatpush.bf16.msra.mxu0 %v3775
    %3857 = vmatpush.bf16.msra.mxu0 %v3771
    %3858 = vmatpush.bf16.msra.mxu0 %v3767
    %3859 = vmatpush.bf16.msra.mxu0 %v3763
    %3860 = vmatpush.bf16.msra.mxu0 %v3759
    %3861 = vmatpush.bf16.msra.mxu0 %v3755
    %3862 = vmatpush.bf16.msra.mxu0 %v3751
    %3863 = vmatpush.bf16.msra.mxu0 %v3747
    %3864 = vmatmul.bf16.gmra.mxu0 %v3394
    %v3865 = vpop.f32.mrf.mxu0
    %v3866 = vadd.f32 %v3853, %v3865
    %v3867 = vpop.f32.mrf.mxu0
    %3868 = vdwg.mxu0
    %3869 = vmatpush.bf16.msra.mxu0 %v3744
    %3870 = vmatpush.bf16.msra.mxu0 %v3740
    %3871 = vmatpush.bf16.msra.mxu0 %v3736
    %3872 = vmatpush.bf16.msra.mxu0 %v3732
    %3873 = vmatpush.bf16.msra.mxu0 %v3728
    %3874 = vmatpush.bf16.msra.mxu0 %v3724
    %3875 = vmatpush.bf16.msra.mxu0 %v3720
    %3876 = vmatpush.bf16.msra.mxu0 %v3716
    %3877 = vmatmul.bf16.gmra.mxu0 %v3393
    %v3878 = vpop.f32.mrf.mxu0
    %v3879 = vadd.f32 0.0, %v3878
    %v3880 = vpop.f32.mrf.mxu0
    %3881 = vdwg.mxu0
    %3882 = vmatpush.bf16.msra.mxu0 %v3776
    %3883 = vmatpush.bf16.msra.mxu0 %v3772
    %3884 = vmatpush.bf16.msra.mxu0 %v3768
    %3885 = vmatpush.bf16.msra.mxu0 %v3764
    %3886 = vmatpush.bf16.msra.mxu0 %v3760
    %3887 = vmatpush.bf16.msra.mxu0 %v3756
    %3888 = vmatpush.bf16.msra.mxu0 %v3752
    %3889 = vmatpush.bf16.msra.mxu0 %v3748
    %3890 = vmatmul.bf16.gmra.mxu0 %v3394
    %v3891 = vpop.f32.mrf.mxu0
    %v3892 = vadd.f32 %v3879, %v3891
    %v3893 = vpop.f32.mrf.mxu0
    %3894 = vdwg.mxu0
    %3895 = vmatpush.bf16.msra.mxu0 %v3745
    %3896 = vmatpush.bf16.msra.mxu0 %v3741
    %3897 = vmatpush.bf16.msra.mxu0 %v3737
    %3898 = vmatpush.bf16.msra.mxu0 %v3733
    %3899 = vmatpush.bf16.msra.mxu0 %v3729
    %3900 = vmatpush.bf16.msra.mxu0 %v3725
    %3901 = vmatpush.bf16.msra.mxu0 %v3721
    %3902 = vmatpush.bf16.msra.mxu0 %v3717
    %3903 = vmatmul.bf16.gmra.mxu0 %v3393
    %v3904 = vpop.f32.mrf.mxu0
    %v3905 = vadd.f32 0.0, %v3904
    %v3906 = vpop.f32.mrf.mxu0
    %3907 = vdwg.mxu0
    %3908 = vmatpush.bf16.msra.mxu0 %v3777
    %3909 = vmatpush.bf16.msra.mxu0 %v3773
    %3910 = vmatpush.bf16.msra.mxu0 %v3769
    %3911 = vmatpush.bf16.msra.mxu0 %v3765
    %3912 = vmatpush.bf16.msra.mxu0 %v3761
    %3913 = vmatpush.bf16.msra.mxu0 %v3757
    %3914 = vmatpush.bf16.msra.mxu0 %v3753
    %3915 = vmatpush.bf16.msra.mxu0 %v3749
    %3916 = vmatmul.bf16.gmra.mxu0 %v3394
    %v3917 = vpop.f32.mrf.mxu0
    %v3918 = vadd.f32 %v3905, %v3917
    %v3919 = vpop.f32.mrf.mxu0
    %3920 = vdwg.mxu0
    %3921 = vmatpush.bf16.msra.mxu0 %v3746
    %3922 = vmatpush.bf16.msra.mxu0 %v3742
    %3923 = vmatpush.bf16.msra.mxu0 %v3738
    %3924 = vmatpush.bf16.msra.mxu0 %v3734
    %3925 = vmatpush.bf16.msra.mxu0 %v3730
    %3926 = vmatpush.bf16.msra.mxu0 %v3726
    %3927 = vmatpush.bf16.msra.mxu0 %v3722
    %3928 = vmatpush.bf16.msra.mxu0 %v3718
    %3929 = vmatmul.bf16.gmra.mxu0 %v3393
    %v3930 = vpop.f32.mrf.mxu0
    %v3931 = vadd.f32 0.0, %v3930
    %v3932 = vpop.f32.mrf.mxu0
    %3933 = vdwg.mxu0
    %3934 = vmatpush.bf16.msra.mxu0 %v3778
    %3935 = vmatpush.bf16.msra.mxu0 %v3774
    %3936 = vmatpush.bf16.msra.mxu0 %v3770
    %3937 = vmatpush.bf16.msra.mxu0 %v3766
    %3938 = vmatpush.bf16.msra.mxu0 %v3762
    %3939 = vmatpush.bf16.msra.mxu0 %v3758
    %3940 = vmatpush.bf16.msra.mxu0 %v3754
    %3941 = vmatpush.bf16.msra.mxu0 %v3750
    %3942 = vmatmul.bf16.gmra.mxu0 %v3394
    %v3943 = vpop.f32.mrf.mxu0
    %v3944 = vadd.f32 %v3931, %v3943
    %v3945 = vpop.f32.mrf.mxu0
    %3946 = vdwg.mxu0
    %v4011 = vunpack.c.l.b16 %v3395
    %v4012 = vunpack.c.h.b16 %v3395
    %v4013 = vunpack.c.l.b16 %v3396
    %v4014 = vunpack.c.h.b16 %v3396
    %v4015 = vunpack.c.l.b16 %v3397
    %v4016 = vunpack.c.h.b16 %v3397
    %v4017 = vunpack.c.l.b16 %v3398
    %v4018 = vunpack.c.h.b16 %v3398
    %v4019 = vunpack.c.l.b16 %v3399
    %v4020 = vunpack.c.h.b16 %v3399
    %v4021 = vunpack.c.l.b16 %v3400
    %v4022 = vunpack.c.h.b16 %v3400
    %v4023 = vunpack.c.l.b16 %v3401
    %v4024 = vunpack.c.h.b16 %v3401
    %v4025 = vunpack.c.l.b16 %v3402
    %v4026 = vunpack.c.h.b16 %v3402
    %v4027 = vunpack.c.l.b16 %v3403
    %v4028 = vunpack.c.h.b16 %v3403
    %v4029 = vunpack.c.l.b16 %v3404
    %v4030 = vunpack.c.h.b16 %v3404
    %v4031 = vunpack.c.l.b16 %v3405
    %v4032 = vunpack.c.h.b16 %v3405
    %v4033 = vunpack.c.l.b16 %v3406
    %v4034 = vunpack.c.h.b16 %v3406
    %v4035 = vunpack.c.l.b16 %v3407
    %v4036 = vunpack.c.h.b16 %v3407
    %v4037 = vunpack.c.l.b16 %v3408
    %v4038 = vunpack.c.h.b16 %v3408
    %v4039 = vunpack.c.l.b16 %v3409
    %v4040 = vunpack.c.h.b16 %v3409
    %v4041 = vunpack.c.l.b16 %v3410
    %v4042 = vunpack.c.h.b16 %v3410
    %v4043 = vunpack.c.l.b16 %v3411
    %v4044 = vunpack.c.h.b16 %v3411
    %v4045 = vunpack.c.l.b16 %v3412
    %v4046 = vunpack.c.h.b16 %v3412
    %v4047 = vunpack.c.l.b16 %v3413
    %v4048 = vunpack.c.h.b16 %v3413
    %v4049 = vunpack.c.l.b16 %v3414
    %v4050 = vunpack.c.h.b16 %v3414
    %v4051 = vunpack.c.l.b16 %v3415
    %v4052 = vunpack.c.h.b16 %v3415
    %v4053 = vunpack.c.l.b16 %v3416
    %v4054 = vunpack.c.h.b16 %v3416
    %v4055 = vunpack.c.l.b16 %v3417
    %v4056 = vunpack.c.h.b16 %v3417
    %v4057 = vunpack.c.l.b16 %v3418
    %v4058 = vunpack.c.h.b16 %v3418
    %v4059 = vunpack.c.l.b16 %v3419
    %v4060 = vunpack.c.h.b16 %v3419
    %v4061 = vunpack.c.l.b16 %v3420
    %v4062 = vunpack.c.h.b16 %v3420
    %v4063 = vunpack.c.l.b16 %v3421
    %v4064 = vunpack.c.h.b16 %v3421
    %v4065 = vunpack.c.l.b16 %v3422
    %v4066 = vunpack.c.h.b16 %v3422
    %v4067 = vunpack.c.l.b16 %v3423
    %v4068 = vunpack.c.h.b16 %v3423
    %v4069 = vunpack.c.l.b16 %v3424
    %v4070 = vunpack.c.h.b16 %v3424
    %v4071 = vunpack.c.l.b16 %v3425
    %v4072 = vunpack.c.h.b16 %v3425
    %v4073 = vunpack.c.l.b16 %v3426
    %v4074 = vunpack.c.h.b16 %v3426
    %v4075 = vunpack.c.l.b16 %v3427
    %v4076 = vunpack.c.h.b16 %v3427
    %v4077 = vunpack.c.l.b16 %v3428
    %v4078 = vunpack.c.h.b16 %v3428
    %v4079 = vunpack.c.l.b16 %v3429
    %v4080 = vunpack.c.h.b16 %v3429
    %v4081 = vunpack.c.l.b16 %v3430
    %v4082 = vunpack.c.h.b16 %v3430
    %v4083 = vunpack.c.l.b16 %v3431
    %v4084 = vunpack.c.h.b16 %v3431
    %v4085 = vunpack.c.l.b16 %v3432
    %v4086 = vunpack.c.h.b16 %v3432
    %v4087 = vunpack.c.l.b16 %v3433
    %v4088 = vunpack.c.h.b16 %v3433
    %v4089 = vunpack.c.l.b16 %v3434
    %v4090 = vunpack.c.h.b16 %v3434
    %v4091 = vunpack.c.l.b16 %v3435
    %v4092 = vunpack.c.h.b16 %v3435
    %v4093 = vunpack.c.l.b16 %v3436
    %v4094 = vunpack.c.h.b16 %v3436
    %v4095 = vunpack.c.l.b16 %v3437
    %v4096 = vunpack.c.h.b16 %v3437
    %v4097 = vunpack.c.l.b16 %v3438
    %v4098 = vunpack.c.h.b16 %v3438
    %v4099 = vunpack.c.l.b16 %v3439
    %v4100 = vunpack.c.h.b16 %v3439
    %v4101 = vunpack.c.l.b16 %v3440
    %v4102 = vunpack.c.h.b16 %v3440
    %v4103 = vunpack.c.l.b16 %v3441
    %v4104 = vunpack.c.h.b16 %v3441
    %v4105 = vunpack.c.l.b16 %v3442
    %v4106 = vunpack.c.h.b16 %v3442
    %v4107 = vunpack.c.l.b16 %v3443
    %v4108 = vunpack.c.h.b16 %v3443
    %v4109 = vunpack.c.l.b16 %v3444
    %v4110 = vunpack.c.h.b16 %v3444
    %v4111 = vunpack.c.l.b16 %v3445
    %v4112 = vunpack.c.h.b16 %v3445
    %v4113 = vunpack.c.l.b16 %v3446
    %v4114 = vunpack.c.h.b16 %v3446
    %v4115 = vunpack.c.l.b16 %v3447
    %v4116 = vunpack.c.h.b16 %v3447
    %v4117 = vunpack.c.l.b16 %v3448
    %v4118 = vunpack.c.h.b16 %v3448
    %v4119 = vunpack.c.l.b16 %v3449
    %v4120 = vunpack.c.h.b16 %v3449
    %v4121 = vunpack.c.l.b16 %v3450
    %v4122 = vunpack.c.h.b16 %v3450
    %v4123 = vunpack.c.l.b16 %v3451
    %v4124 = vunpack.c.h.b16 %v3451
    %v4125 = vunpack.c.l.b16 %v3452
    %v4126 = vunpack.c.h.b16 %v3452
    %v4127 = vunpack.c.l.b16 %v3453
    %v4128 = vunpack.c.h.b16 %v3453
    %v4129 = vunpack.c.l.b16 %v3454
    %v4130 = vunpack.c.h.b16 %v3454
    %v4131 = vunpack.c.l.b16 %v3455
    %v4132 = vunpack.c.h.b16 %v3455
    %v4133 = vunpack.c.l.b16 %v3456
    %v4134 = vunpack.c.h.b16 %v3456
    %v4135 = vunpack.c.l.b16 %v3457
    %v4136 = vunpack.c.h.b16 %v3457
    %v4137 = vunpack.c.l.b16 %v3458
    %v4138 = vunpack.c.h.b16 %v3458
    %v4139 = vpack.c.b16 %v4015, %v4011
    %v4140 = vpack.c.b16 %v4016, %v4012
    %v4141 = vpack.c.b16 %v4017, %v4013
    %v4142 = vpack.c.b16 %v4018, %v4014
    %v4143 = vpack.c.b16 %v4023, %v4019
    %v4144 = vpack.c.b16 %v4024, %v4020
    %v4145 = vpack.c.b16 %v4025, %v4021
    %v4146 = vpack.c.b16 %v4026, %v4022
    %v4147 = vpack.c.b16 %v4031, %v4027
    %v4148 = vpack.c.b16 %v4032, %v4028
    %v4149 = vpack.c.b16 %v4033, %v4029
    %v4150 = vpack.c.b16 %v4034, %v4030
    %v4151 = vpack.c.b16 %v4039, %v4035
    %v4152 = vpack.c.b16 %v4040, %v4036
    %v4153 = vpack.c.b16 %v4041, %v4037
    %v4154 = vpack.c.b16 %v4042, %v4038
    %v4155 = vpack.c.b16 %v4047, %v4043
    %v4156 = vpack.c.b16 %v4048, %v4044
    %v4157 = vpack.c.b16 %v4049, %v4045
    %v4158 = vpack.c.b16 %v4050, %v4046
    %v4159 = vpack.c.b16 %v4055, %v4051
    %v4160 = vpack.c.b16 %v4056, %v4052
    %v4161 = vpack.c.b16 %v4057, %v4053
    %v4162 = vpack.c.b16 %v4058, %v4054
    %v4163 = vpack.c.b16 %v4063, %v4059
    %v4164 = vpack.c.b16 %v4064, %v4060
    %v4165 = vpack.c.b16 %v4065, %v4061
    %v4166 = vpack.c.b16 %v4066, %v4062
    %v4167 = vpack.c.b16 %v4071, %v4067
    %v4168 = vpack.c.b16 %v4072, %v4068
    %v4169 = vpack.c.b16 %v4073, %v4069
    %v4170 = vpack.c.b16 %v4074, %v4070
    %v4171 = vpack.c.b16 %v4079, %v4075
    %v4172 = vpack.c.b16 %v4080, %v4076
    %v4173 = vpack.c.b16 %v4081, %v4077
    %v4174 = vpack.c.b16 %v4082, %v4078
    %v4175 = vpack.c.b16 %v4087, %v4083
    %v4176 = vpack.c.b16 %v4088, %v4084
    %v4177 = vpack.c.b16 %v4089, %v4085
    %v4178 = vpack.c.b16 %v4090, %v4086
    %v4179 = vpack.c.b16 %v4095, %v4091
    %v4180 = vpack.c.b16 %v4096, %v4092
    %v4181 = vpack.c.b16 %v4097, %v4093
    %v4182 = vpack.c.b16 %v4098, %v4094
    %v4183 = vpack.c.b16 %v4103, %v4099
    %v4184 = vpack.c.b16 %v4104, %v4100
    %v4185 = vpack.c.b16 %v4105, %v4101
    %v4186 = vpack.c.b16 %v4106, %v4102
    %v4187 = vpack.c.b16 %v4111, %v4107
    %v4188 = vpack.c.b16 %v4112, %v4108
    %v4189 = vpack.c.b16 %v4113, %v4109
    %v4190 = vpack.c.b16 %v4114, %v4110
    %v4191 = vpack.c.b16 %v4119, %v4115
    %v4192 = vpack.c.b16 %v4120, %v4116
    %v4193 = vpack.c.b16 %v4121, %v4117
    %v4194 = vpack.c.b16 %v4122, %v4118
    %v4195 = vpack.c.b16 %v4127, %v4123
    %v4196 = vpack.c.b16 %v4128, %v4124
    %v4197 = vpack.c.b16 %v4129, %v4125
    %v4198 = vpack.c.b16 %v4130, %v4126
    %v4199 = vpack.c.b16 %v4135, %v4131
    %v4200 = vpack.c.b16 %v4136, %v4132
    %v4201 = vpack.c.b16 %v4137, %v4133
    %v4202 = vpack.c.b16 %v4138, %v4134
    %4267 = vmatpush.bf16.msra.mxu0 %v4167
    %4268 = vmatpush.bf16.msra.mxu0 %v4163
    %4269 = vmatpush.bf16.msra.mxu0 %v4159
    %4270 = vmatpush.bf16.msra.mxu0 %v4155
    %4271 = vmatpush.bf16.msra.mxu0 %v4151
    %4272 = vmatpush.bf16.msra.mxu0 %v4147
    %4273 = vmatpush.bf16.msra.mxu0 %v4143
    %4274 = vmatpush.bf16.msra.mxu0 %v4139
    %4275 = vmatmul.bf16.gmra.mxu0 %v3391
    %v4276 = vpop.f32.mrf.mxu0
    %v4277 = vadd.f32 %v3866, %v4276
    %v4278 = vpop.f32.mrf.mxu0
    %4279 = vdwg.mxu0
    %4280 = vmatpush.bf16.msra.mxu0 %v4199
    %4281 = vmatpush.bf16.msra.mxu0 %v4195
    %4282 = vmatpush.bf16.msra.mxu0 %v4191
    %4283 = vmatpush.bf16.msra.mxu0 %v4187
    %4284 = vmatpush.bf16.msra.mxu0 %v4183
    %4285 = vmatpush.bf16.msra.mxu0 %v4179
    %4286 = vmatpush.bf16.msra.mxu0 %v4175
    %4287 = vmatpush.bf16.msra.mxu0 %v4171
    %4288 = vmatmul.bf16.gmra.mxu0 %v3392
    %v4289 = vpop.f32.mrf.mxu0
    %v4290 = vadd.f32 %v4277, %v4289
    %v4291 = vpop.f32.mrf.mxu0
    %4292 = vdwg.mxu0
    %4293 = vmatpush.bf16.msra.mxu0 %v4168
    %4294 = vmatpush.bf16.msra.mxu0 %v4164
    %4295 = vmatpush.bf16.msra.mxu0 %v4160
    %4296 = vmatpush.bf16.msra.mxu0 %v4156
    %4297 = vmatpush.bf16.msra.mxu0 %v4152
    %4298 = vmatpush.bf16.msra.mxu0 %v4148
    %4299 = vmatpush.bf16.msra.mxu0 %v4144
    %4300 = vmatpush.bf16.msra.mxu0 %v4140
    %4301 = vmatmul.bf16.gmra.mxu0 %v3391
    %v4302 = vpop.f32.mrf.mxu0
    %v4303 = vadd.f32 %v3892, %v4302
    %v4304 = vpop.f32.mrf.mxu0
    %4305 = vdwg.mxu0
    %4306 = vmatpush.bf16.msra.mxu0 %v4200
    %4307 = vmatpush.bf16.msra.mxu0 %v4196
    %4308 = vmatpush.bf16.msra.mxu0 %v4192
    %4309 = vmatpush.bf16.msra.mxu0 %v4188
    %4310 = vmatpush.bf16.msra.mxu0 %v4184
    %4311 = vmatpush.bf16.msra.mxu0 %v4180
    %4312 = vmatpush.bf16.msra.mxu0 %v4176
    %4313 = vmatpush.bf16.msra.mxu0 %v4172
    %4314 = vmatmul.bf16.gmra.mxu0 %v3392
    %v4315 = vpop.f32.mrf.mxu0
    %v4316 = vadd.f32 %v4303, %v4315
    %v4317 = vpop.f32.mrf.mxu0
    %4318 = vdwg.mxu0
    %4319 = vmatpush.bf16.msra.mxu0 %v4169
    %4320 = vmatpush.bf16.msra.mxu0 %v4165
    %4321 = vmatpush.bf16.msra.mxu0 %v4161
    %4322 = vmatpush.bf16.msra.mxu0 %v4157
    %4323 = vmatpush.bf16.msra.mxu0 %v4153
    %4324 = vmatpush.bf16.msra.mxu0 %v4149
    %4325 = vmatpush.bf16.msra.mxu0 %v4145
    %4326 = vmatpush.bf16.msra.mxu0 %v4141
    %4327 = vmatmul.bf16.gmra.mxu0 %v3391
    %v4328 = vpop.f32.mrf.mxu0
    %v4329 = vadd.f32 %v3918, %v4328
    %v4330 = vpop.f32.mrf.mxu0
    %4331 = vdwg.mxu0
    %4332 = vmatpush.bf16.msra.mxu0 %v4201
    %4333 = vmatpush.bf16.msra.mxu0 %v4197
    %4334 = vmatpush.bf16.msra.mxu0 %v4193
    %4335 = vmatpush.bf16.msra.mxu0 %v4189
    %4336 = vmatpush.bf16.msra.mxu0 %v4185
    %4337 = vmatpush.bf16.msra.mxu0 %v4181
    %4338 = vmatpush.bf16.msra.mxu0 %v4177
    %4339 = vmatpush.bf16.msra.mxu0 %v4173
    %4340 = vmatmul.bf16.gmra.mxu0 %v3392
    %v4341 = vpop.f32.mrf.mxu0
    %v4342 = vadd.f32 %v4329, %v4341
    %v4343 = vpop.f32.mrf.mxu0
    %4344 = vdwg.mxu0
    %4345 = vmatpush.bf16.msra.mxu0 %v4170
    %4346 = vmatpush.bf16.msra.mxu0 %v4166
    %4347 = vmatpush.bf16.msra.mxu0 %v4162
    %4348 = vmatpush.bf16.msra.mxu0 %v4158
    %4349 = vmatpush.bf16.msra.mxu0 %v4154
    %4350 = vmatpush.bf16.msra.mxu0 %v4150
    %4351 = vmatpush.bf16.msra.mxu0 %v4146
    %4352 = vmatpush.bf16.msra.mxu0 %v4142
    %4353 = vmatmul.bf16.gmra.mxu0 %v3391
    %v4354 = vpop.f32.mrf.mxu0
    %v4355 = vadd.f32 %v3944, %v4354
    %v4356 = vpop.f32.mrf.mxu0
    %4357 = vdwg.mxu0
    %4358 = vmatpush.bf16.msra.mxu0 %v4202
    %4359 = vmatpush.bf16.msra.mxu0 %v4198
    %4360 = vmatpush.bf16.msra.mxu0 %v4194
    %4361 = vmatpush.bf16.msra.mxu0 %v4190
    %4362 = vmatpush.bf16.msra.mxu0 %v4186
    %4363 = vmatpush.bf16.msra.mxu0 %v4182
    %4364 = vmatpush.bf16.msra.mxu0 %v4178
    %4365 = vmatpush.bf16.msra.mxu0 %v4174
    %4366 = vmatmul.bf16.gmra.mxu0 %v3392
    %v4367 = vpop.f32.mrf.mxu0
    %v4368 = vadd.f32 %v4355, %v4367
    %v4369 = vpop.f32.mrf.mxu0
    %4370 = vdwg.mxu0
    %v4371 = vld [vmem:[#allocation11] sm:$0xf]
    %v4373 = vperm.slane %v4371, 0
    %v4374 = vperm.slane %v4371, 1
    %v4375 = vperm.slane %v4371, 2
    %v4376 = vperm.slane %v4371, 3
    %v4381 = vadd.f32 %v4290, %v4373
    %v4382 = vadd.f32 %v4316, %v4374
    %v4383 = vadd.f32 %v4342, %v4375
    %v4384 = vadd.f32 %v4368, %v4376
    %v4385 = vxor.u32 %v4381, 2147483648
    %v4386 = vxor.u32 %v4382, 2147483648
    %v4387 = vxor.u32 %v4383, 2147483648
    %v4388 = vxor.u32 %v4384, 2147483648
    %v4389 = vmul.f32 %v4385, 1.442695
    %v4390 = vpow.pop %v4389
    %v4391 = vmul.f32 %v4386, 1.442695
    %v4392 = vpow.pop %v4391
    %v4393 = vmul.f32 %v4387, 1.442695
    %v4394 = vpow.pop %v4393
    %v4395 = vmul.f32 %v4388, 1.442695
    %v4396 = vpow.pop %v4395
    %v4397 = vadd.f32 %v4390, 1.0
    %v4398 = vadd.f32 %v4392, 1.0
    %v4399 = vadd.f32 %v4394, 1.0
    %v4400 = vadd.f32 %v4396, 1.0
    %v4401 = vrcp.pop %v4397
    %v4402 = vmul.f32 %v4397, %v4401
    %v4403 = vsub.f32 1.0, %v4402
    %v4404 = vmul.f32 %v4401, %v4403
    %v4405 = vadd.f32 %v4401, %v4404
    %vm4406 = vweird.f32 %v4397
    %vm4407 = vweird.f32 %v4401
    %vm4408 = vmor %vm4406, %vm4407
    %v4409 = vsel %vm4408, %v4401, %v4405
    %v4410 = vand.u32 2147483647, %v4397
    %vm4411 = vcmp.eq.f32.partialorder %v4410, 8.507059e+37
    %v4412 = vand.u32 %v4397, 2147483648
    %v4413 = vor.u32 1.1754944e-38, %v4412
    %v4414 = vsel %vm4411, %v4413, %v4409
    %v4415 = vmul.f32 1.0, %v4414
    %v4416 = vrcp.pop %v4398
    %v4417 = vmul.f32 %v4398, %v4416
    %v4418 = vsub.f32 1.0, %v4417
    %v4419 = vmul.f32 %v4416, %v4418
    %v4420 = vadd.f32 %v4416, %v4419
    %vm4421 = vweird.f32 %v4398
    %vm4422 = vweird.f32 %v4416
    %vm4423 = vmor %vm4421, %vm4422
    %v4424 = vsel %vm4423, %v4416, %v4420
    %v4425 = vand.u32 2147483647, %v4398
    %vm4426 = vcmp.eq.f32.partialorder %v4425, 8.507059e+37
    %v4427 = vand.u32 %v4398, 2147483648
    %v4428 = vor.u32 1.1754944e-38, %v4427
    %v4429 = vsel %vm4426, %v4428, %v4424
    %v4430 = vmul.f32 1.0, %v4429
    %v4431 = vrcp.pop %v4399
    %v4432 = vmul.f32 %v4399, %v4431
    %v4433 = vsub.f32 1.0, %v4432
    %v4434 = vmul.f32 %v4431, %v4433
    %v4435 = vadd.f32 %v4431, %v4434
    %vm4436 = vweird.f32 %v4399
    %vm4437 = vweird.f32 %v4431
    %vm4438 = vmor %vm4436, %vm4437
    %v4439 = vsel %vm4438, %v4431, %v4435
    %v4440 = vand.u32 2147483647, %v4399
    %vm4441 = vcmp.eq.f32.partialorder %v4440, 8.507059e+37
    %v4442 = vand.u32 %v4399, 2147483648
    %v4443 = vor.u32 1.1754944e-38, %v4442
    %v4444 = vsel %vm4441, %v4443, %v4439
    %v4445 = vmul.f32 1.0, %v4444
    %v4446 = vrcp.pop %v4400
    %v4447 = vmul.f32 %v4400, %v4446
    %v4448 = vsub.f32 1.0, %v4447
    %v4449 = vmul.f32 %v4446, %v4448
    %v4450 = vadd.f32 %v4446, %v4449
    %vm4451 = vweird.f32 %v4400
    %vm4452 = vweird.f32 %v4446
    %vm4453 = vmor %vm4451, %vm4452
    %v4454 = vsel %vm4453, %v4446, %v4450
    %v4455 = vand.u32 2147483647, %v4400
    %vm4456 = vcmp.eq.f32.partialorder %v4455, 8.507059e+37
    %v4457 = vand.u32 %v4400, 2147483648
    %v4458 = vor.u32 1.1754944e-38, %v4457
    %v4459 = vsel %vm4456, %v4458, %v4454
    %v4460 = vmul.f32 1.0, %v4459
    %v4461 = vld [vmem:[#allocation12] sm:$0xff]
    %v4462 = vld [vmem:[#allocation12 + $0x8] sm:$0xff]
    %v4463 = vld [vmem:[#allocation12 + $0x10] sm:$0xff]
    %v4464 = vld [vmem:[#allocation12 + $0x18] sm:$0xff]
    %v4465 = vld [vmem:[#allocation12 + $0x20] sm:$0xff]
    %v4466 = vld [vmem:[#allocation12 + $0x28] sm:$0xff]
    %v4467 = vld [vmem:[#allocation12 + $0x30] sm:$0xff]
    %v4468 = vld [vmem:[#allocation12 + $0x38] sm:$0xff]
    %v4469 = vld [vmem:[#allocation12 + $0x40] sm:$0xff]
    %v4470 = vld [vmem:[#allocation12 + $0x48] sm:$0xff]
    %v4471 = vld [vmem:[#allocation12 + $0x50] sm:$0xff]
    %v4472 = vld [vmem:[#allocation12 + $0x58] sm:$0xff]
    %v4473 = vld [vmem:[#allocation12 + $0x60] sm:$0xff]
    %v4474 = vld [vmem:[#allocation12 + $0x68] sm:$0xff]
    %v4475 = vld [vmem:[#allocation12 + $0x70] sm:$0xff]
    %v4476 = vld [vmem:[#allocation12 + $0x78] sm:$0xff]
    %v4477 = vld [vmem:[#allocation12 + $0x80] sm:$0xff]
    %v4478 = vld [vmem:[#allocation12 + $0x88] sm:$0xff]
    %v4479 = vld [vmem:[#allocation12 + $0x90] sm:$0xff]
    %v4480 = vld [vmem:[#allocation12 + $0x98] sm:$0xff]
    %v4481 = vld [vmem:[#allocation12 + $0xa0] sm:$0xff]
    %v4482 = vld [vmem:[#allocation12 + $0xa8] sm:$0xff]
    %v4483 = vld [vmem:[#allocation12 + $0xb0] sm:$0xff]
    %v4484 = vld [vmem:[#allocation12 + $0xb8] sm:$0xff]
    %v4485 = vld [vmem:[#allocation12 + $0xc0] sm:$0xff]
    %v4486 = vld [vmem:[#allocation12 + $0xc8] sm:$0xff]
    %v4487 = vld [vmem:[#allocation12 + $0xd0] sm:$0xff]
    %v4488 = vld [vmem:[#allocation12 + $0xd8] sm:$0xff]
    %v4489 = vld [vmem:[#allocation12 + $0xe0] sm:$0xff]
    %v4490 = vld [vmem:[#allocation12 + $0xe8] sm:$0xff]
    %v4491 = vld [vmem:[#allocation12 + $0xf0] sm:$0xff]
    %v4492 = vld [vmem:[#allocation12 + $0xf8] sm:$0xff]
    %v4493 = vld [vmem:[%s7] sm:$0x3]
    %v4526 = vunpack.c.l.b16 %v4461
    %v4527 = vunpack.c.h.b16 %v4461
    %v4528 = vunpack.c.l.b16 %v4462
    %v4529 = vunpack.c.h.b16 %v4462
    %v4530 = vunpack.c.l.b16 %v4463
    %v4531 = vunpack.c.h.b16 %v4463
    %v4532 = vunpack.c.l.b16 %v4464
    %v4533 = vunpack.c.h.b16 %v4464
    %v4534 = vunpack.c.l.b16 %v4465
    %v4535 = vunpack.c.h.b16 %v4465
    %v4536 = vunpack.c.l.b16 %v4466
    %v4537 = vunpack.c.h.b16 %v4466
    %v4538 = vunpack.c.l.b16 %v4467
    %v4539 = vunpack.c.h.b16 %v4467
    %v4540 = vunpack.c.l.b16 %v4468
    %v4541 = vunpack.c.h.b16 %v4468
    %v4542 = vunpack.c.l.b16 %v4469
    %v4543 = vunpack.c.h.b16 %v4469
    %v4544 = vunpack.c.l.b16 %v4470
    %v4545 = vunpack.c.h.b16 %v4470
    %v4546 = vunpack.c.l.b16 %v4471
    %v4547 = vunpack.c.h.b16 %v4471
    %v4548 = vunpack.c.l.b16 %v4472
    %v4549 = vunpack.c.h.b16 %v4472
    %v4550 = vunpack.c.l.b16 %v4473
    %v4551 = vunpack.c.h.b16 %v4473
    %v4552 = vunpack.c.l.b16 %v4474
    %v4553 = vunpack.c.h.b16 %v4474
    %v4554 = vunpack.c.l.b16 %v4475
    %v4555 = vunpack.c.h.b16 %v4475
    %v4556 = vunpack.c.l.b16 %v4476
    %v4557 = vunpack.c.h.b16 %v4476
    %v4558 = vunpack.c.l.b16 %v4477
    %v4559 = vunpack.c.h.b16 %v4477
    %v4560 = vunpack.c.l.b16 %v4478
    %v4561 = vunpack.c.h.b16 %v4478
    %v4562 = vunpack.c.l.b16 %v4479
    %v4563 = vunpack.c.h.b16 %v4479
    %v4564 = vunpack.c.l.b16 %v4480
    %v4565 = vunpack.c.h.b16 %v4480
    %v4566 = vunpack.c.l.b16 %v4481
    %v4567 = vunpack.c.h.b16 %v4481
    %v4568 = vunpack.c.l.b16 %v4482
    %v4569 = vunpack.c.h.b16 %v4482
    %v4570 = vunpack.c.l.b16 %v4483
    %v4571 = vunpack.c.h.b16 %v4483
    %v4572 = vunpack.c.l.b16 %v4484
    %v4573 = vunpack.c.h.b16 %v4484
    %v4574 = vunpack.c.l.b16 %v4485
    %v4575 = vunpack.c.h.b16 %v4485
    %v4576 = vunpack.c.l.b16 %v4486
    %v4577 = vunpack.c.h.b16 %v4486
    %v4578 = vunpack.c.l.b16 %v4487
    %v4579 = vunpack.c.h.b16 %v4487
    %v4580 = vunpack.c.l.b16 %v4488
    %v4581 = vunpack.c.h.b16 %v4488
    %v4582 = vunpack.c.l.b16 %v4489
    %v4583 = vunpack.c.h.b16 %v4489
    %v4584 = vunpack.c.l.b16 %v4490
    %v4585 = vunpack.c.h.b16 %v4490
    %v4586 = vunpack.c.l.b16 %v4491
    %v4587 = vunpack.c.h.b16 %v4491
    %v4588 = vunpack.c.l.b16 %v4492
    %v4589 = vunpack.c.h.b16 %v4492
    %v4590 = vpack.c.b16 %v4528, %v4526
    %v4591 = vpack.c.b16 %v4529, %v4527
    %v4592 = vpack.c.b16 %v4532, %v4530
    %v4593 = vpack.c.b16 %v4533, %v4531
    %v4594 = vpack.c.b16 %v4536, %v4534
    %v4595 = vpack.c.b16 %v4537, %v4535
    %v4596 = vpack.c.b16 %v4540, %v4538
    %v4597 = vpack.c.b16 %v4541, %v4539
    %v4598 = vpack.c.b16 %v4544, %v4542
    %v4599 = vpack.c.b16 %v4545, %v4543
    %v4600 = vpack.c.b16 %v4548, %v4546
    %v4601 = vpack.c.b16 %v4549, %v4547
    %v4602 = vpack.c.b16 %v4552, %v4550
    %v4603 = vpack.c.b16 %v4553, %v4551
    %v4604 = vpack.c.b16 %v4556, %v4554
    %v4605 = vpack.c.b16 %v4557, %v4555
    %v4606 = vpack.c.b16 %v4560, %v4558
    %v4607 = vpack.c.b16 %v4561, %v4559
    %v4608 = vpack.c.b16 %v4564, %v4562
    %v4609 = vpack.c.b16 %v4565, %v4563
    %v4610 = vpack.c.b16 %v4568, %v4566
    %v4611 = vpack.c.b16 %v4569, %v4567
    %v4612 = vpack.c.b16 %v4572, %v4570
    %v4613 = vpack.c.b16 %v4573, %v4571
    %v4614 = vpack.c.b16 %v4576, %v4574
    %v4615 = vpack.c.b16 %v4577, %v4575
    %v4616 = vpack.c.b16 %v4580, %v4578
    %v4617 = vpack.c.b16 %v4581, %v4579
    %v4618 = vpack.c.b16 %v4584, %v4582
    %v4619 = vpack.c.b16 %v4585, %v4583
    %v4620 = vpack.c.b16 %v4588, %v4586
    %v4621 = vpack.c.b16 %v4589, %v4587
    %v4655 = vperm.slane %v4493, 0
    %v4656 = vperm.slane %v4493, 1
    %4659 = vmatpush.bf16.msra.mxu0 %v4604
    %4660 = vmatpush.bf16.msra.mxu0 %v4602
    %4661 = vmatpush.bf16.msra.mxu0 %v4600
    %4662 = vmatpush.bf16.msra.mxu0 %v4598
    %4663 = vmatpush.bf16.msra.mxu0 %v4596
    %4664 = vmatpush.bf16.msra.mxu0 %v4594
    %4665 = vmatpush.bf16.msra.mxu0 %v4592
    %4666 = vmatpush.bf16.msra.mxu0 %v4590
    %4667 = vmatmul.bf16.gmra.mxu0 %v3391
    %v4668 = vpop.f32.mrf.mxu0
    %v4669 = vadd.f32 %v4655, %v4668
    %v4670 = vpop.f32.mrf.mxu0
    %4671 = vdwg.mxu0
    %4672 = vmatpush.bf16.msra.mxu0 %v4620
    %4673 = vmatpush.bf16.msra.mxu0 %v4618
    %4674 = vmatpush.bf16.msra.mxu0 %v4616
    %4675 = vmatpush.bf16.msra.mxu0 %v4614
    %4676 = vmatpush.bf16.msra.mxu0 %v4612
    %4677 = vmatpush.bf16.msra.mxu0 %v4610
    %4678 = vmatpush.bf16.msra.mxu0 %v4608
    %4679 = vmatpush.bf16.msra.mxu0 %v4606
    %4680 = vmatmul.bf16.gmra.mxu0 %v3392
    %v4681 = vpop.f32.mrf.mxu0
    %v4682 = vadd.f32 %v4669, %v4681
    %v4683 = vpop.f32.mrf.mxu0
    %4684 = vdwg.mxu0
    %4685 = vmatpush.bf16.msra.mxu0 %v4605
    %4686 = vmatpush.bf16.msra.mxu0 %v4603
    %4687 = vmatpush.bf16.msra.mxu0 %v4601
    %4688 = vmatpush.bf16.msra.mxu0 %v4599
    %4689 = vmatpush.bf16.msra.mxu0 %v4597
    %4690 = vmatpush.bf16.msra.mxu0 %v4595
    %4691 = vmatpush.bf16.msra.mxu0 %v4593
    %4692 = vmatpush.bf16.msra.mxu0 %v4591
    %4693 = vmatmul.bf16.gmra.mxu0 %v3391
    %v4694 = vpop.f32.mrf.mxu0
    %v4695 = vadd.f32 %v4656, %v4694
    %v4696 = vpop.f32.mrf.mxu0
    %4697 = vdwg.mxu0
    %4698 = vmatpush.bf16.msra.mxu0 %v4621
    %4699 = vmatpush.bf16.msra.mxu0 %v4619
    %4700 = vmatpush.bf16.msra.mxu0 %v4617
    %4701 = vmatpush.bf16.msra.mxu0 %v4615
    %4702 = vmatpush.bf16.msra.mxu0 %v4613
    %4703 = vmatpush.bf16.msra.mxu0 %v4611
    %4704 = vmatpush.bf16.msra.mxu0 %v4609
    %4705 = vmatpush.bf16.msra.mxu0 %v4607
    %4706 = vmatmul.bf16.gmra.mxu0 %v3392
    %v4707 = vpop.f32.mrf.mxu0
    %v4708 = vadd.f32 %v4695, %v4707
    %v4709 = vpop.f32.mrf.mxu0
    %4710 = vdwg.mxu0
    %v4711 = vld [vmem:[#allocation14] sm:$0xff]
    %v4712 = vld [vmem:[#allocation14 + $0x8] sm:$0xff]
    %v4713 = vld [vmem:[#allocation14 + $0x10] sm:$0xff]
    %v4714 = vld [vmem:[#allocation14 + $0x18] sm:$0xff]
    %v4715 = vld [vmem:[#allocation14 + $0x20] sm:$0xff]
    %v4716 = vld [vmem:[#allocation14 + $0x28] sm:$0xff]
    %v4717 = vld [vmem:[#allocation14 + $0x30] sm:$0xff]
    %v4718 = vld [vmem:[#allocation14 + $0x38] sm:$0xff]
    %v4719 = vld [vmem:[#allocation14 + $0x40] sm:$0xff]
    %v4720 = vld [vmem:[#allocation14 + $0x48] sm:$0xff]
    %v4721 = vld [vmem:[#allocation14 + $0x50] sm:$0xff]
    %v4722 = vld [vmem:[#allocation14 + $0x58] sm:$0xff]
    %v4723 = vld [vmem:[#allocation14 + $0x60] sm:$0xff]
    %v4724 = vld [vmem:[#allocation14 + $0x68] sm:$0xff]
    %v4725 = vld [vmem:[#allocation14 + $0x70] sm:$0xff]
    %v4726 = vld [vmem:[#allocation14 + $0x78] sm:$0xff]
    %v4727 = vld [vmem:[#allocation14 + $0x80] sm:$0xff]
    %v4728 = vld [vmem:[#allocation14 + $0x88] sm:$0xff]
    %v4729 = vld [vmem:[#allocation14 + $0x90] sm:$0xff]
    %v4730 = vld [vmem:[#allocation14 + $0x98] sm:$0xff]
    %v4731 = vld [vmem:[#allocation14 + $0xa0] sm:$0xff]
    %v4732 = vld [vmem:[#allocation14 + $0xa8] sm:$0xff]
    %v4733 = vld [vmem:[#allocation14 + $0xb0] sm:$0xff]
    %v4734 = vld [vmem:[#allocation14 + $0xb8] sm:$0xff]
    %v4735 = vld [vmem:[#allocation14 + $0xc0] sm:$0xff]
    %v4736 = vld [vmem:[#allocation14 + $0xc8] sm:$0xff]
    %v4737 = vld [vmem:[#allocation14 + $0xd0] sm:$0xff]
    %v4738 = vld [vmem:[#allocation14 + $0xd8] sm:$0xff]
    %v4739 = vld [vmem:[#allocation14 + $0xe0] sm:$0xff]
    %v4740 = vld [vmem:[#allocation14 + $0xe8] sm:$0xff]
    %v4741 = vld [vmem:[#allocation14 + $0xf0] sm:$0xff]
    %v4742 = vld [vmem:[#allocation14 + $0xf8] sm:$0xff]
    %v4743 = vld [vmem:[#allocation15] sm:$0x3]
    %v4776 = vunpack.c.l.b16 %v4711
    %v4777 = vunpack.c.h.b16 %v4711
    %v4778 = vunpack.c.l.b16 %v4712
    %v4779 = vunpack.c.h.b16 %v4712
    %v4780 = vunpack.c.l.b16 %v4713
    %v4781 = vunpack.c.h.b16 %v4713
    %v4782 = vunpack.c.l.b16 %v4714
    %v4783 = vunpack.c.h.b16 %v4714
    %v4784 = vunpack.c.l.b16 %v4715
    %v4785 = vunpack.c.h.b16 %v4715
    %v4786 = vunpack.c.l.b16 %v4716
    %v4787 = vunpack.c.h.b16 %v4716
    %v4788 = vunpack.c.l.b16 %v4717
    %v4789 = vunpack.c.h.b16 %v4717
    %v4790 = vunpack.c.l.b16 %v4718
    %v4791 = vunpack.c.h.b16 %v4718
    %v4792 = vunpack.c.l.b16 %v4719
    %v4793 = vunpack.c.h.b16 %v4719
    %v4794 = vunpack.c.l.b16 %v4720
    %v4795 = vunpack.c.h.b16 %v4720
    %v4796 = vunpack.c.l.b16 %v4721
    %v4797 = vunpack.c.h.b16 %v4721
    %v4798 = vunpack.c.l.b16 %v4722
    %v4799 = vunpack.c.h.b16 %v4722
    %v4800 = vunpack.c.l.b16 %v4723
    %v4801 = vunpack.c.h.b16 %v4723
    %v4802 = vunpack.c.l.b16 %v4724
    %v4803 = vunpack.c.h.b16 %v4724
    %v4804 = vunpack.c.l.b16 %v4725
    %v4805 = vunpack.c.h.b16 %v4725
    %v4806 = vunpack.c.l.b16 %v4726
    %v4807 = vunpack.c.h.b16 %v4726
    %v4808 = vunpack.c.l.b16 %v4727
    %v4809 = vunpack.c.h.b16 %v4727
    %v4810 = vunpack.c.l.b16 %v4728
    %v4811 = vunpack.c.h.b16 %v4728
    %v4812 = vunpack.c.l.b16 %v4729
    %v4813 = vunpack.c.h.b16 %v4729
    %v4814 = vunpack.c.l.b16 %v4730
    %v4815 = vunpack.c.h.b16 %v4730
    %v4816 = vunpack.c.l.b16 %v4731
    %v4817 = vunpack.c.h.b16 %v4731
    %v4818 = vunpack.c.l.b16 %v4732
    %v4819 = vunpack.c.h.b16 %v4732
    %v4820 = vunpack.c.l.b16 %v4733
    %v4821 = vunpack.c.h.b16 %v4733
    %v4822 = vunpack.c.l.b16 %v4734
    %v4823 = vunpack.c.h.b16 %v4734
    %v4824 = vunpack.c.l.b16 %v4735
    %v4825 = vunpack.c.h.b16 %v4735
    %v4826 = vunpack.c.l.b16 %v4736
    %v4827 = vunpack.c.h.b16 %v4736
    %v4828 = vunpack.c.l.b16 %v4737
    %v4829 = vunpack.c.h.b16 %v4737
    %v4830 = vunpack.c.l.b16 %v4738
    %v4831 = vunpack.c.h.b16 %v4738
    %v4832 = vunpack.c.l.b16 %v4739
    %v4833 = vunpack.c.h.b16 %v4739
    %v4834 = vunpack.c.l.b16 %v4740
    %v4835 = vunpack.c.h.b16 %v4740
    %v4836 = vunpack.c.l.b16 %v4741
    %v4837 = vunpack.c.h.b16 %v4741
    %v4838 = vunpack.c.l.b16 %v4742
    %v4839 = vunpack.c.h.b16 %v4742
    %v4840 = vpack.c.b16 %v4778, %v4776
    %v4841 = vpack.c.b16 %v4779, %v4777
    %v4842 = vpack.c.b16 %v4782, %v4780
    %v4843 = vpack.c.b16 %v4783, %v4781
    %v4844 = vpack.c.b16 %v4786, %v4784
    %v4845 = vpack.c.b16 %v4787, %v4785
    %v4846 = vpack.c.b16 %v4790, %v4788
    %v4847 = vpack.c.b16 %v4791, %v4789
    %v4848 = vpack.c.b16 %v4794, %v4792
    %v4849 = vpack.c.b16 %v4795, %v4793
    %v4850 = vpack.c.b16 %v4798, %v4796
    %v4851 = vpack.c.b16 %v4799, %v4797
    %v4852 = vpack.c.b16 %v4802, %v4800
    %v4853 = vpack.c.b16 %v4803, %v4801
    %v4854 = vpack.c.b16 %v4806, %v4804
    %v4855 = vpack.c.b16 %v4807, %v4805
    %v4856 = vpack.c.b16 %v4810, %v4808
    %v4857 = vpack.c.b16 %v4811, %v4809
    %v4858 = vpack.c.b16 %v4814, %v4812
    %v4859 = vpack.c.b16 %v4815, %v4813
    %v4860 = vpack.c.b16 %v4818, %v4816
    %v4861 = vpack.c.b16 %v4819, %v4817
    %v4862 = vpack.c.b16 %v4822, %v4820
    %v4863 = vpack.c.b16 %v4823, %v4821
    %v4864 = vpack.c.b16 %v4826, %v4824
    %v4865 = vpack.c.b16 %v4827, %v4825
    %v4866 = vpack.c.b16 %v4830, %v4828
    %v4867 = vpack.c.b16 %v4831, %v4829
    %v4868 = vpack.c.b16 %v4834, %v4832
    %v4869 = vpack.c.b16 %v4835, %v4833
    %v4870 = vpack.c.b16 %v4838, %v4836
    %v4871 = vpack.c.b16 %v4839, %v4837
    %v4905 = vperm.slane %v4743, 0
    %v4906 = vperm.slane %v4743, 1
    %4909 = vmatpush.bf16.msra.mxu0 %v4854
    %4910 = vmatpush.bf16.msra.mxu0 %v4852
    %4911 = vmatpush.bf16.msra.mxu0 %v4850
    %4912 = vmatpush.bf16.msra.mxu0 %v4848
    %4913 = vmatpush.bf16.msra.mxu0 %v4846
    %4914 = vmatpush.bf16.msra.mxu0 %v4844
    %4915 = vmatpush.bf16.msra.mxu0 %v4842
    %4916 = vmatpush.bf16.msra.mxu0 %v4840
    %4917 = vmatmul.bf16.gmra.mxu0 %v3393
    %v4918 = vpop.f32.mrf.mxu0
    %v4919 = vadd.f32 %v4905, %v4918
    %v4920 = vpop.f32.mrf.mxu0
    %4921 = vdwg.mxu0
    %4922 = vmatpush.bf16.msra.mxu0 %v4870
    %4923 = vmatpush.bf16.msra.mxu0 %v4868
    %4924 = vmatpush.bf16.msra.mxu0 %v4866
    %4925 = vmatpush.bf16.msra.mxu0 %v4864
    %4926 = vmatpush.bf16.msra.mxu0 %v4862
    %4927 = vmatpush.bf16.msra.mxu0 %v4860
    %4928 = vmatpush.bf16.msra.mxu0 %v4858
    %4929 = vmatpush.bf16.msra.mxu0 %v4856
    %4930 = vmatmul.bf16.gmra.mxu0 %v3394
    %v4931 = vpop.f32.mrf.mxu0
    %v4932 = vadd.f32 %v4919, %v4931
    %v4933 = vpop.f32.mrf.mxu0
    %4934 = vdwg.mxu0
    %4935 = vmatpush.bf16.msra.mxu0 %v4855
    %4936 = vmatpush.bf16.msra.mxu0 %v4853
    %4937 = vmatpush.bf16.msra.mxu0 %v4851
    %4938 = vmatpush.bf16.msra.mxu0 %v4849
    %4939 = vmatpush.bf16.msra.mxu0 %v4847
    %4940 = vmatpush.bf16.msra.mxu0 %v4845
    %4941 = vmatpush.bf16.msra.mxu0 %v4843
    %4942 = vmatpush.bf16.msra.mxu0 %v4841
    %4943 = vmatmul.bf16.gmra.mxu0 %v3393
    %v4944 = vpop.f32.mrf.mxu0
    %v4945 = vadd.f32 %v4906, %v4944
    %v4946 = vpop.f32.mrf.mxu0
    %4947 = vdwg.mxu0
    %4948 = vmatpush.bf16.msra.mxu0 %v4871
    %4949 = vmatpush.bf16.msra.mxu0 %v4869
    %4950 = vmatpush.bf16.msra.mxu0 %v4867
    %4951 = vmatpush.bf16.msra.mxu0 %v4865
    %4952 = vmatpush.bf16.msra.mxu0 %v4863
    %4953 = vmatpush.bf16.msra.mxu0 %v4861
    %4954 = vmatpush.bf16.msra.mxu0 %v4859
    %4955 = vmatpush.bf16.msra.mxu0 %v4857
    %4956 = vmatmul.bf16.gmra.mxu0 %v3394
    %v4957 = vpop.f32.mrf.mxu0
    %v4958 = vadd.f32 %v4945, %v4957
    %v4959 = vpop.f32.mrf.mxu0
    %4960 = vdwg.mxu0
    %v4961 = vmul.f32 %v4415, %v4932
    %v4962 = vmul.f32 %v4430, %v4958
    %v4963 = vadd.f32 %v4682, %v4961
    %v4964 = vadd.f32 %v4708, %v4962
    %v4965 = vtanh.pop %v4963
    %v4966 = vtanh.pop %v4964
    %v4967 = vsub.f32 1.0, %v4445
    %v4968 = vsub.f32 1.0, %v4460
    %v4969 = vmul.f32 %v4967, %v4965
    %v4970 = vmul.f32 %v4968, %v4966
    %v4971 = vmul.f32 %v4445, %v3373
    %v4972 = vmul.f32 %v4460, %v3374
    %v4973 = vadd.f32 %v4969, %v4971
    %v4974 = vadd.f32 %v4970, %v4972
    %v4977 = vrot.slane %v4974, 7
    %v4978 = vsel %vm1774, %v4973, %v4977
    %s4980 = scalar_lea.vmem [#allocation2], 2
    %4981 = vst.msk [vmem:[%s4980] ss:$8 sm:$0x3] %vm1780, %v4978
    %4982 = vst.msk [vmem:[%s4980] ss:$8 sm:$0x0] %vm1780, %v4978
    %s4983 = scalar_lea.vmem [#allocation3], 3
    %v4984 = vld [vmem:[%s4983] ss:$8 sm:$0x3]
    %v4985 = vmax.f32 %v4984, 0.0
    %v4987 = vperm.slane %v4985, 0
    %v4988 = vperm.slane %v4985, 1
    %v4991 = vpack.c.bf16 %v4987, %v4987
    %v4992 = vpack.c.bf16 %v4988, %v4988
    %v4993 = vpack.c.bf16 %v4973, %v4973
    %v4994 = vpack.c.bf16 %v4974, %v4974
    %v4995 = vld [vmem:[#allocation8] sm:$0xff]
    %v4996 = vld [vmem:[#allocation8 + $0x8] sm:$0xff]
    %v4997 = vld [vmem:[#allocation8 + $0x10] sm:$0xff]
    %v4998 = vld [vmem:[#allocation8 + $0x18] sm:$0xff]
    %v4999 = vld [vmem:[#allocation8 + $0x20] sm:$0xff]
    %v5000 = vld [vmem:[#allocation8 + $0x28] sm:$0xff]
    %v5001 = vld [vmem:[#allocation8 + $0x30] sm:$0xff]
    %v5002 = vld [vmem:[#allocation8 + $0x38] sm:$0xff]
    %v5003 = vld [vmem:[#allocation8 + $0x40] sm:$0xff]
    %v5004 = vld [vmem:[#allocation8 + $0x48] sm:$0xff]
    %v5005 = vld [vmem:[#allocation8 + $0x50] sm:$0xff]
    %v5006 = vld [vmem:[#allocation8 + $0x58] sm:$0xff]
    %v5007 = vld [vmem:[#allocation8 + $0x60] sm:$0xff]
    %v5008 = vld [vmem:[#allocation8 + $0x68] sm:$0xff]
    %v5009 = vld [vmem:[#allocation8 + $0x70] sm:$0xff]
    %v5010 = vld [vmem:[#allocation8 + $0x78] sm:$0xff]
    %v5011 = vld [vmem:[#allocation8 + $0x80] sm:$0xff]
    %v5012 = vld [vmem:[#allocation8 + $0x88] sm:$0xff]
    %v5013 = vld [vmem:[#allocation8 + $0x90] sm:$0xff]
    %v5014 = vld [vmem:[#allocation8 + $0x98] sm:$0xff]
    %v5015 = vld [vmem:[#allocation8 + $0xa0] sm:$0xff]
    %v5016 = vld [vmem:[#allocation8 + $0xa8] sm:$0xff]
    %v5017 = vld [vmem:[#allocation8 + $0xb0] sm:$0xff]
    %v5018 = vld [vmem:[#allocation8 + $0xb8] sm:$0xff]
    %v5019 = vld [vmem:[#allocation8 + $0xc0] sm:$0xff]
    %v5020 = vld [vmem:[#allocation8 + $0xc8] sm:$0xff]
    %v5021 = vld [vmem:[#allocation8 + $0xd0] sm:$0xff]
    %v5022 = vld [vmem:[#allocation8 + $0xd8] sm:$0xff]
    %v5023 = vld [vmem:[#allocation8 + $0xe0] sm:$0xff]
    %v5024 = vld [vmem:[#allocation8 + $0xe8] sm:$0xff]
    %v5025 = vld [vmem:[#allocation8 + $0xf0] sm:$0xff]
    %v5026 = vld [vmem:[#allocation8 + $0xf8] sm:$0xff]
    %v5027 = vld [vmem:[#allocation8 + $0x100] sm:$0xff]
    %v5028 = vld [vmem:[#allocation8 + $0x108] sm:$0xff]
    %v5029 = vld [vmem:[#allocation8 + $0x110] sm:$0xff]
    %v5030 = vld [vmem:[#allocation8 + $0x118] sm:$0xff]
    %v5031 = vld [vmem:[#allocation8 + $0x120] sm:$0xff]
    %v5032 = vld [vmem:[#allocation8 + $0x128] sm:$0xff]
    %v5033 = vld [vmem:[#allocation8 + $0x130] sm:$0xff]
    %v5034 = vld [vmem:[#allocation8 + $0x138] sm:$0xff]
    %v5035 = vld [vmem:[#allocation8 + $0x140] sm:$0xff]
    %v5036 = vld [vmem:[#allocation8 + $0x148] sm:$0xff]
    %v5037 = vld [vmem:[#allocation8 + $0x150] sm:$0xff]
    %v5038 = vld [vmem:[#allocation8 + $0x158] sm:$0xff]
    %v5039 = vld [vmem:[#allocation8 + $0x160] sm:$0xff]
    %v5040 = vld [vmem:[#allocation8 + $0x168] sm:$0xff]
    %v5041 = vld [vmem:[#allocation8 + $0x170] sm:$0xff]
    %v5042 = vld [vmem:[#allocation8 + $0x178] sm:$0xff]
    %v5043 = vld [vmem:[#allocation8 + $0x180] sm:$0xff]
    %v5044 = vld [vmem:[#allocation8 + $0x188] sm:$0xff]
    %v5045 = vld [vmem:[#allocation8 + $0x190] sm:$0xff]
    %v5046 = vld [vmem:[#allocation8 + $0x198] sm:$0xff]
    %v5047 = vld [vmem:[#allocation8 + $0x1a0] sm:$0xff]
    %v5048 = vld [vmem:[#allocation8 + $0x1a8] sm:$0xff]
    %v5049 = vld [vmem:[#allocation8 + $0x1b0] sm:$0xff]
    %v5050 = vld [vmem:[#allocation8 + $0x1b8] sm:$0xff]
    %v5051 = vld [vmem:[#allocation8 + $0x1c0] sm:$0xff]
    %v5052 = vld [vmem:[#allocation8 + $0x1c8] sm:$0xff]
    %v5053 = vld [vmem:[#allocation8 + $0x1d0] sm:$0xff]
    %v5054 = vld [vmem:[#allocation8 + $0x1d8] sm:$0xff]
    %v5055 = vld [vmem:[#allocation8 + $0x1e0] sm:$0xff]
    %v5056 = vld [vmem:[#allocation8 + $0x1e8] sm:$0xff]
    %v5057 = vld [vmem:[#allocation8 + $0x1f0] sm:$0xff]
    %v5058 = vld [vmem:[#allocation8 + $0x1f8] sm:$0xff]
    %v5059 = vld [vmem:[#allocation9] sm:$0xff]
    %v5060 = vld [vmem:[#allocation9 + $0x8] sm:$0xff]
    %v5061 = vld [vmem:[#allocation9 + $0x10] sm:$0xff]
    %v5062 = vld [vmem:[#allocation9 + $0x18] sm:$0xff]
    %v5063 = vld [vmem:[#allocation9 + $0x20] sm:$0xff]
    %v5064 = vld [vmem:[#allocation9 + $0x28] sm:$0xff]
    %v5065 = vld [vmem:[#allocation9 + $0x30] sm:$0xff]
    %v5066 = vld [vmem:[#allocation9 + $0x38] sm:$0xff]
    %v5067 = vld [vmem:[#allocation9 + $0x40] sm:$0xff]
    %v5068 = vld [vmem:[#allocation9 + $0x48] sm:$0xff]
    %v5069 = vld [vmem:[#allocation9 + $0x50] sm:$0xff]
    %v5070 = vld [vmem:[#allocation9 + $0x58] sm:$0xff]
    %v5071 = vld [vmem:[#allocation9 + $0x60] sm:$0xff]
    %v5072 = vld [vmem:[#allocation9 + $0x68] sm:$0xff]
    %v5073 = vld [vmem:[#allocation9 + $0x70] sm:$0xff]
    %v5074 = vld [vmem:[#allocation9 + $0x78] sm:$0xff]
    %v5075 = vld [vmem:[#allocation9 + $0x80] sm:$0xff]
    %v5076 = vld [vmem:[#allocation9 + $0x88] sm:$0xff]
    %v5077 = vld [vmem:[#allocation9 + $0x90] sm:$0xff]
    %v5078 = vld [vmem:[#allocation9 + $0x98] sm:$0xff]
    %v5079 = vld [vmem:[#allocation9 + $0xa0] sm:$0xff]
    %v5080 = vld [vmem:[#allocation9 + $0xa8] sm:$0xff]
    %v5081 = vld [vmem:[#allocation9 + $0xb0] sm:$0xff]
    %v5082 = vld [vmem:[#allocation9 + $0xb8] sm:$0xff]
    %v5083 = vld [vmem:[#allocation9 + $0xc0] sm:$0xff]
    %v5084 = vld [vmem:[#allocation9 + $0xc8] sm:$0xff]
    %v5085 = vld [vmem:[#allocation9 + $0xd0] sm:$0xff]
    %v5086 = vld [vmem:[#allocation9 + $0xd8] sm:$0xff]
    %v5087 = vld [vmem:[#allocation9 + $0xe0] sm:$0xff]
    %v5088 = vld [vmem:[#allocation9 + $0xe8] sm:$0xff]
    %v5089 = vld [vmem:[#allocation9 + $0xf0] sm:$0xff]
    %v5090 = vld [vmem:[#allocation9 + $0xf8] sm:$0xff]
    %v5091 = vld [vmem:[#allocation9 + $0x100] sm:$0xff]
    %v5092 = vld [vmem:[#allocation9 + $0x108] sm:$0xff]
    %v5093 = vld [vmem:[#allocation9 + $0x110] sm:$0xff]
    %v5094 = vld [vmem:[#allocation9 + $0x118] sm:$0xff]
    %v5095 = vld [vmem:[#allocation9 + $0x120] sm:$0xff]
    %v5096 = vld [vmem:[#allocation9 + $0x128] sm:$0xff]
    %v5097 = vld [vmem:[#allocation9 + $0x130] sm:$0xff]
    %v5098 = vld [vmem:[#allocation9 + $0x138] sm:$0xff]
    %v5099 = vld [vmem:[#allocation9 + $0x140] sm:$0xff]
    %v5100 = vld [vmem:[#allocation9 + $0x148] sm:$0xff]
    %v5101 = vld [vmem:[#allocation9 + $0x150] sm:$0xff]
    %v5102 = vld [vmem:[#allocation9 + $0x158] sm:$0xff]
    %v5103 = vld [vmem:[#allocation9 + $0x160] sm:$0xff]
    %v5104 = vld [vmem:[#allocation9 + $0x168] sm:$0xff]
    %v5105 = vld [vmem:[#allocation9 + $0x170] sm:$0xff]
    %v5106 = vld [vmem:[#allocation9 + $0x178] sm:$0xff]
    %v5107 = vld [vmem:[#allocation9 + $0x180] sm:$0xff]
    %v5108 = vld [vmem:[#allocation9 + $0x188] sm:$0xff]
    %v5109 = vld [vmem:[#allocation9 + $0x190] sm:$0xff]
    %v5110 = vld [vmem:[#allocation9 + $0x198] sm:$0xff]
    %v5111 = vld [vmem:[#allocation9 + $0x1a0] sm:$0xff]
    %v5112 = vld [vmem:[#allocation9 + $0x1a8] sm:$0xff]
    %v5113 = vld [vmem:[#allocation9 + $0x1b0] sm:$0xff]
    %v5114 = vld [vmem:[#allocation9 + $0x1b8] sm:$0xff]
    %v5115 = vld [vmem:[#allocation9 + $0x1c0] sm:$0xff]
    %v5116 = vld [vmem:[#allocation9 + $0x1c8] sm:$0xff]
    %v5117 = vld [vmem:[#allocation9 + $0x1d0] sm:$0xff]
    %v5118 = vld [vmem:[#allocation9 + $0x1d8] sm:$0xff]
    %v5119 = vld [vmem:[#allocation9 + $0x1e0] sm:$0xff]
    %v5120 = vld [vmem:[#allocation9 + $0x1e8] sm:$0xff]
    %v5121 = vld [vmem:[#allocation9 + $0x1f0] sm:$0xff]
    %v5122 = vld [vmem:[#allocation9 + $0x1f8] sm:$0xff]
    %v5187 = vunpack.c.l.b16 %v5059
    %v5188 = vunpack.c.h.b16 %v5059
    %v5189 = vunpack.c.l.b16 %v5060
    %v5190 = vunpack.c.h.b16 %v5060
    %v5191 = vunpack.c.l.b16 %v5061
    %v5192 = vunpack.c.h.b16 %v5061
    %v5193 = vunpack.c.l.b16 %v5062
    %v5194 = vunpack.c.h.b16 %v5062
    %v5195 = vunpack.c.l.b16 %v5063
    %v5196 = vunpack.c.h.b16 %v5063
    %v5197 = vunpack.c.l.b16 %v5064
    %v5198 = vunpack.c.h.b16 %v5064
    %v5199 = vunpack.c.l.b16 %v5065
    %v5200 = vunpack.c.h.b16 %v5065
    %v5201 = vunpack.c.l.b16 %v5066
    %v5202 = vunpack.c.h.b16 %v5066
    %v5203 = vunpack.c.l.b16 %v5067
    %v5204 = vunpack.c.h.b16 %v5067
    %v5205 = vunpack.c.l.b16 %v5068
    %v5206 = vunpack.c.h.b16 %v5068
    %v5207 = vunpack.c.l.b16 %v5069
    %v5208 = vunpack.c.h.b16 %v5069
    %v5209 = vunpack.c.l.b16 %v5070
    %v5210 = vunpack.c.h.b16 %v5070
    %v5211 = vunpack.c.l.b16 %v5071
    %v5212 = vunpack.c.h.b16 %v5071
    %v5213 = vunpack.c.l.b16 %v5072
    %v5214 = vunpack.c.h.b16 %v5072
    %v5215 = vunpack.c.l.b16 %v5073
    %v5216 = vunpack.c.h.b16 %v5073
    %v5217 = vunpack.c.l.b16 %v5074
    %v5218 = vunpack.c.h.b16 %v5074
    %v5219 = vunpack.c.l.b16 %v5075
    %v5220 = vunpack.c.h.b16 %v5075
    %v5221 = vunpack.c.l.b16 %v5076
    %v5222 = vunpack.c.h.b16 %v5076
    %v5223 = vunpack.c.l.b16 %v5077
    %v5224 = vunpack.c.h.b16 %v5077
    %v5225 = vunpack.c.l.b16 %v5078
    %v5226 = vunpack.c.h.b16 %v5078
    %v5227 = vunpack.c.l.b16 %v5079
    %v5228 = vunpack.c.h.b16 %v5079
    %v5229 = vunpack.c.l.b16 %v5080
    %v5230 = vunpack.c.h.b16 %v5080
    %v5231 = vunpack.c.l.b16 %v5081
    %v5232 = vunpack.c.h.b16 %v5081
    %v5233 = vunpack.c.l.b16 %v5082
    %v5234 = vunpack.c.h.b16 %v5082
    %v5235 = vunpack.c.l.b16 %v5083
    %v5236 = vunpack.c.h.b16 %v5083
    %v5237 = vunpack.c.l.b16 %v5084
    %v5238 = vunpack.c.h.b16 %v5084
    %v5239 = vunpack.c.l.b16 %v5085
    %v5240 = vunpack.c.h.b16 %v5085
    %v5241 = vunpack.c.l.b16 %v5086
    %v5242 = vunpack.c.h.b16 %v5086
    %v5243 = vunpack.c.l.b16 %v5087
    %v5244 = vunpack.c.h.b16 %v5087
    %v5245 = vunpack.c.l.b16 %v5088
    %v5246 = vunpack.c.h.b16 %v5088
    %v5247 = vunpack.c.l.b16 %v5089
    %v5248 = vunpack.c.h.b16 %v5089
    %v5249 = vunpack.c.l.b16 %v5090
    %v5250 = vunpack.c.h.b16 %v5090
    %v5251 = vunpack.c.l.b16 %v5091
    %v5252 = vunpack.c.h.b16 %v5091
    %v5253 = vunpack.c.l.b16 %v5092
    %v5254 = vunpack.c.h.b16 %v5092
    %v5255 = vunpack.c.l.b16 %v5093
    %v5256 = vunpack.c.h.b16 %v5093
    %v5257 = vunpack.c.l.b16 %v5094
    %v5258 = vunpack.c.h.b16 %v5094
    %v5259 = vunpack.c.l.b16 %v5095
    %v5260 = vunpack.c.h.b16 %v5095
    %v5261 = vunpack.c.l.b16 %v5096
    %v5262 = vunpack.c.h.b16 %v5096
    %v5263 = vunpack.c.l.b16 %v5097
    %v5264 = vunpack.c.h.b16 %v5097
    %v5265 = vunpack.c.l.b16 %v5098
    %v5266 = vunpack.c.h.b16 %v5098
    %v5267 = vunpack.c.l.b16 %v5099
    %v5268 = vunpack.c.h.b16 %v5099
    %v5269 = vunpack.c.l.b16 %v5100
    %v5270 = vunpack.c.h.b16 %v5100
    %v5271 = vunpack.c.l.b16 %v5101
    %v5272 = vunpack.c.h.b16 %v5101
    %v5273 = vunpack.c.l.b16 %v5102
    %v5274 = vunpack.c.h.b16 %v5102
    %v5275 = vunpack.c.l.b16 %v5103
    %v5276 = vunpack.c.h.b16 %v5103
    %v5277 = vunpack.c.l.b16 %v5104
    %v5278 = vunpack.c.h.b16 %v5104
    %v5279 = vunpack.c.l.b16 %v5105
    %v5280 = vunpack.c.h.b16 %v5105
    %v5281 = vunpack.c.l.b16 %v5106
    %v5282 = vunpack.c.h.b16 %v5106
    %v5283 = vunpack.c.l.b16 %v5107
    %v5284 = vunpack.c.h.b16 %v5107
    %v5285 = vunpack.c.l.b16 %v5108
    %v5286 = vunpack.c.h.b16 %v5108
    %v5287 = vunpack.c.l.b16 %v5109
    %v5288 = vunpack.c.h.b16 %v5109
    %v5289 = vunpack.c.l.b16 %v5110
    %v5290 = vunpack.c.h.b16 %v5110
    %v5291 = vunpack.c.l.b16 %v5111
    %v5292 = vunpack.c.h.b16 %v5111
    %v5293 = vunpack.c.l.b16 %v5112
    %v5294 = vunpack.c.h.b16 %v5112
    %v5295 = vunpack.c.l.b16 %v5113
    %v5296 = vunpack.c.h.b16 %v5113
    %v5297 = vunpack.c.l.b16 %v5114
    %v5298 = vunpack.c.h.b16 %v5114
    %v5299 = vunpack.c.l.b16 %v5115
    %v5300 = vunpack.c.h.b16 %v5115
    %v5301 = vunpack.c.l.b16 %v5116
    %v5302 = vunpack.c.h.b16 %v5116
    %v5303 = vunpack.c.l.b16 %v5117
    %v5304 = vunpack.c.h.b16 %v5117
    %v5305 = vunpack.c.l.b16 %v5118
    %v5306 = vunpack.c.h.b16 %v5118
    %v5307 = vunpack.c.l.b16 %v5119
    %v5308 = vunpack.c.h.b16 %v5119
    %v5309 = vunpack.c.l.b16 %v5120
    %v5310 = vunpack.c.h.b16 %v5120
    %v5311 = vunpack.c.l.b16 %v5121
    %v5312 = vunpack.c.h.b16 %v5121
    %v5313 = vunpack.c.l.b16 %v5122
    %v5314 = vunpack.c.h.b16 %v5122
    %v5315 = vpack.c.b16 %v5191, %v5187
    %v5316 = vpack.c.b16 %v5192, %v5188
    %v5317 = vpack.c.b16 %v5193, %v5189
    %v5318 = vpack.c.b16 %v5194, %v5190
    %v5319 = vpack.c.b16 %v5199, %v5195
    %v5320 = vpack.c.b16 %v5200, %v5196
    %v5321 = vpack.c.b16 %v5201, %v5197
    %v5322 = vpack.c.b16 %v5202, %v5198
    %v5323 = vpack.c.b16 %v5207, %v5203
    %v5324 = vpack.c.b16 %v5208, %v5204
    %v5325 = vpack.c.b16 %v5209, %v5205
    %v5326 = vpack.c.b16 %v5210, %v5206
    %v5327 = vpack.c.b16 %v5215, %v5211
    %v5328 = vpack.c.b16 %v5216, %v5212
    %v5329 = vpack.c.b16 %v5217, %v5213
    %v5330 = vpack.c.b16 %v5218, %v5214
    %v5331 = vpack.c.b16 %v5223, %v5219
    %v5332 = vpack.c.b16 %v5224, %v5220
    %v5333 = vpack.c.b16 %v5225, %v5221
    %v5334 = vpack.c.b16 %v5226, %v5222
    %v5335 = vpack.c.b16 %v5231, %v5227
    %v5336 = vpack.c.b16 %v5232, %v5228
    %v5337 = vpack.c.b16 %v5233, %v5229
    %v5338 = vpack.c.b16 %v5234, %v5230
    %v5339 = vpack.c.b16 %v5239, %v5235
    %v5340 = vpack.c.b16 %v5240, %v5236
    %v5341 = vpack.c.b16 %v5241, %v5237
    %v5342 = vpack.c.b16 %v5242, %v5238
    %v5343 = vpack.c.b16 %v5247, %v5243
    %v5344 = vpack.c.b16 %v5248, %v5244
    %v5345 = vpack.c.b16 %v5249, %v5245
    %v5346 = vpack.c.b16 %v5250, %v5246
    %v5347 = vpack.c.b16 %v5255, %v5251
    %v5348 = vpack.c.b16 %v5256, %v5252
    %v5349 = vpack.c.b16 %v5257, %v5253
    %v5350 = vpack.c.b16 %v5258, %v5254
    %v5351 = vpack.c.b16 %v5263, %v5259
    %v5352 = vpack.c.b16 %v5264, %v5260
    %v5353 = vpack.c.b16 %v5265, %v5261
    %v5354 = vpack.c.b16 %v5266, %v5262
    %v5355 = vpack.c.b16 %v5271, %v5267
    %v5356 = vpack.c.b16 %v5272, %v5268
    %v5357 = vpack.c.b16 %v5273, %v5269
    %v5358 = vpack.c.b16 %v5274, %v5270
    %v5359 = vpack.c.b16 %v5279, %v5275
    %v5360 = vpack.c.b16 %v5280, %v5276
    %v5361 = vpack.c.b16 %v5281, %v5277
    %v5362 = vpack.c.b16 %v5282, %v5278
    %v5363 = vpack.c.b16 %v5287, %v5283
    %v5364 = vpack.c.b16 %v5288, %v5284
    %v5365 = vpack.c.b16 %v5289, %v5285
    %v5366 = vpack.c.b16 %v5290, %v5286
    %v5367 = vpack.c.b16 %v5295, %v5291
    %v5368 = vpack.c.b16 %v5296, %v5292
    %v5369 = vpack.c.b16 %v5297, %v5293
    %v5370 = vpack.c.b16 %v5298, %v5294
    %v5371 = vpack.c.b16 %v5303, %v5299
    %v5372 = vpack.c.b16 %v5304, %v5300
    %v5373 = vpack.c.b16 %v5305, %v5301
    %v5374 = vpack.c.b16 %v5306, %v5302
    %v5375 = vpack.c.b16 %v5311, %v5307
    %v5376 = vpack.c.b16 %v5312, %v5308
    %v5377 = vpack.c.b16 %v5313, %v5309
    %v5378 = vpack.c.b16 %v5314, %v5310
    %5443 = vmatpush.bf16.msra.mxu0 %v5343
    %5444 = vmatpush.bf16.msra.mxu0 %v5339
    %5445 = vmatpush.bf16.msra.mxu0 %v5335
    %5446 = vmatpush.bf16.msra.mxu0 %v5331
    %5447 = vmatpush.bf16.msra.mxu0 %v5327
    %5448 = vmatpush.bf16.msra.mxu0 %v5323
    %5449 = vmatpush.bf16.msra.mxu0 %v5319
    %5450 = vmatpush.bf16.msra.mxu0 %v5315
    %5451 = vmatmul.bf16.gmra.mxu0 %v4993
    %v5452 = vpop.f32.mrf.mxu0
    %v5453 = vadd.f32 0.0, %v5452
    %v5454 = vpop.f32.mrf.mxu0
    %5455 = vdwg.mxu0
    %5456 = vmatpush.bf16.msra.mxu0 %v5375
    %5457 = vmatpush.bf16.msra.mxu0 %v5371
    %5458 = vmatpush.bf16.msra.mxu0 %v5367
    %5459 = vmatpush.bf16.msra.mxu0 %v5363
    %5460 = vmatpush.bf16.msra.mxu0 %v5359
    %5461 = vmatpush.bf16.msra.mxu0 %v5355
    %5462 = vmatpush.bf16.msra.mxu0 %v5351
    %5463 = vmatpush.bf16.msra.mxu0 %v5347
    %5464 = vmatmul.bf16.gmra.mxu0 %v4994
    %v5465 = vpop.f32.mrf.mxu0
    %v5466 = vadd.f32 %v5453, %v5465
    %v5467 = vpop.f32.mrf.mxu0
    %5468 = vdwg.mxu0
    %5469 = vmatpush.bf16.msra.mxu0 %v5344
    %5470 = vmatpush.bf16.msra.mxu0 %v5340
    %5471 = vmatpush.bf16.msra.mxu0 %v5336
    %5472 = vmatpush.bf16.msra.mxu0 %v5332
    %5473 = vmatpush.bf16.msra.mxu0 %v5328
    %5474 = vmatpush.bf16.msra.mxu0 %v5324
    %5475 = vmatpush.bf16.msra.mxu0 %v5320
    %5476 = vmatpush.bf16.msra.mxu0 %v5316
    %5477 = vmatmul.bf16.gmra.mxu0 %v4993
    %v5478 = vpop.f32.mrf.mxu0
    %v5479 = vadd.f32 0.0, %v5478
    %v5480 = vpop.f32.mrf.mxu0
    %5481 = vdwg.mxu0
    %5482 = vmatpush.bf16.msra.mxu0 %v5376
    %5483 = vmatpush.bf16.msra.mxu0 %v5372
    %5484 = vmatpush.bf16.msra.mxu0 %v5368
    %5485 = vmatpush.bf16.msra.mxu0 %v5364
    %5486 = vmatpush.bf16.msra.mxu0 %v5360
    %5487 = vmatpush.bf16.msra.mxu0 %v5356
    %5488 = vmatpush.bf16.msra.mxu0 %v5352
    %5489 = vmatpush.bf16.msra.mxu0 %v5348
    %5490 = vmatmul.bf16.gmra.mxu0 %v4994
    %v5491 = vpop.f32.mrf.mxu0
    %v5492 = vadd.f32 %v5479, %v5491
    %v5493 = vpop.f32.mrf.mxu0
    %5494 = vdwg.mxu0
    %5495 = vmatpush.bf16.msra.mxu0 %v5345
    %5496 = vmatpush.bf16.msra.mxu0 %v5341
    %5497 = vmatpush.bf16.msra.mxu0 %v5337
    %5498 = vmatpush.bf16.msra.mxu0 %v5333
    %5499 = vmatpush.bf16.msra.mxu0 %v5329
    %5500 = vmatpush.bf16.msra.mxu0 %v5325
    %5501 = vmatpush.bf16.msra.mxu0 %v5321
    %5502 = vmatpush.bf16.msra.mxu0 %v5317
    %5503 = vmatmul.bf16.gmra.mxu0 %v4993
    %v5504 = vpop.f32.mrf.mxu0
    %v5505 = vadd.f32 0.0, %v5504
    %v5506 = vpop.f32.mrf.mxu0
    %5507 = vdwg.mxu0
    %5508 = vmatpush.bf16.msra.mxu0 %v5377
    %5509 = vmatpush.bf16.msra.mxu0 %v5373
    %5510 = vmatpush.bf16.msra.mxu0 %v5369
    %5511 = vmatpush.bf16.msra.mxu0 %v5365
    %5512 = vmatpush.bf16.msra.mxu0 %v5361
    %5513 = vmatpush.bf16.msra.mxu0 %v5357
    %5514 = vmatpush.bf16.msra.mxu0 %v5353
    %5515 = vmatpush.bf16.msra.mxu0 %v5349
    %5516 = vmatmul.bf16.gmra.mxu0 %v4994
    %v5517 = vpop.f32.mrf.mxu0
    %v5518 = vadd.f32 %v5505, %v5517
    %v5519 = vpop.f32.mrf.mxu0
    %5520 = vdwg.mxu0
    %5521 = vmatpush.bf16.msra.mxu0 %v5346
    %5522 = vmatpush.bf16.msra.mxu0 %v5342
    %5523 = vmatpush.bf16.msra.mxu0 %v5338
    %5524 = vmatpush.bf16.msra.mxu0 %v5334
    %5525 = vmatpush.bf16.msra.mxu0 %v5330
    %5526 = vmatpush.bf16.msra.mxu0 %v5326
    %5527 = vmatpush.bf16.msra.mxu0 %v5322
    %5528 = vmatpush.bf16.msra.mxu0 %v5318
    %5529 = vmatmul.bf16.gmra.mxu0 %v4993
    %v5530 = vpop.f32.mrf.mxu0
    %v5531 = vadd.f32 0.0, %v5530
    %v5532 = vpop.f32.mrf.mxu0
    %5533 = vdwg.mxu0
    %5534 = vmatpush.bf16.msra.mxu0 %v5378
    %5535 = vmatpush.bf16.msra.mxu0 %v5374
    %5536 = vmatpush.bf16.msra.mxu0 %v5370
    %5537 = vmatpush.bf16.msra.mxu0 %v5366
    %5538 = vmatpush.bf16.msra.mxu0 %v5362
    %5539 = vmatpush.bf16.msra.mxu0 %v5358
    %5540 = vmatpush.bf16.msra.mxu0 %v5354
    %5541 = vmatpush.bf16.msra.mxu0 %v5350
    %5542 = vmatmul.bf16.gmra.mxu0 %v4994
    %v5543 = vpop.f32.mrf.mxu0
    %v5544 = vadd.f32 %v5531, %v5543
    %v5545 = vpop.f32.mrf.mxu0
    %5546 = vdwg.mxu0
    %v5611 = vunpack.c.l.b16 %v4995
    %v5612 = vunpack.c.h.b16 %v4995
    %v5613 = vunpack.c.l.b16 %v4996
    %v5614 = vunpack.c.h.b16 %v4996
    %v5615 = vunpack.c.l.b16 %v4997
    %v5616 = vunpack.c.h.b16 %v4997
    %v5617 = vunpack.c.l.b16 %v4998
    %v5618 = vunpack.c.h.b16 %v4998
    %v5619 = vunpack.c.l.b16 %v4999
    %v5620 = vunpack.c.h.b16 %v4999
    %v5621 = vunpack.c.l.b16 %v5000
    %v5622 = vunpack.c.h.b16 %v5000
    %v5623 = vunpack.c.l.b16 %v5001
    %v5624 = vunpack.c.h.b16 %v5001
    %v5625 = vunpack.c.l.b16 %v5002
    %v5626 = vunpack.c.h.b16 %v5002
    %v5627 = vunpack.c.l.b16 %v5003
    %v5628 = vunpack.c.h.b16 %v5003
    %v5629 = vunpack.c.l.b16 %v5004
    %v5630 = vunpack.c.h.b16 %v5004
    %v5631 = vunpack.c.l.b16 %v5005
    %v5632 = vunpack.c.h.b16 %v5005
    %v5633 = vunpack.c.l.b16 %v5006
    %v5634 = vunpack.c.h.b16 %v5006
    %v5635 = vunpack.c.l.b16 %v5007
    %v5636 = vunpack.c.h.b16 %v5007
    %v5637 = vunpack.c.l.b16 %v5008
    %v5638 = vunpack.c.h.b16 %v5008
    %v5639 = vunpack.c.l.b16 %v5009
    %v5640 = vunpack.c.h.b16 %v5009
    %v5641 = vunpack.c.l.b16 %v5010
    %v5642 = vunpack.c.h.b16 %v5010
    %v5643 = vunpack.c.l.b16 %v5011
    %v5644 = vunpack.c.h.b16 %v5011
    %v5645 = vunpack.c.l.b16 %v5012
    %v5646 = vunpack.c.h.b16 %v5012
    %v5647 = vunpack.c.l.b16 %v5013
    %v5648 = vunpack.c.h.b16 %v5013
    %v5649 = vunpack.c.l.b16 %v5014
    %v5650 = vunpack.c.h.b16 %v5014
    %v5651 = vunpack.c.l.b16 %v5015
    %v5652 = vunpack.c.h.b16 %v5015
    %v5653 = vunpack.c.l.b16 %v5016
    %v5654 = vunpack.c.h.b16 %v5016
    %v5655 = vunpack.c.l.b16 %v5017
    %v5656 = vunpack.c.h.b16 %v5017
    %v5657 = vunpack.c.l.b16 %v5018
    %v5658 = vunpack.c.h.b16 %v5018
    %v5659 = vunpack.c.l.b16 %v5019
    %v5660 = vunpack.c.h.b16 %v5019
    %v5661 = vunpack.c.l.b16 %v5020
    %v5662 = vunpack.c.h.b16 %v5020
    %v5663 = vunpack.c.l.b16 %v5021
    %v5664 = vunpack.c.h.b16 %v5021
    %v5665 = vunpack.c.l.b16 %v5022
    %v5666 = vunpack.c.h.b16 %v5022
    %v5667 = vunpack.c.l.b16 %v5023
    %v5668 = vunpack.c.h.b16 %v5023
    %v5669 = vunpack.c.l.b16 %v5024
    %v5670 = vunpack.c.h.b16 %v5024
    %v5671 = vunpack.c.l.b16 %v5025
    %v5672 = vunpack.c.h.b16 %v5025
    %v5673 = vunpack.c.l.b16 %v5026
    %v5674 = vunpack.c.h.b16 %v5026
    %v5675 = vunpack.c.l.b16 %v5027
    %v5676 = vunpack.c.h.b16 %v5027
    %v5677 = vunpack.c.l.b16 %v5028
    %v5678 = vunpack.c.h.b16 %v5028
    %v5679 = vunpack.c.l.b16 %v5029
    %v5680 = vunpack.c.h.b16 %v5029
    %v5681 = vunpack.c.l.b16 %v5030
    %v5682 = vunpack.c.h.b16 %v5030
    %v5683 = vunpack.c.l.b16 %v5031
    %v5684 = vunpack.c.h.b16 %v5031
    %v5685 = vunpack.c.l.b16 %v5032
    %v5686 = vunpack.c.h.b16 %v5032
    %v5687 = vunpack.c.l.b16 %v5033
    %v5688 = vunpack.c.h.b16 %v5033
    %v5689 = vunpack.c.l.b16 %v5034
    %v5690 = vunpack.c.h.b16 %v5034
    %v5691 = vunpack.c.l.b16 %v5035
    %v5692 = vunpack.c.h.b16 %v5035
    %v5693 = vunpack.c.l.b16 %v5036
    %v5694 = vunpack.c.h.b16 %v5036
    %v5695 = vunpack.c.l.b16 %v5037
    %v5696 = vunpack.c.h.b16 %v5037
    %v5697 = vunpack.c.l.b16 %v5038
    %v5698 = vunpack.c.h.b16 %v5038
    %v5699 = vunpack.c.l.b16 %v5039
    %v5700 = vunpack.c.h.b16 %v5039
    %v5701 = vunpack.c.l.b16 %v5040
    %v5702 = vunpack.c.h.b16 %v5040
    %v5703 = vunpack.c.l.b16 %v5041
    %v5704 = vunpack.c.h.b16 %v5041
    %v5705 = vunpack.c.l.b16 %v5042
    %v5706 = vunpack.c.h.b16 %v5042
    %v5707 = vunpack.c.l.b16 %v5043
    %v5708 = vunpack.c.h.b16 %v5043
    %v5709 = vunpack.c.l.b16 %v5044
    %v5710 = vunpack.c.h.b16 %v5044
    %v5711 = vunpack.c.l.b16 %v5045
    %v5712 = vunpack.c.h.b16 %v5045
    %v5713 = vunpack.c.l.b16 %v5046
    %v5714 = vunpack.c.h.b16 %v5046
    %v5715 = vunpack.c.l.b16 %v5047
    %v5716 = vunpack.c.h.b16 %v5047
    %v5717 = vunpack.c.l.b16 %v5048
    %v5718 = vunpack.c.h.b16 %v5048
    %v5719 = vunpack.c.l.b16 %v5049
    %v5720 = vunpack.c.h.b16 %v5049
    %v5721 = vunpack.c.l.b16 %v5050
    %v5722 = vunpack.c.h.b16 %v5050
    %v5723 = vunpack.c.l.b16 %v5051
    %v5724 = vunpack.c.h.b16 %v5051
    %v5725 = vunpack.c.l.b16 %v5052
    %v5726 = vunpack.c.h.b16 %v5052
    %v5727 = vunpack.c.l.b16 %v5053
    %v5728 = vunpack.c.h.b16 %v5053
    %v5729 = vunpack.c.l.b16 %v5054
    %v5730 = vunpack.c.h.b16 %v5054
    %v5731 = vunpack.c.l.b16 %v5055
    %v5732 = vunpack.c.h.b16 %v5055
    %v5733 = vunpack.c.l.b16 %v5056
    %v5734 = vunpack.c.h.b16 %v5056
    %v5735 = vunpack.c.l.b16 %v5057
    %v5736 = vunpack.c.h.b16 %v5057
    %v5737 = vunpack.c.l.b16 %v5058
    %v5738 = vunpack.c.h.b16 %v5058
    %v5739 = vpack.c.b16 %v5615, %v5611
    %v5740 = vpack.c.b16 %v5616, %v5612
    %v5741 = vpack.c.b16 %v5617, %v5613
    %v5742 = vpack.c.b16 %v5618, %v5614
    %v5743 = vpack.c.b16 %v5623, %v5619
    %v5744 = vpack.c.b16 %v5624, %v5620
    %v5745 = vpack.c.b16 %v5625, %v5621
    %v5746 = vpack.c.b16 %v5626, %v5622
    %v5747 = vpack.c.b16 %v5631, %v5627
    %v5748 = vpack.c.b16 %v5632, %v5628
    %v5749 = vpack.c.b16 %v5633, %v5629
    %v5750 = vpack.c.b16 %v5634, %v5630
    %v5751 = vpack.c.b16 %v5639, %v5635
    %v5752 = vpack.c.b16 %v5640, %v5636
    %v5753 = vpack.c.b16 %v5641, %v5637
    %v5754 = vpack.c.b16 %v5642, %v5638
    %v5755 = vpack.c.b16 %v5647, %v5643
    %v5756 = vpack.c.b16 %v5648, %v5644
    %v5757 = vpack.c.b16 %v5649, %v5645
    %v5758 = vpack.c.b16 %v5650, %v5646
    %v5759 = vpack.c.b16 %v5655, %v5651
    %v5760 = vpack.c.b16 %v5656, %v5652
    %v5761 = vpack.c.b16 %v5657, %v5653
    %v5762 = vpack.c.b16 %v5658, %v5654
    %v5763 = vpack.c.b16 %v5663, %v5659
    %v5764 = vpack.c.b16 %v5664, %v5660
    %v5765 = vpack.c.b16 %v5665, %v5661
    %v5766 = vpack.c.b16 %v5666, %v5662
    %v5767 = vpack.c.b16 %v5671, %v5667
    %v5768 = vpack.c.b16 %v5672, %v5668
    %v5769 = vpack.c.b16 %v5673, %v5669
    %v5770 = vpack.c.b16 %v5674, %v5670
    %v5771 = vpack.c.b16 %v5679, %v5675
    %v5772 = vpack.c.b16 %v5680, %v5676
    %v5773 = vpack.c.b16 %v5681, %v5677
    %v5774 = vpack.c.b16 %v5682, %v5678
    %v5775 = vpack.c.b16 %v5687, %v5683
    %v5776 = vpack.c.b16 %v5688, %v5684
    %v5777 = vpack.c.b16 %v5689, %v5685
    %v5778 = vpack.c.b16 %v5690, %v5686
    %v5779 = vpack.c.b16 %v5695, %v5691
    %v5780 = vpack.c.b16 %v5696, %v5692
    %v5781 = vpack.c.b16 %v5697, %v5693
    %v5782 = vpack.c.b16 %v5698, %v5694
    %v5783 = vpack.c.b16 %v5703, %v5699
    %v5784 = vpack.c.b16 %v5704, %v5700
    %v5785 = vpack.c.b16 %v5705, %v5701
    %v5786 = vpack.c.b16 %v5706, %v5702
    %v5787 = vpack.c.b16 %v5711, %v5707
    %v5788 = vpack.c.b16 %v5712, %v5708
    %v5789 = vpack.c.b16 %v5713, %v5709
    %v5790 = vpack.c.b16 %v5714, %v5710
    %v5791 = vpack.c.b16 %v5719, %v5715
    %v5792 = vpack.c.b16 %v5720, %v5716
    %v5793 = vpack.c.b16 %v5721, %v5717
    %v5794 = vpack.c.b16 %v5722, %v5718
    %v5795 = vpack.c.b16 %v5727, %v5723
    %v5796 = vpack.c.b16 %v5728, %v5724
    %v5797 = vpack.c.b16 %v5729, %v5725
    %v5798 = vpack.c.b16 %v5730, %v5726
    %v5799 = vpack.c.b16 %v5735, %v5731
    %v5800 = vpack.c.b16 %v5736, %v5732
    %v5801 = vpack.c.b16 %v5737, %v5733
    %v5802 = vpack.c.b16 %v5738, %v5734
    %5867 = vmatpush.bf16.msra.mxu0 %v5767
    %5868 = vmatpush.bf16.msra.mxu0 %v5763
    %5869 = vmatpush.bf16.msra.mxu0 %v5759
    %5870 = vmatpush.bf16.msra.mxu0 %v5755
    %5871 = vmatpush.bf16.msra.mxu0 %v5751
    %5872 = vmatpush.bf16.msra.mxu0 %v5747
    %5873 = vmatpush.bf16.msra.mxu0 %v5743
    %5874 = vmatpush.bf16.msra.mxu0 %v5739
    %5875 = vmatmul.bf16.gmra.mxu0 %v4991
    %v5876 = vpop.f32.mrf.mxu0
    %v5877 = vadd.f32 %v5466, %v5876
    %v5878 = vpop.f32.mrf.mxu0
    %5879 = vdwg.mxu0
    %5880 = vmatpush.bf16.msra.mxu0 %v5799
    %5881 = vmatpush.bf16.msra.mxu0 %v5795
    %5882 = vmatpush.bf16.msra.mxu0 %v5791
    %5883 = vmatpush.bf16.msra.mxu0 %v5787
    %5884 = vmatpush.bf16.msra.mxu0 %v5783
    %5885 = vmatpush.bf16.msra.mxu0 %v5779
    %5886 = vmatpush.bf16.msra.mxu0 %v5775
    %5887 = vmatpush.bf16.msra.mxu0 %v5771
    %5888 = vmatmul.bf16.gmra.mxu0 %v4992
    %v5889 = vpop.f32.mrf.mxu0
    %v5890 = vadd.f32 %v5877, %v5889
    %v5891 = vpop.f32.mrf.mxu0
    %5892 = vdwg.mxu0
    %5893 = vmatpush.bf16.msra.mxu0 %v5768
    %5894 = vmatpush.bf16.msra.mxu0 %v5764
    %5895 = vmatpush.bf16.msra.mxu0 %v5760
    %5896 = vmatpush.bf16.msra.mxu0 %v5756
    %5897 = vmatpush.bf16.msra.mxu0 %v5752
    %5898 = vmatpush.bf16.msra.mxu0 %v5748
    %5899 = vmatpush.bf16.msra.mxu0 %v5744
    %5900 = vmatpush.bf16.msra.mxu0 %v5740
    %5901 = vmatmul.bf16.gmra.mxu0 %v4991
    %v5902 = vpop.f32.mrf.mxu0
    %v5903 = vadd.f32 %v5492, %v5902
    %v5904 = vpop.f32.mrf.mxu0
    %5905 = vdwg.mxu0
    %5906 = vmatpush.bf16.msra.mxu0 %v5800
    %5907 = vmatpush.bf16.msra.mxu0 %v5796
    %5908 = vmatpush.bf16.msra.mxu0 %v5792
    %5909 = vmatpush.bf16.msra.mxu0 %v5788
    %5910 = vmatpush.bf16.msra.mxu0 %v5784
    %5911 = vmatpush.bf16.msra.mxu0 %v5780
    %5912 = vmatpush.bf16.msra.mxu0 %v5776
    %5913 = vmatpush.bf16.msra.mxu0 %v5772
    %5914 = vmatmul.bf16.gmra.mxu0 %v4992
    %v5915 = vpop.f32.mrf.mxu0
    %v5916 = vadd.f32 %v5903, %v5915
    %v5917 = vpop.f32.mrf.mxu0
    %5918 = vdwg.mxu0
    %5919 = vmatpush.bf16.msra.mxu0 %v5769
    %5920 = vmatpush.bf16.msra.mxu0 %v5765
    %5921 = vmatpush.bf16.msra.mxu0 %v5761
    %5922 = vmatpush.bf16.msra.mxu0 %v5757
    %5923 = vmatpush.bf16.msra.mxu0 %v5753
    %5924 = vmatpush.bf16.msra.mxu0 %v5749
    %5925 = vmatpush.bf16.msra.mxu0 %v5745
    %5926 = vmatpush.bf16.msra.mxu0 %v5741
    %5927 = vmatmul.bf16.gmra.mxu0 %v4991
    %v5928 = vpop.f32.mrf.mxu0
    %v5929 = vadd.f32 %v5518, %v5928
    %v5930 = vpop.f32.mrf.mxu0
    %5931 = vdwg.mxu0
    %5932 = vmatpush.bf16.msra.mxu0 %v5801
    %5933 = vmatpush.bf16.msra.mxu0 %v5797
    %5934 = vmatpush.bf16.msra.mxu0 %v5793
    %5935 = vmatpush.bf16.msra.mxu0 %v5789
    %5936 = vmatpush.bf16.msra.mxu0 %v5785
    %5937 = vmatpush.bf16.msra.mxu0 %v5781
    %5938 = vmatpush.bf16.msra.mxu0 %v5777
    %5939 = vmatpush.bf16.msra.mxu0 %v5773
    %5940 = vmatmul.bf16.gmra.mxu0 %v4992
    %v5941 = vpop.f32.mrf.mxu0
    %v5942 = vadd.f32 %v5929, %v5941
    %v5943 = vpop.f32.mrf.mxu0
    %5944 = vdwg.mxu0
    %5945 = vmatpush.bf16.msra.mxu0 %v5770
    %5946 = vmatpush.bf16.msra.mxu0 %v5766
    %5947 = vmatpush.bf16.msra.mxu0 %v5762
    %5948 = vmatpush.bf16.msra.mxu0 %v5758
    %5949 = vmatpush.bf16.msra.mxu0 %v5754
    %5950 = vmatpush.bf16.msra.mxu0 %v5750
    %5951 = vmatpush.bf16.msra.mxu0 %v5746
    %5952 = vmatpush.bf16.msra.mxu0 %v5742
    %5953 = vmatmul.bf16.gmra.mxu0 %v4991
    %v5954 = vpop.f32.mrf.mxu0
    %v5955 = vadd.f32 %v5544, %v5954
    %v5956 = vpop.f32.mrf.mxu0
    %5957 = vdwg.mxu0
    %5958 = vmatpush.bf16.msra.mxu0 %v5802
    %5959 = vmatpush.bf16.msra.mxu0 %v5798
    %5960 = vmatpush.bf16.msra.mxu0 %v5794
    %5961 = vmatpush.bf16.msra.mxu0 %v5790
    %5962 = vmatpush.bf16.msra.mxu0 %v5786
    %5963 = vmatpush.bf16.msra.mxu0 %v5782
    %5964 = vmatpush.bf16.msra.mxu0 %v5778
    %5965 = vmatpush.bf16.msra.mxu0 %v5774
    %5966 = vmatmul.bf16.gmra.mxu0 %v4992
    %v5967 = vpop.f32.mrf.mxu0
    %v5968 = vadd.f32 %v5955, %v5967
    %v5969 = vpop.f32.mrf.mxu0
    %5970 = vdwg.mxu0
    %v5971 = vld [vmem:[#allocation11] sm:$0xf]
    %v5973 = vperm.slane %v5971, 0
    %v5974 = vperm.slane %v5971, 1
    %v5975 = vperm.slane %v5971, 2
    %v5976 = vperm.slane %v5971, 3
    %v5981 = vadd.f32 %v5890, %v5973
    %v5982 = vadd.f32 %v5916, %v5974
    %v5983 = vadd.f32 %v5942, %v5975
    %v5984 = vadd.f32 %v5968, %v5976
    %v5985 = vxor.u32 %v5981, 2147483648
    %v5986 = vxor.u32 %v5982, 2147483648
    %v5987 = vxor.u32 %v5983, 2147483648
    %v5988 = vxor.u32 %v5984, 2147483648
    %v5989 = vmul.f32 %v5985, 1.442695
    %v5990 = vpow.pop %v5989
    %v5991 = vmul.f32 %v5986, 1.442695
    %v5992 = vpow.pop %v5991
    %v5993 = vmul.f32 %v5987, 1.442695
    %v5994 = vpow.pop %v5993
    %v5995 = vmul.f32 %v5988, 1.442695
    %v5996 = vpow.pop %v5995
    %v5997 = vadd.f32 %v5990, 1.0
    %v5998 = vadd.f32 %v5992, 1.0
    %v5999 = vadd.f32 %v5994, 1.0
    %v6000 = vadd.f32 %v5996, 1.0
    %v6001 = vrcp.pop %v5997
    %v6002 = vmul.f32 %v5997, %v6001
    %v6003 = vsub.f32 1.0, %v6002
    %v6004 = vmul.f32 %v6001, %v6003
    %v6005 = vadd.f32 %v6001, %v6004
    %vm6006 = vweird.f32 %v5997
    %vm6007 = vweird.f32 %v6001
    %vm6008 = vmor %vm6006, %vm6007
    %v6009 = vsel %vm6008, %v6001, %v6005
    %v6010 = vand.u32 2147483647, %v5997
    %vm6011 = vcmp.eq.f32.partialorder %v6010, 8.507059e+37
    %v6012 = vand.u32 %v5997, 2147483648
    %v6013 = vor.u32 1.1754944e-38, %v6012
    %v6014 = vsel %vm6011, %v6013, %v6009
    %v6015 = vmul.f32 1.0, %v6014
    %v6016 = vrcp.pop %v5998
    %v6017 = vmul.f32 %v5998, %v6016
    %v6018 = vsub.f32 1.0, %v6017
    %v6019 = vmul.f32 %v6016, %v6018
    %v6020 = vadd.f32 %v6016, %v6019
    %vm6021 = vweird.f32 %v5998
    %vm6022 = vweird.f32 %v6016
    %vm6023 = vmor %vm6021, %vm6022
    %v6024 = vsel %vm6023, %v6016, %v6020
    %v6025 = vand.u32 2147483647, %v5998
    %vm6026 = vcmp.eq.f32.partialorder %v6025, 8.507059e+37
    %v6027 = vand.u32 %v5998, 2147483648
    %v6028 = vor.u32 1.1754944e-38, %v6027
    %v6029 = vsel %vm6026, %v6028, %v6024
    %v6030 = vmul.f32 1.0, %v6029
    %v6031 = vrcp.pop %v5999
    %v6032 = vmul.f32 %v5999, %v6031
    %v6033 = vsub.f32 1.0, %v6032
    %v6034 = vmul.f32 %v6031, %v6033
    %v6035 = vadd.f32 %v6031, %v6034
    %vm6036 = vweird.f32 %v5999
    %vm6037 = vweird.f32 %v6031
    %vm6038 = vmor %vm6036, %vm6037
    %v6039 = vsel %vm6038, %v6031, %v6035
    %v6040 = vand.u32 2147483647, %v5999
    %vm6041 = vcmp.eq.f32.partialorder %v6040, 8.507059e+37
    %v6042 = vand.u32 %v5999, 2147483648
    %v6043 = vor.u32 1.1754944e-38, %v6042
    %v6044 = vsel %vm6041, %v6043, %v6039
    %v6045 = vmul.f32 1.0, %v6044
    %v6046 = vrcp.pop %v6000
    %v6047 = vmul.f32 %v6000, %v6046
    %v6048 = vsub.f32 1.0, %v6047
    %v6049 = vmul.f32 %v6046, %v6048
    %v6050 = vadd.f32 %v6046, %v6049
    %vm6051 = vweird.f32 %v6000
    %vm6052 = vweird.f32 %v6046
    %vm6053 = vmor %vm6051, %vm6052
    %v6054 = vsel %vm6053, %v6046, %v6050
    %v6055 = vand.u32 2147483647, %v6000
    %vm6056 = vcmp.eq.f32.partialorder %v6055, 8.507059e+37
    %v6057 = vand.u32 %v6000, 2147483648
    %v6058 = vor.u32 1.1754944e-38, %v6057
    %v6059 = vsel %vm6056, %v6058, %v6054
    %v6060 = vmul.f32 1.0, %v6059
    %v6061 = vld [vmem:[#allocation12] sm:$0xff]
    %v6062 = vld [vmem:[#allocation12 + $0x8] sm:$0xff]
    %v6063 = vld [vmem:[#allocation12 + $0x10] sm:$0xff]
    %v6064 = vld [vmem:[#allocation12 + $0x18] sm:$0xff]
    %v6065 = vld [vmem:[#allocation12 + $0x20] sm:$0xff]
    %v6066 = vld [vmem:[#allocation12 + $0x28] sm:$0xff]
    %v6067 = vld [vmem:[#allocation12 + $0x30] sm:$0xff]
    %v6068 = vld [vmem:[#allocation12 + $0x38] sm:$0xff]
    %v6069 = vld [vmem:[#allocation12 + $0x40] sm:$0xff]
    %v6070 = vld [vmem:[#allocation12 + $0x48] sm:$0xff]
    %v6071 = vld [vmem:[#allocation12 + $0x50] sm:$0xff]
    %v6072 = vld [vmem:[#allocation12 + $0x58] sm:$0xff]
    %v6073 = vld [vmem:[#allocation12 + $0x60] sm:$0xff]
    %v6074 = vld [vmem:[#allocation12 + $0x68] sm:$0xff]
    %v6075 = vld [vmem:[#allocation12 + $0x70] sm:$0xff]
    %v6076 = vld [vmem:[#allocation12 + $0x78] sm:$0xff]
    %v6077 = vld [vmem:[#allocation12 + $0x80] sm:$0xff]
    %v6078 = vld [vmem:[#allocation12 + $0x88] sm:$0xff]
    %v6079 = vld [vmem:[#allocation12 + $0x90] sm:$0xff]
    %v6080 = vld [vmem:[#allocation12 + $0x98] sm:$0xff]
    %v6081 = vld [vmem:[#allocation12 + $0xa0] sm:$0xff]
    %v6082 = vld [vmem:[#allocation12 + $0xa8] sm:$0xff]
    %v6083 = vld [vmem:[#allocation12 + $0xb0] sm:$0xff]
    %v6084 = vld [vmem:[#allocation12 + $0xb8] sm:$0xff]
    %v6085 = vld [vmem:[#allocation12 + $0xc0] sm:$0xff]
    %v6086 = vld [vmem:[#allocation12 + $0xc8] sm:$0xff]
    %v6087 = vld [vmem:[#allocation12 + $0xd0] sm:$0xff]
    %v6088 = vld [vmem:[#allocation12 + $0xd8] sm:$0xff]
    %v6089 = vld [vmem:[#allocation12 + $0xe0] sm:$0xff]
    %v6090 = vld [vmem:[#allocation12 + $0xe8] sm:$0xff]
    %v6091 = vld [vmem:[#allocation12 + $0xf0] sm:$0xff]
    %v6092 = vld [vmem:[#allocation12 + $0xf8] sm:$0xff]
    %v6093 = vld [vmem:[%s7] sm:$0x3]
    %v6126 = vunpack.c.l.b16 %v6061
    %v6127 = vunpack.c.h.b16 %v6061
    %v6128 = vunpack.c.l.b16 %v6062
    %v6129 = vunpack.c.h.b16 %v6062
    %v6130 = vunpack.c.l.b16 %v6063
    %v6131 = vunpack.c.h.b16 %v6063
    %v6132 = vunpack.c.l.b16 %v6064
    %v6133 = vunpack.c.h.b16 %v6064
    %v6134 = vunpack.c.l.b16 %v6065
    %v6135 = vunpack.c.h.b16 %v6065
    %v6136 = vunpack.c.l.b16 %v6066
    %v6137 = vunpack.c.h.b16 %v6066
    %v6138 = vunpack.c.l.b16 %v6067
    %v6139 = vunpack.c.h.b16 %v6067
    %v6140 = vunpack.c.l.b16 %v6068
    %v6141 = vunpack.c.h.b16 %v6068
    %v6142 = vunpack.c.l.b16 %v6069
    %v6143 = vunpack.c.h.b16 %v6069
    %v6144 = vunpack.c.l.b16 %v6070
    %v6145 = vunpack.c.h.b16 %v6070
    %v6146 = vunpack.c.l.b16 %v6071
    %v6147 = vunpack.c.h.b16 %v6071
    %v6148 = vunpack.c.l.b16 %v6072
    %v6149 = vunpack.c.h.b16 %v6072
    %v6150 = vunpack.c.l.b16 %v6073
    %v6151 = vunpack.c.h.b16 %v6073
    %v6152 = vunpack.c.l.b16 %v6074
    %v6153 = vunpack.c.h.b16 %v6074
    %v6154 = vunpack.c.l.b16 %v6075
    %v6155 = vunpack.c.h.b16 %v6075
    %v6156 = vunpack.c.l.b16 %v6076
    %v6157 = vunpack.c.h.b16 %v6076
    %v6158 = vunpack.c.l.b16 %v6077
    %v6159 = vunpack.c.h.b16 %v6077
    %v6160 = vunpack.c.l.b16 %v6078
    %v6161 = vunpack.c.h.b16 %v6078
    %v6162 = vunpack.c.l.b16 %v6079
    %v6163 = vunpack.c.h.b16 %v6079
    %v6164 = vunpack.c.l.b16 %v6080
    %v6165 = vunpack.c.h.b16 %v6080
    %v6166 = vunpack.c.l.b16 %v6081
    %v6167 = vunpack.c.h.b16 %v6081
    %v6168 = vunpack.c.l.b16 %v6082
    %v6169 = vunpack.c.h.b16 %v6082
    %v6170 = vunpack.c.l.b16 %v6083
    %v6171 = vunpack.c.h.b16 %v6083
    %v6172 = vunpack.c.l.b16 %v6084
    %v6173 = vunpack.c.h.b16 %v6084
    %v6174 = vunpack.c.l.b16 %v6085
    %v6175 = vunpack.c.h.b16 %v6085
    %v6176 = vunpack.c.l.b16 %v6086
    %v6177 = vunpack.c.h.b16 %v6086
    %v6178 = vunpack.c.l.b16 %v6087
    %v6179 = vunpack.c.h.b16 %v6087
    %v6180 = vunpack.c.l.b16 %v6088
    %v6181 = vunpack.c.h.b16 %v6088
    %v6182 = vunpack.c.l.b16 %v6089
    %v6183 = vunpack.c.h.b16 %v6089
    %v6184 = vunpack.c.l.b16 %v6090
    %v6185 = vunpack.c.h.b16 %v6090
    %v6186 = vunpack.c.l.b16 %v6091
    %v6187 = vunpack.c.h.b16 %v6091
    %v6188 = vunpack.c.l.b16 %v6092
    %v6189 = vunpack.c.h.b16 %v6092
    %v6190 = vpack.c.b16 %v6128, %v6126
    %v6191 = vpack.c.b16 %v6129, %v6127
    %v6192 = vpack.c.b16 %v6132, %v6130
    %v6193 = vpack.c.b16 %v6133, %v6131
    %v6194 = vpack.c.b16 %v6136, %v6134
    %v6195 = vpack.c.b16 %v6137, %v6135
    %v6196 = vpack.c.b16 %v6140, %v6138
    %v6197 = vpack.c.b16 %v6141, %v6139
    %v6198 = vpack.c.b16 %v6144, %v6142
    %v6199 = vpack.c.b16 %v6145, %v6143
    %v6200 = vpack.c.b16 %v6148, %v6146
    %v6201 = vpack.c.b16 %v6149, %v6147
    %v6202 = vpack.c.b16 %v6152, %v6150
    %v6203 = vpack.c.b16 %v6153, %v6151
    %v6204 = vpack.c.b16 %v6156, %v6154
    %v6205 = vpack.c.b16 %v6157, %v6155
    %v6206 = vpack.c.b16 %v6160, %v6158
    %v6207 = vpack.c.b16 %v6161, %v6159
    %v6208 = vpack.c.b16 %v6164, %v6162
    %v6209 = vpack.c.b16 %v6165, %v6163
    %v6210 = vpack.c.b16 %v6168, %v6166
    %v6211 = vpack.c.b16 %v6169, %v6167
    %v6212 = vpack.c.b16 %v6172, %v6170
    %v6213 = vpack.c.b16 %v6173, %v6171
    %v6214 = vpack.c.b16 %v6176, %v6174
    %v6215 = vpack.c.b16 %v6177, %v6175
    %v6216 = vpack.c.b16 %v6180, %v6178
    %v6217 = vpack.c.b16 %v6181, %v6179
    %v6218 = vpack.c.b16 %v6184, %v6182
    %v6219 = vpack.c.b16 %v6185, %v6183
    %v6220 = vpack.c.b16 %v6188, %v6186
    %v6221 = vpack.c.b16 %v6189, %v6187
    %v6255 = vperm.slane %v6093, 0
    %v6256 = vperm.slane %v6093, 1
    %6259 = vmatpush.bf16.msra.mxu0 %v6204
    %6260 = vmatpush.bf16.msra.mxu0 %v6202
    %6261 = vmatpush.bf16.msra.mxu0 %v6200
    %6262 = vmatpush.bf16.msra.mxu0 %v6198
    %6263 = vmatpush.bf16.msra.mxu0 %v6196
    %6264 = vmatpush.bf16.msra.mxu0 %v6194
    %6265 = vmatpush.bf16.msra.mxu0 %v6192
    %6266 = vmatpush.bf16.msra.mxu0 %v6190
    %6267 = vmatmul.bf16.gmra.mxu0 %v4991
    %v6268 = vpop.f32.mrf.mxu0
    %v6269 = vadd.f32 %v6255, %v6268
    %v6270 = vpop.f32.mrf.mxu0
    %6271 = vdwg.mxu0
    %6272 = vmatpush.bf16.msra.mxu0 %v6220
    %6273 = vmatpush.bf16.msra.mxu0 %v6218
    %6274 = vmatpush.bf16.msra.mxu0 %v6216
    %6275 = vmatpush.bf16.msra.mxu0 %v6214
    %6276 = vmatpush.bf16.msra.mxu0 %v6212
    %6277 = vmatpush.bf16.msra.mxu0 %v6210
    %6278 = vmatpush.bf16.msra.mxu0 %v6208
    %6279 = vmatpush.bf16.msra.mxu0 %v6206
    %6280 = vmatmul.bf16.gmra.mxu0 %v4992
    %v6281 = vpop.f32.mrf.mxu0
    %v6282 = vadd.f32 %v6269, %v6281
    %v6283 = vpop.f32.mrf.mxu0
    %6284 = vdwg.mxu0
    %6285 = vmatpush.bf16.msra.mxu0 %v6205
    %6286 = vmatpush.bf16.msra.mxu0 %v6203
    %6287 = vmatpush.bf16.msra.mxu0 %v6201
    %6288 = vmatpush.bf16.msra.mxu0 %v6199
    %6289 = vmatpush.bf16.msra.mxu0 %v6197
    %6290 = vmatpush.bf16.msra.mxu0 %v6195
    %6291 = vmatpush.bf16.msra.mxu0 %v6193
    %6292 = vmatpush.bf16.msra.mxu0 %v6191
    %6293 = vmatmul.bf16.gmra.mxu0 %v4991
    %v6294 = vpop.f32.mrf.mxu0
    %v6295 = vadd.f32 %v6256, %v6294
    %v6296 = vpop.f32.mrf.mxu0
    %6297 = vdwg.mxu0
    %6298 = vmatpush.bf16.msra.mxu0 %v6221
    %6299 = vmatpush.bf16.msra.mxu0 %v6219
    %6300 = vmatpush.bf16.msra.mxu0 %v6217
    %6301 = vmatpush.bf16.msra.mxu0 %v6215
    %6302 = vmatpush.bf16.msra.mxu0 %v6213
    %6303 = vmatpush.bf16.msra.mxu0 %v6211
    %6304 = vmatpush.bf16.msra.mxu0 %v6209
    %6305 = vmatpush.bf16.msra.mxu0 %v6207
    %6306 = vmatmul.bf16.gmra.mxu0 %v4992
    %v6307 = vpop.f32.mrf.mxu0
    %v6308 = vadd.f32 %v6295, %v6307
    %v6309 = vpop.f32.mrf.mxu0
    %6310 = vdwg.mxu0
    %v6311 = vld [vmem:[#allocation14] sm:$0xff]
    %v6312 = vld [vmem:[#allocation14 + $0x8] sm:$0xff]
    %v6313 = vld [vmem:[#allocation14 + $0x10] sm:$0xff]
    %v6314 = vld [vmem:[#allocation14 + $0x18] sm:$0xff]
    %v6315 = vld [vmem:[#allocation14 + $0x20] sm:$0xff]
    %v6316 = vld [vmem:[#allocation14 + $0x28] sm:$0xff]
    %v6317 = vld [vmem:[#allocation14 + $0x30] sm:$0xff]
    %v6318 = vld [vmem:[#allocation14 + $0x38] sm:$0xff]
    %v6319 = vld [vmem:[#allocation14 + $0x40] sm:$0xff]
    %v6320 = vld [vmem:[#allocation14 + $0x48] sm:$0xff]
    %v6321 = vld [vmem:[#allocation14 + $0x50] sm:$0xff]
    %v6322 = vld [vmem:[#allocation14 + $0x58] sm:$0xff]
    %v6323 = vld [vmem:[#allocation14 + $0x60] sm:$0xff]
    %v6324 = vld [vmem:[#allocation14 + $0x68] sm:$0xff]
    %v6325 = vld [vmem:[#allocation14 + $0x70] sm:$0xff]
    %v6326 = vld [vmem:[#allocation14 + $0x78] sm:$0xff]
    %v6327 = vld [vmem:[#allocation14 + $0x80] sm:$0xff]
    %v6328 = vld [vmem:[#allocation14 + $0x88] sm:$0xff]
    %v6329 = vld [vmem:[#allocation14 + $0x90] sm:$0xff]
    %v6330 = vld [vmem:[#allocation14 + $0x98] sm:$0xff]
    %v6331 = vld [vmem:[#allocation14 + $0xa0] sm:$0xff]
    %v6332 = vld [vmem:[#allocation14 + $0xa8] sm:$0xff]
    %v6333 = vld [vmem:[#allocation14 + $0xb0] sm:$0xff]
    %v6334 = vld [vmem:[#allocation14 + $0xb8] sm:$0xff]
    %v6335 = vld [vmem:[#allocation14 + $0xc0] sm:$0xff]
    %v6336 = vld [vmem:[#allocation14 + $0xc8] sm:$0xff]
    %v6337 = vld [vmem:[#allocation14 + $0xd0] sm:$0xff]
    %v6338 = vld [vmem:[#allocation14 + $0xd8] sm:$0xff]
    %v6339 = vld [vmem:[#allocation14 + $0xe0] sm:$0xff]
    %v6340 = vld [vmem:[#allocation14 + $0xe8] sm:$0xff]
    %v6341 = vld [vmem:[#allocation14 + $0xf0] sm:$0xff]
    %v6342 = vld [vmem:[#allocation14 + $0xf8] sm:$0xff]
    %v6343 = vld [vmem:[#allocation15] sm:$0x3]
    %v6376 = vunpack.c.l.b16 %v6311
    %v6377 = vunpack.c.h.b16 %v6311
    %v6378 = vunpack.c.l.b16 %v6312
    %v6379 = vunpack.c.h.b16 %v6312
    %v6380 = vunpack.c.l.b16 %v6313
    %v6381 = vunpack.c.h.b16 %v6313
    %v6382 = vunpack.c.l.b16 %v6314
    %v6383 = vunpack.c.h.b16 %v6314
    %v6384 = vunpack.c.l.b16 %v6315
    %v6385 = vunpack.c.h.b16 %v6315
    %v6386 = vunpack.c.l.b16 %v6316
    %v6387 = vunpack.c.h.b16 %v6316
    %v6388 = vunpack.c.l.b16 %v6317
    %v6389 = vunpack.c.h.b16 %v6317
    %v6390 = vunpack.c.l.b16 %v6318
    %v6391 = vunpack.c.h.b16 %v6318
    %v6392 = vunpack.c.l.b16 %v6319
    %v6393 = vunpack.c.h.b16 %v6319
    %v6394 = vunpack.c.l.b16 %v6320
    %v6395 = vunpack.c.h.b16 %v6320
    %v6396 = vunpack.c.l.b16 %v6321
    %v6397 = vunpack.c.h.b16 %v6321
    %v6398 = vunpack.c.l.b16 %v6322
    %v6399 = vunpack.c.h.b16 %v6322
    %v6400 = vunpack.c.l.b16 %v6323
    %v6401 = vunpack.c.h.b16 %v6323
    %v6402 = vunpack.c.l.b16 %v6324
    %v6403 = vunpack.c.h.b16 %v6324
    %v6404 = vunpack.c.l.b16 %v6325
    %v6405 = vunpack.c.h.b16 %v6325
    %v6406 = vunpack.c.l.b16 %v6326
    %v6407 = vunpack.c.h.b16 %v6326
    %v6408 = vunpack.c.l.b16 %v6327
    %v6409 = vunpack.c.h.b16 %v6327
    %v6410 = vunpack.c.l.b16 %v6328
    %v6411 = vunpack.c.h.b16 %v6328
    %v6412 = vunpack.c.l.b16 %v6329
    %v6413 = vunpack.c.h.b16 %v6329
    %v6414 = vunpack.c.l.b16 %v6330
    %v6415 = vunpack.c.h.b16 %v6330
    %v6416 = vunpack.c.l.b16 %v6331
    %v6417 = vunpack.c.h.b16 %v6331
    %v6418 = vunpack.c.l.b16 %v6332
    %v6419 = vunpack.c.h.b16 %v6332
    %v6420 = vunpack.c.l.b16 %v6333
    %v6421 = vunpack.c.h.b16 %v6333
    %v6422 = vunpack.c.l.b16 %v6334
    %v6423 = vunpack.c.h.b16 %v6334
    %v6424 = vunpack.c.l.b16 %v6335
    %v6425 = vunpack.c.h.b16 %v6335
    %v6426 = vunpack.c.l.b16 %v6336
    %v6427 = vunpack.c.h.b16 %v6336
    %v6428 = vunpack.c.l.b16 %v6337
    %v6429 = vunpack.c.h.b16 %v6337
    %v6430 = vunpack.c.l.b16 %v6338
    %v6431 = vunpack.c.h.b16 %v6338
    %v6432 = vunpack.c.l.b16 %v6339
    %v6433 = vunpack.c.h.b16 %v6339
    %v6434 = vunpack.c.l.b16 %v6340
    %v6435 = vunpack.c.h.b16 %v6340
    %v6436 = vunpack.c.l.b16 %v6341
    %v6437 = vunpack.c.h.b16 %v6341
    %v6438 = vunpack.c.l.b16 %v6342
    %v6439 = vunpack.c.h.b16 %v6342
    %v6440 = vpack.c.b16 %v6378, %v6376
    %v6441 = vpack.c.b16 %v6379, %v6377
    %v6442 = vpack.c.b16 %v6382, %v6380
    %v6443 = vpack.c.b16 %v6383, %v6381
    %v6444 = vpack.c.b16 %v6386, %v6384
    %v6445 = vpack.c.b16 %v6387, %v6385
    %v6446 = vpack.c.b16 %v6390, %v6388
    %v6447 = vpack.c.b16 %v6391, %v6389
    %v6448 = vpack.c.b16 %v6394, %v6392
    %v6449 = vpack.c.b16 %v6395, %v6393
    %v6450 = vpack.c.b16 %v6398, %v6396
    %v6451 = vpack.c.b16 %v6399, %v6397
    %v6452 = vpack.c.b16 %v6402, %v6400
    %v6453 = vpack.c.b16 %v6403, %v6401
    %v6454 = vpack.c.b16 %v6406, %v6404
    %v6455 = vpack.c.b16 %v6407, %v6405
    %v6456 = vpack.c.b16 %v6410, %v6408
    %v6457 = vpack.c.b16 %v6411, %v6409
    %v6458 = vpack.c.b16 %v6414, %v6412
    %v6459 = vpack.c.b16 %v6415, %v6413
    %v6460 = vpack.c.b16 %v6418, %v6416
    %v6461 = vpack.c.b16 %v6419, %v6417
    %v6462 = vpack.c.b16 %v6422, %v6420
    %v6463 = vpack.c.b16 %v6423, %v6421
    %v6464 = vpack.c.b16 %v6426, %v6424
    %v6465 = vpack.c.b16 %v6427, %v6425
    %v6466 = vpack.c.b16 %v6430, %v6428
    %v6467 = vpack.c.b16 %v6431, %v6429
    %v6468 = vpack.c.b16 %v6434, %v6432
    %v6469 = vpack.c.b16 %v6435, %v6433
    %v6470 = vpack.c.b16 %v6438, %v6436
    %v6471 = vpack.c.b16 %v6439, %v6437
    %v6505 = vperm.slane %v6343, 0
    %v6506 = vperm.slane %v6343, 1
    %6509 = vmatpush.bf16.msra.mxu0 %v6454
    %6510 = vmatpush.bf16.msra.mxu0 %v6452
    %6511 = vmatpush.bf16.msra.mxu0 %v6450
    %6512 = vmatpush.bf16.msra.mxu0 %v6448
    %6513 = vmatpush.bf16.msra.mxu0 %v6446
    %6514 = vmatpush.bf16.msra.mxu0 %v6444
    %6515 = vmatpush.bf16.msra.mxu0 %v6442
    %6516 = vmatpush.bf16.msra.mxu0 %v6440
    %6517 = vmatmul.bf16.gmra.mxu0 %v4993
    %v6518 = vpop.f32.mrf.mxu0
    %v6519 = vadd.f32 %v6505, %v6518
    %v6520 = vpop.f32.mrf.mxu0
    %6521 = vdwg.mxu0
    %6522 = vmatpush.bf16.msra.mxu0 %v6470
    %6523 = vmatpush.bf16.msra.mxu0 %v6468
    %6524 = vmatpush.bf16.msra.mxu0 %v6466
    %6525 = vmatpush.bf16.msra.mxu0 %v6464
    %6526 = vmatpush.bf16.msra.mxu0 %v6462
    %6527 = vmatpush.bf16.msra.mxu0 %v6460
    %6528 = vmatpush.bf16.msra.mxu0 %v6458
    %6529 = vmatpush.bf16.msra.mxu0 %v6456
    %6530 = vmatmul.bf16.gmra.mxu0 %v4994
    %v6531 = vpop.f32.mrf.mxu0
    %v6532 = vadd.f32 %v6519, %v6531
    %v6533 = vpop.f32.mrf.mxu0
    %6534 = vdwg.mxu0
    %6535 = vmatpush.bf16.msra.mxu0 %v6455
    %6536 = vmatpush.bf16.msra.mxu0 %v6453
    %6537 = vmatpush.bf16.msra.mxu0 %v6451
    %6538 = vmatpush.bf16.msra.mxu0 %v6449
    %6539 = vmatpush.bf16.msra.mxu0 %v6447
    %6540 = vmatpush.bf16.msra.mxu0 %v6445
    %6541 = vmatpush.bf16.msra.mxu0 %v6443
    %6542 = vmatpush.bf16.msra.mxu0 %v6441
    %6543 = vmatmul.bf16.gmra.mxu0 %v4993
    %v6544 = vpop.f32.mrf.mxu0
    %v6545 = vadd.f32 %v6506, %v6544
    %v6546 = vpop.f32.mrf.mxu0
    %6547 = vdwg.mxu0
    %6548 = vmatpush.bf16.msra.mxu0 %v6471
    %6549 = vmatpush.bf16.msra.mxu0 %v6469
    %6550 = vmatpush.bf16.msra.mxu0 %v6467
    %6551 = vmatpush.bf16.msra.mxu0 %v6465
    %6552 = vmatpush.bf16.msra.mxu0 %v6463
    %6553 = vmatpush.bf16.msra.mxu0 %v6461
    %6554 = vmatpush.bf16.msra.mxu0 %v6459
    %6555 = vmatpush.bf16.msra.mxu0 %v6457
    %6556 = vmatmul.bf16.gmra.mxu0 %v4994
    %v6557 = vpop.f32.mrf.mxu0
    %v6558 = vadd.f32 %v6545, %v6557
    %v6559 = vpop.f32.mrf.mxu0
    %6560 = vdwg.mxu0
    %v6561 = vmul.f32 %v6015, %v6532
    %v6562 = vmul.f32 %v6030, %v6558
    %v6563 = vadd.f32 %v6282, %v6561
    %v6564 = vadd.f32 %v6308, %v6562
    %v6565 = vtanh.pop %v6563
    %v6566 = vtanh.pop %v6564
    %v6567 = vsub.f32 1.0, %v6045
    %v6568 = vsub.f32 1.0, %v6060
    %v6569 = vmul.f32 %v6567, %v6565
    %v6570 = vmul.f32 %v6568, %v6566
    %v6571 = vmul.f32 %v6045, %v4973
    %v6572 = vmul.f32 %v6060, %v4974
    %v6573 = vadd.f32 %v6569, %v6571
    %v6574 = vadd.f32 %v6570, %v6572
    %v6577 = vrot.slane %v6574, 7
    %v6578 = vsel %vm1774, %v6573, %v6577
    %s6580 = scalar_lea.vmem [#allocation2], 3
    %6581 = vst.msk [vmem:[%s6580] ss:$8 sm:$0x3] %vm1780, %v6578
    %6582 = vst.msk [vmem:[%s6580] ss:$8 sm:$0x0] %vm1780, %v6578
    %s6583 = scalar_lea.vmem [#allocation3], 4
    %v6584 = vld [vmem:[%s6583] ss:$8 sm:$0x3]
    %v6585 = vmax.f32 %v6584, 0.0
    %v6587 = vperm.slane %v6585, 0
    %v6588 = vperm.slane %v6585, 1
    %v6591 = vpack.c.bf16 %v6587, %v6587
    %v6592 = vpack.c.bf16 %v6588, %v6588
    %v6593 = vpack.c.bf16 %v6573, %v6573
    %v6594 = vpack.c.bf16 %v6574, %v6574
    %v6595 = vld [vmem:[#allocation8] sm:$0xff]
    %v6596 = vld [vmem:[#allocation8 + $0x8] sm:$0xff]
    %v6597 = vld [vmem:[#allocation8 + $0x10] sm:$0xff]
    %v6598 = vld [vmem:[#allocation8 + $0x18] sm:$0xff]
    %v6599 = vld [vmem:[#allocation8 + $0x20] sm:$0xff]
    %v6600 = vld [vmem:[#allocation8 + $0x28] sm:$0xff]
    %v6601 = vld [vmem:[#allocation8 + $0x30] sm:$0xff]
    %v6602 = vld [vmem:[#allocation8 + $0x38] sm:$0xff]
    %v6603 = vld [vmem:[#allocation8 + $0x40] sm:$0xff]
    %v6604 = vld [vmem:[#allocation8 + $0x48] sm:$0xff]
    %v6605 = vld [vmem:[#allocation8 + $0x50] sm:$0xff]
    %v6606 = vld [vmem:[#allocation8 + $0x58] sm:$0xff]
    %v6607 = vld [vmem:[#allocation8 + $0x60] sm:$0xff]
    %v6608 = vld [vmem:[#allocation8 + $0x68] sm:$0xff]
    %v6609 = vld [vmem:[#allocation8 + $0x70] sm:$0xff]
    %v6610 = vld [vmem:[#allocation8 + $0x78] sm:$0xff]
    %v6611 = vld [vmem:[#allocation8 + $0x80] sm:$0xff]
    %v6612 = vld [vmem:[#allocation8 + $0x88] sm:$0xff]
    %v6613 = vld [vmem:[#allocation8 + $0x90] sm:$0xff]
    %v6614 = vld [vmem:[#allocation8 + $0x98] sm:$0xff]
    %v6615 = vld [vmem:[#allocation8 + $0xa0] sm:$0xff]
    %v6616 = vld [vmem:[#allocation8 + $0xa8] sm:$0xff]
    %v6617 = vld [vmem:[#allocation8 + $0xb0] sm:$0xff]
    %v6618 = vld [vmem:[#allocation8 + $0xb8] sm:$0xff]
    %v6619 = vld [vmem:[#allocation8 + $0xc0] sm:$0xff]
    %v6620 = vld [vmem:[#allocation8 + $0xc8] sm:$0xff]
    %v6621 = vld [vmem:[#allocation8 + $0xd0] sm:$0xff]
    %v6622 = vld [vmem:[#allocation8 + $0xd8] sm:$0xff]
    %v6623 = vld [vmem:[#allocation8 + $0xe0] sm:$0xff]
    %v6624 = vld [vmem:[#allocation8 + $0xe8] sm:$0xff]
    %v6625 = vld [vmem:[#allocation8 + $0xf0] sm:$0xff]
    %v6626 = vld [vmem:[#allocation8 + $0xf8] sm:$0xff]
    %v6627 = vld [vmem:[#allocation8 + $0x100] sm:$0xff]
    %v6628 = vld [vmem:[#allocation8 + $0x108] sm:$0xff]
    %v6629 = vld [vmem:[#allocation8 + $0x110] sm:$0xff]
    %v6630 = vld [vmem:[#allocation8 + $0x118] sm:$0xff]
    %v6631 = vld [vmem:[#allocation8 + $0x120] sm:$0xff]
    %v6632 = vld [vmem:[#allocation8 + $0x128] sm:$0xff]
    %v6633 = vld [vmem:[#allocation8 + $0x130] sm:$0xff]
    %v6634 = vld [vmem:[#allocation8 + $0x138] sm:$0xff]
    %v6635 = vld [vmem:[#allocation8 + $0x140] sm:$0xff]
    %v6636 = vld [vmem:[#allocation8 + $0x148] sm:$0xff]
    %v6637 = vld [vmem:[#allocation8 + $0x150] sm:$0xff]
    %v6638 = vld [vmem:[#allocation8 + $0x158] sm:$0xff]
    %v6639 = vld [vmem:[#allocation8 + $0x160] sm:$0xff]
    %v6640 = vld [vmem:[#allocation8 + $0x168] sm:$0xff]
    %v6641 = vld [vmem:[#allocation8 + $0x170] sm:$0xff]
    %v6642 = vld [vmem:[#allocation8 + $0x178] sm:$0xff]
    %v6643 = vld [vmem:[#allocation8 + $0x180] sm:$0xff]
    %v6644 = vld [vmem:[#allocation8 + $0x188] sm:$0xff]
    %v6645 = vld [vmem:[#allocation8 + $0x190] sm:$0xff]
    %v6646 = vld [vmem:[#allocation8 + $0x198] sm:$0xff]
    %v6647 = vld [vmem:[#allocation8 + $0x1a0] sm:$0xff]
    %v6648 = vld [vmem:[#allocation8 + $0x1a8] sm:$0xff]
    %v6649 = vld [vmem:[#allocation8 + $0x1b0] sm:$0xff]
    %v6650 = vld [vmem:[#allocation8 + $0x1b8] sm:$0xff]
    %v6651 = vld [vmem:[#allocation8 + $0x1c0] sm:$0xff]
    %v6652 = vld [vmem:[#allocation8 + $0x1c8] sm:$0xff]
    %v6653 = vld [vmem:[#allocation8 + $0x1d0] sm:$0xff]
    %v6654 = vld [vmem:[#allocation8 + $0x1d8] sm:$0xff]
    %v6655 = vld [vmem:[#allocation8 + $0x1e0] sm:$0xff]
    %v6656 = vld [vmem:[#allocation8 + $0x1e8] sm:$0xff]
    %v6657 = vld [vmem:[#allocation8 + $0x1f0] sm:$0xff]
    %v6658 = vld [vmem:[#allocation8 + $0x1f8] sm:$0xff]
    %v6659 = vld [vmem:[#allocation9] sm:$0xff]
    %v6660 = vld [vmem:[#allocation9 + $0x8] sm:$0xff]
    %v6661 = vld [vmem:[#allocation9 + $0x10] sm:$0xff]
    %v6662 = vld [vmem:[#allocation9 + $0x18] sm:$0xff]
    %v6663 = vld [vmem:[#allocation9 + $0x20] sm:$0xff]
    %v6664 = vld [vmem:[#allocation9 + $0x28] sm:$0xff]
    %v6665 = vld [vmem:[#allocation9 + $0x30] sm:$0xff]
    %v6666 = vld [vmem:[#allocation9 + $0x38] sm:$0xff]
    %v6667 = vld [vmem:[#allocation9 + $0x40] sm:$0xff]
    %v6668 = vld [vmem:[#allocation9 + $0x48] sm:$0xff]
    %v6669 = vld [vmem:[#allocation9 + $0x50] sm:$0xff]
    %v6670 = vld [vmem:[#allocation9 + $0x58] sm:$0xff]
    %v6671 = vld [vmem:[#allocation9 + $0x60] sm:$0xff]
    %v6672 = vld [vmem:[#allocation9 + $0x68] sm:$0xff]
    %v6673 = vld [vmem:[#allocation9 + $0x70] sm:$0xff]
    %v6674 = vld [vmem:[#allocation9 + $0x78] sm:$0xff]
    %v6675 = vld [vmem:[#allocation9 + $0x80] sm:$0xff]
    %v6676 = vld [vmem:[#allocation9 + $0x88] sm:$0xff]
    %v6677 = vld [vmem:[#allocation9 + $0x90] sm:$0xff]
    %v6678 = vld [vmem:[#allocation9 + $0x98] sm:$0xff]
    %v6679 = vld [vmem:[#allocation9 + $0xa0] sm:$0xff]
    %v6680 = vld [vmem:[#allocation9 + $0xa8] sm:$0xff]
    %v6681 = vld [vmem:[#allocation9 + $0xb0] sm:$0xff]
    %v6682 = vld [vmem:[#allocation9 + $0xb8] sm:$0xff]
    %v6683 = vld [vmem:[#allocation9 + $0xc0] sm:$0xff]
    %v6684 = vld [vmem:[#allocation9 + $0xc8] sm:$0xff]
    %v6685 = vld [vmem:[#allocation9 + $0xd0] sm:$0xff]
    %v6686 = vld [vmem:[#allocation9 + $0xd8] sm:$0xff]
    %v6687 = vld [vmem:[#allocation9 + $0xe0] sm:$0xff]
    %v6688 = vld [vmem:[#allocation9 + $0xe8] sm:$0xff]
    %v6689 = vld [vmem:[#allocation9 + $0xf0] sm:$0xff]
    %v6690 = vld [vmem:[#allocation9 + $0xf8] sm:$0xff]
    %v6691 = vld [vmem:[#allocation9 + $0x100] sm:$0xff]
    %v6692 = vld [vmem:[#allocation9 + $0x108] sm:$0xff]
    %v6693 = vld [vmem:[#allocation9 + $0x110] sm:$0xff]
    %v6694 = vld [vmem:[#allocation9 + $0x118] sm:$0xff]
    %v6695 = vld [vmem:[#allocation9 + $0x120] sm:$0xff]
    %v6696 = vld [vmem:[#allocation9 + $0x128] sm:$0xff]
    %v6697 = vld [vmem:[#allocation9 + $0x130] sm:$0xff]
    %v6698 = vld [vmem:[#allocation9 + $0x138] sm:$0xff]
    %v6699 = vld [vmem:[#allocation9 + $0x140] sm:$0xff]
    %v6700 = vld [vmem:[#allocation9 + $0x148] sm:$0xff]
    %v6701 = vld [vmem:[#allocation9 + $0x150] sm:$0xff]
    %v6702 = vld [vmem:[#allocation9 + $0x158] sm:$0xff]
    %v6703 = vld [vmem:[#allocation9 + $0x160] sm:$0xff]
    %v6704 = vld [vmem:[#allocation9 + $0x168] sm:$0xff]
    %v6705 = vld [vmem:[#allocation9 + $0x170] sm:$0xff]
    %v6706 = vld [vmem:[#allocation9 + $0x178] sm:$0xff]
    %v6707 = vld [vmem:[#allocation9 + $0x180] sm:$0xff]
    %v6708 = vld [vmem:[#allocation9 + $0x188] sm:$0xff]
    %v6709 = vld [vmem:[#allocation9 + $0x190] sm:$0xff]
    %v6710 = vld [vmem:[#allocation9 + $0x198] sm:$0xff]
    %v6711 = vld [vmem:[#allocation9 + $0x1a0] sm:$0xff]
    %v6712 = vld [vmem:[#allocation9 + $0x1a8] sm:$0xff]
    %v6713 = vld [vmem:[#allocation9 + $0x1b0] sm:$0xff]
    %v6714 = vld [vmem:[#allocation9 + $0x1b8] sm:$0xff]
    %v6715 = vld [vmem:[#allocation9 + $0x1c0] sm:$0xff]
    %v6716 = vld [vmem:[#allocation9 + $0x1c8] sm:$0xff]
    %v6717 = vld [vmem:[#allocation9 + $0x1d0] sm:$0xff]
    %v6718 = vld [vmem:[#allocation9 + $0x1d8] sm:$0xff]
    %v6719 = vld [vmem:[#allocation9 + $0x1e0] sm:$0xff]
    %v6720 = vld [vmem:[#allocation9 + $0x1e8] sm:$0xff]
    %v6721 = vld [vmem:[#allocation9 + $0x1f0] sm:$0xff]
    %v6722 = vld [vmem:[#allocation9 + $0x1f8] sm:$0xff]
    %v6787 = vunpack.c.l.b16 %v6659
    %v6788 = vunpack.c.h.b16 %v6659
    %v6789 = vunpack.c.l.b16 %v6660
    %v6790 = vunpack.c.h.b16 %v6660
    %v6791 = vunpack.c.l.b16 %v6661
    %v6792 = vunpack.c.h.b16 %v6661
    %v6793 = vunpack.c.l.b16 %v6662
    %v6794 = vunpack.c.h.b16 %v6662
    %v6795 = vunpack.c.l.b16 %v6663
    %v6796 = vunpack.c.h.b16 %v6663
    %v6797 = vunpack.c.l.b16 %v6664
    %v6798 = vunpack.c.h.b16 %v6664
    %v6799 = vunpack.c.l.b16 %v6665
    %v6800 = vunpack.c.h.b16 %v6665
    %v6801 = vunpack.c.l.b16 %v6666
    %v6802 = vunpack.c.h.b16 %v6666
    %v6803 = vunpack.c.l.b16 %v6667
    %v6804 = vunpack.c.h.b16 %v6667
    %v6805 = vunpack.c.l.b16 %v6668
    %v6806 = vunpack.c.h.b16 %v6668
    %v6807 = vunpack.c.l.b16 %v6669
    %v6808 = vunpack.c.h.b16 %v6669
    %v6809 = vunpack.c.l.b16 %v6670
    %v6810 = vunpack.c.h.b16 %v6670
    %v6811 = vunpack.c.l.b16 %v6671
    %v6812 = vunpack.c.h.b16 %v6671
    %v6813 = vunpack.c.l.b16 %v6672
    %v6814 = vunpack.c.h.b16 %v6672
    %v6815 = vunpack.c.l.b16 %v6673
    %v6816 = vunpack.c.h.b16 %v6673
    %v6817 = vunpack.c.l.b16 %v6674
    %v6818 = vunpack.c.h.b16 %v6674
    %v6819 = vunpack.c.l.b16 %v6675
    %v6820 = vunpack.c.h.b16 %v6675
    %v6821 = vunpack.c.l.b16 %v6676
    %v6822 = vunpack.c.h.b16 %v6676
    %v6823 = vunpack.c.l.b16 %v6677
    %v6824 = vunpack.c.h.b16 %v6677
    %v6825 = vunpack.c.l.b16 %v6678
    %v6826 = vunpack.c.h.b16 %v6678
    %v6827 = vunpack.c.l.b16 %v6679
    %v6828 = vunpack.c.h.b16 %v6679
    %v6829 = vunpack.c.l.b16 %v6680
    %v6830 = vunpack.c.h.b16 %v6680
    %v6831 = vunpack.c.l.b16 %v6681
    %v6832 = vunpack.c.h.b16 %v6681
    %v6833 = vunpack.c.l.b16 %v6682
    %v6834 = vunpack.c.h.b16 %v6682
    %v6835 = vunpack.c.l.b16 %v6683
    %v6836 = vunpack.c.h.b16 %v6683
    %v6837 = vunpack.c.l.b16 %v6684
    %v6838 = vunpack.c.h.b16 %v6684
    %v6839 = vunpack.c.l.b16 %v6685
    %v6840 = vunpack.c.h.b16 %v6685
    %v6841 = vunpack.c.l.b16 %v6686
    %v6842 = vunpack.c.h.b16 %v6686
    %v6843 = vunpack.c.l.b16 %v6687
    %v6844 = vunpack.c.h.b16 %v6687
    %v6845 = vunpack.c.l.b16 %v6688
    %v6846 = vunpack.c.h.b16 %v6688
    %v6847 = vunpack.c.l.b16 %v6689
    %v6848 = vunpack.c.h.b16 %v6689
    %v6849 = vunpack.c.l.b16 %v6690
    %v6850 = vunpack.c.h.b16 %v6690
    %v6851 = vunpack.c.l.b16 %v6691
    %v6852 = vunpack.c.h.b16 %v6691
    %v6853 = vunpack.c.l.b16 %v6692
    %v6854 = vunpack.c.h.b16 %v6692
    %v6855 = vunpack.c.l.b16 %v6693
    %v6856 = vunpack.c.h.b16 %v6693
    %v6857 = vunpack.c.l.b16 %v6694
    %v6858 = vunpack.c.h.b16 %v6694
    %v6859 = vunpack.c.l.b16 %v6695
    %v6860 = vunpack.c.h.b16 %v6695
    %v6861 = vunpack.c.l.b16 %v6696
    %v6862 = vunpack.c.h.b16 %v6696
    %v6863 = vunpack.c.l.b16 %v6697
    %v6864 = vunpack.c.h.b16 %v6697
    %v6865 = vunpack.c.l.b16 %v6698
    %v6866 = vunpack.c.h.b16 %v6698
    %v6867 = vunpack.c.l.b16 %v6699
    %v6868 = vunpack.c.h.b16 %v6699
    %v6869 = vunpack.c.l.b16 %v6700
    %v6870 = vunpack.c.h.b16 %v6700
    %v6871 = vunpack.c.l.b16 %v6701
    %v6872 = vunpack.c.h.b16 %v6701
    %v6873 = vunpack.c.l.b16 %v6702
    %v6874 = vunpack.c.h.b16 %v6702
    %v6875 = vunpack.c.l.b16 %v6703
    %v6876 = vunpack.c.h.b16 %v6703
    %v6877 = vunpack.c.l.b16 %v6704
    %v6878 = vunpack.c.h.b16 %v6704
    %v6879 = vunpack.c.l.b16 %v6705
    %v6880 = vunpack.c.h.b16 %v6705
    %v6881 = vunpack.c.l.b16 %v6706
    %v6882 = vunpack.c.h.b16 %v6706
    %v6883 = vunpack.c.l.b16 %v6707
    %v6884 = vunpack.c.h.b16 %v6707
    %v6885 = vunpack.c.l.b16 %v6708
    %v6886 = vunpack.c.h.b16 %v6708
    %v6887 = vunpack.c.l.b16 %v6709
    %v6888 = vunpack.c.h.b16 %v6709
    %v6889 = vunpack.c.l.b16 %v6710
    %v6890 = vunpack.c.h.b16 %v6710
    %v6891 = vunpack.c.l.b16 %v6711
    %v6892 = vunpack.c.h.b16 %v6711
    %v6893 = vunpack.c.l.b16 %v6712
    %v6894 = vunpack.c.h.b16 %v6712
    %v6895 = vunpack.c.l.b16 %v6713
    %v6896 = vunpack.c.h.b16 %v6713
    %v6897 = vunpack.c.l.b16 %v6714
    %v6898 = vunpack.c.h.b16 %v6714
    %v6899 = vunpack.c.l.b16 %v6715
    %v6900 = vunpack.c.h.b16 %v6715
    %v6901 = vunpack.c.l.b16 %v6716
    %v6902 = vunpack.c.h.b16 %v6716
    %v6903 = vunpack.c.l.b16 %v6717
    %v6904 = vunpack.c.h.b16 %v6717
    %v6905 = vunpack.c.l.b16 %v6718
    %v6906 = vunpack.c.h.b16 %v6718
    %v6907 = vunpack.c.l.b16 %v6719
    %v6908 = vunpack.c.h.b16 %v6719
    %v6909 = vunpack.c.l.b16 %v6720
    %v6910 = vunpack.c.h.b16 %v6720
    %v6911 = vunpack.c.l.b16 %v6721
    %v6912 = vunpack.c.h.b16 %v6721
    %v6913 = vunpack.c.l.b16 %v6722
    %v6914 = vunpack.c.h.b16 %v6722
    %v6915 = vpack.c.b16 %v6791, %v6787
    %v6916 = vpack.c.b16 %v6792, %v6788
    %v6917 = vpack.c.b16 %v6793, %v6789
    %v6918 = vpack.c.b16 %v6794, %v6790
    %v6919 = vpack.c.b16 %v6799, %v6795
    %v6920 = vpack.c.b16 %v6800, %v6796
    %v6921 = vpack.c.b16 %v6801, %v6797
    %v6922 = vpack.c.b16 %v6802, %v6798
    %v6923 = vpack.c.b16 %v6807, %v6803
    %v6924 = vpack.c.b16 %v6808, %v6804
    %v6925 = vpack.c.b16 %v6809, %v6805
    %v6926 = vpack.c.b16 %v6810, %v6806
    %v6927 = vpack.c.b16 %v6815, %v6811
    %v6928 = vpack.c.b16 %v6816, %v6812
    %v6929 = vpack.c.b16 %v6817, %v6813
    %v6930 = vpack.c.b16 %v6818, %v6814
    %v6931 = vpack.c.b16 %v6823, %v6819
    %v6932 = vpack.c.b16 %v6824, %v6820
    %v6933 = vpack.c.b16 %v6825, %v6821
    %v6934 = vpack.c.b16 %v6826, %v6822
    %v6935 = vpack.c.b16 %v6831, %v6827
    %v6936 = vpack.c.b16 %v6832, %v6828
    %v6937 = vpack.c.b16 %v6833, %v6829
    %v6938 = vpack.c.b16 %v6834, %v6830
    %v6939 = vpack.c.b16 %v6839, %v6835
    %v6940 = vpack.c.b16 %v6840, %v6836
    %v6941 = vpack.c.b16 %v6841, %v6837
    %v6942 = vpack.c.b16 %v6842, %v6838
    %v6943 = vpack.c.b16 %v6847, %v6843
    %v6944 = vpack.c.b16 %v6848, %v6844
    %v6945 = vpack.c.b16 %v6849, %v6845
    %v6946 = vpack.c.b16 %v6850, %v6846
    %v6947 = vpack.c.b16 %v6855, %v6851
    %v6948 = vpack.c.b16 %v6856, %v6852
    %v6949 = vpack.c.b16 %v6857, %v6853
    %v6950 = vpack.c.b16 %v6858, %v6854
    %v6951 = vpack.c.b16 %v6863, %v6859
    %v6952 = vpack.c.b16 %v6864, %v6860
    %v6953 = vpack.c.b16 %v6865, %v6861
    %v6954 = vpack.c.b16 %v6866, %v6862
    %v6955 = vpack.c.b16 %v6871, %v6867
    %v6956 = vpack.c.b16 %v6872, %v6868
    %v6957 = vpack.c.b16 %v6873, %v6869
    %v6958 = vpack.c.b16 %v6874, %v6870
    %v6959 = vpack.c.b16 %v6879, %v6875
    %v6960 = vpack.c.b16 %v6880, %v6876
    %v6961 = vpack.c.b16 %v6881, %v6877
    %v6962 = vpack.c.b16 %v6882, %v6878
    %v6963 = vpack.c.b16 %v6887, %v6883
    %v6964 = vpack.c.b16 %v6888, %v6884
    %v6965 = vpack.c.b16 %v6889, %v6885
    %v6966 = vpack.c.b16 %v6890, %v6886
    %v6967 = vpack.c.b16 %v6895, %v6891
    %v6968 = vpack.c.b16 %v6896, %v6892
    %v6969 = vpack.c.b16 %v6897, %v6893
    %v6970 = vpack.c.b16 %v6898, %v6894
    %v6971 = vpack.c.b16 %v6903, %v6899
    %v6972 = vpack.c.b16 %v6904, %v6900
    %v6973 = vpack.c.b16 %v6905, %v6901
    %v6974 = vpack.c.b16 %v6906, %v6902
    %v6975 = vpack.c.b16 %v6911, %v6907
    %v6976 = vpack.c.b16 %v6912, %v6908
    %v6977 = vpack.c.b16 %v6913, %v6909
    %v6978 = vpack.c.b16 %v6914, %v6910
    %7043 = vmatpush.bf16.msra.mxu0 %v6943
    %7044 = vmatpush.bf16.msra.mxu0 %v6939
    %7045 = vmatpush.bf16.msra.mxu0 %v6935
    %7046 = vmatpush.bf16.msra.mxu0 %v6931
    %7047 = vmatpush.bf16.msra.mxu0 %v6927
    %7048 = vmatpush.bf16.msra.mxu0 %v6923
    %7049 = vmatpush.bf16.msra.mxu0 %v6919
    %7050 = vmatpush.bf16.msra.mxu0 %v6915
    %7051 = vmatmul.bf16.gmra.mxu0 %v6593
    %v7052 = vpop.f32.mrf.mxu0
    %v7053 = vadd.f32 0.0, %v7052
    %v7054 = vpop.f32.mrf.mxu0
    %7055 = vdwg.mxu0
    %7056 = vmatpush.bf16.msra.mxu0 %v6975
    %7057 = vmatpush.bf16.msra.mxu0 %v6971
    %7058 = vmatpush.bf16.msra.mxu0 %v6967
    %7059 = vmatpush.bf16.msra.mxu0 %v6963
    %7060 = vmatpush.bf16.msra.mxu0 %v6959
    %7061 = vmatpush.bf16.msra.mxu0 %v6955
    %7062 = vmatpush.bf16.msra.mxu0 %v6951
    %7063 = vmatpush.bf16.msra.mxu0 %v6947
    %7064 = vmatmul.bf16.gmra.mxu0 %v6594
    %v7065 = vpop.f32.mrf.mxu0
    %v7066 = vadd.f32 %v7053, %v7065
    %v7067 = vpop.f32.mrf.mxu0
    %7068 = vdwg.mxu0
    %7069 = vmatpush.bf16.msra.mxu0 %v6944
    %7070 = vmatpush.bf16.msra.mxu0 %v6940
    %7071 = vmatpush.bf16.msra.mxu0 %v6936
    %7072 = vmatpush.bf16.msra.mxu0 %v6932
    %7073 = vmatpush.bf16.msra.mxu0 %v6928
    %7074 = vmatpush.bf16.msra.mxu0 %v6924
    %7075 = vmatpush.bf16.msra.mxu0 %v6920
    %7076 = vmatpush.bf16.msra.mxu0 %v6916
    %7077 = vmatmul.bf16.gmra.mxu0 %v6593
    %v7078 = vpop.f32.mrf.mxu0
    %v7079 = vadd.f32 0.0, %v7078
    %v7080 = vpop.f32.mrf.mxu0
    %7081 = vdwg.mxu0
    %7082 = vmatpush.bf16.msra.mxu0 %v6976
    %7083 = vmatpush.bf16.msra.mxu0 %v6972
    %7084 = vmatpush.bf16.msra.mxu0 %v6968
    %7085 = vmatpush.bf16.msra.mxu0 %v6964
    %7086 = vmatpush.bf16.msra.mxu0 %v6960
    %7087 = vmatpush.bf16.msra.mxu0 %v6956
    %7088 = vmatpush.bf16.msra.mxu0 %v6952
    %7089 = vmatpush.bf16.msra.mxu0 %v6948
    %7090 = vmatmul.bf16.gmra.mxu0 %v6594
    %v7091 = vpop.f32.mrf.mxu0
    %v7092 = vadd.f32 %v7079, %v7091
    %v7093 = vpop.f32.mrf.mxu0
    %7094 = vdwg.mxu0
    %7095 = vmatpush.bf16.msra.mxu0 %v6945
    %7096 = vmatpush.bf16.msra.mxu0 %v6941
    %7097 = vmatpush.bf16.msra.mxu0 %v6937
    %7098 = vmatpush.bf16.msra.mxu0 %v6933
    %7099 = vmatpush.bf16.msra.mxu0 %v6929
    %7100 = vmatpush.bf16.msra.mxu0 %v6925
    %7101 = vmatpush.bf16.msra.mxu0 %v6921
    %7102 = vmatpush.bf16.msra.mxu0 %v6917
    %7103 = vmatmul.bf16.gmra.mxu0 %v6593
    %v7104 = vpop.f32.mrf.mxu0
    %v7105 = vadd.f32 0.0, %v7104
    %v7106 = vpop.f32.mrf.mxu0
    %7107 = vdwg.mxu0
    %7108 = vmatpush.bf16.msra.mxu0 %v6977
    %7109 = vmatpush.bf16.msra.mxu0 %v6973
    %7110 = vmatpush.bf16.msra.mxu0 %v6969
    %7111 = vmatpush.bf16.msra.mxu0 %v6965
    %7112 = vmatpush.bf16.msra.mxu0 %v6961
    %7113 = vmatpush.bf16.msra.mxu0 %v6957
    %7114 = vmatpush.bf16.msra.mxu0 %v6953
    %7115 = vmatpush.bf16.msra.mxu0 %v6949
    %7116 = vmatmul.bf16.gmra.mxu0 %v6594
    %v7117 = vpop.f32.mrf.mxu0
    %v7118 = vadd.f32 %v7105, %v7117
    %v7119 = vpop.f32.mrf.mxu0
    %7120 = vdwg.mxu0
    %7121 = vmatpush.bf16.msra.mxu0 %v6946
    %7122 = vmatpush.bf16.msra.mxu0 %v6942
    %7123 = vmatpush.bf16.msra.mxu0 %v6938
    %7124 = vmatpush.bf16.msra.mxu0 %v6934
    %7125 = vmatpush.bf16.msra.mxu0 %v6930
    %7126 = vmatpush.bf16.msra.mxu0 %v6926
    %7127 = vmatpush.bf16.msra.mxu0 %v6922
    %7128 = vmatpush.bf16.msra.mxu0 %v6918
    %7129 = vmatmul.bf16.gmra.mxu0 %v6593
    %v7130 = vpop.f32.mrf.mxu0
    %v7131 = vadd.f32 0.0, %v7130
    %v7132 = vpop.f32.mrf.mxu0
    %7133 = vdwg.mxu0
    %7134 = vmatpush.bf16.msra.mxu0 %v6978
    %7135 = vmatpush.bf16.msra.mxu0 %v6974
    %7136 = vmatpush.bf16.msra.mxu0 %v6970
    %7137 = vmatpush.bf16.msra.mxu0 %v6966
    %7138 = vmatpush.bf16.msra.mxu0 %v6962
    %7139 = vmatpush.bf16.msra.mxu0 %v6958
    %7140 = vmatpush.bf16.msra.mxu0 %v6954
    %7141 = vmatpush.bf16.msra.mxu0 %v6950
    %7142 = vmatmul.bf16.gmra.mxu0 %v6594
    %v7143 = vpop.f32.mrf.mxu0
    %v7144 = vadd.f32 %v7131, %v7143
    %v7145 = vpop.f32.mrf.mxu0
    %7146 = vdwg.mxu0
    %v7211 = vunpack.c.l.b16 %v6595
    %v7212 = vunpack.c.h.b16 %v6595
    %v7213 = vunpack.c.l.b16 %v6596
    %v7214 = vunpack.c.h.b16 %v6596
    %v7215 = vunpack.c.l.b16 %v6597
    %v7216 = vunpack.c.h.b16 %v6597
    %v7217 = vunpack.c.l.b16 %v6598
    %v7218 = vunpack.c.h.b16 %v6598
    %v7219 = vunpack.c.l.b16 %v6599
    %v7220 = vunpack.c.h.b16 %v6599
    %v7221 = vunpack.c.l.b16 %v6600
    %v7222 = vunpack.c.h.b16 %v6600
    %v7223 = vunpack.c.l.b16 %v6601
    %v7224 = vunpack.c.h.b16 %v6601
    %v7225 = vunpack.c.l.b16 %v6602
    %v7226 = vunpack.c.h.b16 %v6602
    %v7227 = vunpack.c.l.b16 %v6603
    %v7228 = vunpack.c.h.b16 %v6603
    %v7229 = vunpack.c.l.b16 %v6604
    %v7230 = vunpack.c.h.b16 %v6604
    %v7231 = vunpack.c.l.b16 %v6605
    %v7232 = vunpack.c.h.b16 %v6605
    %v7233 = vunpack.c.l.b16 %v6606
    %v7234 = vunpack.c.h.b16 %v6606
    %v7235 = vunpack.c.l.b16 %v6607
    %v7236 = vunpack.c.h.b16 %v6607
    %v7237 = vunpack.c.l.b16 %v6608
    %v7238 = vunpack.c.h.b16 %v6608
    %v7239 = vunpack.c.l.b16 %v6609
    %v7240 = vunpack.c.h.b16 %v6609
    %v7241 = vunpack.c.l.b16 %v6610
    %v7242 = vunpack.c.h.b16 %v6610
    %v7243 = vunpack.c.l.b16 %v6611
    %v7244 = vunpack.c.h.b16 %v6611
    %v7245 = vunpack.c.l.b16 %v6612
    %v7246 = vunpack.c.h.b16 %v6612
    %v7247 = vunpack.c.l.b16 %v6613
    %v7248 = vunpack.c.h.b16 %v6613
    %v7249 = vunpack.c.l.b16 %v6614
    %v7250 = vunpack.c.h.b16 %v6614
    %v7251 = vunpack.c.l.b16 %v6615
    %v7252 = vunpack.c.h.b16 %v6615
    %v7253 = vunpack.c.l.b16 %v6616
    %v7254 = vunpack.c.h.b16 %v6616
    %v7255 = vunpack.c.l.b16 %v6617
    %v7256 = vunpack.c.h.b16 %v6617
    %v7257 = vunpack.c.l.b16 %v6618
    %v7258 = vunpack.c.h.b16 %v6618
    %v7259 = vunpack.c.l.b16 %v6619
    %v7260 = vunpack.c.h.b16 %v6619
    %v7261 = vunpack.c.l.b16 %v6620
    %v7262 = vunpack.c.h.b16 %v6620
    %v7263 = vunpack.c.l.b16 %v6621
    %v7264 = vunpack.c.h.b16 %v6621
    %v7265 = vunpack.c.l.b16 %v6622
    %v7266 = vunpack.c.h.b16 %v6622
    %v7267 = vunpack.c.l.b16 %v6623
    %v7268 = vunpack.c.h.b16 %v6623
    %v7269 = vunpack.c.l.b16 %v6624
    %v7270 = vunpack.c.h.b16 %v6624
    %v7271 = vunpack.c.l.b16 %v6625
    %v7272 = vunpack.c.h.b16 %v6625
    %v7273 = vunpack.c.l.b16 %v6626
    %v7274 = vunpack.c.h.b16 %v6626
    %v7275 = vunpack.c.l.b16 %v6627
    %v7276 = vunpack.c.h.b16 %v6627
    %v7277 = vunpack.c.l.b16 %v6628
    %v7278 = vunpack.c.h.b16 %v6628
    %v7279 = vunpack.c.l.b16 %v6629
    %v7280 = vunpack.c.h.b16 %v6629
    %v7281 = vunpack.c.l.b16 %v6630
    %v7282 = vunpack.c.h.b16 %v6630
    %v7283 = vunpack.c.l.b16 %v6631
    %v7284 = vunpack.c.h.b16 %v6631
    %v7285 = vunpack.c.l.b16 %v6632
    %v7286 = vunpack.c.h.b16 %v6632
    %v7287 = vunpack.c.l.b16 %v6633
    %v7288 = vunpack.c.h.b16 %v6633
    %v7289 = vunpack.c.l.b16 %v6634
    %v7290 = vunpack.c.h.b16 %v6634
    %v7291 = vunpack.c.l.b16 %v6635
    %v7292 = vunpack.c.h.b16 %v6635
    %v7293 = vunpack.c.l.b16 %v6636
    %v7294 = vunpack.c.h.b16 %v6636
    %v7295 = vunpack.c.l.b16 %v6637
    %v7296 = vunpack.c.h.b16 %v6637
    %v7297 = vunpack.c.l.b16 %v6638
    %v7298 = vunpack.c.h.b16 %v6638
    %v7299 = vunpack.c.l.b16 %v6639
    %v7300 = vunpack.c.h.b16 %v6639
    %v7301 = vunpack.c.l.b16 %v6640
    %v7302 = vunpack.c.h.b16 %v6640
    %v7303 = vunpack.c.l.b16 %v6641
    %v7304 = vunpack.c.h.b16 %v6641
    %v7305 = vunpack.c.l.b16 %v6642
    %v7306 = vunpack.c.h.b16 %v6642
    %v7307 = vunpack.c.l.b16 %v6643
    %v7308 = vunpack.c.h.b16 %v6643
    %v7309 = vunpack.c.l.b16 %v6644
    %v7310 = vunpack.c.h.b16 %v6644
    %v7311 = vunpack.c.l.b16 %v6645
    %v7312 = vunpack.c.h.b16 %v6645
    %v7313 = vunpack.c.l.b16 %v6646
    %v7314 = vunpack.c.h.b16 %v6646
    %v7315 = vunpack.c.l.b16 %v6647
    %v7316 = vunpack.c.h.b16 %v6647
    %v7317 = vunpack.c.l.b16 %v6648
    %v7318 = vunpack.c.h.b16 %v6648
    %v7319 = vunpack.c.l.b16 %v6649
    %v7320 = vunpack.c.h.b16 %v6649
    %v7321 = vunpack.c.l.b16 %v6650
    %v7322 = vunpack.c.h.b16 %v6650
    %v7323 = vunpack.c.l.b16 %v6651
    %v7324 = vunpack.c.h.b16 %v6651
    %v7325 = vunpack.c.l.b16 %v6652
    %v7326 = vunpack.c.h.b16 %v6652
    %v7327 = vunpack.c.l.b16 %v6653
    %v7328 = vunpack.c.h.b16 %v6653
    %v7329 = vunpack.c.l.b16 %v6654
    %v7330 = vunpack.c.h.b16 %v6654
    %v7331 = vunpack.c.l.b16 %v6655
    %v7332 = vunpack.c.h.b16 %v6655
    %v7333 = vunpack.c.l.b16 %v6656
    %v7334 = vunpack.c.h.b16 %v6656
    %v7335 = vunpack.c.l.b16 %v6657
    %v7336 = vunpack.c.h.b16 %v6657
    %v7337 = vunpack.c.l.b16 %v6658
    %v7338 = vunpack.c.h.b16 %v6658
    %v7339 = vpack.c.b16 %v7215, %v7211
    %v7340 = vpack.c.b16 %v7216, %v7212
    %v7341 = vpack.c.b16 %v7217, %v7213
    %v7342 = vpack.c.b16 %v7218, %v7214
    %v7343 = vpack.c.b16 %v7223, %v7219
    %v7344 = vpack.c.b16 %v7224, %v7220
    %v7345 = vpack.c.b16 %v7225, %v7221
    %v7346 = vpack.c.b16 %v7226, %v7222
    %v7347 = vpack.c.b16 %v7231, %v7227
    %v7348 = vpack.c.b16 %v7232, %v7228
    %v7349 = vpack.c.b16 %v7233, %v7229
    %v7350 = vpack.c.b16 %v7234, %v7230
    %v7351 = vpack.c.b16 %v7239, %v7235
    %v7352 = vpack.c.b16 %v7240, %v7236
    %v7353 = vpack.c.b16 %v7241, %v7237
    %v7354 = vpack.c.b16 %v7242, %v7238
    %v7355 = vpack.c.b16 %v7247, %v7243
    %v7356 = vpack.c.b16 %v7248, %v7244
    %v7357 = vpack.c.b16 %v7249, %v7245
    %v7358 = vpack.c.b16 %v7250, %v7246
    %v7359 = vpack.c.b16 %v7255, %v7251
    %v7360 = vpack.c.b16 %v7256, %v7252
    %v7361 = vpack.c.b16 %v7257, %v7253
    %v7362 = vpack.c.b16 %v7258, %v7254
    %v7363 = vpack.c.b16 %v7263, %v7259
    %v7364 = vpack.c.b16 %v7264, %v7260
    %v7365 = vpack.c.b16 %v7265, %v7261
    %v7366 = vpack.c.b16 %v7266, %v7262
    %v7367 = vpack.c.b16 %v7271, %v7267
    %v7368 = vpack.c.b16 %v7272, %v7268
    %v7369 = vpack.c.b16 %v7273, %v7269
    %v7370 = vpack.c.b16 %v7274, %v7270
    %v7371 = vpack.c.b16 %v7279, %v7275
    %v7372 = vpack.c.b16 %v7280, %v7276
    %v7373 = vpack.c.b16 %v7281, %v7277
    %v7374 = vpack.c.b16 %v7282, %v7278
    %v7375 = vpack.c.b16 %v7287, %v7283
    %v7376 = vpack.c.b16 %v7288, %v7284
    %v7377 = vpack.c.b16 %v7289, %v7285
    %v7378 = vpack.c.b16 %v7290, %v7286
    %v7379 = vpack.c.b16 %v7295, %v7291
    %v7380 = vpack.c.b16 %v7296, %v7292
    %v7381 = vpack.c.b16 %v7297, %v7293
    %v7382 = vpack.c.b16 %v7298, %v7294
    %v7383 = vpack.c.b16 %v7303, %v7299
    %v7384 = vpack.c.b16 %v7304, %v7300
    %v7385 = vpack.c.b16 %v7305, %v7301
    %v7386 = vpack.c.b16 %v7306, %v7302
    %v7387 = vpack.c.b16 %v7311, %v7307
    %v7388 = vpack.c.b16 %v7312, %v7308
    %v7389 = vpack.c.b16 %v7313, %v7309
    %v7390 = vpack.c.b16 %v7314, %v7310
    %v7391 = vpack.c.b16 %v7319, %v7315
    %v7392 = vpack.c.b16 %v7320, %v7316
    %v7393 = vpack.c.b16 %v7321, %v7317
    %v7394 = vpack.c.b16 %v7322, %v7318
    %v7395 = vpack.c.b16 %v7327, %v7323
    %v7396 = vpack.c.b16 %v7328, %v7324
    %v7397 = vpack.c.b16 %v7329, %v7325
    %v7398 = vpack.c.b16 %v7330, %v7326
    %v7399 = vpack.c.b16 %v7335, %v7331
    %v7400 = vpack.c.b16 %v7336, %v7332
    %v7401 = vpack.c.b16 %v7337, %v7333
    %v7402 = vpack.c.b16 %v7338, %v7334
    %7467 = vmatpush.bf16.msra.mxu0 %v7367
    %7468 = vmatpush.bf16.msra.mxu0 %v7363
    %7469 = vmatpush.bf16.msra.mxu0 %v7359
    %7470 = vmatpush.bf16.msra.mxu0 %v7355
    %7471 = vmatpush.bf16.msra.mxu0 %v7351
    %7472 = vmatpush.bf16.msra.mxu0 %v7347
    %7473 = vmatpush.bf16.msra.mxu0 %v7343
    %7474 = vmatpush.bf16.msra.mxu0 %v7339
    %7475 = vmatmul.bf16.gmra.mxu0 %v6591
    %v7476 = vpop.f32.mrf.mxu0
    %v7477 = vadd.f32 %v7066, %v7476
    %v7478 = vpop.f32.mrf.mxu0
    %7479 = vdwg.mxu0
    %7480 = vmatpush.bf16.msra.mxu0 %v7399
    %7481 = vmatpush.bf16.msra.mxu0 %v7395
    %7482 = vmatpush.bf16.msra.mxu0 %v7391
    %7483 = vmatpush.bf16.msra.mxu0 %v7387
    %7484 = vmatpush.bf16.msra.mxu0 %v7383
    %7485 = vmatpush.bf16.msra.mxu0 %v7379
    %7486 = vmatpush.bf16.msra.mxu0 %v7375
    %7487 = vmatpush.bf16.msra.mxu0 %v7371
    %7488 = vmatmul.bf16.gmra.mxu0 %v6592
    %v7489 = vpop.f32.mrf.mxu0
    %v7490 = vadd.f32 %v7477, %v7489
    %v7491 = vpop.f32.mrf.mxu0
    %7492 = vdwg.mxu0
    %7493 = vmatpush.bf16.msra.mxu0 %v7368
    %7494 = vmatpush.bf16.msra.mxu0 %v7364
    %7495 = vmatpush.bf16.msra.mxu0 %v7360
    %7496 = vmatpush.bf16.msra.mxu0 %v7356
    %7497 = vmatpush.bf16.msra.mxu0 %v7352
    %7498 = vmatpush.bf16.msra.mxu0 %v7348
    %7499 = vmatpush.bf16.msra.mxu0 %v7344
    %7500 = vmatpush.bf16.msra.mxu0 %v7340
    %7501 = vmatmul.bf16.gmra.mxu0 %v6591
    %v7502 = vpop.f32.mrf.mxu0
    %v7503 = vadd.f32 %v7092, %v7502
    %v7504 = vpop.f32.mrf.mxu0
    %7505 = vdwg.mxu0
    %7506 = vmatpush.bf16.msra.mxu0 %v7400
    %7507 = vmatpush.bf16.msra.mxu0 %v7396
    %7508 = vmatpush.bf16.msra.mxu0 %v7392
    %7509 = vmatpush.bf16.msra.mxu0 %v7388
    %7510 = vmatpush.bf16.msra.mxu0 %v7384
    %7511 = vmatpush.bf16.msra.mxu0 %v7380
    %7512 = vmatpush.bf16.msra.mxu0 %v7376
    %7513 = vmatpush.bf16.msra.mxu0 %v7372
    %7514 = vmatmul.bf16.gmra.mxu0 %v6592
    %v7515 = vpop.f32.mrf.mxu0
    %v7516 = vadd.f32 %v7503, %v7515
    %v7517 = vpop.f32.mrf.mxu0
    %7518 = vdwg.mxu0
    %7519 = vmatpush.bf16.msra.mxu0 %v7369
    %7520 = vmatpush.bf16.msra.mxu0 %v7365
    %7521 = vmatpush.bf16.msra.mxu0 %v7361
    %7522 = vmatpush.bf16.msra.mxu0 %v7357
    %7523 = vmatpush.bf16.msra.mxu0 %v7353
    %7524 = vmatpush.bf16.msra.mxu0 %v7349
    %7525 = vmatpush.bf16.msra.mxu0 %v7345
    %7526 = vmatpush.bf16.msra.mxu0 %v7341
    %7527 = vmatmul.bf16.gmra.mxu0 %v6591
    %v7528 = vpop.f32.mrf.mxu0
    %v7529 = vadd.f32 %v7118, %v7528
    %v7530 = vpop.f32.mrf.mxu0
    %7531 = vdwg.mxu0
    %7532 = vmatpush.bf16.msra.mxu0 %v7401
    %7533 = vmatpush.bf16.msra.mxu0 %v7397
    %7534 = vmatpush.bf16.msra.mxu0 %v7393
    %7535 = vmatpush.bf16.msra.mxu0 %v7389
    %7536 = vmatpush.bf16.msra.mxu0 %v7385
    %7537 = vmatpush.bf16.msra.mxu0 %v7381
    %7538 = vmatpush.bf16.msra.mxu0 %v7377
    %7539 = vmatpush.bf16.msra.mxu0 %v7373
    %7540 = vmatmul.bf16.gmra.mxu0 %v6592
    %v7541 = vpop.f32.mrf.mxu0
    %v7542 = vadd.f32 %v7529, %v7541
    %v7543 = vpop.f32.mrf.mxu0
    %7544 = vdwg.mxu0
    %7545 = vmatpush.bf16.msra.mxu0 %v7370
    %7546 = vmatpush.bf16.msra.mxu0 %v7366
    %7547 = vmatpush.bf16.msra.mxu0 %v7362
    %7548 = vmatpush.bf16.msra.mxu0 %v7358
    %7549 = vmatpush.bf16.msra.mxu0 %v7354
    %7550 = vmatpush.bf16.msra.mxu0 %v7350
    %7551 = vmatpush.bf16.msra.mxu0 %v7346
    %7552 = vmatpush.bf16.msra.mxu0 %v7342
    %7553 = vmatmul.bf16.gmra.mxu0 %v6591
    %v7554 = vpop.f32.mrf.mxu0
    %v7555 = vadd.f32 %v7144, %v7554
    %v7556 = vpop.f32.mrf.mxu0
    %7557 = vdwg.mxu0
    %7558 = vmatpush.bf16.msra.mxu0 %v7402
    %7559 = vmatpush.bf16.msra.mxu0 %v7398
    %7560 = vmatpush.bf16.msra.mxu0 %v7394
    %7561 = vmatpush.bf16.msra.mxu0 %v7390
    %7562 = vmatpush.bf16.msra.mxu0 %v7386
    %7563 = vmatpush.bf16.msra.mxu0 %v7382
    %7564 = vmatpush.bf16.msra.mxu0 %v7378
    %7565 = vmatpush.bf16.msra.mxu0 %v7374
    %7566 = vmatmul.bf16.gmra.mxu0 %v6592
    %v7567 = vpop.f32.mrf.mxu0
    %v7568 = vadd.f32 %v7555, %v7567
    %v7569 = vpop.f32.mrf.mxu0
    %7570 = vdwg.mxu0
    %v7571 = vld [vmem:[#allocation11] sm:$0xf]
    %v7573 = vperm.slane %v7571, 0
    %v7574 = vperm.slane %v7571, 1
    %v7575 = vperm.slane %v7571, 2
    %v7576 = vperm.slane %v7571, 3
    %v7581 = vadd.f32 %v7490, %v7573
    %v7582 = vadd.f32 %v7516, %v7574
    %v7583 = vadd.f32 %v7542, %v7575
    %v7584 = vadd.f32 %v7568, %v7576
    %v7585 = vxor.u32 %v7581, 2147483648
    %v7586 = vxor.u32 %v7582, 2147483648
    %v7587 = vxor.u32 %v7583, 2147483648
    %v7588 = vxor.u32 %v7584, 2147483648
    %v7589 = vmul.f32 %v7585, 1.442695
    %v7590 = vpow.pop %v7589
    %v7591 = vmul.f32 %v7586, 1.442695
    %v7592 = vpow.pop %v7591
    %v7593 = vmul.f32 %v7587, 1.442695
    %v7594 = vpow.pop %v7593
    %v7595 = vmul.f32 %v7588, 1.442695
    %v7596 = vpow.pop %v7595
    %v7597 = vadd.f32 %v7590, 1.0
    %v7598 = vadd.f32 %v7592, 1.0
    %v7599 = vadd.f32 %v7594, 1.0
    %v7600 = vadd.f32 %v7596, 1.0
    %v7601 = vrcp.pop %v7597
    %v7602 = vmul.f32 %v7597, %v7601
    %v7603 = vsub.f32 1.0, %v7602
    %v7604 = vmul.f32 %v7601, %v7603
    %v7605 = vadd.f32 %v7601, %v7604
    %vm7606 = vweird.f32 %v7597
    %vm7607 = vweird.f32 %v7601
    %vm7608 = vmor %vm7606, %vm7607
    %v7609 = vsel %vm7608, %v7601, %v7605
    %v7610 = vand.u32 2147483647, %v7597
    %vm7611 = vcmp.eq.f32.partialorder %v7610, 8.507059e+37
    %v7612 = vand.u32 %v7597, 2147483648
    %v7613 = vor.u32 1.1754944e-38, %v7612
    %v7614 = vsel %vm7611, %v7613, %v7609
    %v7615 = vmul.f32 1.0, %v7614
    %v7616 = vrcp.pop %v7598
    %v7617 = vmul.f32 %v7598, %v7616
    %v7618 = vsub.f32 1.0, %v7617
    %v7619 = vmul.f32 %v7616, %v7618
    %v7620 = vadd.f32 %v7616, %v7619
    %vm7621 = vweird.f32 %v7598
    %vm7622 = vweird.f32 %v7616
    %vm7623 = vmor %vm7621, %vm7622
    %v7624 = vsel %vm7623, %v7616, %v7620
    %v7625 = vand.u32 2147483647, %v7598
    %vm7626 = vcmp.eq.f32.partialorder %v7625, 8.507059e+37
    %v7627 = vand.u32 %v7598, 2147483648
    %v7628 = vor.u32 1.1754944e-38, %v7627
    %v7629 = vsel %vm7626, %v7628, %v7624
    %v7630 = vmul.f32 1.0, %v7629
    %v7631 = vrcp.pop %v7599
    %v7632 = vmul.f32 %v7599, %v7631
    %v7633 = vsub.f32 1.0, %v7632
    %v7634 = vmul.f32 %v7631, %v7633
    %v7635 = vadd.f32 %v7631, %v7634
    %vm7636 = vweird.f32 %v7599
    %vm7637 = vweird.f32 %v7631
    %vm7638 = vmor %vm7636, %vm7637
    %v7639 = vsel %vm7638, %v7631, %v7635
    %v7640 = vand.u32 2147483647, %v7599
    %vm7641 = vcmp.eq.f32.partialorder %v7640, 8.507059e+37
    %v7642 = vand.u32 %v7599, 2147483648
    %v7643 = vor.u32 1.1754944e-38, %v7642
    %v7644 = vsel %vm7641, %v7643, %v7639
    %v7645 = vmul.f32 1.0, %v7644
    %v7646 = vrcp.pop %v7600
    %v7647 = vmul.f32 %v7600, %v7646
    %v7648 = vsub.f32 1.0, %v7647
    %v7649 = vmul.f32 %v7646, %v7648
    %v7650 = vadd.f32 %v7646, %v7649
    %vm7651 = vweird.f32 %v7600
    %vm7652 = vweird.f32 %v7646
    %vm7653 = vmor %vm7651, %vm7652
    %v7654 = vsel %vm7653, %v7646, %v7650
    %v7655 = vand.u32 2147483647, %v7600
    %vm7656 = vcmp.eq.f32.partialorder %v7655, 8.507059e+37
    %v7657 = vand.u32 %v7600, 2147483648
    %v7658 = vor.u32 1.1754944e-38, %v7657
    %v7659 = vsel %vm7656, %v7658, %v7654
    %v7660 = vmul.f32 1.0, %v7659
    %v7661 = vld [vmem:[#allocation12] sm:$0xff]
    %v7662 = vld [vmem:[#allocation12 + $0x8] sm:$0xff]
    %v7663 = vld [vmem:[#allocation12 + $0x10] sm:$0xff]
    %v7664 = vld [vmem:[#allocation12 + $0x18] sm:$0xff]
    %v7665 = vld [vmem:[#allocation12 + $0x20] sm:$0xff]
    %v7666 = vld [vmem:[#allocation12 + $0x28] sm:$0xff]
    %v7667 = vld [vmem:[#allocation12 + $0x30] sm:$0xff]
    %v7668 = vld [vmem:[#allocation12 + $0x38] sm:$0xff]
    %v7669 = vld [vmem:[#allocation12 + $0x40] sm:$0xff]
    %v7670 = vld [vmem:[#allocation12 + $0x48] sm:$0xff]
    %v7671 = vld [vmem:[#allocation12 + $0x50] sm:$0xff]
    %v7672 = vld [vmem:[#allocation12 + $0x58] sm:$0xff]
    %v7673 = vld [vmem:[#allocation12 + $0x60] sm:$0xff]
    %v7674 = vld [vmem:[#allocation12 + $0x68] sm:$0xff]
    %v7675 = vld [vmem:[#allocation12 + $0x70] sm:$0xff]
    %v7676 = vld [vmem:[#allocation12 + $0x78] sm:$0xff]
    %v7677 = vld [vmem:[#allocation12 + $0x80] sm:$0xff]
    %v7678 = vld [vmem:[#allocation12 + $0x88] sm:$0xff]
    %v7679 = vld [vmem:[#allocation12 + $0x90] sm:$0xff]
    %v7680 = vld [vmem:[#allocation12 + $0x98] sm:$0xff]
    %v7681 = vld [vmem:[#allocation12 + $0xa0] sm:$0xff]
    %v7682 = vld [vmem:[#allocation12 + $0xa8] sm:$0xff]
    %v7683 = vld [vmem:[#allocation12 + $0xb0] sm:$0xff]
    %v7684 = vld [vmem:[#allocation12 + $0xb8] sm:$0xff]
    %v7685 = vld [vmem:[#allocation12 + $0xc0] sm:$0xff]
    %v7686 = vld [vmem:[#allocation12 + $0xc8] sm:$0xff]
    %v7687 = vld [vmem:[#allocation12 + $0xd0] sm:$0xff]
    %v7688 = vld [vmem:[#allocation12 + $0xd8] sm:$0xff]
    %v7689 = vld [vmem:[#allocation12 + $0xe0] sm:$0xff]
    %v7690 = vld [vmem:[#allocation12 + $0xe8] sm:$0xff]
    %v7691 = vld [vmem:[#allocation12 + $0xf0] sm:$0xff]
    %v7692 = vld [vmem:[#allocation12 + $0xf8] sm:$0xff]
    %v7693 = vld [vmem:[%s7] sm:$0x3]
    %v7726 = vunpack.c.l.b16 %v7661
    %v7727 = vunpack.c.h.b16 %v7661
    %v7728 = vunpack.c.l.b16 %v7662
    %v7729 = vunpack.c.h.b16 %v7662
    %v7730 = vunpack.c.l.b16 %v7663
    %v7731 = vunpack.c.h.b16 %v7663
    %v7732 = vunpack.c.l.b16 %v7664
    %v7733 = vunpack.c.h.b16 %v7664
    %v7734 = vunpack.c.l.b16 %v7665
    %v7735 = vunpack.c.h.b16 %v7665
    %v7736 = vunpack.c.l.b16 %v7666
    %v7737 = vunpack.c.h.b16 %v7666
    %v7738 = vunpack.c.l.b16 %v7667
    %v7739 = vunpack.c.h.b16 %v7667
    %v7740 = vunpack.c.l.b16 %v7668
    %v7741 = vunpack.c.h.b16 %v7668
    %v7742 = vunpack.c.l.b16 %v7669
    %v7743 = vunpack.c.h.b16 %v7669
    %v7744 = vunpack.c.l.b16 %v7670
    %v7745 = vunpack.c.h.b16 %v7670
    %v7746 = vunpack.c.l.b16 %v7671
    %v7747 = vunpack.c.h.b16 %v7671
    %v7748 = vunpack.c.l.b16 %v7672
    %v7749 = vunpack.c.h.b16 %v7672
    %v7750 = vunpack.c.l.b16 %v7673
    %v7751 = vunpack.c.h.b16 %v7673
    %v7752 = vunpack.c.l.b16 %v7674
    %v7753 = vunpack.c.h.b16 %v7674
    %v7754 = vunpack.c.l.b16 %v7675
    %v7755 = vunpack.c.h.b16 %v7675
    %v7756 = vunpack.c.l.b16 %v7676
    %v7757 = vunpack.c.h.b16 %v7676
    %v7758 = vunpack.c.l.b16 %v7677
    %v7759 = vunpack.c.h.b16 %v7677
    %v7760 = vunpack.c.l.b16 %v7678
    %v7761 = vunpack.c.h.b16 %v7678
    %v7762 = vunpack.c.l.b16 %v7679
    %v7763 = vunpack.c.h.b16 %v7679
    %v7764 = vunpack.c.l.b16 %v7680
    %v7765 = vunpack.c.h.b16 %v7680
    %v7766 = vunpack.c.l.b16 %v7681
    %v7767 = vunpack.c.h.b16 %v7681
    %v7768 = vunpack.c.l.b16 %v7682
    %v7769 = vunpack.c.h.b16 %v7682
    %v7770 = vunpack.c.l.b16 %v7683
    %v7771 = vunpack.c.h.b16 %v7683
    %v7772 = vunpack.c.l.b16 %v7684
    %v7773 = vunpack.c.h.b16 %v7684
    %v7774 = vunpack.c.l.b16 %v7685
    %v7775 = vunpack.c.h.b16 %v7685
    %v7776 = vunpack.c.l.b16 %v7686
    %v7777 = vunpack.c.h.b16 %v7686
    %v7778 = vunpack.c.l.b16 %v7687
    %v7779 = vunpack.c.h.b16 %v7687
    %v7780 = vunpack.c.l.b16 %v7688
    %v7781 = vunpack.c.h.b16 %v7688
    %v7782 = vunpack.c.l.b16 %v7689
    %v7783 = vunpack.c.h.b16 %v7689
    %v7784 = vunpack.c.l.b16 %v7690
    %v7785 = vunpack.c.h.b16 %v7690
    %v7786 = vunpack.c.l.b16 %v7691
    %v7787 = vunpack.c.h.b16 %v7691
    %v7788 = vunpack.c.l.b16 %v7692
    %v7789 = vunpack.c.h.b16 %v7692
    %v7790 = vpack.c.b16 %v7728, %v7726
    %v7791 = vpack.c.b16 %v7729, %v7727
    %v7792 = vpack.c.b16 %v7732, %v7730
    %v7793 = vpack.c.b16 %v7733, %v7731
    %v7794 = vpack.c.b16 %v7736, %v7734
    %v7795 = vpack.c.b16 %v7737, %v7735
    %v7796 = vpack.c.b16 %v7740, %v7738
    %v7797 = vpack.c.b16 %v7741, %v7739
    %v7798 = vpack.c.b16 %v7744, %v7742
    %v7799 = vpack.c.b16 %v7745, %v7743
    %v7800 = vpack.c.b16 %v7748, %v7746
    %v7801 = vpack.c.b16 %v7749, %v7747
    %v7802 = vpack.c.b16 %v7752, %v7750
    %v7803 = vpack.c.b16 %v7753, %v7751
    %v7804 = vpack.c.b16 %v7756, %v7754
    %v7805 = vpack.c.b16 %v7757, %v7755
    %v7806 = vpack.c.b16 %v7760, %v7758
    %v7807 = vpack.c.b16 %v7761, %v7759
    %v7808 = vpack.c.b16 %v7764, %v7762
    %v7809 = vpack.c.b16 %v7765, %v7763
    %v7810 = vpack.c.b16 %v7768, %v7766
    %v7811 = vpack.c.b16 %v7769, %v7767
    %v7812 = vpack.c.b16 %v7772, %v7770
    %v7813 = vpack.c.b16 %v7773, %v7771
    %v7814 = vpack.c.b16 %v7776, %v7774
    %v7815 = vpack.c.b16 %v7777, %v7775
    %v7816 = vpack.c.b16 %v7780, %v7778
    %v7817 = vpack.c.b16 %v7781, %v7779
    %v7818 = vpack.c.b16 %v7784, %v7782
    %v7819 = vpack.c.b16 %v7785, %v7783
    %v7820 = vpack.c.b16 %v7788, %v7786
    %v7821 = vpack.c.b16 %v7789, %v7787
    %v7855 = vperm.slane %v7693, 0
    %v7856 = vperm.slane %v7693, 1
    %7859 = vmatpush.bf16.msra.mxu0 %v7804
    %7860 = vmatpush.bf16.msra.mxu0 %v7802
    %7861 = vmatpush.bf16.msra.mxu0 %v7800
    %7862 = vmatpush.bf16.msra.mxu0 %v7798
    %7863 = vmatpush.bf16.msra.mxu0 %v7796
    %7864 = vmatpush.bf16.msra.mxu0 %v7794
    %7865 = vmatpush.bf16.msra.mxu0 %v7792
    %7866 = vmatpush.bf16.msra.mxu0 %v7790
    %7867 = vmatmul.bf16.gmra.mxu0 %v6591
    %v7868 = vpop.f32.mrf.mxu0
    %v7869 = vadd.f32 %v7855, %v7868
    %v7870 = vpop.f32.mrf.mxu0
    %7871 = vdwg.mxu0
    %7872 = vmatpush.bf16.msra.mxu0 %v7820
    %7873 = vmatpush.bf16.msra.mxu0 %v7818
    %7874 = vmatpush.bf16.msra.mxu0 %v7816
    %7875 = vmatpush.bf16.msra.mxu0 %v7814
    %7876 = vmatpush.bf16.msra.mxu0 %v7812
    %7877 = vmatpush.bf16.msra.mxu0 %v7810
    %7878 = vmatpush.bf16.msra.mxu0 %v7808
    %7879 = vmatpush.bf16.msra.mxu0 %v7806
    %7880 = vmatmul.bf16.gmra.mxu0 %v6592
    %v7881 = vpop.f32.mrf.mxu0
    %v7882 = vadd.f32 %v7869, %v7881
    %v7883 = vpop.f32.mrf.mxu0
    %7884 = vdwg.mxu0
    %7885 = vmatpush.bf16.msra.mxu0 %v7805
    %7886 = vmatpush.bf16.msra.mxu0 %v7803
    %7887 = vmatpush.bf16.msra.mxu0 %v7801
    %7888 = vmatpush.bf16.msra.mxu0 %v7799
    %7889 = vmatpush.bf16.msra.mxu0 %v7797
    %7890 = vmatpush.bf16.msra.mxu0 %v7795
    %7891 = vmatpush.bf16.msra.mxu0 %v7793
    %7892 = vmatpush.bf16.msra.mxu0 %v7791
    %7893 = vmatmul.bf16.gmra.mxu0 %v6591
    %v7894 = vpop.f32.mrf.mxu0
    %v7895 = vadd.f32 %v7856, %v7894
    %v7896 = vpop.f32.mrf.mxu0
    %7897 = vdwg.mxu0
    %7898 = vmatpush.bf16.msra.mxu0 %v7821
    %7899 = vmatpush.bf16.msra.mxu0 %v7819
    %7900 = vmatpush.bf16.msra.mxu0 %v7817
    %7901 = vmatpush.bf16.msra.mxu0 %v7815
    %7902 = vmatpush.bf16.msra.mxu0 %v7813
    %7903 = vmatpush.bf16.msra.mxu0 %v7811
    %7904 = vmatpush.bf16.msra.mxu0 %v7809
    %7905 = vmatpush.bf16.msra.mxu0 %v7807
    %7906 = vmatmul.bf16.gmra.mxu0 %v6592
    %v7907 = vpop.f32.mrf.mxu0
    %v7908 = vadd.f32 %v7895, %v7907
    %v7909 = vpop.f32.mrf.mxu0
    %7910 = vdwg.mxu0
    %v7911 = vld [vmem:[#allocation14] sm:$0xff]
    %v7912 = vld [vmem:[#allocation14 + $0x8] sm:$0xff]
    %v7913 = vld [vmem:[#allocation14 + $0x10] sm:$0xff]
    %v7914 = vld [vmem:[#allocation14 + $0x18] sm:$0xff]
    %v7915 = vld [vmem:[#allocation14 + $0x20] sm:$0xff]
    %v7916 = vld [vmem:[#allocation14 + $0x28] sm:$0xff]
    %v7917 = vld [vmem:[#allocation14 + $0x30] sm:$0xff]
    %v7918 = vld [vmem:[#allocation14 + $0x38] sm:$0xff]
    %v7919 = vld [vmem:[#allocation14 + $0x40] sm:$0xff]
    %v7920 = vld [vmem:[#allocation14 + $0x48] sm:$0xff]
    %v7921 = vld [vmem:[#allocation14 + $0x50] sm:$0xff]
    %v7922 = vld [vmem:[#allocation14 + $0x58] sm:$0xff]
    %v7923 = vld [vmem:[#allocation14 + $0x60] sm:$0xff]
    %v7924 = vld [vmem:[#allocation14 + $0x68] sm:$0xff]
    %v7925 = vld [vmem:[#allocation14 + $0x70] sm:$0xff]
    %v7926 = vld [vmem:[#allocation14 + $0x78] sm:$0xff]
    %v7927 = vld [vmem:[#allocation14 + $0x80] sm:$0xff]
    %v7928 = vld [vmem:[#allocation14 + $0x88] sm:$0xff]
    %v7929 = vld [vmem:[#allocation14 + $0x90] sm:$0xff]
    %v7930 = vld [vmem:[#allocation14 + $0x98] sm:$0xff]
    %v7931 = vld [vmem:[#allocation14 + $0xa0] sm:$0xff]
    %v7932 = vld [vmem:[#allocation14 + $0xa8] sm:$0xff]
    %v7933 = vld [vmem:[#allocation14 + $0xb0] sm:$0xff]
    %v7934 = vld [vmem:[#allocation14 + $0xb8] sm:$0xff]
    %v7935 = vld [vmem:[#allocation14 + $0xc0] sm:$0xff]
    %v7936 = vld [vmem:[#allocation14 + $0xc8] sm:$0xff]
    %v7937 = vld [vmem:[#allocation14 + $0xd0] sm:$0xff]
    %v7938 = vld [vmem:[#allocation14 + $0xd8] sm:$0xff]
    %v7939 = vld [vmem:[#allocation14 + $0xe0] sm:$0xff]
    %v7940 = vld [vmem:[#allocation14 + $0xe8] sm:$0xff]
    %v7941 = vld [vmem:[#allocation14 + $0xf0] sm:$0xff]
    %v7942 = vld [vmem:[#allocation14 + $0xf8] sm:$0xff]
    %v7943 = vld [vmem:[#allocation15] sm:$0x3]
    %v7976 = vunpack.c.l.b16 %v7911
    %v7977 = vunpack.c.h.b16 %v7911
    %v7978 = vunpack.c.l.b16 %v7912
    %v7979 = vunpack.c.h.b16 %v7912
    %v7980 = vunpack.c.l.b16 %v7913
    %v7981 = vunpack.c.h.b16 %v7913
    %v7982 = vunpack.c.l.b16 %v7914
    %v7983 = vunpack.c.h.b16 %v7914
    %v7984 = vunpack.c.l.b16 %v7915
    %v7985 = vunpack.c.h.b16 %v7915
    %v7986 = vunpack.c.l.b16 %v7916
    %v7987 = vunpack.c.h.b16 %v7916
    %v7988 = vunpack.c.l.b16 %v7917
    %v7989 = vunpack.c.h.b16 %v7917
    %v7990 = vunpack.c.l.b16 %v7918
    %v7991 = vunpack.c.h.b16 %v7918
    %v7992 = vunpack.c.l.b16 %v7919
    %v7993 = vunpack.c.h.b16 %v7919
    %v7994 = vunpack.c.l.b16 %v7920
    %v7995 = vunpack.c.h.b16 %v7920
    %v7996 = vunpack.c.l.b16 %v7921
    %v7997 = vunpack.c.h.b16 %v7921
    %v7998 = vunpack.c.l.b16 %v7922
    %v7999 = vunpack.c.h.b16 %v7922
    %v8000 = vunpack.c.l.b16 %v7923
    %v8001 = vunpack.c.h.b16 %v7923
    %v8002 = vunpack.c.l.b16 %v7924
    %v8003 = vunpack.c.h.b16 %v7924
    %v8004 = vunpack.c.l.b16 %v7925
    %v8005 = vunpack.c.h.b16 %v7925
    %v8006 = vunpack.c.l.b16 %v7926
    %v8007 = vunpack.c.h.b16 %v7926
    %v8008 = vunpack.c.l.b16 %v7927
    %v8009 = vunpack.c.h.b16 %v7927
    %v8010 = vunpack.c.l.b16 %v7928
    %v8011 = vunpack.c.h.b16 %v7928
    %v8012 = vunpack.c.l.b16 %v7929
    %v8013 = vunpack.c.h.b16 %v7929
    %v8014 = vunpack.c.l.b16 %v7930
    %v8015 = vunpack.c.h.b16 %v7930
    %v8016 = vunpack.c.l.b16 %v7931
    %v8017 = vunpack.c.h.b16 %v7931
    %v8018 = vunpack.c.l.b16 %v7932
    %v8019 = vunpack.c.h.b16 %v7932
    %v8020 = vunpack.c.l.b16 %v7933
    %v8021 = vunpack.c.h.b16 %v7933
    %v8022 = vunpack.c.l.b16 %v7934
    %v8023 = vunpack.c.h.b16 %v7934
    %v8024 = vunpack.c.l.b16 %v7935
    %v8025 = vunpack.c.h.b16 %v7935
    %v8026 = vunpack.c.l.b16 %v7936
    %v8027 = vunpack.c.h.b16 %v7936
    %v8028 = vunpack.c.l.b16 %v7937
    %v8029 = vunpack.c.h.b16 %v7937
    %v8030 = vunpack.c.l.b16 %v7938
    %v8031 = vunpack.c.h.b16 %v7938
    %v8032 = vunpack.c.l.b16 %v7939
    %v8033 = vunpack.c.h.b16 %v7939
    %v8034 = vunpack.c.l.b16 %v7940
    %v8035 = vunpack.c.h.b16 %v7940
    %v8036 = vunpack.c.l.b16 %v7941
    %v8037 = vunpack.c.h.b16 %v7941
    %v8038 = vunpack.c.l.b16 %v7942
    %v8039 = vunpack.c.h.b16 %v7942
    %v8040 = vpack.c.b16 %v7978, %v7976
    %v8041 = vpack.c.b16 %v7979, %v7977
    %v8042 = vpack.c.b16 %v7982, %v7980
    %v8043 = vpack.c.b16 %v7983, %v7981
    %v8044 = vpack.c.b16 %v7986, %v7984
    %v8045 = vpack.c.b16 %v7987, %v7985
    %v8046 = vpack.c.b16 %v7990, %v7988
    %v8047 = vpack.c.b16 %v7991, %v7989
    %v8048 = vpack.c.b16 %v7994, %v7992
    %v8049 = vpack.c.b16 %v7995, %v7993
    %v8050 = vpack.c.b16 %v7998, %v7996
    %v8051 = vpack.c.b16 %v7999, %v7997
    %v8052 = vpack.c.b16 %v8002, %v8000
    %v8053 = vpack.c.b16 %v8003, %v8001
    %v8054 = vpack.c.b16 %v8006, %v8004
    %v8055 = vpack.c.b16 %v8007, %v8005
    %v8056 = vpack.c.b16 %v8010, %v8008
    %v8057 = vpack.c.b16 %v8011, %v8009
    %v8058 = vpack.c.b16 %v8014, %v8012
    %v8059 = vpack.c.b16 %v8015, %v8013
    %v8060 = vpack.c.b16 %v8018, %v8016
    %v8061 = vpack.c.b16 %v8019, %v8017
    %v8062 = vpack.c.b16 %v8022, %v8020
    %v8063 = vpack.c.b16 %v8023, %v8021
    %v8064 = vpack.c.b16 %v8026, %v8024
    %v8065 = vpack.c.b16 %v8027, %v8025
    %v8066 = vpack.c.b16 %v8030, %v8028
    %v8067 = vpack.c.b16 %v8031, %v8029
    %v8068 = vpack.c.b16 %v8034, %v8032
    %v8069 = vpack.c.b16 %v8035, %v8033
    %v8070 = vpack.c.b16 %v8038, %v8036
    %v8071 = vpack.c.b16 %v8039, %v8037
    %v8105 = vperm.slane %v7943, 0
    %v8106 = vperm.slane %v7943, 1
    %8109 = vmatpush.bf16.msra.mxu0 %v8054
    %8110 = vmatpush.bf16.msra.mxu0 %v8052
    %8111 = vmatpush.bf16.msra.mxu0 %v8050
    %8112 = vmatpush.bf16.msra.mxu0 %v8048
    %8113 = vmatpush.bf16.msra.mxu0 %v8046
    %8114 = vmatpush.bf16.msra.mxu0 %v8044
    %8115 = vmatpush.bf16.msra.mxu0 %v8042
    %8116 = vmatpush.bf16.msra.mxu0 %v8040
    %8117 = vmatmul.bf16.gmra.mxu0 %v6593
    %v8118 = vpop.f32.mrf.mxu0
    %v8119 = vadd.f32 %v8105, %v8118
    %v8120 = vpop.f32.mrf.mxu0
    %8121 = vdwg.mxu0
    %8122 = vmatpush.bf16.msra.mxu0 %v8070
    %8123 = vmatpush.bf16.msra.mxu0 %v8068
    %8124 = vmatpush.bf16.msra.mxu0 %v8066
    %8125 = vmatpush.bf16.msra.mxu0 %v8064
    %8126 = vmatpush.bf16.msra.mxu0 %v8062
    %8127 = vmatpush.bf16.msra.mxu0 %v8060
    %8128 = vmatpush.bf16.msra.mxu0 %v8058
    %8129 = vmatpush.bf16.msra.mxu0 %v8056
    %8130 = vmatmul.bf16.gmra.mxu0 %v6594
    %v8131 = vpop.f32.mrf.mxu0
    %v8132 = vadd.f32 %v8119, %v8131
    %v8133 = vpop.f32.mrf.mxu0
    %8134 = vdwg.mxu0
    %8135 = vmatpush.bf16.msra.mxu0 %v8055
    %8136 = vmatpush.bf16.msra.mxu0 %v8053
    %8137 = vmatpush.bf16.msra.mxu0 %v8051
    %8138 = vmatpush.bf16.msra.mxu0 %v8049
    %8139 = vmatpush.bf16.msra.mxu0 %v8047
    %8140 = vmatpush.bf16.msra.mxu0 %v8045
    %8141 = vmatpush.bf16.msra.mxu0 %v8043
    %8142 = vmatpush.bf16.msra.mxu0 %v8041
    %8143 = vmatmul.bf16.gmra.mxu0 %v6593
    %v8144 = vpop.f32.mrf.mxu0
    %v8145 = vadd.f32 %v8106, %v8144
    %v8146 = vpop.f32.mrf.mxu0
    %8147 = vdwg.mxu0
    %8148 = vmatpush.bf16.msra.mxu0 %v8071
    %8149 = vmatpush.bf16.msra.mxu0 %v8069
    %8150 = vmatpush.bf16.msra.mxu0 %v8067
    %8151 = vmatpush.bf16.msra.mxu0 %v8065
    %8152 = vmatpush.bf16.msra.mxu0 %v8063
    %8153 = vmatpush.bf16.msra.mxu0 %v8061
    %8154 = vmatpush.bf16.msra.mxu0 %v8059
    %8155 = vmatpush.bf16.msra.mxu0 %v8057
    %8156 = vmatmul.bf16.gmra.mxu0 %v6594
    %v8157 = vpop.f32.mrf.mxu0
    %v8158 = vadd.f32 %v8145, %v8157
    %v8159 = vpop.f32.mrf.mxu0
    %8160 = vdwg.mxu0
    %v8161 = vmul.f32 %v7615, %v8132
    %v8162 = vmul.f32 %v7630, %v8158
    %v8163 = vadd.f32 %v7882, %v8161
    %v8164 = vadd.f32 %v7908, %v8162
    %v8165 = vtanh.pop %v8163
    %v8166 = vtanh.pop %v8164
    %v8167 = vsub.f32 1.0, %v7645
    %v8168 = vsub.f32 1.0, %v7660
    %v8169 = vmul.f32 %v8167, %v8165
    %v8170 = vmul.f32 %v8168, %v8166
    %v8171 = vmul.f32 %v7645, %v6573
    %v8172 = vmul.f32 %v7660, %v6574
    %v8173 = vadd.f32 %v8169, %v8171
    %v8174 = vadd.f32 %v8170, %v8172
    %v8177 = vrot.slane %v8174, 7
    %v8178 = vsel %vm1774, %v8173, %v8177
    %s8180 = scalar_lea.vmem [#allocation2], 4
    %8181 = vst.msk [vmem:[%s8180] ss:$8 sm:$0x3] %vm1780, %v8178
    %8182 = vst.msk [vmem:[%s8180] ss:$8 sm:$0x0] %vm1780, %v8178
    %s8183 = scalar_lea.vmem [#allocation3], 5
    %v8184 = vld [vmem:[%s8183] ss:$8 sm:$0x3]
    %v8185 = vmax.f32 %v8184, 0.0
    %v8187 = vperm.slane %v8185, 0
    %v8188 = vperm.slane %v8185, 1
    %v8191 = vpack.c.bf16 %v8187, %v8187
    %v8192 = vpack.c.bf16 %v8188, %v8188
    %v8193 = vpack.c.bf16 %v8173, %v8173
    %v8194 = vpack.c.bf16 %v8174, %v8174
    %v8195 = vld [vmem:[#allocation8] sm:$0xff]
    %v8196 = vld [vmem:[#allocation8 + $0x8] sm:$0xff]
    %v8197 = vld [vmem:[#allocation8 + $0x10] sm:$0xff]
    %v8198 = vld [vmem:[#allocation8 + $0x18] sm:$0xff]
    %v8199 = vld [vmem:[#allocation8 + $0x20] sm:$0xff]
    %v8200 = vld [vmem:[#allocation8 + $0x28] sm:$0xff]
    %v8201 = vld [vmem:[#allocation8 + $0x30] sm:$0xff]
    %v8202 = vld [vmem:[#allocation8 + $0x38] sm:$0xff]
    %v8203 = vld [vmem:[#allocation8 + $0x40] sm:$0xff]
    %v8204 = vld [vmem:[#allocation8 + $0x48] sm:$0xff]
    %v8205 = vld [vmem:[#allocation8 + $0x50] sm:$0xff]
    %v8206 = vld [vmem:[#allocation8 + $0x58] sm:$0xff]
    %v8207 = vld [vmem:[#allocation8 + $0x60] sm:$0xff]
    %v8208 = vld [vmem:[#allocation8 + $0x68] sm:$0xff]
    %v8209 = vld [vmem:[#allocation8 + $0x70] sm:$0xff]
    %v8210 = vld [vmem:[#allocation8 + $0x78] sm:$0xff]
    %v8211 = vld [vmem:[#allocation8 + $0x80] sm:$0xff]
    %v8212 = vld [vmem:[#allocation8 + $0x88] sm:$0xff]
    %v8213 = vld [vmem:[#allocation8 + $0x90] sm:$0xff]
    %v8214 = vld [vmem:[#allocation8 + $0x98] sm:$0xff]
    %v8215 = vld [vmem:[#allocation8 + $0xa0] sm:$0xff]
    %v8216 = vld [vmem:[#allocation8 + $0xa8] sm:$0xff]
    %v8217 = vld [vmem:[#allocation8 + $0xb0] sm:$0xff]
    %v8218 = vld [vmem:[#allocation8 + $0xb8] sm:$0xff]
    %v8219 = vld [vmem:[#allocation8 + $0xc0] sm:$0xff]
    %v8220 = vld [vmem:[#allocation8 + $0xc8] sm:$0xff]
    %v8221 = vld [vmem:[#allocation8 + $0xd0] sm:$0xff]
    %v8222 = vld [vmem:[#allocation8 + $0xd8] sm:$0xff]
    %v8223 = vld [vmem:[#allocation8 + $0xe0] sm:$0xff]
    %v8224 = vld [vmem:[#allocation8 + $0xe8] sm:$0xff]
    %v8225 = vld [vmem:[#allocation8 + $0xf0] sm:$0xff]
    %v8226 = vld [vmem:[#allocation8 + $0xf8] sm:$0xff]
    %v8227 = vld [vmem:[#allocation8 + $0x100] sm:$0xff]
    %v8228 = vld [vmem:[#allocation8 + $0x108] sm:$0xff]
    %v8229 = vld [vmem:[#allocation8 + $0x110] sm:$0xff]
    %v8230 = vld [vmem:[#allocation8 + $0x118] sm:$0xff]
    %v8231 = vld [vmem:[#allocation8 + $0x120] sm:$0xff]
    %v8232 = vld [vmem:[#allocation8 + $0x128] sm:$0xff]
    %v8233 = vld [vmem:[#allocation8 + $0x130] sm:$0xff]
    %v8234 = vld [vmem:[#allocation8 + $0x138] sm:$0xff]
    %v8235 = vld [vmem:[#allocation8 + $0x140] sm:$0xff]
    %v8236 = vld [vmem:[#allocation8 + $0x148] sm:$0xff]
    %v8237 = vld [vmem:[#allocation8 + $0x150] sm:$0xff]
    %v8238 = vld [vmem:[#allocation8 + $0x158] sm:$0xff]
    %v8239 = vld [vmem:[#allocation8 + $0x160] sm:$0xff]
    %v8240 = vld [vmem:[#allocation8 + $0x168] sm:$0xff]
    %v8241 = vld [vmem:[#allocation8 + $0x170] sm:$0xff]
    %v8242 = vld [vmem:[#allocation8 + $0x178] sm:$0xff]
    %v8243 = vld [vmem:[#allocation8 + $0x180] sm:$0xff]
    %v8244 = vld [vmem:[#allocation8 + $0x188] sm:$0xff]
    %v8245 = vld [vmem:[#allocation8 + $0x190] sm:$0xff]
    %v8246 = vld [vmem:[#allocation8 + $0x198] sm:$0xff]
    %v8247 = vld [vmem:[#allocation8 + $0x1a0] sm:$0xff]
    %v8248 = vld [vmem:[#allocation8 + $0x1a8] sm:$0xff]
    %v8249 = vld [vmem:[#allocation8 + $0x1b0] sm:$0xff]
    %v8250 = vld [vmem:[#allocation8 + $0x1b8] sm:$0xff]
    %v8251 = vld [vmem:[#allocation8 + $0x1c0] sm:$0xff]
    %v8252 = vld [vmem:[#allocation8 + $0x1c8] sm:$0xff]
    %v8253 = vld [vmem:[#allocation8 + $0x1d0] sm:$0xff]
    %v8254 = vld [vmem:[#allocation8 + $0x1d8] sm:$0xff]
    %v8255 = vld [vmem:[#allocation8 + $0x1e0] sm:$0xff]
    %v8256 = vld [vmem:[#allocation8 + $0x1e8] sm:$0xff]
    %v8257 = vld [vmem:[#allocation8 + $0x1f0] sm:$0xff]
    %v8258 = vld [vmem:[#allocation8 + $0x1f8] sm:$0xff]
    %v8259 = vld [vmem:[#allocation9] sm:$0xff]
    %v8260 = vld [vmem:[#allocation9 + $0x8] sm:$0xff]
    %v8261 = vld [vmem:[#allocation9 + $0x10] sm:$0xff]
    %v8262 = vld [vmem:[#allocation9 + $0x18] sm:$0xff]
    %v8263 = vld [vmem:[#allocation9 + $0x20] sm:$0xff]
    %v8264 = vld [vmem:[#allocation9 + $0x28] sm:$0xff]
    %v8265 = vld [vmem:[#allocation9 + $0x30] sm:$0xff]
    %v8266 = vld [vmem:[#allocation9 + $0x38] sm:$0xff]
    %v8267 = vld [vmem:[#allocation9 + $0x40] sm:$0xff]
    %v8268 = vld [vmem:[#allocation9 + $0x48] sm:$0xff]
    %v8269 = vld [vmem:[#allocation9 + $0x50] sm:$0xff]
    %v8270 = vld [vmem:[#allocation9 + $0x58] sm:$0xff]
    %v8271 = vld [vmem:[#allocation9 + $0x60] sm:$0xff]
    %v8272 = vld [vmem:[#allocation9 + $0x68] sm:$0xff]
    %v8273 = vld [vmem:[#allocation9 + $0x70] sm:$0xff]
    %v8274 = vld [vmem:[#allocation9 + $0x78] sm:$0xff]
    %v8275 = vld [vmem:[#allocation9 + $0x80] sm:$0xff]
    %v8276 = vld [vmem:[#allocation9 + $0x88] sm:$0xff]
    %v8277 = vld [vmem:[#allocation9 + $0x90] sm:$0xff]
    %v8278 = vld [vmem:[#allocation9 + $0x98] sm:$0xff]
    %v8279 = vld [vmem:[#allocation9 + $0xa0] sm:$0xff]
    %v8280 = vld [vmem:[#allocation9 + $0xa8] sm:$0xff]
    %v8281 = vld [vmem:[#allocation9 + $0xb0] sm:$0xff]
    %v8282 = vld [vmem:[#allocation9 + $0xb8] sm:$0xff]
    %v8283 = vld [vmem:[#allocation9 + $0xc0] sm:$0xff]
    %v8284 = vld [vmem:[#allocation9 + $0xc8] sm:$0xff]
    %v8285 = vld [vmem:[#allocation9 + $0xd0] sm:$0xff]
    %v8286 = vld [vmem:[#allocation9 + $0xd8] sm:$0xff]
    %v8287 = vld [vmem:[#allocation9 + $0xe0] sm:$0xff]
    %v8288 = vld [vmem:[#allocation9 + $0xe8] sm:$0xff]
    %v8289 = vld [vmem:[#allocation9 + $0xf0] sm:$0xff]
    %v8290 = vld [vmem:[#allocation9 + $0xf8] sm:$0xff]
    %v8291 = vld [vmem:[#allocation9 + $0x100] sm:$0xff]
    %v8292 = vld [vmem:[#allocation9 + $0x108] sm:$0xff]
    %v8293 = vld [vmem:[#allocation9 + $0x110] sm:$0xff]
    %v8294 = vld [vmem:[#allocation9 + $0x118] sm:$0xff]
    %v8295 = vld [vmem:[#allocation9 + $0x120] sm:$0xff]
    %v8296 = vld [vmem:[#allocation9 + $0x128] sm:$0xff]
    %v8297 = vld [vmem:[#allocation9 + $0x130] sm:$0xff]
    %v8298 = vld [vmem:[#allocation9 + $0x138] sm:$0xff]
    %v8299 = vld [vmem:[#allocation9 + $0x140] sm:$0xff]
    %v8300 = vld [vmem:[#allocation9 + $0x148] sm:$0xff]
    %v8301 = vld [vmem:[#allocation9 + $0x150] sm:$0xff]
    %v8302 = vld [vmem:[#allocation9 + $0x158] sm:$0xff]
    %v8303 = vld [vmem:[#allocation9 + $0x160] sm:$0xff]
    %v8304 = vld [vmem:[#allocation9 + $0x168] sm:$0xff]
    %v8305 = vld [vmem:[#allocation9 + $0x170] sm:$0xff]
    %v8306 = vld [vmem:[#allocation9 + $0x178] sm:$0xff]
    %v8307 = vld [vmem:[#allocation9 + $0x180] sm:$0xff]
    %v8308 = vld [vmem:[#allocation9 + $0x188] sm:$0xff]
    %v8309 = vld [vmem:[#allocation9 + $0x190] sm:$0xff]
    %v8310 = vld [vmem:[#allocation9 + $0x198] sm:$0xff]
    %v8311 = vld [vmem:[#allocation9 + $0x1a0] sm:$0xff]
    %v8312 = vld [vmem:[#allocation9 + $0x1a8] sm:$0xff]
    %v8313 = vld [vmem:[#allocation9 + $0x1b0] sm:$0xff]
    %v8314 = vld [vmem:[#allocation9 + $0x1b8] sm:$0xff]
    %v8315 = vld [vmem:[#allocation9 + $0x1c0] sm:$0xff]
    %v8316 = vld [vmem:[#allocation9 + $0x1c8] sm:$0xff]
    %v8317 = vld [vmem:[#allocation9 + $0x1d0] sm:$0xff]
    %v8318 = vld [vmem:[#allocation9 + $0x1d8] sm:$0xff]
    %v8319 = vld [vmem:[#allocation9 + $0x1e0] sm:$0xff]
    %v8320 = vld [vmem:[#allocation9 + $0x1e8] sm:$0xff]
    %v8321 = vld [vmem:[#allocation9 + $0x1f0] sm:$0xff]
    %v8322 = vld [vmem:[#allocation9 + $0x1f8] sm:$0xff]
    %v8387 = vunpack.c.l.b16 %v8259
    %v8388 = vunpack.c.h.b16 %v8259
    %v8389 = vunpack.c.l.b16 %v8260
    %v8390 = vunpack.c.h.b16 %v8260
    %v8391 = vunpack.c.l.b16 %v8261
    %v8392 = vunpack.c.h.b16 %v8261
    %v8393 = vunpack.c.l.b16 %v8262
    %v8394 = vunpack.c.h.b16 %v8262
    %v8395 = vunpack.c.l.b16 %v8263
    %v8396 = vunpack.c.h.b16 %v8263
    %v8397 = vunpack.c.l.b16 %v8264
    %v8398 = vunpack.c.h.b16 %v8264
    %v8399 = vunpack.c.l.b16 %v8265
    %v8400 = vunpack.c.h.b16 %v8265
    %v8401 = vunpack.c.l.b16 %v8266
    %v8402 = vunpack.c.h.b16 %v8266
    %v8403 = vunpack.c.l.b16 %v8267
    %v8404 = vunpack.c.h.b16 %v8267
    %v8405 = vunpack.c.l.b16 %v8268
    %v8406 = vunpack.c.h.b16 %v8268
    %v8407 = vunpack.c.l.b16 %v8269
    %v8408 = vunpack.c.h.b16 %v8269
    %v8409 = vunpack.c.l.b16 %v8270
    %v8410 = vunpack.c.h.b16 %v8270
    %v8411 = vunpack.c.l.b16 %v8271
    %v8412 = vunpack.c.h.b16 %v8271
    %v8413 = vunpack.c.l.b16 %v8272
    %v8414 = vunpack.c.h.b16 %v8272
    %v8415 = vunpack.c.l.b16 %v8273
    %v8416 = vunpack.c.h.b16 %v8273
    %v8417 = vunpack.c.l.b16 %v8274
    %v8418 = vunpack.c.h.b16 %v8274
    %v8419 = vunpack.c.l.b16 %v8275
    %v8420 = vunpack.c.h.b16 %v8275
    %v8421 = vunpack.c.l.b16 %v8276
    %v8422 = vunpack.c.h.b16 %v8276
    %v8423 = vunpack.c.l.b16 %v8277
    %v8424 = vunpack.c.h.b16 %v8277
    %v8425 = vunpack.c.l.b16 %v8278
    %v8426 = vunpack.c.h.b16 %v8278
    %v8427 = vunpack.c.l.b16 %v8279
    %v8428 = vunpack.c.h.b16 %v8279
    %v8429 = vunpack.c.l.b16 %v8280
    %v8430 = vunpack.c.h.b16 %v8280
    %v8431 = vunpack.c.l.b16 %v8281
    %v8432 = vunpack.c.h.b16 %v8281
    %v8433 = vunpack.c.l.b16 %v8282
    %v8434 = vunpack.c.h.b16 %v8282
    %v8435 = vunpack.c.l.b16 %v8283
    %v8436 = vunpack.c.h.b16 %v8283
    %v8437 = vunpack.c.l.b16 %v8284
    %v8438 = vunpack.c.h.b16 %v8284
    %v8439 = vunpack.c.l.b16 %v8285
    %v8440 = vunpack.c.h.b16 %v8285
    %v8441 = vunpack.c.l.b16 %v8286
    %v8442 = vunpack.c.h.b16 %v8286
    %v8443 = vunpack.c.l.b16 %v8287
    %v8444 = vunpack.c.h.b16 %v8287
    %v8445 = vunpack.c.l.b16 %v8288
    %v8446 = vunpack.c.h.b16 %v8288
    %v8447 = vunpack.c.l.b16 %v8289
    %v8448 = vunpack.c.h.b16 %v8289
    %v8449 = vunpack.c.l.b16 %v8290
    %v8450 = vunpack.c.h.b16 %v8290
    %v8451 = vunpack.c.l.b16 %v8291
    %v8452 = vunpack.c.h.b16 %v8291
    %v8453 = vunpack.c.l.b16 %v8292
    %v8454 = vunpack.c.h.b16 %v8292
    %v8455 = vunpack.c.l.b16 %v8293
    %v8456 = vunpack.c.h.b16 %v8293
    %v8457 = vunpack.c.l.b16 %v8294
    %v8458 = vunpack.c.h.b16 %v8294
    %v8459 = vunpack.c.l.b16 %v8295
    %v8460 = vunpack.c.h.b16 %v8295
    %v8461 = vunpack.c.l.b16 %v8296
    %v8462 = vunpack.c.h.b16 %v8296
    %v8463 = vunpack.c.l.b16 %v8297
    %v8464 = vunpack.c.h.b16 %v8297
    %v8465 = vunpack.c.l.b16 %v8298
    %v8466 = vunpack.c.h.b16 %v8298
    %v8467 = vunpack.c.l.b16 %v8299
    %v8468 = vunpack.c.h.b16 %v8299
    %v8469 = vunpack.c.l.b16 %v8300
    %v8470 = vunpack.c.h.b16 %v8300
    %v8471 = vunpack.c.l.b16 %v8301
    %v8472 = vunpack.c.h.b16 %v8301
    %v8473 = vunpack.c.l.b16 %v8302
    %v8474 = vunpack.c.h.b16 %v8302
    %v8475 = vunpack.c.l.b16 %v8303
    %v8476 = vunpack.c.h.b16 %v8303
    %v8477 = vunpack.c.l.b16 %v8304
    %v8478 = vunpack.c.h.b16 %v8304
    %v8479 = vunpack.c.l.b16 %v8305
    %v8480 = vunpack.c.h.b16 %v8305
    %v8481 = vunpack.c.l.b16 %v8306
    %v8482 = vunpack.c.h.b16 %v8306
    %v8483 = vunpack.c.l.b16 %v8307
    %v8484 = vunpack.c.h.b16 %v8307
    %v8485 = vunpack.c.l.b16 %v8308
    %v8486 = vunpack.c.h.b16 %v8308
    %v8487 = vunpack.c.l.b16 %v8309
    %v8488 = vunpack.c.h.b16 %v8309
    %v8489 = vunpack.c.l.b16 %v8310
    %v8490 = vunpack.c.h.b16 %v8310
    %v8491 = vunpack.c.l.b16 %v8311
    %v8492 = vunpack.c.h.b16 %v8311
    %v8493 = vunpack.c.l.b16 %v8312
    %v8494 = vunpack.c.h.b16 %v8312
    %v8495 = vunpack.c.l.b16 %v8313
    %v8496 = vunpack.c.h.b16 %v8313
    %v8497 = vunpack.c.l.b16 %v8314
    %v8498 = vunpack.c.h.b16 %v8314
    %v8499 = vunpack.c.l.b16 %v8315
    %v8500 = vunpack.c.h.b16 %v8315
    %v8501 = vunpack.c.l.b16 %v8316
    %v8502 = vunpack.c.h.b16 %v8316
    %v8503 = vunpack.c.l.b16 %v8317
    %v8504 = vunpack.c.h.b16 %v8317
    %v8505 = vunpack.c.l.b16 %v8318
    %v8506 = vunpack.c.h.b16 %v8318
    %v8507 = vunpack.c.l.b16 %v8319
    %v8508 = vunpack.c.h.b16 %v8319
    %v8509 = vunpack.c.l.b16 %v8320
    %v8510 = vunpack.c.h.b16 %v8320
    %v8511 = vunpack.c.l.b16 %v8321
    %v8512 = vunpack.c.h.b16 %v8321
    %v8513 = vunpack.c.l.b16 %v8322
    %v8514 = vunpack.c.h.b16 %v8322
    %v8515 = vpack.c.b16 %v8391, %v8387
    %v8516 = vpack.c.b16 %v8392, %v8388
    %v8517 = vpack.c.b16 %v8393, %v8389
    %v8518 = vpack.c.b16 %v8394, %v8390
    %v8519 = vpack.c.b16 %v8399, %v8395
    %v8520 = vpack.c.b16 %v8400, %v8396
    %v8521 = vpack.c.b16 %v8401, %v8397
    %v8522 = vpack.c.b16 %v8402, %v8398
    %v8523 = vpack.c.b16 %v8407, %v8403
    %v8524 = vpack.c.b16 %v8408, %v8404
    %v8525 = vpack.c.b16 %v8409, %v8405
    %v8526 = vpack.c.b16 %v8410, %v8406
    %v8527 = vpack.c.b16 %v8415, %v8411
    %v8528 = vpack.c.b16 %v8416, %v8412
    %v8529 = vpack.c.b16 %v8417, %v8413
    %v8530 = vpack.c.b16 %v8418, %v8414
    %v8531 = vpack.c.b16 %v8423, %v8419
    %v8532 = vpack.c.b16 %v8424, %v8420
    %v8533 = vpack.c.b16 %v8425, %v8421
    %v8534 = vpack.c.b16 %v8426, %v8422
    %v8535 = vpack.c.b16 %v8431, %v8427
    %v8536 = vpack.c.b16 %v8432, %v8428
    %v8537 = vpack.c.b16 %v8433, %v8429
    %v8538 = vpack.c.b16 %v8434, %v8430
    %v8539 = vpack.c.b16 %v8439, %v8435
    %v8540 = vpack.c.b16 %v8440, %v8436
    %v8541 = vpack.c.b16 %v8441, %v8437
    %v8542 = vpack.c.b16 %v8442, %v8438
    %v8543 = vpack.c.b16 %v8447, %v8443
    %v8544 = vpack.c.b16 %v8448, %v8444
    %v8545 = vpack.c.b16 %v8449, %v8445
    %v8546 = vpack.c.b16 %v8450, %v8446
    %v8547 = vpack.c.b16 %v8455, %v8451
    %v8548 = vpack.c.b16 %v8456, %v8452
    %v8549 = vpack.c.b16 %v8457, %v8453
    %v8550 = vpack.c.b16 %v8458, %v8454
    %v8551 = vpack.c.b16 %v8463, %v8459
    %v8552 = vpack.c.b16 %v8464, %v8460
    %v8553 = vpack.c.b16 %v8465, %v8461
    %v8554 = vpack.c.b16 %v8466, %v8462
    %v8555 = vpack.c.b16 %v8471, %v8467
    %v8556 = vpack.c.b16 %v8472, %v8468
    %v8557 = vpack.c.b16 %v8473, %v8469
    %v8558 = vpack.c.b16 %v8474, %v8470
    %v8559 = vpack.c.b16 %v8479, %v8475
    %v8560 = vpack.c.b16 %v8480, %v8476
    %v8561 = vpack.c.b16 %v8481, %v8477
    %v8562 = vpack.c.b16 %v8482, %v8478
    %v8563 = vpack.c.b16 %v8487, %v8483
    %v8564 = vpack.c.b16 %v8488, %v8484
    %v8565 = vpack.c.b16 %v8489, %v8485
    %v8566 = vpack.c.b16 %v8490, %v8486
    %v8567 = vpack.c.b16 %v8495, %v8491
    %v8568 = vpack.c.b16 %v8496, %v8492
    %v8569 = vpack.c.b16 %v8497, %v8493
    %v8570 = vpack.c.b16 %v8498, %v8494
    %v8571 = vpack.c.b16 %v8503, %v8499
    %v8572 = vpack.c.b16 %v8504, %v8500
    %v8573 = vpack.c.b16 %v8505, %v8501
    %v8574 = vpack.c.b16 %v8506, %v8502
    %v8575 = vpack.c.b16 %v8511, %v8507
    %v8576 = vpack.c.b16 %v8512, %v8508
    %v8577 = vpack.c.b16 %v8513, %v8509
    %v8578 = vpack.c.b16 %v8514, %v8510
    %8643 = vmatpush.bf16.msra.mxu0 %v8543
    %8644 = vmatpush.bf16.msra.mxu0 %v8539
    %8645 = vmatpush.bf16.msra.mxu0 %v8535
    %8646 = vmatpush.bf16.msra.mxu0 %v8531
    %8647 = vmatpush.bf16.msra.mxu0 %v8527
    %8648 = vmatpush.bf16.msra.mxu0 %v8523
    %8649 = vmatpush.bf16.msra.mxu0 %v8519
    %8650 = vmatpush.bf16.msra.mxu0 %v8515
    %8651 = vmatmul.bf16.gmra.mxu0 %v8193
    %v8652 = vpop.f32.mrf.mxu0
    %v8653 = vadd.f32 0.0, %v8652
    %v8654 = vpop.f32.mrf.mxu0
    %8655 = vdwg.mxu0
    %8656 = vmatpush.bf16.msra.mxu0 %v8575
    %8657 = vmatpush.bf16.msra.mxu0 %v8571
    %8658 = vmatpush.bf16.msra.mxu0 %v8567
    %8659 = vmatpush.bf16.msra.mxu0 %v8563
    %8660 = vmatpush.bf16.msra.mxu0 %v8559
    %8661 = vmatpush.bf16.msra.mxu0 %v8555
    %8662 = vmatpush.bf16.msra.mxu0 %v8551
    %8663 = vmatpush.bf16.msra.mxu0 %v8547
    %8664 = vmatmul.bf16.gmra.mxu0 %v8194
    %v8665 = vpop.f32.mrf.mxu0
    %v8666 = vadd.f32 %v8653, %v8665
    %v8667 = vpop.f32.mrf.mxu0
    %8668 = vdwg.mxu0
    %8669 = vmatpush.bf16.msra.mxu0 %v8544
    %8670 = vmatpush.bf16.msra.mxu0 %v8540
    %8671 = vmatpush.bf16.msra.mxu0 %v8536
    %8672 = vmatpush.bf16.msra.mxu0 %v8532
    %8673 = vmatpush.bf16.msra.mxu0 %v8528
    %8674 = vmatpush.bf16.msra.mxu0 %v8524
    %8675 = vmatpush.bf16.msra.mxu0 %v8520
    %8676 = vmatpush.bf16.msra.mxu0 %v8516
    %8677 = vmatmul.bf16.gmra.mxu0 %v8193
    %v8678 = vpop.f32.mrf.mxu0
    %v8679 = vadd.f32 0.0, %v8678
    %v8680 = vpop.f32.mrf.mxu0
    %8681 = vdwg.mxu0
    %8682 = vmatpush.bf16.msra.mxu0 %v8576
    %8683 = vmatpush.bf16.msra.mxu0 %v8572
    %8684 = vmatpush.bf16.msra.mxu0 %v8568
    %8685 = vmatpush.bf16.msra.mxu0 %v8564
    %8686 = vmatpush.bf16.msra.mxu0 %v8560
    %8687 = vmatpush.bf16.msra.mxu0 %v8556
    %8688 = vmatpush.bf16.msra.mxu0 %v8552
    %8689 = vmatpush.bf16.msra.mxu0 %v8548
    %8690 = vmatmul.bf16.gmra.mxu0 %v8194
    %v8691 = vpop.f32.mrf.mxu0
    %v8692 = vadd.f32 %v8679, %v8691
    %v8693 = vpop.f32.mrf.mxu0
    %8694 = vdwg.mxu0
    %8695 = vmatpush.bf16.msra.mxu0 %v8545
    %8696 = vmatpush.bf16.msra.mxu0 %v8541
    %8697 = vmatpush.bf16.msra.mxu0 %v8537
    %8698 = vmatpush.bf16.msra.mxu0 %v8533
    %8699 = vmatpush.bf16.msra.mxu0 %v8529
    %8700 = vmatpush.bf16.msra.mxu0 %v8525
    %8701 = vmatpush.bf16.msra.mxu0 %v8521
    %8702 = vmatpush.bf16.msra.mxu0 %v8517
    %8703 = vmatmul.bf16.gmra.mxu0 %v8193
    %v8704 = vpop.f32.mrf.mxu0
    %v8705 = vadd.f32 0.0, %v8704
    %v8706 = vpop.f32.mrf.mxu0
    %8707 = vdwg.mxu0
    %8708 = vmatpush.bf16.msra.mxu0 %v8577
    %8709 = vmatpush.bf16.msra.mxu0 %v8573
    %8710 = vmatpush.bf16.msra.mxu0 %v8569
    %8711 = vmatpush.bf16.msra.mxu0 %v8565
    %8712 = vmatpush.bf16.msra.mxu0 %v8561
    %8713 = vmatpush.bf16.msra.mxu0 %v8557
    %8714 = vmatpush.bf16.msra.mxu0 %v8553
    %8715 = vmatpush.bf16.msra.mxu0 %v8549
    %8716 = vmatmul.bf16.gmra.mxu0 %v8194
    %v8717 = vpop.f32.mrf.mxu0
    %v8718 = vadd.f32 %v8705, %v8717
    %v8719 = vpop.f32.mrf.mxu0
    %8720 = vdwg.mxu0
    %8721 = vmatpush.bf16.msra.mxu0 %v8546
    %8722 = vmatpush.bf16.msra.mxu0 %v8542
    %8723 = vmatpush.bf16.msra.mxu0 %v8538
    %8724 = vmatpush.bf16.msra.mxu0 %v8534
    %8725 = vmatpush.bf16.msra.mxu0 %v8530
    %8726 = vmatpush.bf16.msra.mxu0 %v8526
    %8727 = vmatpush.bf16.msra.mxu0 %v8522
    %8728 = vmatpush.bf16.msra.mxu0 %v8518
    %8729 = vmatmul.bf16.gmra.mxu0 %v8193
    %v8730 = vpop.f32.mrf.mxu0
    %v8731 = vadd.f32 0.0, %v8730
    %v8732 = vpop.f32.mrf.mxu0
    %8733 = vdwg.mxu0
    %8734 = vmatpush.bf16.msra.mxu0 %v8578
    %8735 = vmatpush.bf16.msra.mxu0 %v8574
    %8736 = vmatpush.bf16.msra.mxu0 %v8570
    %8737 = vmatpush.bf16.msra.mxu0 %v8566
    %8738 = vmatpush.bf16.msra.mxu0 %v8562
    %8739 = vmatpush.bf16.msra.mxu0 %v8558
    %8740 = vmatpush.bf16.msra.mxu0 %v8554
    %8741 = vmatpush.bf16.msra.mxu0 %v8550
    %8742 = vmatmul.bf16.gmra.mxu0 %v8194
    %v8743 = vpop.f32.mrf.mxu0
    %v8744 = vadd.f32 %v8731, %v8743
    %v8745 = vpop.f32.mrf.mxu0
    %8746 = vdwg.mxu0
    %v8811 = vunpack.c.l.b16 %v8195
    %v8812 = vunpack.c.h.b16 %v8195
    %v8813 = vunpack.c.l.b16 %v8196
    %v8814 = vunpack.c.h.b16 %v8196
    %v8815 = vunpack.c.l.b16 %v8197
    %v8816 = vunpack.c.h.b16 %v8197
    %v8817 = vunpack.c.l.b16 %v8198
    %v8818 = vunpack.c.h.b16 %v8198
    %v8819 = vunpack.c.l.b16 %v8199
    %v8820 = vunpack.c.h.b16 %v8199
    %v8821 = vunpack.c.l.b16 %v8200
    %v8822 = vunpack.c.h.b16 %v8200
    %v8823 = vunpack.c.l.b16 %v8201
    %v8824 = vunpack.c.h.b16 %v8201
    %v8825 = vunpack.c.l.b16 %v8202
    %v8826 = vunpack.c.h.b16 %v8202
    %v8827 = vunpack.c.l.b16 %v8203
    %v8828 = vunpack.c.h.b16 %v8203
    %v8829 = vunpack.c.l.b16 %v8204
    %v8830 = vunpack.c.h.b16 %v8204
    %v8831 = vunpack.c.l.b16 %v8205
    %v8832 = vunpack.c.h.b16 %v8205
    %v8833 = vunpack.c.l.b16 %v8206
    %v8834 = vunpack.c.h.b16 %v8206
    %v8835 = vunpack.c.l.b16 %v8207
    %v8836 = vunpack.c.h.b16 %v8207
    %v8837 = vunpack.c.l.b16 %v8208
    %v8838 = vunpack.c.h.b16 %v8208
    %v8839 = vunpack.c.l.b16 %v8209
    %v8840 = vunpack.c.h.b16 %v8209
    %v8841 = vunpack.c.l.b16 %v8210
    %v8842 = vunpack.c.h.b16 %v8210
    %v8843 = vunpack.c.l.b16 %v8211
    %v8844 = vunpack.c.h.b16 %v8211
    %v8845 = vunpack.c.l.b16 %v8212
    %v8846 = vunpack.c.h.b16 %v8212
    %v8847 = vunpack.c.l.b16 %v8213
    %v8848 = vunpack.c.h.b16 %v8213
    %v8849 = vunpack.c.l.b16 %v8214
    %v8850 = vunpack.c.h.b16 %v8214
    %v8851 = vunpack.c.l.b16 %v8215
    %v8852 = vunpack.c.h.b16 %v8215
    %v8853 = vunpack.c.l.b16 %v8216
    %v8854 = vunpack.c.h.b16 %v8216
    %v8855 = vunpack.c.l.b16 %v8217
    %v8856 = vunpack.c.h.b16 %v8217
    %v8857 = vunpack.c.l.b16 %v8218
    %v8858 = vunpack.c.h.b16 %v8218
    %v8859 = vunpack.c.l.b16 %v8219
    %v8860 = vunpack.c.h.b16 %v8219
    %v8861 = vunpack.c.l.b16 %v8220
    %v8862 = vunpack.c.h.b16 %v8220
    %v8863 = vunpack.c.l.b16 %v8221
    %v8864 = vunpack.c.h.b16 %v8221
    %v8865 = vunpack.c.l.b16 %v8222
    %v8866 = vunpack.c.h.b16 %v8222
    %v8867 = vunpack.c.l.b16 %v8223
    %v8868 = vunpack.c.h.b16 %v8223
    %v8869 = vunpack.c.l.b16 %v8224
    %v8870 = vunpack.c.h.b16 %v8224
    %v8871 = vunpack.c.l.b16 %v8225
    %v8872 = vunpack.c.h.b16 %v8225
    %v8873 = vunpack.c.l.b16 %v8226
    %v8874 = vunpack.c.h.b16 %v8226
    %v8875 = vunpack.c.l.b16 %v8227
    %v8876 = vunpack.c.h.b16 %v8227
    %v8877 = vunpack.c.l.b16 %v8228
    %v8878 = vunpack.c.h.b16 %v8228
    %v8879 = vunpack.c.l.b16 %v8229
    %v8880 = vunpack.c.h.b16 %v8229
    %v8881 = vunpack.c.l.b16 %v8230
    %v8882 = vunpack.c.h.b16 %v8230
    %v8883 = vunpack.c.l.b16 %v8231
    %v8884 = vunpack.c.h.b16 %v8231
    %v8885 = vunpack.c.l.b16 %v8232
    %v8886 = vunpack.c.h.b16 %v8232
    %v8887 = vunpack.c.l.b16 %v8233
    %v8888 = vunpack.c.h.b16 %v8233
    %v8889 = vunpack.c.l.b16 %v8234
    %v8890 = vunpack.c.h.b16 %v8234
    %v8891 = vunpack.c.l.b16 %v8235
    %v8892 = vunpack.c.h.b16 %v8235
    %v8893 = vunpack.c.l.b16 %v8236
    %v8894 = vunpack.c.h.b16 %v8236
    %v8895 = vunpack.c.l.b16 %v8237
    %v8896 = vunpack.c.h.b16 %v8237
    %v8897 = vunpack.c.l.b16 %v8238
    %v8898 = vunpack.c.h.b16 %v8238
    %v8899 = vunpack.c.l.b16 %v8239
    %v8900 = vunpack.c.h.b16 %v8239
    %v8901 = vunpack.c.l.b16 %v8240
    %v8902 = vunpack.c.h.b16 %v8240
    %v8903 = vunpack.c.l.b16 %v8241
    %v8904 = vunpack.c.h.b16 %v8241
    %v8905 = vunpack.c.l.b16 %v8242
    %v8906 = vunpack.c.h.b16 %v8242
    %v8907 = vunpack.c.l.b16 %v8243
    %v8908 = vunpack.c.h.b16 %v8243
    %v8909 = vunpack.c.l.b16 %v8244
    %v8910 = vunpack.c.h.b16 %v8244
    %v8911 = vunpack.c.l.b16 %v8245
    %v8912 = vunpack.c.h.b16 %v8245
    %v8913 = vunpack.c.l.b16 %v8246
    %v8914 = vunpack.c.h.b16 %v8246
    %v8915 = vunpack.c.l.b16 %v8247
    %v8916 = vunpack.c.h.b16 %v8247
    %v8917 = vunpack.c.l.b16 %v8248
    %v8918 = vunpack.c.h.b16 %v8248
    %v8919 = vunpack.c.l.b16 %v8249
    %v8920 = vunpack.c.h.b16 %v8249
    %v8921 = vunpack.c.l.b16 %v8250
    %v8922 = vunpack.c.h.b16 %v8250
    %v8923 = vunpack.c.l.b16 %v8251
    %v8924 = vunpack.c.h.b16 %v8251
    %v8925 = vunpack.c.l.b16 %v8252
    %v8926 = vunpack.c.h.b16 %v8252
    %v8927 = vunpack.c.l.b16 %v8253
    %v8928 = vunpack.c.h.b16 %v8253
    %v8929 = vunpack.c.l.b16 %v8254
    %v8930 = vunpack.c.h.b16 %v8254
    %v8931 = vunpack.c.l.b16 %v8255
    %v8932 = vunpack.c.h.b16 %v8255
    %v8933 = vunpack.c.l.b16 %v8256
    %v8934 = vunpack.c.h.b16 %v8256
    %v8935 = vunpack.c.l.b16 %v8257
    %v8936 = vunpack.c.h.b16 %v8257
    %v8937 = vunpack.c.l.b16 %v8258
    %v8938 = vunpack.c.h.b16 %v8258
    %v8939 = vpack.c.b16 %v8815, %v8811
    %v8940 = vpack.c.b16 %v8816, %v8812
    %v8941 = vpack.c.b16 %v8817, %v8813
    %v8942 = vpack.c.b16 %v8818, %v8814
    %v8943 = vpack.c.b16 %v8823, %v8819
    %v8944 = vpack.c.b16 %v8824, %v8820
    %v8945 = vpack.c.b16 %v8825, %v8821
    %v8946 = vpack.c.b16 %v8826, %v8822
    %v8947 = vpack.c.b16 %v8831, %v8827
    %v8948 = vpack.c.b16 %v8832, %v8828
    %v8949 = vpack.c.b16 %v8833, %v8829
    %v8950 = vpack.c.b16 %v8834, %v8830
    %v8951 = vpack.c.b16 %v8839, %v8835
    %v8952 = vpack.c.b16 %v8840, %v8836
    %v8953 = vpack.c.b16 %v8841, %v8837
    %v8954 = vpack.c.b16 %v8842, %v8838
    %v8955 = vpack.c.b16 %v8847, %v8843
    %v8956 = vpack.c.b16 %v8848, %v8844
    %v8957 = vpack.c.b16 %v8849, %v8845
    %v8958 = vpack.c.b16 %v8850, %v8846
    %v8959 = vpack.c.b16 %v8855, %v8851
    %v8960 = vpack.c.b16 %v8856, %v8852
    %v8961 = vpack.c.b16 %v8857, %v8853
    %v8962 = vpack.c.b16 %v8858, %v8854
    %v8963 = vpack.c.b16 %v8863, %v8859
    %v8964 = vpack.c.b16 %v8864, %v8860
    %v8965 = vpack.c.b16 %v8865, %v8861
    %v8966 = vpack.c.b16 %v8866, %v8862
    %v8967 = vpack.c.b16 %v8871, %v8867
    %v8968 = vpack.c.b16 %v8872, %v8868
    %v8969 = vpack.c.b16 %v8873, %v8869
    %v8970 = vpack.c.b16 %v8874, %v8870
    %v8971 = vpack.c.b16 %v8879, %v8875
    %v8972 = vpack.c.b16 %v8880, %v8876
    %v8973 = vpack.c.b16 %v8881, %v8877
    %v8974 = vpack.c.b16 %v8882, %v8878
    %v8975 = vpack.c.b16 %v8887, %v8883
    %v8976 = vpack.c.b16 %v8888, %v8884
    %v8977 = vpack.c.b16 %v8889, %v8885
    %v8978 = vpack.c.b16 %v8890, %v8886
    %v8979 = vpack.c.b16 %v8895, %v8891
    %v8980 = vpack.c.b16 %v8896, %v8892
    %v8981 = vpack.c.b16 %v8897, %v8893
    %v8982 = vpack.c.b16 %v8898, %v8894
    %v8983 = vpack.c.b16 %v8903, %v8899
    %v8984 = vpack.c.b16 %v8904, %v8900
    %v8985 = vpack.c.b16 %v8905, %v8901
    %v8986 = vpack.c.b16 %v8906, %v8902
    %v8987 = vpack.c.b16 %v8911, %v8907
    %v8988 = vpack.c.b16 %v8912, %v8908
    %v8989 = vpack.c.b16 %v8913, %v8909
    %v8990 = vpack.c.b16 %v8914, %v8910
    %v8991 = vpack.c.b16 %v8919, %v8915
    %v8992 = vpack.c.b16 %v8920, %v8916
    %v8993 = vpack.c.b16 %v8921, %v8917
    %v8994 = vpack.c.b16 %v8922, %v8918
    %v8995 = vpack.c.b16 %v8927, %v8923
    %v8996 = vpack.c.b16 %v8928, %v8924
    %v8997 = vpack.c.b16 %v8929, %v8925
    %v8998 = vpack.c.b16 %v8930, %v8926
    %v8999 = vpack.c.b16 %v8935, %v8931
    %v9000 = vpack.c.b16 %v8936, %v8932
    %v9001 = vpack.c.b16 %v8937, %v8933
    %v9002 = vpack.c.b16 %v8938, %v8934
    %9067 = vmatpush.bf16.msra.mxu0 %v8967
    %9068 = vmatpush.bf16.msra.mxu0 %v8963
    %9069 = vmatpush.bf16.msra.mxu0 %v8959
    %9070 = vmatpush.bf16.msra.mxu0 %v8955
    %9071 = vmatpush.bf16.msra.mxu0 %v8951
    %9072 = vmatpush.bf16.msra.mxu0 %v8947
    %9073 = vmatpush.bf16.msra.mxu0 %v8943
    %9074 = vmatpush.bf16.msra.mxu0 %v8939
    %9075 = vmatmul.bf16.gmra.mxu0 %v8191
    %v9076 = vpop.f32.mrf.mxu0
    %v9077 = vadd.f32 %v8666, %v9076
    %v9078 = vpop.f32.mrf.mxu0
    %9079 = vdwg.mxu0
    %9080 = vmatpush.bf16.msra.mxu0 %v8999
    %9081 = vmatpush.bf16.msra.mxu0 %v8995
    %9082 = vmatpush.bf16.msra.mxu0 %v8991
    %9083 = vmatpush.bf16.msra.mxu0 %v8987
    %9084 = vmatpush.bf16.msra.mxu0 %v8983
    %9085 = vmatpush.bf16.msra.mxu0 %v8979
    %9086 = vmatpush.bf16.msra.mxu0 %v8975
    %9087 = vmatpush.bf16.msra.mxu0 %v8971
    %9088 = vmatmul.bf16.gmra.mxu0 %v8192
    %v9089 = vpop.f32.mrf.mxu0
    %v9090 = vadd.f32 %v9077, %v9089
    %v9091 = vpop.f32.mrf.mxu0
    %9092 = vdwg.mxu0
    %9093 = vmatpush.bf16.msra.mxu0 %v8968
    %9094 = vmatpush.bf16.msra.mxu0 %v8964
    %9095 = vmatpush.bf16.msra.mxu0 %v8960
    %9096 = vmatpush.bf16.msra.mxu0 %v8956
    %9097 = vmatpush.bf16.msra.mxu0 %v8952
    %9098 = vmatpush.bf16.msra.mxu0 %v8948
    %9099 = vmatpush.bf16.msra.mxu0 %v8944
    %9100 = vmatpush.bf16.msra.mxu0 %v8940
    %9101 = vmatmul.bf16.gmra.mxu0 %v8191
    %v9102 = vpop.f32.mrf.mxu0
    %v9103 = vadd.f32 %v8692, %v9102
    %v9104 = vpop.f32.mrf.mxu0
    %9105 = vdwg.mxu0
    %9106 = vmatpush.bf16.msra.mxu0 %v9000
    %9107 = vmatpush.bf16.msra.mxu0 %v8996
    %9108 = vmatpush.bf16.msra.mxu0 %v8992
    %9109 = vmatpush.bf16.msra.mxu0 %v8988
    %9110 = vmatpush.bf16.msra.mxu0 %v8984
    %9111 = vmatpush.bf16.msra.mxu0 %v8980
    %9112 = vmatpush.bf16.msra.mxu0 %v8976
    %9113 = vmatpush.bf16.msra.mxu0 %v8972
    %9114 = vmatmul.bf16.gmra.mxu0 %v8192
    %v9115 = vpop.f32.mrf.mxu0
    %v9116 = vadd.f32 %v9103, %v9115
    %v9117 = vpop.f32.mrf.mxu0
    %9118 = vdwg.mxu0
    %9119 = vmatpush.bf16.msra.mxu0 %v8969
    %9120 = vmatpush.bf16.msra.mxu0 %v8965
    %9121 = vmatpush.bf16.msra.mxu0 %v8961
    %9122 = vmatpush.bf16.msra.mxu0 %v8957
    %9123 = vmatpush.bf16.msra.mxu0 %v8953
    %9124 = vmatpush.bf16.msra.mxu0 %v8949
    %9125 = vmatpush.bf16.msra.mxu0 %v8945
    %9126 = vmatpush.bf16.msra.mxu0 %v8941
    %9127 = vmatmul.bf16.gmra.mxu0 %v8191
    %v9128 = vpop.f32.mrf.mxu0
    %v9129 = vadd.f32 %v8718, %v9128
    %v9130 = vpop.f32.mrf.mxu0
    %9131 = vdwg.mxu0
    %9132 = vmatpush.bf16.msra.mxu0 %v9001
    %9133 = vmatpush.bf16.msra.mxu0 %v8997
    %9134 = vmatpush.bf16.msra.mxu0 %v8993
    %9135 = vmatpush.bf16.msra.mxu0 %v8989
    %9136 = vmatpush.bf16.msra.mxu0 %v8985
    %9137 = vmatpush.bf16.msra.mxu0 %v8981
    %9138 = vmatpush.bf16.msra.mxu0 %v8977
    %9139 = vmatpush.bf16.msra.mxu0 %v8973
    %9140 = vmatmul.bf16.gmra.mxu0 %v8192
    %v9141 = vpop.f32.mrf.mxu0
    %v9142 = vadd.f32 %v9129, %v9141
    %v9143 = vpop.f32.mrf.mxu0
    %9144 = vdwg.mxu0
    %9145 = vmatpush.bf16.msra.mxu0 %v8970
    %9146 = vmatpush.bf16.msra.mxu0 %v8966
    %9147 = vmatpush.bf16.msra.mxu0 %v8962
    %9148 = vmatpush.bf16.msra.mxu0 %v8958
    %9149 = vmatpush.bf16.msra.mxu0 %v8954
    %9150 = vmatpush.bf16.msra.mxu0 %v8950
    %9151 = vmatpush.bf16.msra.mxu0 %v8946
    %9152 = vmatpush.bf16.msra.mxu0 %v8942
    %9153 = vmatmul.bf16.gmra.mxu0 %v8191
    %v9154 = vpop.f32.mrf.mxu0
    %v9155 = vadd.f32 %v8744, %v9154
    %v9156 = vpop.f32.mrf.mxu0
    %9157 = vdwg.mxu0
    %9158 = vmatpush.bf16.msra.mxu0 %v9002
    %9159 = vmatpush.bf16.msra.mxu0 %v8998
    %9160 = vmatpush.bf16.msra.mxu0 %v8994
    %9161 = vmatpush.bf16.msra.mxu0 %v8990
    %9162 = vmatpush.bf16.msra.mxu0 %v8986
    %9163 = vmatpush.bf16.msra.mxu0 %v8982
    %9164 = vmatpush.bf16.msra.mxu0 %v8978
    %9165 = vmatpush.bf16.msra.mxu0 %v8974
    %9166 = vmatmul.bf16.gmra.mxu0 %v8192
    %v9167 = vpop.f32.mrf.mxu0
    %v9168 = vadd.f32 %v9155, %v9167
    %v9169 = vpop.f32.mrf.mxu0
    %9170 = vdwg.mxu0
    %v9171 = vld [vmem:[#allocation11] sm:$0xf]
    %v9173 = vperm.slane %v9171, 0
    %v9174 = vperm.slane %v9171, 1
    %v9175 = vperm.slane %v9171, 2
    %v9176 = vperm.slane %v9171, 3
    %v9181 = vadd.f32 %v9090, %v9173
    %v9182 = vadd.f32 %v9116, %v9174
    %v9183 = vadd.f32 %v9142, %v9175
    %v9184 = vadd.f32 %v9168, %v9176
    %v9185 = vxor.u32 %v9181, 2147483648
    %v9186 = vxor.u32 %v9182, 2147483648
    %v9187 = vxor.u32 %v9183, 2147483648
    %v9188 = vxor.u32 %v9184, 2147483648
    %v9189 = vmul.f32 %v9185, 1.442695
    %v9190 = vpow.pop %v9189
    %v9191 = vmul.f32 %v9186, 1.442695
    %v9192 = vpow.pop %v9191
    %v9193 = vmul.f32 %v9187, 1.442695
    %v9194 = vpow.pop %v9193
    %v9195 = vmul.f32 %v9188, 1.442695
    %v9196 = vpow.pop %v9195
    %v9197 = vadd.f32 %v9190, 1.0
    %v9198 = vadd.f32 %v9192, 1.0
    %v9199 = vadd.f32 %v9194, 1.0
    %v9200 = vadd.f32 %v9196, 1.0
    %v9201 = vrcp.pop %v9197
    %v9202 = vmul.f32 %v9197, %v9201
    %v9203 = vsub.f32 1.0, %v9202
    %v9204 = vmul.f32 %v9201, %v9203
    %v9205 = vadd.f32 %v9201, %v9204
    %vm9206 = vweird.f32 %v9197
    %vm9207 = vweird.f32 %v9201
    %vm9208 = vmor %vm9206, %vm9207
    %v9209 = vsel %vm9208, %v9201, %v9205
    %v9210 = vand.u32 2147483647, %v9197
    %vm9211 = vcmp.eq.f32.partialorder %v9210, 8.507059e+37
    %v9212 = vand.u32 %v9197, 2147483648
    %v9213 = vor.u32 1.1754944e-38, %v9212
    %v9214 = vsel %vm9211, %v9213, %v9209
    %v9215 = vmul.f32 1.0, %v9214
    %v9216 = vrcp.pop %v9198
    %v9217 = vmul.f32 %v9198, %v9216
    %v9218 = vsub.f32 1.0, %v9217
    %v9219 = vmul.f32 %v9216, %v9218
    %v9220 = vadd.f32 %v9216, %v9219
    %vm9221 = vweird.f32 %v9198
    %vm9222 = vweird.f32 %v9216
    %vm9223 = vmor %vm9221, %vm9222
    %v9224 = vsel %vm9223, %v9216, %v9220
    %v9225 = vand.u32 2147483647, %v9198
    %vm9226 = vcmp.eq.f32.partialorder %v9225, 8.507059e+37
    %v9227 = vand.u32 %v9198, 2147483648
    %v9228 = vor.u32 1.1754944e-38, %v9227
    %v9229 = vsel %vm9226, %v9228, %v9224
    %v9230 = vmul.f32 1.0, %v9229
    %v9231 = vrcp.pop %v9199
    %v9232 = vmul.f32 %v9199, %v9231
    %v9233 = vsub.f32 1.0, %v9232
    %v9234 = vmul.f32 %v9231, %v9233
    %v9235 = vadd.f32 %v9231, %v9234
    %vm9236 = vweird.f32 %v9199
    %vm9237 = vweird.f32 %v9231
    %vm9238 = vmor %vm9236, %vm9237
    %v9239 = vsel %vm9238, %v9231, %v9235
    %v9240 = vand.u32 2147483647, %v9199
    %vm9241 = vcmp.eq.f32.partialorder %v9240, 8.507059e+37
    %v9242 = vand.u32 %v9199, 2147483648
    %v9243 = vor.u32 1.1754944e-38, %v9242
    %v9244 = vsel %vm9241, %v9243, %v9239
    %v9245 = vmul.f32 1.0, %v9244
    %v9246 = vrcp.pop %v9200
    %v9247 = vmul.f32 %v9200, %v9246
    %v9248 = vsub.f32 1.0, %v9247
    %v9249 = vmul.f32 %v9246, %v9248
    %v9250 = vadd.f32 %v9246, %v9249
    %vm9251 = vweird.f32 %v9200
    %vm9252 = vweird.f32 %v9246
    %vm9253 = vmor %vm9251, %vm9252
    %v9254 = vsel %vm9253, %v9246, %v9250
    %v9255 = vand.u32 2147483647, %v9200
    %vm9256 = vcmp.eq.f32.partialorder %v9255, 8.507059e+37
    %v9257 = vand.u32 %v9200, 2147483648
    %v9258 = vor.u32 1.1754944e-38, %v9257
    %v9259 = vsel %vm9256, %v9258, %v9254
    %v9260 = vmul.f32 1.0, %v9259
    %v9261 = vld [vmem:[#allocation12] sm:$0xff]
    %v9262 = vld [vmem:[#allocation12 + $0x8] sm:$0xff]
    %v9263 = vld [vmem:[#allocation12 + $0x10] sm:$0xff]
    %v9264 = vld [vmem:[#allocation12 + $0x18] sm:$0xff]
    %v9265 = vld [vmem:[#allocation12 + $0x20] sm:$0xff]
    %v9266 = vld [vmem:[#allocation12 + $0x28] sm:$0xff]
    %v9267 = vld [vmem:[#allocation12 + $0x30] sm:$0xff]
    %v9268 = vld [vmem:[#allocation12 + $0x38] sm:$0xff]
    %v9269 = vld [vmem:[#allocation12 + $0x40] sm:$0xff]
    %v9270 = vld [vmem:[#allocation12 + $0x48] sm:$0xff]
    %v9271 = vld [vmem:[#allocation12 + $0x50] sm:$0xff]
    %v9272 = vld [vmem:[#allocation12 + $0x58] sm:$0xff]
    %v9273 = vld [vmem:[#allocation12 + $0x60] sm:$0xff]
    %v9274 = vld [vmem:[#allocation12 + $0x68] sm:$0xff]
    %v9275 = vld [vmem:[#allocation12 + $0x70] sm:$0xff]
    %v9276 = vld [vmem:[#allocation12 + $0x78] sm:$0xff]
    %v9277 = vld [vmem:[#allocation12 + $0x80] sm:$0xff]
    %v9278 = vld [vmem:[#allocation12 + $0x88] sm:$0xff]
    %v9279 = vld [vmem:[#allocation12 + $0x90] sm:$0xff]
    %v9280 = vld [vmem:[#allocation12 + $0x98] sm:$0xff]
    %v9281 = vld [vmem:[#allocation12 + $0xa0] sm:$0xff]
    %v9282 = vld [vmem:[#allocation12 + $0xa8] sm:$0xff]
    %v9283 = vld [vmem:[#allocation12 + $0xb0] sm:$0xff]
    %v9284 = vld [vmem:[#allocation12 + $0xb8] sm:$0xff]
    %v9285 = vld [vmem:[#allocation12 + $0xc0] sm:$0xff]
    %v9286 = vld [vmem:[#allocation12 + $0xc8] sm:$0xff]
    %v9287 = vld [vmem:[#allocation12 + $0xd0] sm:$0xff]
    %v9288 = vld [vmem:[#allocation12 + $0xd8] sm:$0xff]
    %v9289 = vld [vmem:[#allocation12 + $0xe0] sm:$0xff]
    %v9290 = vld [vmem:[#allocation12 + $0xe8] sm:$0xff]
    %v9291 = vld [vmem:[#allocation12 + $0xf0] sm:$0xff]
    %v9292 = vld [vmem:[#allocation12 + $0xf8] sm:$0xff]
    %v9293 = vld [vmem:[%s7] sm:$0x3]
    %v9326 = vunpack.c.l.b16 %v9261
    %v9327 = vunpack.c.h.b16 %v9261
    %v9328 = vunpack.c.l.b16 %v9262
    %v9329 = vunpack.c.h.b16 %v9262
    %v9330 = vunpack.c.l.b16 %v9263
    %v9331 = vunpack.c.h.b16 %v9263
    %v9332 = vunpack.c.l.b16 %v9264
    %v9333 = vunpack.c.h.b16 %v9264
    %v9334 = vunpack.c.l.b16 %v9265
    %v9335 = vunpack.c.h.b16 %v9265
    %v9336 = vunpack.c.l.b16 %v9266
    %v9337 = vunpack.c.h.b16 %v9266
    %v9338 = vunpack.c.l.b16 %v9267
    %v9339 = vunpack.c.h.b16 %v9267
    %v9340 = vunpack.c.l.b16 %v9268
    %v9341 = vunpack.c.h.b16 %v9268
    %v9342 = vunpack.c.l.b16 %v9269
    %v9343 = vunpack.c.h.b16 %v9269
    %v9344 = vunpack.c.l.b16 %v9270
    %v9345 = vunpack.c.h.b16 %v9270
    %v9346 = vunpack.c.l.b16 %v9271
    %v9347 = vunpack.c.h.b16 %v9271
    %v9348 = vunpack.c.l.b16 %v9272
    %v9349 = vunpack.c.h.b16 %v9272
    %v9350 = vunpack.c.l.b16 %v9273
    %v9351 = vunpack.c.h.b16 %v9273
    %v9352 = vunpack.c.l.b16 %v9274
    %v9353 = vunpack.c.h.b16 %v9274
    %v9354 = vunpack.c.l.b16 %v9275
    %v9355 = vunpack.c.h.b16 %v9275
    %v9356 = vunpack.c.l.b16 %v9276
    %v9357 = vunpack.c.h.b16 %v9276
    %v9358 = vunpack.c.l.b16 %v9277
    %v9359 = vunpack.c.h.b16 %v9277
    %v9360 = vunpack.c.l.b16 %v9278
    %v9361 = vunpack.c.h.b16 %v9278
    %v9362 = vunpack.c.l.b16 %v9279
    %v9363 = vunpack.c.h.b16 %v9279
    %v9364 = vunpack.c.l.b16 %v9280
    %v9365 = vunpack.c.h.b16 %v9280
    %v9366 = vunpack.c.l.b16 %v9281
    %v9367 = vunpack.c.h.b16 %v9281
    %v9368 = vunpack.c.l.b16 %v9282
    %v9369 = vunpack.c.h.b16 %v9282
    %v9370 = vunpack.c.l.b16 %v9283
    %v9371 = vunpack.c.h.b16 %v9283
    %v9372 = vunpack.c.l.b16 %v9284
    %v9373 = vunpack.c.h.b16 %v9284
    %v9374 = vunpack.c.l.b16 %v9285
    %v9375 = vunpack.c.h.b16 %v9285
    %v9376 = vunpack.c.l.b16 %v9286
    %v9377 = vunpack.c.h.b16 %v9286
    %v9378 = vunpack.c.l.b16 %v9287
    %v9379 = vunpack.c.h.b16 %v9287
    %v9380 = vunpack.c.l.b16 %v9288
    %v9381 = vunpack.c.h.b16 %v9288
    %v9382 = vunpack.c.l.b16 %v9289
    %v9383 = vunpack.c.h.b16 %v9289
    %v9384 = vunpack.c.l.b16 %v9290
    %v9385 = vunpack.c.h.b16 %v9290
    %v9386 = vunpack.c.l.b16 %v9291
    %v9387 = vunpack.c.h.b16 %v9291
    %v9388 = vunpack.c.l.b16 %v9292
    %v9389 = vunpack.c.h.b16 %v9292
    %v9390 = vpack.c.b16 %v9328, %v9326
    %v9391 = vpack.c.b16 %v9329, %v9327
    %v9392 = vpack.c.b16 %v9332, %v9330
    %v9393 = vpack.c.b16 %v9333, %v9331
    %v9394 = vpack.c.b16 %v9336, %v9334
    %v9395 = vpack.c.b16 %v9337, %v9335
    %v9396 = vpack.c.b16 %v9340, %v9338
    %v9397 = vpack.c.b16 %v9341, %v9339
    %v9398 = vpack.c.b16 %v9344, %v9342
    %v9399 = vpack.c.b16 %v9345, %v9343
    %v9400 = vpack.c.b16 %v9348, %v9346
    %v9401 = vpack.c.b16 %v9349, %v9347
    %v9402 = vpack.c.b16 %v9352, %v9350
    %v9403 = vpack.c.b16 %v9353, %v9351
    %v9404 = vpack.c.b16 %v9356, %v9354
    %v9405 = vpack.c.b16 %v9357, %v9355
    %v9406 = vpack.c.b16 %v9360, %v9358
    %v9407 = vpack.c.b16 %v9361, %v9359
    %v9408 = vpack.c.b16 %v9364, %v9362
    %v9409 = vpack.c.b16 %v9365, %v9363
    %v9410 = vpack.c.b16 %v9368, %v9366
    %v9411 = vpack.c.b16 %v9369, %v9367
    %v9412 = vpack.c.b16 %v9372, %v9370
    %v9413 = vpack.c.b16 %v9373, %v9371
    %v9414 = vpack.c.b16 %v9376, %v9374
    %v9415 = vpack.c.b16 %v9377, %v9375
    %v9416 = vpack.c.b16 %v9380, %v9378
    %v9417 = vpack.c.b16 %v9381, %v9379
    %v9418 = vpack.c.b16 %v9384, %v9382
    %v9419 = vpack.c.b16 %v9385, %v9383
    %v9420 = vpack.c.b16 %v9388, %v9386
    %v9421 = vpack.c.b16 %v9389, %v9387
    %v9455 = vperm.slane %v9293, 0
    %v9456 = vperm.slane %v9293, 1
    %9459 = vmatpush.bf16.msra.mxu0 %v9404
    %9460 = vmatpush.bf16.msra.mxu0 %v9402
    %9461 = vmatpush.bf16.msra.mxu0 %v9400
    %9462 = vmatpush.bf16.msra.mxu0 %v9398
    %9463 = vmatpush.bf16.msra.mxu0 %v9396
    %9464 = vmatpush.bf16.msra.mxu0 %v9394
    %9465 = vmatpush.bf16.msra.mxu0 %v9392
    %9466 = vmatpush.bf16.msra.mxu0 %v9390
    %9467 = vmatmul.bf16.gmra.mxu0 %v8191
    %v9468 = vpop.f32.mrf.mxu0
    %v9469 = vadd.f32 %v9455, %v9468
    %v9470 = vpop.f32.mrf.mxu0
    %9471 = vdwg.mxu0
    %9472 = vmatpush.bf16.msra.mxu0 %v9420
    %9473 = vmatpush.bf16.msra.mxu0 %v9418
    %9474 = vmatpush.bf16.msra.mxu0 %v9416
    %9475 = vmatpush.bf16.msra.mxu0 %v9414
    %9476 = vmatpush.bf16.msra.mxu0 %v9412
    %9477 = vmatpush.bf16.msra.mxu0 %v9410
    %9478 = vmatpush.bf16.msra.mxu0 %v9408
    %9479 = vmatpush.bf16.msra.mxu0 %v9406
    %9480 = vmatmul.bf16.gmra.mxu0 %v8192
    %v9481 = vpop.f32.mrf.mxu0
    %v9482 = vadd.f32 %v9469, %v9481
    %v9483 = vpop.f32.mrf.mxu0
    %9484 = vdwg.mxu0
    %9485 = vmatpush.bf16.msra.mxu0 %v9405
    %9486 = vmatpush.bf16.msra.mxu0 %v9403
    %9487 = vmatpush.bf16.msra.mxu0 %v9401
    %9488 = vmatpush.bf16.msra.mxu0 %v9399
    %9489 = vmatpush.bf16.msra.mxu0 %v9397
    %9490 = vmatpush.bf16.msra.mxu0 %v9395
    %9491 = vmatpush.bf16.msra.mxu0 %v9393
    %9492 = vmatpush.bf16.msra.mxu0 %v9391
    %9493 = vmatmul.bf16.gmra.mxu0 %v8191
    %v9494 = vpop.f32.mrf.mxu0
    %v9495 = vadd.f32 %v9456, %v9494
    %v9496 = vpop.f32.mrf.mxu0
    %9497 = vdwg.mxu0
    %9498 = vmatpush.bf16.msra.mxu0 %v9421
    %9499 = vmatpush.bf16.msra.mxu0 %v9419
    %9500 = vmatpush.bf16.msra.mxu0 %v9417
    %9501 = vmatpush.bf16.msra.mxu0 %v9415
    %9502 = vmatpush.bf16.msra.mxu0 %v9413
    %9503 = vmatpush.bf16.msra.mxu0 %v9411
    %9504 = vmatpush.bf16.msra.mxu0 %v9409
    %9505 = vmatpush.bf16.msra.mxu0 %v9407
    %9506 = vmatmul.bf16.gmra.mxu0 %v8192
    %v9507 = vpop.f32.mrf.mxu0
    %v9508 = vadd.f32 %v9495, %v9507
    %v9509 = vpop.f32.mrf.mxu0
    %9510 = vdwg.mxu0
    %v9511 = vld [vmem:[#allocation14] sm:$0xff]
    %v9512 = vld [vmem:[#allocation14 + $0x8] sm:$0xff]
    %v9513 = vld [vmem:[#allocation14 + $0x10] sm:$0xff]
    %v9514 = vld [vmem:[#allocation14 + $0x18] sm:$0xff]
    %v9515 = vld [vmem:[#allocation14 + $0x20] sm:$0xff]
    %v9516 = vld [vmem:[#allocation14 + $0x28] sm:$0xff]
    %v9517 = vld [vmem:[#allocation14 + $0x30] sm:$0xff]
    %v9518 = vld [vmem:[#allocation14 + $0x38] sm:$0xff]
    %v9519 = vld [vmem:[#allocation14 + $0x40] sm:$0xff]
    %v9520 = vld [vmem:[#allocation14 + $0x48] sm:$0xff]
    %v9521 = vld [vmem:[#allocation14 + $0x50] sm:$0xff]
    %v9522 = vld [vmem:[#allocation14 + $0x58] sm:$0xff]
    %v9523 = vld [vmem:[#allocation14 + $0x60] sm:$0xff]
    %v9524 = vld [vmem:[#allocation14 + $0x68] sm:$0xff]
    %v9525 = vld [vmem:[#allocation14 + $0x70] sm:$0xff]
    %v9526 = vld [vmem:[#allocation14 + $0x78] sm:$0xff]
    %v9527 = vld [vmem:[#allocation14 + $0x80] sm:$0xff]
    %v9528 = vld [vmem:[#allocation14 + $0x88] sm:$0xff]
    %v9529 = vld [vmem:[#allocation14 + $0x90] sm:$0xff]
    %v9530 = vld [vmem:[#allocation14 + $0x98] sm:$0xff]
    %v9531 = vld [vmem:[#allocation14 + $0xa0] sm:$0xff]
    %v9532 = vld [vmem:[#allocation14 + $0xa8] sm:$0xff]
    %v9533 = vld [vmem:[#allocation14 + $0xb0] sm:$0xff]
    %v9534 = vld [vmem:[#allocation14 + $0xb8] sm:$0xff]
    %v9535 = vld [vmem:[#allocation14 + $0xc0] sm:$0xff]
    %v9536 = vld [vmem:[#allocation14 + $0xc8] sm:$0xff]
    %v9537 = vld [vmem:[#allocation14 + $0xd0] sm:$0xff]
    %v9538 = vld [vmem:[#allocation14 + $0xd8] sm:$0xff]
    %v9539 = vld [vmem:[#allocation14 + $0xe0] sm:$0xff]
    %v9540 = vld [vmem:[#allocation14 + $0xe8] sm:$0xff]
    %v9541 = vld [vmem:[#allocation14 + $0xf0] sm:$0xff]
    %v9542 = vld [vmem:[#allocation14 + $0xf8] sm:$0xff]
    %v9543 = vld [vmem:[#allocation15] sm:$0x3]
    %v9576 = vunpack.c.l.b16 %v9511
    %v9577 = vunpack.c.h.b16 %v9511
    %v9578 = vunpack.c.l.b16 %v9512
    %v9579 = vunpack.c.h.b16 %v9512
    %v9580 = vunpack.c.l.b16 %v9513
    %v9581 = vunpack.c.h.b16 %v9513
    %v9582 = vunpack.c.l.b16 %v9514
    %v9583 = vunpack.c.h.b16 %v9514
    %v9584 = vunpack.c.l.b16 %v9515
    %v9585 = vunpack.c.h.b16 %v9515
    %v9586 = vunpack.c.l.b16 %v9516
    %v9587 = vunpack.c.h.b16 %v9516
    %v9588 = vunpack.c.l.b16 %v9517
    %v9589 = vunpack.c.h.b16 %v9517
    %v9590 = vunpack.c.l.b16 %v9518
    %v9591 = vunpack.c.h.b16 %v9518
    %v9592 = vunpack.c.l.b16 %v9519
    %v9593 = vunpack.c.h.b16 %v9519
    %v9594 = vunpack.c.l.b16 %v9520
    %v9595 = vunpack.c.h.b16 %v9520
    %v9596 = vunpack.c.l.b16 %v9521
    %v9597 = vunpack.c.h.b16 %v9521
    %v9598 = vunpack.c.l.b16 %v9522
    %v9599 = vunpack.c.h.b16 %v9522
    %v9600 = vunpack.c.l.b16 %v9523
    %v9601 = vunpack.c.h.b16 %v9523
    %v9602 = vunpack.c.l.b16 %v9524
    %v9603 = vunpack.c.h.b16 %v9524
    %v9604 = vunpack.c.l.b16 %v9525
    %v9605 = vunpack.c.h.b16 %v9525
    %v9606 = vunpack.c.l.b16 %v9526
    %v9607 = vunpack.c.h.b16 %v9526
    %v9608 = vunpack.c.l.b16 %v9527
    %v9609 = vunpack.c.h.b16 %v9527
    %v9610 = vunpack.c.l.b16 %v9528
    %v9611 = vunpack.c.h.b16 %v9528
    %v9612 = vunpack.c.l.b16 %v9529
    %v9613 = vunpack.c.h.b16 %v9529
    %v9614 = vunpack.c.l.b16 %v9530
    %v9615 = vunpack.c.h.b16 %v9530
    %v9616 = vunpack.c.l.b16 %v9531
    %v9617 = vunpack.c.h.b16 %v9531
    %v9618 = vunpack.c.l.b16 %v9532
    %v9619 = vunpack.c.h.b16 %v9532
    %v9620 = vunpack.c.l.b16 %v9533
    %v9621 = vunpack.c.h.b16 %v9533
    %v9622 = vunpack.c.l.b16 %v9534
    %v9623 = vunpack.c.h.b16 %v9534
    %v9624 = vunpack.c.l.b16 %v9535
    %v9625 = vunpack.c.h.b16 %v9535
    %v9626 = vunpack.c.l.b16 %v9536
    %v9627 = vunpack.c.h.b16 %v9536
    %v9628 = vunpack.c.l.b16 %v9537
    %v9629 = vunpack.c.h.b16 %v9537
    %v9630 = vunpack.c.l.b16 %v9538
    %v9631 = vunpack.c.h.b16 %v9538
    %v9632 = vunpack.c.l.b16 %v9539
    %v9633 = vunpack.c.h.b16 %v9539
    %v9634 = vunpack.c.l.b16 %v9540
    %v9635 = vunpack.c.h.b16 %v9540
    %v9636 = vunpack.c.l.b16 %v9541
    %v9637 = vunpack.c.h.b16 %v9541
    %v9638 = vunpack.c.l.b16 %v9542
    %v9639 = vunpack.c.h.b16 %v9542
    %v9640 = vpack.c.b16 %v9578, %v9576
    %v9641 = vpack.c.b16 %v9579, %v9577
    %v9642 = vpack.c.b16 %v9582, %v9580
    %v9643 = vpack.c.b16 %v9583, %v9581
    %v9644 = vpack.c.b16 %v9586, %v9584
    %v9645 = vpack.c.b16 %v9587, %v9585
    %v9646 = vpack.c.b16 %v9590, %v9588
    %v9647 = vpack.c.b16 %v9591, %v9589
    %v9648 = vpack.c.b16 %v9594, %v9592
    %v9649 = vpack.c.b16 %v9595, %v9593
    %v9650 = vpack.c.b16 %v9598, %v9596
    %v9651 = vpack.c.b16 %v9599, %v9597
    %v9652 = vpack.c.b16 %v9602, %v9600
    %v9653 = vpack.c.b16 %v9603, %v9601
    %v9654 = vpack.c.b16 %v9606, %v9604
    %v9655 = vpack.c.b16 %v9607, %v9605
    %v9656 = vpack.c.b16 %v9610, %v9608
    %v9657 = vpack.c.b16 %v9611, %v9609
    %v9658 = vpack.c.b16 %v9614, %v9612
    %v9659 = vpack.c.b16 %v9615, %v9613
    %v9660 = vpack.c.b16 %v9618, %v9616
    %v9661 = vpack.c.b16 %v9619, %v9617
    %v9662 = vpack.c.b16 %v9622, %v9620
    %v9663 = vpack.c.b16 %v9623, %v9621
    %v9664 = vpack.c.b16 %v9626, %v9624
    %v9665 = vpack.c.b16 %v9627, %v9625
    %v9666 = vpack.c.b16 %v9630, %v9628
    %v9667 = vpack.c.b16 %v9631, %v9629
    %v9668 = vpack.c.b16 %v9634, %v9632
    %v9669 = vpack.c.b16 %v9635, %v9633
    %v9670 = vpack.c.b16 %v9638, %v9636
    %v9671 = vpack.c.b16 %v9639, %v9637
    %v9705 = vperm.slane %v9543, 0
    %v9706 = vperm.slane %v9543, 1
    %9709 = vmatpush.bf16.msra.mxu0 %v9654
    %9710 = vmatpush.bf16.msra.mxu0 %v9652
    %9711 = vmatpush.bf16.msra.mxu0 %v9650
    %9712 = vmatpush.bf16.msra.mxu0 %v9648
    %9713 = vmatpush.bf16.msra.mxu0 %v9646
    %9714 = vmatpush.bf16.msra.mxu0 %v9644
    %9715 = vmatpush.bf16.msra.mxu0 %v9642
    %9716 = vmatpush.bf16.msra.mxu0 %v9640
    %9717 = vmatmul.bf16.gmra.mxu0 %v8193
    %v9718 = vpop.f32.mrf.mxu0
    %v9719 = vadd.f32 %v9705, %v9718
    %v9720 = vpop.f32.mrf.mxu0
    %9721 = vdwg.mxu0
    %9722 = vmatpush.bf16.msra.mxu0 %v9670
    %9723 = vmatpush.bf16.msra.mxu0 %v9668
    %9724 = vmatpush.bf16.msra.mxu0 %v9666
    %9725 = vmatpush.bf16.msra.mxu0 %v9664
    %9726 = vmatpush.bf16.msra.mxu0 %v9662
    %9727 = vmatpush.bf16.msra.mxu0 %v9660
    %9728 = vmatpush.bf16.msra.mxu0 %v9658
    %9729 = vmatpush.bf16.msra.mxu0 %v9656
    %9730 = vmatmul.bf16.gmra.mxu0 %v8194
    %v9731 = vpop.f32.mrf.mxu0
    %v9732 = vadd.f32 %v9719, %v9731
    %v9733 = vpop.f32.mrf.mxu0
    %9734 = vdwg.mxu0
    %9735 = vmatpush.bf16.msra.mxu0 %v9655
    %9736 = vmatpush.bf16.msra.mxu0 %v9653
    %9737 = vmatpush.bf16.msra.mxu0 %v9651
    %9738 = vmatpush.bf16.msra.mxu0 %v9649
    %9739 = vmatpush.bf16.msra.mxu0 %v9647
    %9740 = vmatpush.bf16.msra.mxu0 %v9645
    %9741 = vmatpush.bf16.msra.mxu0 %v9643
    %9742 = vmatpush.bf16.msra.mxu0 %v9641
    %9743 = vmatmul.bf16.gmra.mxu0 %v8193
    %v9744 = vpop.f32.mrf.mxu0
    %v9745 = vadd.f32 %v9706, %v9744
    %v9746 = vpop.f32.mrf.mxu0
    %9747 = vdwg.mxu0
    %9748 = vmatpush.bf16.msra.mxu0 %v9671
    %9749 = vmatpush.bf16.msra.mxu0 %v9669
    %9750 = vmatpush.bf16.msra.mxu0 %v9667
    %9751 = vmatpush.bf16.msra.mxu0 %v9665
    %9752 = vmatpush.bf16.msra.mxu0 %v9663
    %9753 = vmatpush.bf16.msra.mxu0 %v9661
    %9754 = vmatpush.bf16.msra.mxu0 %v9659
    %9755 = vmatpush.bf16.msra.mxu0 %v9657
    %9756 = vmatmul.bf16.gmra.mxu0 %v8194
    %v9757 = vpop.f32.mrf.mxu0
    %v9758 = vadd.f32 %v9745, %v9757
    %v9759 = vpop.f32.mrf.mxu0
    %9760 = vdwg.mxu0
    %v9761 = vmul.f32 %v9215, %v9732
    %v9762 = vmul.f32 %v9230, %v9758
    %v9763 = vadd.f32 %v9482, %v9761
    %v9764 = vadd.f32 %v9508, %v9762
    %v9765 = vtanh.pop %v9763
    %v9766 = vtanh.pop %v9764
    %v9767 = vsub.f32 1.0, %v9245
    %v9768 = vsub.f32 1.0, %v9260
    %v9769 = vmul.f32 %v9767, %v9765
    %v9770 = vmul.f32 %v9768, %v9766
    %v9771 = vmul.f32 %v9245, %v8173
    %v9772 = vmul.f32 %v9260, %v8174
    %v9773 = vadd.f32 %v9769, %v9771
    %v9774 = vadd.f32 %v9770, %v9772
    %v9777 = vrot.slane %v9774, 7
    %v9778 = vsel %vm1774, %v9773, %v9777
    %s9780 = scalar_lea.vmem [#allocation2], 5
    %9781 = vst.msk [vmem:[%s9780] ss:$8 sm:$0x3] %vm1780, %v9778
    %9782 = vst.msk [vmem:[%s9780] ss:$8 sm:$0x0] %vm1780, %v9778
    %s9783 = scalar_lea.vmem [#allocation3], 6
    %v9784 = vld [vmem:[%s9783] ss:$8 sm:$0x3]
    %v9785 = vmax.f32 %v9784, 0.0
    %v9787 = vperm.slane %v9785, 0
    %v9788 = vperm.slane %v9785, 1
    %v9791 = vpack.c.bf16 %v9787, %v9787
    %v9792 = vpack.c.bf16 %v9788, %v9788
    %v9793 = vpack.c.bf16 %v9773, %v9773
    %v9794 = vpack.c.bf16 %v9774, %v9774
    %v9795 = vld [vmem:[#allocation8] sm:$0xff]
    %v9796 = vld [vmem:[#allocation8 + $0x8] sm:$0xff]
    %v9797 = vld [vmem:[#allocation8 + $0x10] sm:$0xff]
    %v9798 = vld [vmem:[#allocation8 + $0x18] sm:$0xff]
    %v9799 = vld [vmem:[#allocation8 + $0x20] sm:$0xff]
    %v9800 = vld [vmem:[#allocation8 + $0x28] sm:$0xff]
    %v9801 = vld [vmem:[#allocation8 + $0x30] sm:$0xff]
    %v9802 = vld [vmem:[#allocation8 + $0x38] sm:$0xff]
    %v9803 = vld [vmem:[#allocation8 + $0x40] sm:$0xff]
    %v9804 = vld [vmem:[#allocation8 + $0x48] sm:$0xff]
    %v9805 = vld [vmem:[#allocation8 + $0x50] sm:$0xff]
    %v9806 = vld [vmem:[#allocation8 + $0x58] sm:$0xff]
    %v9807 = vld [vmem:[#allocation8 + $0x60] sm:$0xff]
    %v9808 = vld [vmem:[#allocation8 + $0x68] sm:$0xff]
    %v9809 = vld [vmem:[#allocation8 + $0x70] sm:$0xff]
    %v9810 = vld [vmem:[#allocation8 + $0x78] sm:$0xff]
    %v9811 = vld [vmem:[#allocation8 + $0x80] sm:$0xff]
    %v9812 = vld [vmem:[#allocation8 + $0x88] sm:$0xff]
    %v9813 = vld [vmem:[#allocation8 + $0x90] sm:$0xff]
    %v9814 = vld [vmem:[#allocation8 + $0x98] sm:$0xff]
    %v9815 = vld [vmem:[#allocation8 + $0xa0] sm:$0xff]
    %v9816 = vld [vmem:[#allocation8 + $0xa8] sm:$0xff]
    %v9817 = vld [vmem:[#allocation8 + $0xb0] sm:$0xff]
    %v9818 = vld [vmem:[#allocation8 + $0xb8] sm:$0xff]
    %v9819 = vld [vmem:[#allocation8 + $0xc0] sm:$0xff]
    %v9820 = vld [vmem:[#allocation8 + $0xc8] sm:$0xff]
    %v9821 = vld [vmem:[#allocation8 + $0xd0] sm:$0xff]
    %v9822 = vld [vmem:[#allocation8 + $0xd8] sm:$0xff]
    %v9823 = vld [vmem:[#allocation8 + $0xe0] sm:$0xff]
    %v9824 = vld [vmem:[#allocation8 + $0xe8] sm:$0xff]
    %v9825 = vld [vmem:[#allocation8 + $0xf0] sm:$0xff]
    %v9826 = vld [vmem:[#allocation8 + $0xf8] sm:$0xff]
    %v9827 = vld [vmem:[#allocation8 + $0x100] sm:$0xff]
    %v9828 = vld [vmem:[#allocation8 + $0x108] sm:$0xff]
    %v9829 = vld [vmem:[#allocation8 + $0x110] sm:$0xff]
    %v9830 = vld [vmem:[#allocation8 + $0x118] sm:$0xff]
    %v9831 = vld [vmem:[#allocation8 + $0x120] sm:$0xff]
    %v9832 = vld [vmem:[#allocation8 + $0x128] sm:$0xff]
    %v9833 = vld [vmem:[#allocation8 + $0x130] sm:$0xff]
    %v9834 = vld [vmem:[#allocation8 + $0x138] sm:$0xff]
    %v9835 = vld [vmem:[#allocation8 + $0x140] sm:$0xff]
    %v9836 = vld [vmem:[#allocation8 + $0x148] sm:$0xff]
    %v9837 = vld [vmem:[#allocation8 + $0x150] sm:$0xff]
    %v9838 = vld [vmem:[#allocation8 + $0x158] sm:$0xff]
    %v9839 = vld [vmem:[#allocation8 + $0x160] sm:$0xff]
    %v9840 = vld [vmem:[#allocation8 + $0x168] sm:$0xff]
    %v9841 = vld [vmem:[#allocation8 + $0x170] sm:$0xff]
    %v9842 = vld [vmem:[#allocation8 + $0x178] sm:$0xff]
    %v9843 = vld [vmem:[#allocation8 + $0x180] sm:$0xff]
    %v9844 = vld [vmem:[#allocation8 + $0x188] sm:$0xff]
    %v9845 = vld [vmem:[#allocation8 + $0x190] sm:$0xff]
    %v9846 = vld [vmem:[#allocation8 + $0x198] sm:$0xff]
    %v9847 = vld [vmem:[#allocation8 + $0x1a0] sm:$0xff]
    %v9848 = vld [vmem:[#allocation8 + $0x1a8] sm:$0xff]
    %v9849 = vld [vmem:[#allocation8 + $0x1b0] sm:$0xff]
    %v9850 = vld [vmem:[#allocation8 + $0x1b8] sm:$0xff]
    %v9851 = vld [vmem:[#allocation8 + $0x1c0] sm:$0xff]
    %v9852 = vld [vmem:[#allocation8 + $0x1c8] sm:$0xff]
    %v9853 = vld [vmem:[#allocation8 + $0x1d0] sm:$0xff]
    %v9854 = vld [vmem:[#allocation8 + $0x1d8] sm:$0xff]
    %v9855 = vld [vmem:[#allocation8 + $0x1e0] sm:$0xff]
    %v9856 = vld [vmem:[#allocation8 + $0x1e8] sm:$0xff]
    %v9857 = vld [vmem:[#allocation8 + $0x1f0] sm:$0xff]
    %v9858 = vld [vmem:[#allocation8 + $0x1f8] sm:$0xff]
    %v9859 = vld [vmem:[#allocation9] sm:$0xff]
    %v9860 = vld [vmem:[#allocation9 + $0x8] sm:$0xff]
    %v9861 = vld [vmem:[#allocation9 + $0x10] sm:$0xff]
    %v9862 = vld [vmem:[#allocation9 + $0x18] sm:$0xff]
    %v9863 = vld [vmem:[#allocation9 + $0x20] sm:$0xff]
    %v9864 = vld [vmem:[#allocation9 + $0x28] sm:$0xff]
    %v9865 = vld [vmem:[#allocation9 + $0x30] sm:$0xff]
    %v9866 = vld [vmem:[#allocation9 + $0x38] sm:$0xff]
    %v9867 = vld [vmem:[#allocation9 + $0x40] sm:$0xff]
    %v9868 = vld [vmem:[#allocation9 + $0x48] sm:$0xff]
    %v9869 = vld [vmem:[#allocation9 + $0x50] sm:$0xff]
    %v9870 = vld [vmem:[#allocation9 + $0x58] sm:$0xff]
    %v9871 = vld [vmem:[#allocation9 + $0x60] sm:$0xff]
    %v9872 = vld [vmem:[#allocation9 + $0x68] sm:$0xff]
    %v9873 = vld [vmem:[#allocation9 + $0x70] sm:$0xff]
    %v9874 = vld [vmem:[#allocation9 + $0x78] sm:$0xff]
    %v9875 = vld [vmem:[#allocation9 + $0x80] sm:$0xff]
    %v9876 = vld [vmem:[#allocation9 + $0x88] sm:$0xff]
    %v9877 = vld [vmem:[#allocation9 + $0x90] sm:$0xff]
    %v9878 = vld [vmem:[#allocation9 + $0x98] sm:$0xff]
    %v9879 = vld [vmem:[#allocation9 + $0xa0] sm:$0xff]
    %v9880 = vld [vmem:[#allocation9 + $0xa8] sm:$0xff]
    %v9881 = vld [vmem:[#allocation9 + $0xb0] sm:$0xff]
    %v9882 = vld [vmem:[#allocation9 + $0xb8] sm:$0xff]
    %v9883 = vld [vmem:[#allocation9 + $0xc0] sm:$0xff]
    %v9884 = vld [vmem:[#allocation9 + $0xc8] sm:$0xff]
    %v9885 = vld [vmem:[#allocation9 + $0xd0] sm:$0xff]
    %v9886 = vld [vmem:[#allocation9 + $0xd8] sm:$0xff]
    %v9887 = vld [vmem:[#allocation9 + $0xe0] sm:$0xff]
    %v9888 = vld [vmem:[#allocation9 + $0xe8] sm:$0xff]
    %v9889 = vld [vmem:[#allocation9 + $0xf0] sm:$0xff]
    %v9890 = vld [vmem:[#allocation9 + $0xf8] sm:$0xff]
    %v9891 = vld [vmem:[#allocation9 + $0x100] sm:$0xff]
    %v9892 = vld [vmem:[#allocation9 + $0x108] sm:$0xff]
    %v9893 = vld [vmem:[#allocation9 + $0x110] sm:$0xff]
    %v9894 = vld [vmem:[#allocation9 + $0x118] sm:$0xff]
    %v9895 = vld [vmem:[#allocation9 + $0x120] sm:$0xff]
    %v9896 = vld [vmem:[#allocation9 + $0x128] sm:$0xff]
    %v9897 = vld [vmem:[#allocation9 + $0x130] sm:$0xff]
    %v9898 = vld [vmem:[#allocation9 + $0x138] sm:$0xff]
    %v9899 = vld [vmem:[#allocation9 + $0x140] sm:$0xff]
    %v9900 = vld [vmem:[#allocation9 + $0x148] sm:$0xff]
    %v9901 = vld [vmem:[#allocation9 + $0x150] sm:$0xff]
    %v9902 = vld [vmem:[#allocation9 + $0x158] sm:$0xff]
    %v9903 = vld [vmem:[#allocation9 + $0x160] sm:$0xff]
    %v9904 = vld [vmem:[#allocation9 + $0x168] sm:$0xff]
    %v9905 = vld [vmem:[#allocation9 + $0x170] sm:$0xff]
    %v9906 = vld [vmem:[#allocation9 + $0x178] sm:$0xff]
    %v9907 = vld [vmem:[#allocation9 + $0x180] sm:$0xff]
    %v9908 = vld [vmem:[#allocation9 + $0x188] sm:$0xff]
    %v9909 = vld [vmem:[#allocation9 + $0x190] sm:$0xff]
    %v9910 = vld [vmem:[#allocation9 + $0x198] sm:$0xff]
    %v9911 = vld [vmem:[#allocation9 + $0x1a0] sm:$0xff]
    %v9912 = vld [vmem:[#allocation9 + $0x1a8] sm:$0xff]
    %v9913 = vld [vmem:[#allocation9 + $0x1b0] sm:$0xff]
    %v9914 = vld [vmem:[#allocation9 + $0x1b8] sm:$0xff]
    %v9915 = vld [vmem:[#allocation9 + $0x1c0] sm:$0xff]
    %v9916 = vld [vmem:[#allocation9 + $0x1c8] sm:$0xff]
    %v9917 = vld [vmem:[#allocation9 + $0x1d0] sm:$0xff]
    %v9918 = vld [vmem:[#allocation9 + $0x1d8] sm:$0xff]
    %v9919 = vld [vmem:[#allocation9 + $0x1e0] sm:$0xff]
    %v9920 = vld [vmem:[#allocation9 + $0x1e8] sm:$0xff]
    %v9921 = vld [vmem:[#allocation9 + $0x1f0] sm:$0xff]
    %v9922 = vld [vmem:[#allocation9 + $0x1f8] sm:$0xff]
    %v9987 = vunpack.c.l.b16 %v9859
    %v9988 = vunpack.c.h.b16 %v9859
    %v9989 = vunpack.c.l.b16 %v9860
    %v9990 = vunpack.c.h.b16 %v9860
    %v9991 = vunpack.c.l.b16 %v9861
    %v9992 = vunpack.c.h.b16 %v9861
    %v9993 = vunpack.c.l.b16 %v9862
    %v9994 = vunpack.c.h.b16 %v9862
    %v9995 = vunpack.c.l.b16 %v9863
    %v9996 = vunpack.c.h.b16 %v9863
    %v9997 = vunpack.c.l.b16 %v9864
    %v9998 = vunpack.c.h.b16 %v9864
    %v9999 = vunpack.c.l.b16 %v9865
    %v10000 = vunpack.c.h.b16 %v9865
    %v10001 = vunpack.c.l.b16 %v9866
    %v10002 = vunpack.c.h.b16 %v9866
    %v10003 = vunpack.c.l.b16 %v9867
    %v10004 = vunpack.c.h.b16 %v9867
    %v10005 = vunpack.c.l.b16 %v9868
    %v10006 = vunpack.c.h.b16 %v9868
    %v10007 = vunpack.c.l.b16 %v9869
    %v10008 = vunpack.c.h.b16 %v9869
    %v10009 = vunpack.c.l.b16 %v9870
    %v10010 = vunpack.c.h.b16 %v9870
    %v10011 = vunpack.c.l.b16 %v9871
    %v10012 = vunpack.c.h.b16 %v9871
    %v10013 = vunpack.c.l.b16 %v9872
    %v10014 = vunpack.c.h.b16 %v9872
    %v10015 = vunpack.c.l.b16 %v9873
    %v10016 = vunpack.c.h.b16 %v9873
    %v10017 = vunpack.c.l.b16 %v9874
    %v10018 = vunpack.c.h.b16 %v9874
    %v10019 = vunpack.c.l.b16 %v9875
    %v10020 = vunpack.c.h.b16 %v9875
    %v10021 = vunpack.c.l.b16 %v9876
    %v10022 = vunpack.c.h.b16 %v9876
    %v10023 = vunpack.c.l.b16 %v9877
    %v10024 = vunpack.c.h.b16 %v9877
    %v10025 = vunpack.c.l.b16 %v9878
    %v10026 = vunpack.c.h.b16 %v9878
    %v10027 = vunpack.c.l.b16 %v9879
    %v10028 = vunpack.c.h.b16 %v9879
    %v10029 = vunpack.c.l.b16 %v9880
    %v10030 = vunpack.c.h.b16 %v9880
    %v10031 = vunpack.c.l.b16 %v9881
    %v10032 = vunpack.c.h.b16 %v9881
    %v10033 = vunpack.c.l.b16 %v9882
    %v10034 = vunpack.c.h.b16 %v9882
    %v10035 = vunpack.c.l.b16 %v9883
    %v10036 = vunpack.c.h.b16 %v9883
    %v10037 = vunpack.c.l.b16 %v9884
    %v10038 = vunpack.c.h.b16 %v9884
    %v10039 = vunpack.c.l.b16 %v9885
    %v10040 = vunpack.c.h.b16 %v9885
    %v10041 = vunpack.c.l.b16 %v9886
    %v10042 = vunpack.c.h.b16 %v9886
    %v10043 = vunpack.c.l.b16 %v9887
    %v10044 = vunpack.c.h.b16 %v9887
    %v10045 = vunpack.c.l.b16 %v9888
    %v10046 = vunpack.c.h.b16 %v9888
    %v10047 = vunpack.c.l.b16 %v9889
    %v10048 = vunpack.c.h.b16 %v9889
    %v10049 = vunpack.c.l.b16 %v9890
    %v10050 = vunpack.c.h.b16 %v9890
    %v10051 = vunpack.c.l.b16 %v9891
    %v10052 = vunpack.c.h.b16 %v9891
    %v10053 = vunpack.c.l.b16 %v9892
    %v10054 = vunpack.c.h.b16 %v9892
    %v10055 = vunpack.c.l.b16 %v9893
    %v10056 = vunpack.c.h.b16 %v9893
    %v10057 = vunpack.c.l.b16 %v9894
    %v10058 = vunpack.c.h.b16 %v9894
    %v10059 = vunpack.c.l.b16 %v9895
    %v10060 = vunpack.c.h.b16 %v9895
    %v10061 = vunpack.c.l.b16 %v9896
    %v10062 = vunpack.c.h.b16 %v9896
    %v10063 = vunpack.c.l.b16 %v9897
    %v10064 = vunpack.c.h.b16 %v9897
    %v10065 = vunpack.c.l.b16 %v9898
    %v10066 = vunpack.c.h.b16 %v9898
    %v10067 = vunpack.c.l.b16 %v9899
    %v10068 = vunpack.c.h.b16 %v9899
    %v10069 = vunpack.c.l.b16 %v9900
    %v10070 = vunpack.c.h.b16 %v9900
    %v10071 = vunpack.c.l.b16 %v9901
    %v10072 = vunpack.c.h.b16 %v9901
    %v10073 = vunpack.c.l.b16 %v9902
    %v10074 = vunpack.c.h.b16 %v9902
    %v10075 = vunpack.c.l.b16 %v9903
    %v10076 = vunpack.c.h.b16 %v9903
    %v10077 = vunpack.c.l.b16 %v9904
    %v10078 = vunpack.c.h.b16 %v9904
    %v10079 = vunpack.c.l.b16 %v9905
    %v10080 = vunpack.c.h.b16 %v9905
    %v10081 = vunpack.c.l.b16 %v9906
    %v10082 = vunpack.c.h.b16 %v9906
    %v10083 = vunpack.c.l.b16 %v9907
    %v10084 = vunpack.c.h.b16 %v9907
    %v10085 = vunpack.c.l.b16 %v9908
    %v10086 = vunpack.c.h.b16 %v9908
    %v10087 = vunpack.c.l.b16 %v9909
    %v10088 = vunpack.c.h.b16 %v9909
    %v10089 = vunpack.c.l.b16 %v9910
    %v10090 = vunpack.c.h.b16 %v9910
    %v10091 = vunpack.c.l.b16 %v9911
    %v10092 = vunpack.c.h.b16 %v9911
    %v10093 = vunpack.c.l.b16 %v9912
    %v10094 = vunpack.c.h.b16 %v9912
    %v10095 = vunpack.c.l.b16 %v9913
    %v10096 = vunpack.c.h.b16 %v9913
    %v10097 = vunpack.c.l.b16 %v9914
    %v10098 = vunpack.c.h.b16 %v9914
    %v10099 = vunpack.c.l.b16 %v9915
    %v10100 = vunpack.c.h.b16 %v9915
    %v10101 = vunpack.c.l.b16 %v9916
    %v10102 = vunpack.c.h.b16 %v9916
    %v10103 = vunpack.c.l.b16 %v9917
    %v10104 = vunpack.c.h.b16 %v9917
    %v10105 = vunpack.c.l.b16 %v9918
    %v10106 = vunpack.c.h.b16 %v9918
    %v10107 = vunpack.c.l.b16 %v9919
    %v10108 = vunpack.c.h.b16 %v9919
    %v10109 = vunpack.c.l.b16 %v9920
    %v10110 = vunpack.c.h.b16 %v9920
    %v10111 = vunpack.c.l.b16 %v9921
    %v10112 = vunpack.c.h.b16 %v9921
    %v10113 = vunpack.c.l.b16 %v9922
    %v10114 = vunpack.c.h.b16 %v9922
    %v10115 = vpack.c.b16 %v9991, %v9987
    %v10116 = vpack.c.b16 %v9992, %v9988
    %v10117 = vpack.c.b16 %v9993, %v9989
    %v10118 = vpack.c.b16 %v9994, %v9990
    %v10119 = vpack.c.b16 %v9999, %v9995
    %v10120 = vpack.c.b16 %v10000, %v9996
    %v10121 = vpack.c.b16 %v10001, %v9997
    %v10122 = vpack.c.b16 %v10002, %v9998
    %v10123 = vpack.c.b16 %v10007, %v10003
    %v10124 = vpack.c.b16 %v10008, %v10004
    %v10125 = vpack.c.b16 %v10009, %v10005
    %v10126 = vpack.c.b16 %v10010, %v10006
    %v10127 = vpack.c.b16 %v10015, %v10011
    %v10128 = vpack.c.b16 %v10016, %v10012
    %v10129 = vpack.c.b16 %v10017, %v10013
    %v10130 = vpack.c.b16 %v10018, %v10014
    %v10131 = vpack.c.b16 %v10023, %v10019
    %v10132 = vpack.c.b16 %v10024, %v10020
    %v10133 = vpack.c.b16 %v10025, %v10021
    %v10134 = vpack.c.b16 %v10026, %v10022
    %v10135 = vpack.c.b16 %v10031, %v10027
    %v10136 = vpack.c.b16 %v10032, %v10028
    %v10137 = vpack.c.b16 %v10033, %v10029
    %v10138 = vpack.c.b16 %v10034, %v10030
    %v10139 = vpack.c.b16 %v10039, %v10035
    %v10140 = vpack.c.b16 %v10040, %v10036
    %v10141 = vpack.c.b16 %v10041, %v10037
    %v10142 = vpack.c.b16 %v10042, %v10038
    %v10143 = vpack.c.b16 %v10047, %v10043
    %v10144 = vpack.c.b16 %v10048, %v10044
    %v10145 = vpack.c.b16 %v10049, %v10045
    %v10146 = vpack.c.b16 %v10050, %v10046
    %v10147 = vpack.c.b16 %v10055, %v10051
    %v10148 = vpack.c.b16 %v10056, %v10052
    %v10149 = vpack.c.b16 %v10057, %v10053
    %v10150 = vpack.c.b16 %v10058, %v10054
    %v10151 = vpack.c.b16 %v10063, %v10059
    %v10152 = vpack.c.b16 %v10064, %v10060
    %v10153 = vpack.c.b16 %v10065, %v10061
    %v10154 = vpack.c.b16 %v10066, %v10062
    %v10155 = vpack.c.b16 %v10071, %v10067
    %v10156 = vpack.c.b16 %v10072, %v10068
    %v10157 = vpack.c.b16 %v10073, %v10069
    %v10158 = vpack.c.b16 %v10074, %v10070
    %v10159 = vpack.c.b16 %v10079, %v10075
    %v10160 = vpack.c.b16 %v10080, %v10076
    %v10161 = vpack.c.b16 %v10081, %v10077
    %v10162 = vpack.c.b16 %v10082, %v10078
    %v10163 = vpack.c.b16 %v10087, %v10083
    %v10164 = vpack.c.b16 %v10088, %v10084
    %v10165 = vpack.c.b16 %v10089, %v10085
    %v10166 = vpack.c.b16 %v10090, %v10086
    %v10167 = vpack.c.b16 %v10095, %v10091
    %v10168 = vpack.c.b16 %v10096, %v10092
    %v10169 = vpack.c.b16 %v10097, %v10093
    %v10170 = vpack.c.b16 %v10098, %v10094
    %v10171 = vpack.c.b16 %v10103, %v10099
    %v10172 = vpack.c.b16 %v10104, %v10100
    %v10173 = vpack.c.b16 %v10105, %v10101
    %v10174 = vpack.c.b16 %v10106, %v10102
    %v10175 = vpack.c.b16 %v10111, %v10107
    %v10176 = vpack.c.b16 %v10112, %v10108
    %v10177 = vpack.c.b16 %v10113, %v10109
    %v10178 = vpack.c.b16 %v10114, %v10110
    %10243 = vmatpush.bf16.msra.mxu0 %v10143
    %10244 = vmatpush.bf16.msra.mxu0 %v10139
    %10245 = vmatpush.bf16.msra.mxu0 %v10135
    %10246 = vmatpush.bf16.msra.mxu0 %v10131
    %10247 = vmatpush.bf16.msra.mxu0 %v10127
    %10248 = vmatpush.bf16.msra.mxu0 %v10123
    %10249 = vmatpush.bf16.msra.mxu0 %v10119
    %10250 = vmatpush.bf16.msra.mxu0 %v10115
    %10251 = vmatmul.bf16.gmra.mxu0 %v9793
    %v10252 = vpop.f32.mrf.mxu0
    %v10253 = vadd.f32 0.0, %v10252
    %v10254 = vpop.f32.mrf.mxu0
    %10255 = vdwg.mxu0
    %10256 = vmatpush.bf16.msra.mxu0 %v10175
    %10257 = vmatpush.bf16.msra.mxu0 %v10171
    %10258 = vmatpush.bf16.msra.mxu0 %v10167
    %10259 = vmatpush.bf16.msra.mxu0 %v10163
    %10260 = vmatpush.bf16.msra.mxu0 %v10159
    %10261 = vmatpush.bf16.msra.mxu0 %v10155
    %10262 = vmatpush.bf16.msra.mxu0 %v10151
    %10263 = vmatpush.bf16.msra.mxu0 %v10147
    %10264 = vmatmul.bf16.gmra.mxu0 %v9794
    %v10265 = vpop.f32.mrf.mxu0
    %v10266 = vadd.f32 %v10253, %v10265
    %v10267 = vpop.f32.mrf.mxu0
    %10268 = vdwg.mxu0
    %10269 = vmatpush.bf16.msra.mxu0 %v10144
    %10270 = vmatpush.bf16.msra.mxu0 %v10140
    %10271 = vmatpush.bf16.msra.mxu0 %v10136
    %10272 = vmatpush.bf16.msra.mxu0 %v10132
    %10273 = vmatpush.bf16.msra.mxu0 %v10128
    %10274 = vmatpush.bf16.msra.mxu0 %v10124
    %10275 = vmatpush.bf16.msra.mxu0 %v10120
    %10276 = vmatpush.bf16.msra.mxu0 %v10116
    %10277 = vmatmul.bf16.gmra.mxu0 %v9793
    %v10278 = vpop.f32.mrf.mxu0
    %v10279 = vadd.f32 0.0, %v10278
    %v10280 = vpop.f32.mrf.mxu0
    %10281 = vdwg.mxu0
    %10282 = vmatpush.bf16.msra.mxu0 %v10176
    %10283 = vmatpush.bf16.msra.mxu0 %v10172
    %10284 = vmatpush.bf16.msra.mxu0 %v10168
    %10285 = vmatpush.bf16.msra.mxu0 %v10164
    %10286 = vmatpush.bf16.msra.mxu0 %v10160
    %10287 = vmatpush.bf16.msra.mxu0 %v10156
    %10288 = vmatpush.bf16.msra.mxu0 %v10152
    %10289 = vmatpush.bf16.msra.mxu0 %v10148
    %10290 = vmatmul.bf16.gmra.mxu0 %v9794
    %v10291 = vpop.f32.mrf.mxu0
    %v10292 = vadd.f32 %v10279, %v10291
    %v10293 = vpop.f32.mrf.mxu0
    %10294 = vdwg.mxu0
    %10295 = vmatpush.bf16.msra.mxu0 %v10145
    %10296 = vmatpush.bf16.msra.mxu0 %v10141
    %10297 = vmatpush.bf16.msra.mxu0 %v10137
    %10298 = vmatpush.bf16.msra.mxu0 %v10133
    %10299 = vmatpush.bf16.msra.mxu0 %v10129
    %10300 = vmatpush.bf16.msra.mxu0 %v10125
    %10301 = vmatpush.bf16.msra.mxu0 %v10121
    %10302 = vmatpush.bf16.msra.mxu0 %v10117
    %10303 = vmatmul.bf16.gmra.mxu0 %v9793
    %v10304 = vpop.f32.mrf.mxu0
    %v10305 = vadd.f32 0.0, %v10304
    %v10306 = vpop.f32.mrf.mxu0
    %10307 = vdwg.mxu0
    %10308 = vmatpush.bf16.msra.mxu0 %v10177
    %10309 = vmatpush.bf16.msra.mxu0 %v10173
    %10310 = vmatpush.bf16.msra.mxu0 %v10169
    %10311 = vmatpush.bf16.msra.mxu0 %v10165
    %10312 = vmatpush.bf16.msra.mxu0 %v10161
    %10313 = vmatpush.bf16.msra.mxu0 %v10157
    %10314 = vmatpush.bf16.msra.mxu0 %v10153
    %10315 = vmatpush.bf16.msra.mxu0 %v10149
    %10316 = vmatmul.bf16.gmra.mxu0 %v9794
    %v10317 = vpop.f32.mrf.mxu0
    %v10318 = vadd.f32 %v10305, %v10317
    %v10319 = vpop.f32.mrf.mxu0
    %10320 = vdwg.mxu0
    %10321 = vmatpush.bf16.msra.mxu0 %v10146
    %10322 = vmatpush.bf16.msra.mxu0 %v10142
    %10323 = vmatpush.bf16.msra.mxu0 %v10138
    %10324 = vmatpush.bf16.msra.mxu0 %v10134
    %10325 = vmatpush.bf16.msra.mxu0 %v10130
    %10326 = vmatpush.bf16.msra.mxu0 %v10126
    %10327 = vmatpush.bf16.msra.mxu0 %v10122
    %10328 = vmatpush.bf16.msra.mxu0 %v10118
    %10329 = vmatmul.bf16.gmra.mxu0 %v9793
    %v10330 = vpop.f32.mrf.mxu0
    %v10331 = vadd.f32 0.0, %v10330
    %v10332 = vpop.f32.mrf.mxu0
    %10333 = vdwg.mxu0
    %10334 = vmatpush.bf16.msra.mxu0 %v10178
    %10335 = vmatpush.bf16.msra.mxu0 %v10174
    %10336 = vmatpush.bf16.msra.mxu0 %v10170
    %10337 = vmatpush.bf16.msra.mxu0 %v10166
    %10338 = vmatpush.bf16.msra.mxu0 %v10162
    %10339 = vmatpush.bf16.msra.mxu0 %v10158
    %10340 = vmatpush.bf16.msra.mxu0 %v10154
    %10341 = vmatpush.bf16.msra.mxu0 %v10150
    %10342 = vmatmul.bf16.gmra.mxu0 %v9794
    %v10343 = vpop.f32.mrf.mxu0
    %v10344 = vadd.f32 %v10331, %v10343
    %v10345 = vpop.f32.mrf.mxu0
    %10346 = vdwg.mxu0
    %v10411 = vunpack.c.l.b16 %v9795
    %v10412 = vunpack.c.h.b16 %v9795
    %v10413 = vunpack.c.l.b16 %v9796
    %v10414 = vunpack.c.h.b16 %v9796
    %v10415 = vunpack.c.l.b16 %v9797
    %v10416 = vunpack.c.h.b16 %v9797
    %v10417 = vunpack.c.l.b16 %v9798
    %v10418 = vunpack.c.h.b16 %v9798
    %v10419 = vunpack.c.l.b16 %v9799
    %v10420 = vunpack.c.h.b16 %v9799
    %v10421 = vunpack.c.l.b16 %v9800
    %v10422 = vunpack.c.h.b16 %v9800
    %v10423 = vunpack.c.l.b16 %v9801
    %v10424 = vunpack.c.h.b16 %v9801
    %v10425 = vunpack.c.l.b16 %v9802
    %v10426 = vunpack.c.h.b16 %v9802
    %v10427 = vunpack.c.l.b16 %v9803
    %v10428 = vunpack.c.h.b16 %v9803
    %v10429 = vunpack.c.l.b16 %v9804
    %v10430 = vunpack.c.h.b16 %v9804
    %v10431 = vunpack.c.l.b16 %v9805
    %v10432 = vunpack.c.h.b16 %v9805
    %v10433 = vunpack.c.l.b16 %v9806
    %v10434 = vunpack.c.h.b16 %v9806
    %v10435 = vunpack.c.l.b16 %v9807
    %v10436 = vunpack.c.h.b16 %v9807
    %v10437 = vunpack.c.l.b16 %v9808
    %v10438 = vunpack.c.h.b16 %v9808
    %v10439 = vunpack.c.l.b16 %v9809
    %v10440 = vunpack.c.h.b16 %v9809
    %v10441 = vunpack.c.l.b16 %v9810
    %v10442 = vunpack.c.h.b16 %v9810
    %v10443 = vunpack.c.l.b16 %v9811
    %v10444 = vunpack.c.h.b16 %v9811
    %v10445 = vunpack.c.l.b16 %v9812
    %v10446 = vunpack.c.h.b16 %v9812
    %v10447 = vunpack.c.l.b16 %v9813
    %v10448 = vunpack.c.h.b16 %v9813
    %v10449 = vunpack.c.l.b16 %v9814
    %v10450 = vunpack.c.h.b16 %v9814
    %v10451 = vunpack.c.l.b16 %v9815
    %v10452 = vunpack.c.h.b16 %v9815
    %v10453 = vunpack.c.l.b16 %v9816
    %v10454 = vunpack.c.h.b16 %v9816
    %v10455 = vunpack.c.l.b16 %v9817
    %v10456 = vunpack.c.h.b16 %v9817
    %v10457 = vunpack.c.l.b16 %v9818
    %v10458 = vunpack.c.h.b16 %v9818
    %v10459 = vunpack.c.l.b16 %v9819
    %v10460 = vunpack.c.h.b16 %v9819
    %v10461 = vunpack.c.l.b16 %v9820
    %v10462 = vunpack.c.h.b16 %v9820
    %v10463 = vunpack.c.l.b16 %v9821
    %v10464 = vunpack.c.h.b16 %v9821
    %v10465 = vunpack.c.l.b16 %v9822
    %v10466 = vunpack.c.h.b16 %v9822
    %v10467 = vunpack.c.l.b16 %v9823
    %v10468 = vunpack.c.h.b16 %v9823
    %v10469 = vunpack.c.l.b16 %v9824
    %v10470 = vunpack.c.h.b16 %v9824
    %v10471 = vunpack.c.l.b16 %v9825
    %v10472 = vunpack.c.h.b16 %v9825
    %v10473 = vunpack.c.l.b16 %v9826
    %v10474 = vunpack.c.h.b16 %v9826
    %v10475 = vunpack.c.l.b16 %v9827
    %v10476 = vunpack.c.h.b16 %v9827
    %v10477 = vunpack.c.l.b16 %v9828
    %v10478 = vunpack.c.h.b16 %v9828
    %v10479 = vunpack.c.l.b16 %v9829
    %v10480 = vunpack.c.h.b16 %v9829
    %v10481 = vunpack.c.l.b16 %v9830
    %v10482 = vunpack.c.h.b16 %v9830
    %v10483 = vunpack.c.l.b16 %v9831
    %v10484 = vunpack.c.h.b16 %v9831
    %v10485 = vunpack.c.l.b16 %v9832
    %v10486 = vunpack.c.h.b16 %v9832
    %v10487 = vunpack.c.l.b16 %v9833
    %v10488 = vunpack.c.h.b16 %v9833
    %v10489 = vunpack.c.l.b16 %v9834
    %v10490 = vunpack.c.h.b16 %v9834
    %v10491 = vunpack.c.l.b16 %v9835
    %v10492 = vunpack.c.h.b16 %v9835
    %v10493 = vunpack.c.l.b16 %v9836
    %v10494 = vunpack.c.h.b16 %v9836
    %v10495 = vunpack.c.l.b16 %v9837
    %v10496 = vunpack.c.h.b16 %v9837
    %v10497 = vunpack.c.l.b16 %v9838
    %v10498 = vunpack.c.h.b16 %v9838
    %v10499 = vunpack.c.l.b16 %v9839
    %v10500 = vunpack.c.h.b16 %v9839
    %v10501 = vunpack.c.l.b16 %v9840
    %v10502 = vunpack.c.h.b16 %v9840
    %v10503 = vunpack.c.l.b16 %v9841
    %v10504 = vunpack.c.h.b16 %v9841
    %v10505 = vunpack.c.l.b16 %v9842
    %v10506 = vunpack.c.h.b16 %v9842
    %v10507 = vunpack.c.l.b16 %v9843
    %v10508 = vunpack.c.h.b16 %v9843
    %v10509 = vunpack.c.l.b16 %v9844
    %v10510 = vunpack.c.h.b16 %v9844
    %v10511 = vunpack.c.l.b16 %v9845
    %v10512 = vunpack.c.h.b16 %v9845
    %v10513 = vunpack.c.l.b16 %v9846
    %v10514 = vunpack.c.h.b16 %v9846
    %v10515 = vunpack.c.l.b16 %v9847
    %v10516 = vunpack.c.h.b16 %v9847
    %v10517 = vunpack.c.l.b16 %v9848
    %v10518 = vunpack.c.h.b16 %v9848
    %v10519 = vunpack.c.l.b16 %v9849
    %v10520 = vunpack.c.h.b16 %v9849
    %v10521 = vunpack.c.l.b16 %v9850
    %v10522 = vunpack.c.h.b16 %v9850
    %v10523 = vunpack.c.l.b16 %v9851
    %v10524 = vunpack.c.h.b16 %v9851
    %v10525 = vunpack.c.l.b16 %v9852
    %v10526 = vunpack.c.h.b16 %v9852
    %v10527 = vunpack.c.l.b16 %v9853
    %v10528 = vunpack.c.h.b16 %v9853
    %v10529 = vunpack.c.l.b16 %v9854
    %v10530 = vunpack.c.h.b16 %v9854
    %v10531 = vunpack.c.l.b16 %v9855
    %v10532 = vunpack.c.h.b16 %v9855
    %v10533 = vunpack.c.l.b16 %v9856
    %v10534 = vunpack.c.h.b16 %v9856
    %v10535 = vunpack.c.l.b16 %v9857
    %v10536 = vunpack.c.h.b16 %v9857
    %v10537 = vunpack.c.l.b16 %v9858
    %v10538 = vunpack.c.h.b16 %v9858
    %v10539 = vpack.c.b16 %v10415, %v10411
    %v10540 = vpack.c.b16 %v10416, %v10412
    %v10541 = vpack.c.b16 %v10417, %v10413
    %v10542 = vpack.c.b16 %v10418, %v10414
    %v10543 = vpack.c.b16 %v10423, %v10419
    %v10544 = vpack.c.b16 %v10424, %v10420
    %v10545 = vpack.c.b16 %v10425, %v10421
    %v10546 = vpack.c.b16 %v10426, %v10422
    %v10547 = vpack.c.b16 %v10431, %v10427
    %v10548 = vpack.c.b16 %v10432, %v10428
    %v10549 = vpack.c.b16 %v10433, %v10429
    %v10550 = vpack.c.b16 %v10434, %v10430
    %v10551 = vpack.c.b16 %v10439, %v10435
    %v10552 = vpack.c.b16 %v10440, %v10436
    %v10553 = vpack.c.b16 %v10441, %v10437
    %v10554 = vpack.c.b16 %v10442, %v10438
    %v10555 = vpack.c.b16 %v10447, %v10443
    %v10556 = vpack.c.b16 %v10448, %v10444
    %v10557 = vpack.c.b16 %v10449, %v10445
    %v10558 = vpack.c.b16 %v10450, %v10446
    %v10559 = vpack.c.b16 %v10455, %v10451
    %v10560 = vpack.c.b16 %v10456, %v10452
    %v10561 = vpack.c.b16 %v10457, %v10453
    %v10562 = vpack.c.b16 %v10458, %v10454
    %v10563 = vpack.c.b16 %v10463, %v10459
    %v10564 = vpack.c.b16 %v10464, %v10460
    %v10565 = vpack.c.b16 %v10465, %v10461
    %v10566 = vpack.c.b16 %v10466, %v10462
    %v10567 = vpack.c.b16 %v10471, %v10467
    %v10568 = vpack.c.b16 %v10472, %v10468
    %v10569 = vpack.c.b16 %v10473, %v10469
    %v10570 = vpack.c.b16 %v10474, %v10470
    %v10571 = vpack.c.b16 %v10479, %v10475
    %v10572 = vpack.c.b16 %v10480, %v10476
    %v10573 = vpack.c.b16 %v10481, %v10477
    %v10574 = vpack.c.b16 %v10482, %v10478
    %v10575 = vpack.c.b16 %v10487, %v10483
    %v10576 = vpack.c.b16 %v10488, %v10484
    %v10577 = vpack.c.b16 %v10489, %v10485
    %v10578 = vpack.c.b16 %v10490, %v10486
    %v10579 = vpack.c.b16 %v10495, %v10491
    %v10580 = vpack.c.b16 %v10496, %v10492
    %v10581 = vpack.c.b16 %v10497, %v10493
    %v10582 = vpack.c.b16 %v10498, %v10494
    %v10583 = vpack.c.b16 %v10503, %v10499
    %v10584 = vpack.c.b16 %v10504, %v10500
    %v10585 = vpack.c.b16 %v10505, %v10501
    %v10586 = vpack.c.b16 %v10506, %v10502
    %v10587 = vpack.c.b16 %v10511, %v10507
    %v10588 = vpack.c.b16 %v10512, %v10508
    %v10589 = vpack.c.b16 %v10513, %v10509
    %v10590 = vpack.c.b16 %v10514, %v10510
    %v10591 = vpack.c.b16 %v10519, %v10515
    %v10592 = vpack.c.b16 %v10520, %v10516
    %v10593 = vpack.c.b16 %v10521, %v10517
    %v10594 = vpack.c.b16 %v10522, %v10518
    %v10595 = vpack.c.b16 %v10527, %v10523
    %v10596 = vpack.c.b16 %v10528, %v10524
    %v10597 = vpack.c.b16 %v10529, %v10525
    %v10598 = vpack.c.b16 %v10530, %v10526
    %v10599 = vpack.c.b16 %v10535, %v10531
    %v10600 = vpack.c.b16 %v10536, %v10532
    %v10601 = vpack.c.b16 %v10537, %v10533
    %v10602 = vpack.c.b16 %v10538, %v10534
    %10667 = vmatpush.bf16.msra.mxu0 %v10567
    %10668 = vmatpush.bf16.msra.mxu0 %v10563
    %10669 = vmatpush.bf16.msra.mxu0 %v10559
    %10670 = vmatpush.bf16.msra.mxu0 %v10555
    %10671 = vmatpush.bf16.msra.mxu0 %v10551
    %10672 = vmatpush.bf16.msra.mxu0 %v10547
    %10673 = vmatpush.bf16.msra.mxu0 %v10543
    %10674 = vmatpush.bf16.msra.mxu0 %v10539
    %10675 = vmatmul.bf16.gmra.mxu0 %v9791
    %v10676 = vpop.f32.mrf.mxu0
    %v10677 = vadd.f32 %v10266, %v10676
    %v10678 = vpop.f32.mrf.mxu0
    %10679 = vdwg.mxu0
    %10680 = vmatpush.bf16.msra.mxu0 %v10599
    %10681 = vmatpush.bf16.msra.mxu0 %v10595
    %10682 = vmatpush.bf16.msra.mxu0 %v10591
    %10683 = vmatpush.bf16.msra.mxu0 %v10587
    %10684 = vmatpush.bf16.msra.mxu0 %v10583
    %10685 = vmatpush.bf16.msra.mxu0 %v10579
    %10686 = vmatpush.bf16.msra.mxu0 %v10575
    %10687 = vmatpush.bf16.msra.mxu0 %v10571
    %10688 = vmatmul.bf16.gmra.mxu0 %v9792
    %v10689 = vpop.f32.mrf.mxu0
    %v10690 = vadd.f32 %v10677, %v10689
    %v10691 = vpop.f32.mrf.mxu0
    %10692 = vdwg.mxu0
    %10693 = vmatpush.bf16.msra.mxu0 %v10568
    %10694 = vmatpush.bf16.msra.mxu0 %v10564
    %10695 = vmatpush.bf16.msra.mxu0 %v10560
    %10696 = vmatpush.bf16.msra.mxu0 %v10556
    %10697 = vmatpush.bf16.msra.mxu0 %v10552
    %10698 = vmatpush.bf16.msra.mxu0 %v10548
    %10699 = vmatpush.bf16.msra.mxu0 %v10544
    %10700 = vmatpush.bf16.msra.mxu0 %v10540
    %10701 = vmatmul.bf16.gmra.mxu0 %v9791
    %v10702 = vpop.f32.mrf.mxu0
    %v10703 = vadd.f32 %v10292, %v10702
    %v10704 = vpop.f32.mrf.mxu0
    %10705 = vdwg.mxu0
    %10706 = vmatpush.bf16.msra.mxu0 %v10600
    %10707 = vmatpush.bf16.msra.mxu0 %v10596
    %10708 = vmatpush.bf16.msra.mxu0 %v10592
    %10709 = vmatpush.bf16.msra.mxu0 %v10588
    %10710 = vmatpush.bf16.msra.mxu0 %v10584
    %10711 = vmatpush.bf16.msra.mxu0 %v10580
    %10712 = vmatpush.bf16.msra.mxu0 %v10576
    %10713 = vmatpush.bf16.msra.mxu0 %v10572
    %10714 = vmatmul.bf16.gmra.mxu0 %v9792
    %v10715 = vpop.f32.mrf.mxu0
    %v10716 = vadd.f32 %v10703, %v10715
    %v10717 = vpop.f32.mrf.mxu0
    %10718 = vdwg.mxu0
    %10719 = vmatpush.bf16.msra.mxu0 %v10569
    %10720 = vmatpush.bf16.msra.mxu0 %v10565
    %10721 = vmatpush.bf16.msra.mxu0 %v10561
    %10722 = vmatpush.bf16.msra.mxu0 %v10557
    %10723 = vmatpush.bf16.msra.mxu0 %v10553
    %10724 = vmatpush.bf16.msra.mxu0 %v10549
    %10725 = vmatpush.bf16.msra.mxu0 %v10545
    %10726 = vmatpush.bf16.msra.mxu0 %v10541
    %10727 = vmatmul.bf16.gmra.mxu0 %v9791
    %v10728 = vpop.f32.mrf.mxu0
    %v10729 = vadd.f32 %v10318, %v10728
    %v10730 = vpop.f32.mrf.mxu0
    %10731 = vdwg.mxu0
    %10732 = vmatpush.bf16.msra.mxu0 %v10601
    %10733 = vmatpush.bf16.msra.mxu0 %v10597
    %10734 = vmatpush.bf16.msra.mxu0 %v10593
    %10735 = vmatpush.bf16.msra.mxu0 %v10589
    %10736 = vmatpush.bf16.msra.mxu0 %v10585
    %10737 = vmatpush.bf16.msra.mxu0 %v10581
    %10738 = vmatpush.bf16.msra.mxu0 %v10577
    %10739 = vmatpush.bf16.msra.mxu0 %v10573
    %10740 = vmatmul.bf16.gmra.mxu0 %v9792
    %v10741 = vpop.f32.mrf.mxu0
    %v10742 = vadd.f32 %v10729, %v10741
    %v10743 = vpop.f32.mrf.mxu0
    %10744 = vdwg.mxu0
    %10745 = vmatpush.bf16.msra.mxu0 %v10570
    %10746 = vmatpush.bf16.msra.mxu0 %v10566
    %10747 = vmatpush.bf16.msra.mxu0 %v10562
    %10748 = vmatpush.bf16.msra.mxu0 %v10558
    %10749 = vmatpush.bf16.msra.mxu0 %v10554
    %10750 = vmatpush.bf16.msra.mxu0 %v10550
    %10751 = vmatpush.bf16.msra.mxu0 %v10546
    %10752 = vmatpush.bf16.msra.mxu0 %v10542
    %10753 = vmatmul.bf16.gmra.mxu0 %v9791
    %v10754 = vpop.f32.mrf.mxu0
    %v10755 = vadd.f32 %v10344, %v10754
    %v10756 = vpop.f32.mrf.mxu0
    %10757 = vdwg.mxu0
    %10758 = vmatpush.bf16.msra.mxu0 %v10602
    %10759 = vmatpush.bf16.msra.mxu0 %v10598
    %10760 = vmatpush.bf16.msra.mxu0 %v10594
    %10761 = vmatpush.bf16.msra.mxu0 %v10590
    %10762 = vmatpush.bf16.msra.mxu0 %v10586
    %10763 = vmatpush.bf16.msra.mxu0 %v10582
    %10764 = vmatpush.bf16.msra.mxu0 %v10578
    %10765 = vmatpush.bf16.msra.mxu0 %v10574
    %10766 = vmatmul.bf16.gmra.mxu0 %v9792
    %v10767 = vpop.f32.mrf.mxu0
    %v10768 = vadd.f32 %v10755, %v10767
    %v10769 = vpop.f32.mrf.mxu0
    %10770 = vdwg.mxu0
    %v10771 = vld [vmem:[#allocation11] sm:$0xf]
    %v10773 = vperm.slane %v10771, 0
    %v10774 = vperm.slane %v10771, 1
    %v10775 = vperm.slane %v10771, 2
    %v10776 = vperm.slane %v10771, 3
    %v10781 = vadd.f32 %v10690, %v10773
    %v10782 = vadd.f32 %v10716, %v10774
    %v10783 = vadd.f32 %v10742, %v10775
    %v10784 = vadd.f32 %v10768, %v10776
    %v10785 = vxor.u32 %v10781, 2147483648
    %v10786 = vxor.u32 %v10782, 2147483648
    %v10787 = vxor.u32 %v10783, 2147483648
    %v10788 = vxor.u32 %v10784, 2147483648
    %v10789 = vmul.f32 %v10785, 1.442695
    %v10790 = vpow.pop %v10789
    %v10791 = vmul.f32 %v10786, 1.442695
    %v10792 = vpow.pop %v10791
    %v10793 = vmul.f32 %v10787, 1.442695
    %v10794 = vpow.pop %v10793
    %v10795 = vmul.f32 %v10788, 1.442695
    %v10796 = vpow.pop %v10795
    %v10797 = vadd.f32 %v10790, 1.0
    %v10798 = vadd.f32 %v10792, 1.0
    %v10799 = vadd.f32 %v10794, 1.0
    %v10800 = vadd.f32 %v10796, 1.0
    %v10801 = vrcp.pop %v10797
    %v10802 = vmul.f32 %v10797, %v10801
    %v10803 = vsub.f32 1.0, %v10802
    %v10804 = vmul.f32 %v10801, %v10803
    %v10805 = vadd.f32 %v10801, %v10804
    %vm10806 = vweird.f32 %v10797
    %vm10807 = vweird.f32 %v10801
    %vm10808 = vmor %vm10806, %vm10807
    %v10809 = vsel %vm10808, %v10801, %v10805
    %v10810 = vand.u32 2147483647, %v10797
    %vm10811 = vcmp.eq.f32.partialorder %v10810, 8.507059e+37
    %v10812 = vand.u32 %v10797, 2147483648
    %v10813 = vor.u32 1.1754944e-38, %v10812
    %v10814 = vsel %vm10811, %v10813, %v10809
    %v10815 = vmul.f32 1.0, %v10814
    %v10816 = vrcp.pop %v10798
    %v10817 = vmul.f32 %v10798, %v10816
    %v10818 = vsub.f32 1.0, %v10817
    %v10819 = vmul.f32 %v10816, %v10818
    %v10820 = vadd.f32 %v10816, %v10819
    %vm10821 = vweird.f32 %v10798
    %vm10822 = vweird.f32 %v10816
    %vm10823 = vmor %vm10821, %vm10822
    %v10824 = vsel %vm10823, %v10816, %v10820
    %v10825 = vand.u32 2147483647, %v10798
    %vm10826 = vcmp.eq.f32.partialorder %v10825, 8.507059e+37
    %v10827 = vand.u32 %v10798, 2147483648
    %v10828 = vor.u32 1.1754944e-38, %v10827
    %v10829 = vsel %vm10826, %v10828, %v10824
    %v10830 = vmul.f32 1.0, %v10829
    %v10831 = vrcp.pop %v10799
    %v10832 = vmul.f32 %v10799, %v10831
    %v10833 = vsub.f32 1.0, %v10832
    %v10834 = vmul.f32 %v10831, %v10833
    %v10835 = vadd.f32 %v10831, %v10834
    %vm10836 = vweird.f32 %v10799
    %vm10837 = vweird.f32 %v10831
    %vm10838 = vmor %vm10836, %vm10837
    %v10839 = vsel %vm10838, %v10831, %v10835
    %v10840 = vand.u32 2147483647, %v10799
    %vm10841 = vcmp.eq.f32.partialorder %v10840, 8.507059e+37
    %v10842 = vand.u32 %v10799, 2147483648
    %v10843 = vor.u32 1.1754944e-38, %v10842
    %v10844 = vsel %vm10841, %v10843, %v10839
    %v10845 = vmul.f32 1.0, %v10844
    %v10846 = vrcp.pop %v10800
    %v10847 = vmul.f32 %v10800, %v10846
    %v10848 = vsub.f32 1.0, %v10847
    %v10849 = vmul.f32 %v10846, %v10848
    %v10850 = vadd.f32 %v10846, %v10849
    %vm10851 = vweird.f32 %v10800
    %vm10852 = vweird.f32 %v10846
    %vm10853 = vmor %vm10851, %vm10852
    %v10854 = vsel %vm10853, %v10846, %v10850
    %v10855 = vand.u32 2147483647, %v10800
    %vm10856 = vcmp.eq.f32.partialorder %v10855, 8.507059e+37
    %v10857 = vand.u32 %v10800, 2147483648
    %v10858 = vor.u32 1.1754944e-38, %v10857
    %v10859 = vsel %vm10856, %v10858, %v10854
    %v10860 = vmul.f32 1.0, %v10859
    %v10861 = vld [vmem:[#allocation12] sm:$0xff]
    %v10862 = vld [vmem:[#allocation12 + $0x8] sm:$0xff]
    %v10863 = vld [vmem:[#allocation12 + $0x10] sm:$0xff]
    %v10864 = vld [vmem:[#allocation12 + $0x18] sm:$0xff]
    %v10865 = vld [vmem:[#allocation12 + $0x20] sm:$0xff]
    %v10866 = vld [vmem:[#allocation12 + $0x28] sm:$0xff]
    %v10867 = vld [vmem:[#allocation12 + $0x30] sm:$0xff]
    %v10868 = vld [vmem:[#allocation12 + $0x38] sm:$0xff]
    %v10869 = vld [vmem:[#allocation12 + $0x40] sm:$0xff]
    %v10870 = vld [vmem:[#allocation12 + $0x48] sm:$0xff]
    %v10871 = vld [vmem:[#allocation12 + $0x50] sm:$0xff]
    %v10872 = vld [vmem:[#allocation12 + $0x58] sm:$0xff]
    %v10873 = vld [vmem:[#allocation12 + $0x60] sm:$0xff]
    %v10874 = vld [vmem:[#allocation12 + $0x68] sm:$0xff]
    %v10875 = vld [vmem:[#allocation12 + $0x70] sm:$0xff]
    %v10876 = vld [vmem:[#allocation12 + $0x78] sm:$0xff]
    %v10877 = vld [vmem:[#allocation12 + $0x80] sm:$0xff]
    %v10878 = vld [vmem:[#allocation12 + $0x88] sm:$0xff]
    %v10879 = vld [vmem:[#allocation12 + $0x90] sm:$0xff]
    %v10880 = vld [vmem:[#allocation12 + $0x98] sm:$0xff]
    %v10881 = vld [vmem:[#allocation12 + $0xa0] sm:$0xff]
    %v10882 = vld [vmem:[#allocation12 + $0xa8] sm:$0xff]
    %v10883 = vld [vmem:[#allocation12 + $0xb0] sm:$0xff]
    %v10884 = vld [vmem:[#allocation12 + $0xb8] sm:$0xff]
    %v10885 = vld [vmem:[#allocation12 + $0xc0] sm:$0xff]
    %v10886 = vld [vmem:[#allocation12 + $0xc8] sm:$0xff]
    %v10887 = vld [vmem:[#allocation12 + $0xd0] sm:$0xff]
    %v10888 = vld [vmem:[#allocation12 + $0xd8] sm:$0xff]
    %v10889 = vld [vmem:[#allocation12 + $0xe0] sm:$0xff]
    %v10890 = vld [vmem:[#allocation12 + $0xe8] sm:$0xff]
    %v10891 = vld [vmem:[#allocation12 + $0xf0] sm:$0xff]
    %v10892 = vld [vmem:[#allocation12 + $0xf8] sm:$0xff]
    %v10893 = vld [vmem:[%s7] sm:$0x3]
    %v10926 = vunpack.c.l.b16 %v10861
    %v10927 = vunpack.c.h.b16 %v10861
    %v10928 = vunpack.c.l.b16 %v10862
    %v10929 = vunpack.c.h.b16 %v10862
    %v10930 = vunpack.c.l.b16 %v10863
    %v10931 = vunpack.c.h.b16 %v10863
    %v10932 = vunpack.c.l.b16 %v10864
    %v10933 = vunpack.c.h.b16 %v10864
    %v10934 = vunpack.c.l.b16 %v10865
    %v10935 = vunpack.c.h.b16 %v10865
    %v10936 = vunpack.c.l.b16 %v10866
    %v10937 = vunpack.c.h.b16 %v10866
    %v10938 = vunpack.c.l.b16 %v10867
    %v10939 = vunpack.c.h.b16 %v10867
    %v10940 = vunpack.c.l.b16 %v10868
    %v10941 = vunpack.c.h.b16 %v10868
    %v10942 = vunpack.c.l.b16 %v10869
    %v10943 = vunpack.c.h.b16 %v10869
    %v10944 = vunpack.c.l.b16 %v10870
    %v10945 = vunpack.c.h.b16 %v10870
    %v10946 = vunpack.c.l.b16 %v10871
    %v10947 = vunpack.c.h.b16 %v10871
    %v10948 = vunpack.c.l.b16 %v10872
    %v10949 = vunpack.c.h.b16 %v10872
    %v10950 = vunpack.c.l.b16 %v10873
    %v10951 = vunpack.c.h.b16 %v10873
    %v10952 = vunpack.c.l.b16 %v10874
    %v10953 = vunpack.c.h.b16 %v10874
    %v10954 = vunpack.c.l.b16 %v10875
    %v10955 = vunpack.c.h.b16 %v10875
    %v10956 = vunpack.c.l.b16 %v10876
    %v10957 = vunpack.c.h.b16 %v10876
    %v10958 = vunpack.c.l.b16 %v10877
    %v10959 = vunpack.c.h.b16 %v10877
    %v10960 = vunpack.c.l.b16 %v10878
    %v10961 = vunpack.c.h.b16 %v10878
    %v10962 = vunpack.c.l.b16 %v10879
    %v10963 = vunpack.c.h.b16 %v10879
    %v10964 = vunpack.c.l.b16 %v10880
    %v10965 = vunpack.c.h.b16 %v10880
    %v10966 = vunpack.c.l.b16 %v10881
    %v10967 = vunpack.c.h.b16 %v10881
    %v10968 = vunpack.c.l.b16 %v10882
    %v10969 = vunpack.c.h.b16 %v10882
    %v10970 = vunpack.c.l.b16 %v10883
    %v10971 = vunpack.c.h.b16 %v10883
    %v10972 = vunpack.c.l.b16 %v10884
    %v10973 = vunpack.c.h.b16 %v10884
    %v10974 = vunpack.c.l.b16 %v10885
    %v10975 = vunpack.c.h.b16 %v10885
    %v10976 = vunpack.c.l.b16 %v10886
    %v10977 = vunpack.c.h.b16 %v10886
    %v10978 = vunpack.c.l.b16 %v10887
    %v10979 = vunpack.c.h.b16 %v10887
    %v10980 = vunpack.c.l.b16 %v10888
    %v10981 = vunpack.c.h.b16 %v10888
    %v10982 = vunpack.c.l.b16 %v10889
    %v10983 = vunpack.c.h.b16 %v10889
    %v10984 = vunpack.c.l.b16 %v10890
    %v10985 = vunpack.c.h.b16 %v10890
    %v10986 = vunpack.c.l.b16 %v10891
    %v10987 = vunpack.c.h.b16 %v10891
    %v10988 = vunpack.c.l.b16 %v10892
    %v10989 = vunpack.c.h.b16 %v10892
    %v10990 = vpack.c.b16 %v10928, %v10926
    %v10991 = vpack.c.b16 %v10929, %v10927
    %v10992 = vpack.c.b16 %v10932, %v10930
    %v10993 = vpack.c.b16 %v10933, %v10931
    %v10994 = vpack.c.b16 %v10936, %v10934
    %v10995 = vpack.c.b16 %v10937, %v10935
    %v10996 = vpack.c.b16 %v10940, %v10938
    %v10997 = vpack.c.b16 %v10941, %v10939
    %v10998 = vpack.c.b16 %v10944, %v10942
    %v10999 = vpack.c.b16 %v10945, %v10943
    %v11000 = vpack.c.b16 %v10948, %v10946
    %v11001 = vpack.c.b16 %v10949, %v10947
    %v11002 = vpack.c.b16 %v10952, %v10950
    %v11003 = vpack.c.b16 %v10953, %v10951
    %v11004 = vpack.c.b16 %v10956, %v10954
    %v11005 = vpack.c.b16 %v10957, %v10955
    %v11006 = vpack.c.b16 %v10960, %v10958
    %v11007 = vpack.c.b16 %v10961, %v10959
    %v11008 = vpack.c.b16 %v10964, %v10962
    %v11009 = vpack.c.b16 %v10965, %v10963
    %v11010 = vpack.c.b16 %v10968, %v10966
    %v11011 = vpack.c.b16 %v10969, %v10967
    %v11012 = vpack.c.b16 %v10972, %v10970
    %v11013 = vpack.c.b16 %v10973, %v10971
    %v11014 = vpack.c.b16 %v10976, %v10974
    %v11015 = vpack.c.b16 %v10977, %v10975
    %v11016 = vpack.c.b16 %v10980, %v10978
    %v11017 = vpack.c.b16 %v10981, %v10979
    %v11018 = vpack.c.b16 %v10984, %v10982
    %v11019 = vpack.c.b16 %v10985, %v10983
    %v11020 = vpack.c.b16 %v10988, %v10986
    %v11021 = vpack.c.b16 %v10989, %v10987
    %v11055 = vperm.slane %v10893, 0
    %v11056 = vperm.slane %v10893, 1
    %11059 = vmatpush.bf16.msra.mxu0 %v11004
    %11060 = vmatpush.bf16.msra.mxu0 %v11002
    %11061 = vmatpush.bf16.msra.mxu0 %v11000
    %11062 = vmatpush.bf16.msra.mxu0 %v10998
    %11063 = vmatpush.bf16.msra.mxu0 %v10996
    %11064 = vmatpush.bf16.msra.mxu0 %v10994
    %11065 = vmatpush.bf16.msra.mxu0 %v10992
    %11066 = vmatpush.bf16.msra.mxu0 %v10990
    %11067 = vmatmul.bf16.gmra.mxu0 %v9791
    %v11068 = vpop.f32.mrf.mxu0
    %v11069 = vadd.f32 %v11055, %v11068
    %v11070 = vpop.f32.mrf.mxu0
    %11071 = vdwg.mxu0
    %11072 = vmatpush.bf16.msra.mxu0 %v11020
    %11073 = vmatpush.bf16.msra.mxu0 %v11018
    %11074 = vmatpush.bf16.msra.mxu0 %v11016
    %11075 = vmatpush.bf16.msra.mxu0 %v11014
    %11076 = vmatpush.bf16.msra.mxu0 %v11012
    %11077 = vmatpush.bf16.msra.mxu0 %v11010
    %11078 = vmatpush.bf16.msra.mxu0 %v11008
    %11079 = vmatpush.bf16.msra.mxu0 %v11006
    %11080 = vmatmul.bf16.gmra.mxu0 %v9792
    %v11081 = vpop.f32.mrf.mxu0
    %v11082 = vadd.f32 %v11069, %v11081
    %v11083 = vpop.f32.mrf.mxu0
    %11084 = vdwg.mxu0
    %11085 = vmatpush.bf16.msra.mxu0 %v11005
    %11086 = vmatpush.bf16.msra.mxu0 %v11003
    %11087 = vmatpush.bf16.msra.mxu0 %v11001
    %11088 = vmatpush.bf16.msra.mxu0 %v10999
    %11089 = vmatpush.bf16.msra.mxu0 %v10997
    %11090 = vmatpush.bf16.msra.mxu0 %v10995
    %11091 = vmatpush.bf16.msra.mxu0 %v10993
    %11092 = vmatpush.bf16.msra.mxu0 %v10991
    %11093 = vmatmul.bf16.gmra.mxu0 %v9791
    %v11094 = vpop.f32.mrf.mxu0
    %v11095 = vadd.f32 %v11056, %v11094
    %v11096 = vpop.f32.mrf.mxu0
    %11097 = vdwg.mxu0
    %11098 = vmatpush.bf16.msra.mxu0 %v11021
    %11099 = vmatpush.bf16.msra.mxu0 %v11019
    %11100 = vmatpush.bf16.msra.mxu0 %v11017
    %11101 = vmatpush.bf16.msra.mxu0 %v11015
    %11102 = vmatpush.bf16.msra.mxu0 %v11013
    %11103 = vmatpush.bf16.msra.mxu0 %v11011
    %11104 = vmatpush.bf16.msra.mxu0 %v11009
    %11105 = vmatpush.bf16.msra.mxu0 %v11007
    %11106 = vmatmul.bf16.gmra.mxu0 %v9792
    %v11107 = vpop.f32.mrf.mxu0
    %v11108 = vadd.f32 %v11095, %v11107
    %v11109 = vpop.f32.mrf.mxu0
    %11110 = vdwg.mxu0
    %v11111 = vld [vmem:[#allocation14] sm:$0xff]
    %v11112 = vld [vmem:[#allocation14 + $0x8] sm:$0xff]
    %v11113 = vld [vmem:[#allocation14 + $0x10] sm:$0xff]
    %v11114 = vld [vmem:[#allocation14 + $0x18] sm:$0xff]
    %v11115 = vld [vmem:[#allocation14 + $0x20] sm:$0xff]
    %v11116 = vld [vmem:[#allocation14 + $0x28] sm:$0xff]
    %v11117 = vld [vmem:[#allocation14 + $0x30] sm:$0xff]
    %v11118 = vld [vmem:[#allocation14 + $0x38] sm:$0xff]
    %v11119 = vld [vmem:[#allocation14 + $0x40] sm:$0xff]
    %v11120 = vld [vmem:[#allocation14 + $0x48] sm:$0xff]
    %v11121 = vld [vmem:[#allocation14 + $0x50] sm:$0xff]
    %v11122 = vld [vmem:[#allocation14 + $0x58] sm:$0xff]
    %v11123 = vld [vmem:[#allocation14 + $0x60] sm:$0xff]
    %v11124 = vld [vmem:[#allocation14 + $0x68] sm:$0xff]
    %v11125 = vld [vmem:[#allocation14 + $0x70] sm:$0xff]
    %v11126 = vld [vmem:[#allocation14 + $0x78] sm:$0xff]
    %v11127 = vld [vmem:[#allocation14 + $0x80] sm:$0xff]
    %v11128 = vld [vmem:[#allocation14 + $0x88] sm:$0xff]
    %v11129 = vld [vmem:[#allocation14 + $0x90] sm:$0xff]
    %v11130 = vld [vmem:[#allocation14 + $0x98] sm:$0xff]
    %v11131 = vld [vmem:[#allocation14 + $0xa0] sm:$0xff]
    %v11132 = vld [vmem:[#allocation14 + $0xa8] sm:$0xff]
    %v11133 = vld [vmem:[#allocation14 + $0xb0] sm:$0xff]
    %v11134 = vld [vmem:[#allocation14 + $0xb8] sm:$0xff]
    %v11135 = vld [vmem:[#allocation14 + $0xc0] sm:$0xff]
    %v11136 = vld [vmem:[#allocation14 + $0xc8] sm:$0xff]
    %v11137 = vld [vmem:[#allocation14 + $0xd0] sm:$0xff]
    %v11138 = vld [vmem:[#allocation14 + $0xd8] sm:$0xff]
    %v11139 = vld [vmem:[#allocation14 + $0xe0] sm:$0xff]
    %v11140 = vld [vmem:[#allocation14 + $0xe8] sm:$0xff]
    %v11141 = vld [vmem:[#allocation14 + $0xf0] sm:$0xff]
    %v11142 = vld [vmem:[#allocation14 + $0xf8] sm:$0xff]
    %v11143 = vld [vmem:[#allocation15] sm:$0x3]
    %v11176 = vunpack.c.l.b16 %v11111
    %v11177 = vunpack.c.h.b16 %v11111
    %v11178 = vunpack.c.l.b16 %v11112
    %v11179 = vunpack.c.h.b16 %v11112
    %v11180 = vunpack.c.l.b16 %v11113
    %v11181 = vunpack.c.h.b16 %v11113
    %v11182 = vunpack.c.l.b16 %v11114
    %v11183 = vunpack.c.h.b16 %v11114
    %v11184 = vunpack.c.l.b16 %v11115
    %v11185 = vunpack.c.h.b16 %v11115
    %v11186 = vunpack.c.l.b16 %v11116
    %v11187 = vunpack.c.h.b16 %v11116
    %v11188 = vunpack.c.l.b16 %v11117
    %v11189 = vunpack.c.h.b16 %v11117
    %v11190 = vunpack.c.l.b16 %v11118
    %v11191 = vunpack.c.h.b16 %v11118
    %v11192 = vunpack.c.l.b16 %v11119
    %v11193 = vunpack.c.h.b16 %v11119
    %v11194 = vunpack.c.l.b16 %v11120
    %v11195 = vunpack.c.h.b16 %v11120
    %v11196 = vunpack.c.l.b16 %v11121
    %v11197 = vunpack.c.h.b16 %v11121
    %v11198 = vunpack.c.l.b16 %v11122
    %v11199 = vunpack.c.h.b16 %v11122
    %v11200 = vunpack.c.l.b16 %v11123
    %v11201 = vunpack.c.h.b16 %v11123
    %v11202 = vunpack.c.l.b16 %v11124
    %v11203 = vunpack.c.h.b16 %v11124
    %v11204 = vunpack.c.l.b16 %v11125
    %v11205 = vunpack.c.h.b16 %v11125
    %v11206 = vunpack.c.l.b16 %v11126
    %v11207 = vunpack.c.h.b16 %v11126
    %v11208 = vunpack.c.l.b16 %v11127
    %v11209 = vunpack.c.h.b16 %v11127
    %v11210 = vunpack.c.l.b16 %v11128
    %v11211 = vunpack.c.h.b16 %v11128
    %v11212 = vunpack.c.l.b16 %v11129
    %v11213 = vunpack.c.h.b16 %v11129
    %v11214 = vunpack.c.l.b16 %v11130
    %v11215 = vunpack.c.h.b16 %v11130
    %v11216 = vunpack.c.l.b16 %v11131
    %v11217 = vunpack.c.h.b16 %v11131
    %v11218 = vunpack.c.l.b16 %v11132
    %v11219 = vunpack.c.h.b16 %v11132
    %v11220 = vunpack.c.l.b16 %v11133
    %v11221 = vunpack.c.h.b16 %v11133
    %v11222 = vunpack.c.l.b16 %v11134
    %v11223 = vunpack.c.h.b16 %v11134
    %v11224 = vunpack.c.l.b16 %v11135
    %v11225 = vunpack.c.h.b16 %v11135
    %v11226 = vunpack.c.l.b16 %v11136
    %v11227 = vunpack.c.h.b16 %v11136
    %v11228 = vunpack.c.l.b16 %v11137
    %v11229 = vunpack.c.h.b16 %v11137
    %v11230 = vunpack.c.l.b16 %v11138
    %v11231 = vunpack.c.h.b16 %v11138
    %v11232 = vunpack.c.l.b16 %v11139
    %v11233 = vunpack.c.h.b16 %v11139
    %v11234 = vunpack.c.l.b16 %v11140
    %v11235 = vunpack.c.h.b16 %v11140
    %v11236 = vunpack.c.l.b16 %v11141
    %v11237 = vunpack.c.h.b16 %v11141
    %v11238 = vunpack.c.l.b16 %v11142
    %v11239 = vunpack.c.h.b16 %v11142
    %v11240 = vpack.c.b16 %v11178, %v11176
    %v11241 = vpack.c.b16 %v11179, %v11177
    %v11242 = vpack.c.b16 %v11182, %v11180
    %v11243 = vpack.c.b16 %v11183, %v11181
    %v11244 = vpack.c.b16 %v11186, %v11184
    %v11245 = vpack.c.b16 %v11187, %v11185
    %v11246 = vpack.c.b16 %v11190, %v11188
    %v11247 = vpack.c.b16 %v11191, %v11189
    %v11248 = vpack.c.b16 %v11194, %v11192
    %v11249 = vpack.c.b16 %v11195, %v11193
    %v11250 = vpack.c.b16 %v11198, %v11196
    %v11251 = vpack.c.b16 %v11199, %v11197
    %v11252 = vpack.c.b16 %v11202, %v11200
    %v11253 = vpack.c.b16 %v11203, %v11201
    %v11254 = vpack.c.b16 %v11206, %v11204
    %v11255 = vpack.c.b16 %v11207, %v11205
    %v11256 = vpack.c.b16 %v11210, %v11208
    %v11257 = vpack.c.b16 %v11211, %v11209
    %v11258 = vpack.c.b16 %v11214, %v11212
    %v11259 = vpack.c.b16 %v11215, %v11213
    %v11260 = vpack.c.b16 %v11218, %v11216
    %v11261 = vpack.c.b16 %v11219, %v11217
    %v11262 = vpack.c.b16 %v11222, %v11220
    %v11263 = vpack.c.b16 %v11223, %v11221
    %v11264 = vpack.c.b16 %v11226, %v11224
    %v11265 = vpack.c.b16 %v11227, %v11225
    %v11266 = vpack.c.b16 %v11230, %v11228
    %v11267 = vpack.c.b16 %v11231, %v11229
    %v11268 = vpack.c.b16 %v11234, %v11232
    %v11269 = vpack.c.b16 %v11235, %v11233
    %v11270 = vpack.c.b16 %v11238, %v11236
    %v11271 = vpack.c.b16 %v11239, %v11237
    %v11305 = vperm.slane %v11143, 0
    %v11306 = vperm.slane %v11143, 1
    %11309 = vmatpush.bf16.msra.mxu0 %v11254
    %11310 = vmatpush.bf16.msra.mxu0 %v11252
    %11311 = vmatpush.bf16.msra.mxu0 %v11250
    %11312 = vmatpush.bf16.msra.mxu0 %v11248
    %11313 = vmatpush.bf16.msra.mxu0 %v11246
    %11314 = vmatpush.bf16.msra.mxu0 %v11244
    %11315 = vmatpush.bf16.msra.mxu0 %v11242
    %11316 = vmatpush.bf16.msra.mxu0 %v11240
    %11317 = vmatmul.bf16.gmra.mxu0 %v9793
    %v11318 = vpop.f32.mrf.mxu0
    %v11319 = vadd.f32 %v11305, %v11318
    %v11320 = vpop.f32.mrf.mxu0
    %11321 = vdwg.mxu0
    %11322 = vmatpush.bf16.msra.mxu0 %v11270
    %11323 = vmatpush.bf16.msra.mxu0 %v11268
    %11324 = vmatpush.bf16.msra.mxu0 %v11266
    %11325 = vmatpush.bf16.msra.mxu0 %v11264
    %11326 = vmatpush.bf16.msra.mxu0 %v11262
    %11327 = vmatpush.bf16.msra.mxu0 %v11260
    %11328 = vmatpush.bf16.msra.mxu0 %v11258
    %11329 = vmatpush.bf16.msra.mxu0 %v11256
    %11330 = vmatmul.bf16.gmra.mxu0 %v9794
    %v11331 = vpop.f32.mrf.mxu0
    %v11332 = vadd.f32 %v11319, %v11331
    %v11333 = vpop.f32.mrf.mxu0
    %11334 = vdwg.mxu0
    %11335 = vmatpush.bf16.msra.mxu0 %v11255
    %11336 = vmatpush.bf16.msra.mxu0 %v11253
    %11337 = vmatpush.bf16.msra.mxu0 %v11251
    %11338 = vmatpush.bf16.msra.mxu0 %v11249
    %11339 = vmatpush.bf16.msra.mxu0 %v11247
    %11340 = vmatpush.bf16.msra.mxu0 %v11245
    %11341 = vmatpush.bf16.msra.mxu0 %v11243
    %11342 = vmatpush.bf16.msra.mxu0 %v11241
    %11343 = vmatmul.bf16.gmra.mxu0 %v9793
    %v11344 = vpop.f32.mrf.mxu0
    %v11345 = vadd.f32 %v11306, %v11344
    %v11346 = vpop.f32.mrf.mxu0
    %11347 = vdwg.mxu0
    %11348 = vmatpush.bf16.msra.mxu0 %v11271
    %11349 = vmatpush.bf16.msra.mxu0 %v11269
    %11350 = vmatpush.bf16.msra.mxu0 %v11267
    %11351 = vmatpush.bf16.msra.mxu0 %v11265
    %11352 = vmatpush.bf16.msra.mxu0 %v11263
    %11353 = vmatpush.bf16.msra.mxu0 %v11261
    %11354 = vmatpush.bf16.msra.mxu0 %v11259
    %11355 = vmatpush.bf16.msra.mxu0 %v11257
    %11356 = vmatmul.bf16.gmra.mxu0 %v9794
    %v11357 = vpop.f32.mrf.mxu0
    %v11358 = vadd.f32 %v11345, %v11357
    %v11359 = vpop.f32.mrf.mxu0
    %11360 = vdwg.mxu0
    %v11361 = vmul.f32 %v10815, %v11332
    %v11362 = vmul.f32 %v10830, %v11358
    %v11363 = vadd.f32 %v11082, %v11361
    %v11364 = vadd.f32 %v11108, %v11362
    %v11365 = vtanh.pop %v11363
    %v11366 = vtanh.pop %v11364
    %v11367 = vsub.f32 1.0, %v10845
    %v11368 = vsub.f32 1.0, %v10860
    %v11369 = vmul.f32 %v11367, %v11365
    %v11370 = vmul.f32 %v11368, %v11366
    %v11371 = vmul.f32 %v10845, %v9773
    %v11372 = vmul.f32 %v10860, %v9774
    %v11373 = vadd.f32 %v11369, %v11371
    %v11374 = vadd.f32 %v11370, %v11372
    %v11377 = vrot.slane %v11374, 7
    %v11378 = vsel %vm1774, %v11373, %v11377
    %s11380 = scalar_lea.vmem [#allocation2], 6
    %11381 = vst.msk [vmem:[%s11380] ss:$8 sm:$0x3] %vm1780, %v11378
    %11382 = vst.msk [vmem:[%s11380] ss:$8 sm:$0x0] %vm1780, %v11378
    %s11383 = scalar_lea.vmem [#allocation3], 7
    %v11384 = vld [vmem:[%s11383] ss:$8 sm:$0x3]
    %v11385 = vmax.f32 %v11384, 0.0
    %v11387 = vperm.slane %v11385, 0
    %v11388 = vperm.slane %v11385, 1
    %v11391 = vpack.c.bf16 %v11387, %v11387
    %v11392 = vpack.c.bf16 %v11388, %v11388
    %v11393 = vpack.c.bf16 %v11373, %v11373
    %v11394 = vpack.c.bf16 %v11374, %v11374
    %v11395 = vld [vmem:[#allocation8] sm:$0xff]
    %v11396 = vld [vmem:[#allocation8 + $0x8] sm:$0xff]
    %v11397 = vld [vmem:[#allocation8 + $0x10] sm:$0xff]
    %v11398 = vld [vmem:[#allocation8 + $0x18] sm:$0xff]
    %v11399 = vld [vmem:[#allocation8 + $0x20] sm:$0xff]
    %v11400 = vld [vmem:[#allocation8 + $0x28] sm:$0xff]
    %v11401 = vld [vmem:[#allocation8 + $0x30] sm:$0xff]
    %v11402 = vld [vmem:[#allocation8 + $0x38] sm:$0xff]
    %v11403 = vld [vmem:[#allocation8 + $0x40] sm:$0xff]
    %v11404 = vld [vmem:[#allocation8 + $0x48] sm:$0xff]
    %v11405 = vld [vmem:[#allocation8 + $0x50] sm:$0xff]
    %v11406 = vld [vmem:[#allocation8 + $0x58] sm:$0xff]
    %v11407 = vld [vmem:[#allocation8 + $0x60] sm:$0xff]
    %v11408 = vld [vmem:[#allocation8 + $0x68] sm:$0xff]
    %v11409 = vld [vmem:[#allocation8 + $0x70] sm:$0xff]
    %v11410 = vld [vmem:[#allocation8 + $0x78] sm:$0xff]
    %v11411 = vld [vmem:[#allocation8 + $0x80] sm:$0xff]
    %v11412 = vld [vmem:[#allocation8 + $0x88] sm:$0xff]
    %v11413 = vld [vmem:[#allocation8 + $0x90] sm:$0xff]
    %v11414 = vld [vmem:[#allocation8 + $0x98] sm:$0xff]
    %v11415 = vld [vmem:[#allocation8 + $0xa0] sm:$0xff]
    %v11416 = vld [vmem:[#allocation8 + $0xa8] sm:$0xff]
    %v11417 = vld [vmem:[#allocation8 + $0xb0] sm:$0xff]
    %v11418 = vld [vmem:[#allocation8 + $0xb8] sm:$0xff]
    %v11419 = vld [vmem:[#allocation8 + $0xc0] sm:$0xff]
    %v11420 = vld [vmem:[#allocation8 + $0xc8] sm:$0xff]
    %v11421 = vld [vmem:[#allocation8 + $0xd0] sm:$0xff]
    %v11422 = vld [vmem:[#allocation8 + $0xd8] sm:$0xff]
    %v11423 = vld [vmem:[#allocation8 + $0xe0] sm:$0xff]
    %v11424 = vld [vmem:[#allocation8 + $0xe8] sm:$0xff]
    %v11425 = vld [vmem:[#allocation8 + $0xf0] sm:$0xff]
    %v11426 = vld [vmem:[#allocation8 + $0xf8] sm:$0xff]
    %v11427 = vld [vmem:[#allocation8 + $0x100] sm:$0xff]
    %v11428 = vld [vmem:[#allocation8 + $0x108] sm:$0xff]
    %v11429 = vld [vmem:[#allocation8 + $0x110] sm:$0xff]
    %v11430 = vld [vmem:[#allocation8 + $0x118] sm:$0xff]
    %v11431 = vld [vmem:[#allocation8 + $0x120] sm:$0xff]
    %v11432 = vld [vmem:[#allocation8 + $0x128] sm:$0xff]
    %v11433 = vld [vmem:[#allocation8 + $0x130] sm:$0xff]
    %v11434 = vld [vmem:[#allocation8 + $0x138] sm:$0xff]
    %v11435 = vld [vmem:[#allocation8 + $0x140] sm:$0xff]
    %v11436 = vld [vmem:[#allocation8 + $0x148] sm:$0xff]
    %v11437 = vld [vmem:[#allocation8 + $0x150] sm:$0xff]
    %v11438 = vld [vmem:[#allocation8 + $0x158] sm:$0xff]
    %v11439 = vld [vmem:[#allocation8 + $0x160] sm:$0xff]
    %v11440 = vld [vmem:[#allocation8 + $0x168] sm:$0xff]
    %v11441 = vld [vmem:[#allocation8 + $0x170] sm:$0xff]
    %v11442 = vld [vmem:[#allocation8 + $0x178] sm:$0xff]
    %v11443 = vld [vmem:[#allocation8 + $0x180] sm:$0xff]
    %v11444 = vld [vmem:[#allocation8 + $0x188] sm:$0xff]
    %v11445 = vld [vmem:[#allocation8 + $0x190] sm:$0xff]
    %v11446 = vld [vmem:[#allocation8 + $0x198] sm:$0xff]
    %v11447 = vld [vmem:[#allocation8 + $0x1a0] sm:$0xff]
    %v11448 = vld [vmem:[#allocation8 + $0x1a8] sm:$0xff]
    %v11449 = vld [vmem:[#allocation8 + $0x1b0] sm:$0xff]
    %v11450 = vld [vmem:[#allocation8 + $0x1b8] sm:$0xff]
    %v11451 = vld [vmem:[#allocation8 + $0x1c0] sm:$0xff]
    %v11452 = vld [vmem:[#allocation8 + $0x1c8] sm:$0xff]
    %v11453 = vld [vmem:[#allocation8 + $0x1d0] sm:$0xff]
    %v11454 = vld [vmem:[#allocation8 + $0x1d8] sm:$0xff]
    %v11455 = vld [vmem:[#allocation8 + $0x1e0] sm:$0xff]
    %v11456 = vld [vmem:[#allocation8 + $0x1e8] sm:$0xff]
    %v11457 = vld [vmem:[#allocation8 + $0x1f0] sm:$0xff]
    %v11458 = vld [vmem:[#allocation8 + $0x1f8] sm:$0xff]
    %v11459 = vld [vmem:[#allocation9] sm:$0xff]
    %v11460 = vld [vmem:[#allocation9 + $0x8] sm:$0xff]
    %v11461 = vld [vmem:[#allocation9 + $0x10] sm:$0xff]
    %v11462 = vld [vmem:[#allocation9 + $0x18] sm:$0xff]
    %v11463 = vld [vmem:[#allocation9 + $0x20] sm:$0xff]
    %v11464 = vld [vmem:[#allocation9 + $0x28] sm:$0xff]
    %v11465 = vld [vmem:[#allocation9 + $0x30] sm:$0xff]
    %v11466 = vld [vmem:[#allocation9 + $0x38] sm:$0xff]
    %v11467 = vld [vmem:[#allocation9 + $0x40] sm:$0xff]
    %v11468 = vld [vmem:[#allocation9 + $0x48] sm:$0xff]
    %v11469 = vld [vmem:[#allocation9 + $0x50] sm:$0xff]
    %v11470 = vld [vmem:[#allocation9 + $0x58] sm:$0xff]
    %v11471 = vld [vmem:[#allocation9 + $0x60] sm:$0xff]
    %v11472 = vld [vmem:[#allocation9 + $0x68] sm:$0xff]
    %v11473 = vld [vmem:[#allocation9 + $0x70] sm:$0xff]
    %v11474 = vld [vmem:[#allocation9 + $0x78] sm:$0xff]
    %v11475 = vld [vmem:[#allocation9 + $0x80] sm:$0xff]
    %v11476 = vld [vmem:[#allocation9 + $0x88] sm:$0xff]
    %v11477 = vld [vmem:[#allocation9 + $0x90] sm:$0xff]
    %v11478 = vld [vmem:[#allocation9 + $0x98] sm:$0xff]
    %v11479 = vld [vmem:[#allocation9 + $0xa0] sm:$0xff]
    %v11480 = vld [vmem:[#allocation9 + $0xa8] sm:$0xff]
    %v11481 = vld [vmem:[#allocation9 + $0xb0] sm:$0xff]
    %v11482 = vld [vmem:[#allocation9 + $0xb8] sm:$0xff]
    %v11483 = vld [vmem:[#allocation9 + $0xc0] sm:$0xff]
    %v11484 = vld [vmem:[#allocation9 + $0xc8] sm:$0xff]
    %v11485 = vld [vmem:[#allocation9 + $0xd0] sm:$0xff]
    %v11486 = vld [vmem:[#allocation9 + $0xd8] sm:$0xff]
    %v11487 = vld [vmem:[#allocation9 + $0xe0] sm:$0xff]
    %v11488 = vld [vmem:[#allocation9 + $0xe8] sm:$0xff]
    %v11489 = vld [vmem:[#allocation9 + $0xf0] sm:$0xff]
    %v11490 = vld [vmem:[#allocation9 + $0xf8] sm:$0xff]
    %v11491 = vld [vmem:[#allocation9 + $0x100] sm:$0xff]
    %v11492 = vld [vmem:[#allocation9 + $0x108] sm:$0xff]
    %v11493 = vld [vmem:[#allocation9 + $0x110] sm:$0xff]
    %v11494 = vld [vmem:[#allocation9 + $0x118] sm:$0xff]
    %v11495 = vld [vmem:[#allocation9 + $0x120] sm:$0xff]
    %v11496 = vld [vmem:[#allocation9 + $0x128] sm:$0xff]
    %v11497 = vld [vmem:[#allocation9 + $0x130] sm:$0xff]
    %v11498 = vld [vmem:[#allocation9 + $0x138] sm:$0xff]
    %v11499 = vld [vmem:[#allocation9 + $0x140] sm:$0xff]
    %v11500 = vld [vmem:[#allocation9 + $0x148] sm:$0xff]
    %v11501 = vld [vmem:[#allocation9 + $0x150] sm:$0xff]
    %v11502 = vld [vmem:[#allocation9 + $0x158] sm:$0xff]
    %v11503 = vld [vmem:[#allocation9 + $0x160] sm:$0xff]
    %v11504 = vld [vmem:[#allocation9 + $0x168] sm:$0xff]
    %v11505 = vld [vmem:[#allocation9 + $0x170] sm:$0xff]
    %v11506 = vld [vmem:[#allocation9 + $0x178] sm:$0xff]
    %v11507 = vld [vmem:[#allocation9 + $0x180] sm:$0xff]
    %v11508 = vld [vmem:[#allocation9 + $0x188] sm:$0xff]
    %v11509 = vld [vmem:[#allocation9 + $0x190] sm:$0xff]
    %v11510 = vld [vmem:[#allocation9 + $0x198] sm:$0xff]
    %v11511 = vld [vmem:[#allocation9 + $0x1a0] sm:$0xff]
    %v11512 = vld [vmem:[#allocation9 + $0x1a8] sm:$0xff]
    %v11513 = vld [vmem:[#allocation9 + $0x1b0] sm:$0xff]
    %v11514 = vld [vmem:[#allocation9 + $0x1b8] sm:$0xff]
    %v11515 = vld [vmem:[#allocation9 + $0x1c0] sm:$0xff]
    %v11516 = vld [vmem:[#allocation9 + $0x1c8] sm:$0xff]
    %v11517 = vld [vmem:[#allocation9 + $0x1d0] sm:$0xff]
    %v11518 = vld [vmem:[#allocation9 + $0x1d8] sm:$0xff]
    %v11519 = vld [vmem:[#allocation9 + $0x1e0] sm:$0xff]
    %v11520 = vld [vmem:[#allocation9 + $0x1e8] sm:$0xff]
    %v11521 = vld [vmem:[#allocation9 + $0x1f0] sm:$0xff]
    %v11522 = vld [vmem:[#allocation9 + $0x1f8] sm:$0xff]
    %v11587 = vunpack.c.l.b16 %v11459
    %v11588 = vunpack.c.h.b16 %v11459
    %v11589 = vunpack.c.l.b16 %v11460
    %v11590 = vunpack.c.h.b16 %v11460
    %v11591 = vunpack.c.l.b16 %v11461
    %v11592 = vunpack.c.h.b16 %v11461
    %v11593 = vunpack.c.l.b16 %v11462
    %v11594 = vunpack.c.h.b16 %v11462
    %v11595 = vunpack.c.l.b16 %v11463
    %v11596 = vunpack.c.h.b16 %v11463
    %v11597 = vunpack.c.l.b16 %v11464
    %v11598 = vunpack.c.h.b16 %v11464
    %v11599 = vunpack.c.l.b16 %v11465
    %v11600 = vunpack.c.h.b16 %v11465
    %v11601 = vunpack.c.l.b16 %v11466
    %v11602 = vunpack.c.h.b16 %v11466
    %v11603 = vunpack.c.l.b16 %v11467
    %v11604 = vunpack.c.h.b16 %v11467
    %v11605 = vunpack.c.l.b16 %v11468
    %v11606 = vunpack.c.h.b16 %v11468
    %v11607 = vunpack.c.l.b16 %v11469
    %v11608 = vunpack.c.h.b16 %v11469
    %v11609 = vunpack.c.l.b16 %v11470
    %v11610 = vunpack.c.h.b16 %v11470
    %v11611 = vunpack.c.l.b16 %v11471
    %v11612 = vunpack.c.h.b16 %v11471
    %v11613 = vunpack.c.l.b16 %v11472
    %v11614 = vunpack.c.h.b16 %v11472
    %v11615 = vunpack.c.l.b16 %v11473
    %v11616 = vunpack.c.h.b16 %v11473
    %v11617 = vunpack.c.l.b16 %v11474
    %v11618 = vunpack.c.h.b16 %v11474
    %v11619 = vunpack.c.l.b16 %v11475
    %v11620 = vunpack.c.h.b16 %v11475
    %v11621 = vunpack.c.l.b16 %v11476
    %v11622 = vunpack.c.h.b16 %v11476
    %v11623 = vunpack.c.l.b16 %v11477
    %v11624 = vunpack.c.h.b16 %v11477
    %v11625 = vunpack.c.l.b16 %v11478
    %v11626 = vunpack.c.h.b16 %v11478
    %v11627 = vunpack.c.l.b16 %v11479
    %v11628 = vunpack.c.h.b16 %v11479
    %v11629 = vunpack.c.l.b16 %v11480
    %v11630 = vunpack.c.h.b16 %v11480
    %v11631 = vunpack.c.l.b16 %v11481
    %v11632 = vunpack.c.h.b16 %v11481
    %v11633 = vunpack.c.l.b16 %v11482
    %v11634 = vunpack.c.h.b16 %v11482
    %v11635 = vunpack.c.l.b16 %v11483
    %v11636 = vunpack.c.h.b16 %v11483
    %v11637 = vunpack.c.l.b16 %v11484
    %v11638 = vunpack.c.h.b16 %v11484
    %v11639 = vunpack.c.l.b16 %v11485
    %v11640 = vunpack.c.h.b16 %v11485
    %v11641 = vunpack.c.l.b16 %v11486
    %v11642 = vunpack.c.h.b16 %v11486
    %v11643 = vunpack.c.l.b16 %v11487
    %v11644 = vunpack.c.h.b16 %v11487
    %v11645 = vunpack.c.l.b16 %v11488
    %v11646 = vunpack.c.h.b16 %v11488
    %v11647 = vunpack.c.l.b16 %v11489
    %v11648 = vunpack.c.h.b16 %v11489
    %v11649 = vunpack.c.l.b16 %v11490
    %v11650 = vunpack.c.h.b16 %v11490
    %v11651 = vunpack.c.l.b16 %v11491
    %v11652 = vunpack.c.h.b16 %v11491
    %v11653 = vunpack.c.l.b16 %v11492
    %v11654 = vunpack.c.h.b16 %v11492
    %v11655 = vunpack.c.l.b16 %v11493
    %v11656 = vunpack.c.h.b16 %v11493
    %v11657 = vunpack.c.l.b16 %v11494
    %v11658 = vunpack.c.h.b16 %v11494
    %v11659 = vunpack.c.l.b16 %v11495
    %v11660 = vunpack.c.h.b16 %v11495
    %v11661 = vunpack.c.l.b16 %v11496
    %v11662 = vunpack.c.h.b16 %v11496
    %v11663 = vunpack.c.l.b16 %v11497
    %v11664 = vunpack.c.h.b16 %v11497
    %v11665 = vunpack.c.l.b16 %v11498
    %v11666 = vunpack.c.h.b16 %v11498
    %v11667 = vunpack.c.l.b16 %v11499
    %v11668 = vunpack.c.h.b16 %v11499
    %v11669 = vunpack.c.l.b16 %v11500
    %v11670 = vunpack.c.h.b16 %v11500
    %v11671 = vunpack.c.l.b16 %v11501
    %v11672 = vunpack.c.h.b16 %v11501
    %v11673 = vunpack.c.l.b16 %v11502
    %v11674 = vunpack.c.h.b16 %v11502
    %v11675 = vunpack.c.l.b16 %v11503
    %v11676 = vunpack.c.h.b16 %v11503
    %v11677 = vunpack.c.l.b16 %v11504
    %v11678 = vunpack.c.h.b16 %v11504
    %v11679 = vunpack.c.l.b16 %v11505
    %v11680 = vunpack.c.h.b16 %v11505
    %v11681 = vunpack.c.l.b16 %v11506
    %v11682 = vunpack.c.h.b16 %v11506
    %v11683 = vunpack.c.l.b16 %v11507
    %v11684 = vunpack.c.h.b16 %v11507
    %v11685 = vunpack.c.l.b16 %v11508
    %v11686 = vunpack.c.h.b16 %v11508
    %v11687 = vunpack.c.l.b16 %v11509
    %v11688 = vunpack.c.h.b16 %v11509
    %v11689 = vunpack.c.l.b16 %v11510
    %v11690 = vunpack.c.h.b16 %v11510
    %v11691 = vunpack.c.l.b16 %v11511
    %v11692 = vunpack.c.h.b16 %v11511
    %v11693 = vunpack.c.l.b16 %v11512
    %v11694 = vunpack.c.h.b16 %v11512
    %v11695 = vunpack.c.l.b16 %v11513
    %v11696 = vunpack.c.h.b16 %v11513
    %v11697 = vunpack.c.l.b16 %v11514
    %v11698 = vunpack.c.h.b16 %v11514
    %v11699 = vunpack.c.l.b16 %v11515
    %v11700 = vunpack.c.h.b16 %v11515
    %v11701 = vunpack.c.l.b16 %v11516
    %v11702 = vunpack.c.h.b16 %v11516
    %v11703 = vunpack.c.l.b16 %v11517
    %v11704 = vunpack.c.h.b16 %v11517
    %v11705 = vunpack.c.l.b16 %v11518
    %v11706 = vunpack.c.h.b16 %v11518
    %v11707 = vunpack.c.l.b16 %v11519
    %v11708 = vunpack.c.h.b16 %v11519
    %v11709 = vunpack.c.l.b16 %v11520
    %v11710 = vunpack.c.h.b16 %v11520
    %v11711 = vunpack.c.l.b16 %v11521
    %v11712 = vunpack.c.h.b16 %v11521
    %v11713 = vunpack.c.l.b16 %v11522
    %v11714 = vunpack.c.h.b16 %v11522
    %v11715 = vpack.c.b16 %v11591, %v11587
    %v11716 = vpack.c.b16 %v11592, %v11588
    %v11717 = vpack.c.b16 %v11593, %v11589
    %v11718 = vpack.c.b16 %v11594, %v11590
    %v11719 = vpack.c.b16 %v11599, %v11595
    %v11720 = vpack.c.b16 %v11600, %v11596
    %v11721 = vpack.c.b16 %v11601, %v11597
    %v11722 = vpack.c.b16 %v11602, %v11598
    %v11723 = vpack.c.b16 %v11607, %v11603
    %v11724 = vpack.c.b16 %v11608, %v11604
    %v11725 = vpack.c.b16 %v11609, %v11605
    %v11726 = vpack.c.b16 %v11610, %v11606
    %v11727 = vpack.c.b16 %v11615, %v11611
    %v11728 = vpack.c.b16 %v11616, %v11612
    %v11729 = vpack.c.b16 %v11617, %v11613
    %v11730 = vpack.c.b16 %v11618, %v11614
    %v11731 = vpack.c.b16 %v11623, %v11619
    %v11732 = vpack.c.b16 %v11624, %v11620
    %v11733 = vpack.c.b16 %v11625, %v11621
    %v11734 = vpack.c.b16 %v11626, %v11622
    %v11735 = vpack.c.b16 %v11631, %v11627
    %v11736 = vpack.c.b16 %v11632, %v11628
    %v11737 = vpack.c.b16 %v11633, %v11629
    %v11738 = vpack.c.b16 %v11634, %v11630
    %v11739 = vpack.c.b16 %v11639, %v11635
    %v11740 = vpack.c.b16 %v11640, %v11636
    %v11741 = vpack.c.b16 %v11641, %v11637
    %v11742 = vpack.c.b16 %v11642, %v11638
    %v11743 = vpack.c.b16 %v11647, %v11643
    %v11744 = vpack.c.b16 %v11648, %v11644
    %v11745 = vpack.c.b16 %v11649, %v11645
    %v11746 = vpack.c.b16 %v11650, %v11646
    %v11747 = vpack.c.b16 %v11655, %v11651
    %v11748 = vpack.c.b16 %v11656, %v11652
    %v11749 = vpack.c.b16 %v11657, %v11653
    %v11750 = vpack.c.b16 %v11658, %v11654
    %v11751 = vpack.c.b16 %v11663, %v11659
    %v11752 = vpack.c.b16 %v11664, %v11660
    %v11753 = vpack.c.b16 %v11665, %v11661
    %v11754 = vpack.c.b16 %v11666, %v11662
    %v11755 = vpack.c.b16 %v11671, %v11667
    %v11756 = vpack.c.b16 %v11672, %v11668
    %v11757 = vpack.c.b16 %v11673, %v11669
    %v11758 = vpack.c.b16 %v11674, %v11670
    %v11759 = vpack.c.b16 %v11679, %v11675
    %v11760 = vpack.c.b16 %v11680, %v11676
    %v11761 = vpack.c.b16 %v11681, %v11677
    %v11762 = vpack.c.b16 %v11682, %v11678
    %v11763 = vpack.c.b16 %v11687, %v11683
    %v11764 = vpack.c.b16 %v11688, %v11684
    %v11765 = vpack.c.b16 %v11689, %v11685
    %v11766 = vpack.c.b16 %v11690, %v11686
    %v11767 = vpack.c.b16 %v11695, %v11691
    %v11768 = vpack.c.b16 %v11696, %v11692
    %v11769 = vpack.c.b16 %v11697, %v11693
    %v11770 = vpack.c.b16 %v11698, %v11694
    %v11771 = vpack.c.b16 %v11703, %v11699
    %v11772 = vpack.c.b16 %v11704, %v11700
    %v11773 = vpack.c.b16 %v11705, %v11701
    %v11774 = vpack.c.b16 %v11706, %v11702
    %v11775 = vpack.c.b16 %v11711, %v11707
    %v11776 = vpack.c.b16 %v11712, %v11708
    %v11777 = vpack.c.b16 %v11713, %v11709
    %v11778 = vpack.c.b16 %v11714, %v11710
    %11843 = vmatpush.bf16.msra.mxu0 %v11743
    %11844 = vmatpush.bf16.msra.mxu0 %v11739
    %11845 = vmatpush.bf16.msra.mxu0 %v11735
    %11846 = vmatpush.bf16.msra.mxu0 %v11731
    %11847 = vmatpush.bf16.msra.mxu0 %v11727
    %11848 = vmatpush.bf16.msra.mxu0 %v11723
    %11849 = vmatpush.bf16.msra.mxu0 %v11719
    %11850 = vmatpush.bf16.msra.mxu0 %v11715
    %11851 = vmatmul.bf16.gmra.mxu0 %v11393
    %v11852 = vpop.f32.mrf.mxu0
    %v11853 = vadd.f32 0.0, %v11852
    %v11854 = vpop.f32.mrf.mxu0
    %11855 = vdwg.mxu0
    %11856 = vmatpush.bf16.msra.mxu0 %v11775
    %11857 = vmatpush.bf16.msra.mxu0 %v11771
    %11858 = vmatpush.bf16.msra.mxu0 %v11767
    %11859 = vmatpush.bf16.msra.mxu0 %v11763
    %11860 = vmatpush.bf16.msra.mxu0 %v11759
    %11861 = vmatpush.bf16.msra.mxu0 %v11755
    %11862 = vmatpush.bf16.msra.mxu0 %v11751
    %11863 = vmatpush.bf16.msra.mxu0 %v11747
    %11864 = vmatmul.bf16.gmra.mxu0 %v11394
    %v11865 = vpop.f32.mrf.mxu0
    %v11866 = vadd.f32 %v11853, %v11865
    %v11867 = vpop.f32.mrf.mxu0
    %11868 = vdwg.mxu0
    %11869 = vmatpush.bf16.msra.mxu0 %v11744
    %11870 = vmatpush.bf16.msra.mxu0 %v11740
    %11871 = vmatpush.bf16.msra.mxu0 %v11736
    %11872 = vmatpush.bf16.msra.mxu0 %v11732
    %11873 = vmatpush.bf16.msra.mxu0 %v11728
    %11874 = vmatpush.bf16.msra.mxu0 %v11724
    %11875 = vmatpush.bf16.msra.mxu0 %v11720
    %11876 = vmatpush.bf16.msra.mxu0 %v11716
    %11877 = vmatmul.bf16.gmra.mxu0 %v11393
    %v11878 = vpop.f32.mrf.mxu0
    %v11879 = vadd.f32 0.0, %v11878
    %v11880 = vpop.f32.mrf.mxu0
    %11881 = vdwg.mxu0
    %11882 = vmatpush.bf16.msra.mxu0 %v11776
    %11883 = vmatpush.bf16.msra.mxu0 %v11772
    %11884 = vmatpush.bf16.msra.mxu0 %v11768
    %11885 = vmatpush.bf16.msra.mxu0 %v11764
    %11886 = vmatpush.bf16.msra.mxu0 %v11760
    %11887 = vmatpush.bf16.msra.mxu0 %v11756
    %11888 = vmatpush.bf16.msra.mxu0 %v11752
    %11889 = vmatpush.bf16.msra.mxu0 %v11748
    %11890 = vmatmul.bf16.gmra.mxu0 %v11394
    %v11891 = vpop.f32.mrf.mxu0
    %v11892 = vadd.f32 %v11879, %v11891
    %v11893 = vpop.f32.mrf.mxu0
    %11894 = vdwg.mxu0
    %11895 = vmatpush.bf16.msra.mxu0 %v11745
    %11896 = vmatpush.bf16.msra.mxu0 %v11741
    %11897 = vmatpush.bf16.msra.mxu0 %v11737
    %11898 = vmatpush.bf16.msra.mxu0 %v11733
    %11899 = vmatpush.bf16.msra.mxu0 %v11729
    %11900 = vmatpush.bf16.msra.mxu0 %v11725
    %11901 = vmatpush.bf16.msra.mxu0 %v11721
    %11902 = vmatpush.bf16.msra.mxu0 %v11717
    %11903 = vmatmul.bf16.gmra.mxu0 %v11393
    %v11904 = vpop.f32.mrf.mxu0
    %v11905 = vadd.f32 0.0, %v11904
    %v11906 = vpop.f32.mrf.mxu0
    %11907 = vdwg.mxu0
    %11908 = vmatpush.bf16.msra.mxu0 %v11777
    %11909 = vmatpush.bf16.msra.mxu0 %v11773
    %11910 = vmatpush.bf16.msra.mxu0 %v11769
    %11911 = vmatpush.bf16.msra.mxu0 %v11765
    %11912 = vmatpush.bf16.msra.mxu0 %v11761
    %11913 = vmatpush.bf16.msra.mxu0 %v11757
    %11914 = vmatpush.bf16.msra.mxu0 %v11753
    %11915 = vmatpush.bf16.msra.mxu0 %v11749
    %11916 = vmatmul.bf16.gmra.mxu0 %v11394
    %v11917 = vpop.f32.mrf.mxu0
    %v11918 = vadd.f32 %v11905, %v11917
    %v11919 = vpop.f32.mrf.mxu0
    %11920 = vdwg.mxu0
    %11921 = vmatpush.bf16.msra.mxu0 %v11746
    %11922 = vmatpush.bf16.msra.mxu0 %v11742
    %11923 = vmatpush.bf16.msra.mxu0 %v11738
    %11924 = vmatpush.bf16.msra.mxu0 %v11734
    %11925 = vmatpush.bf16.msra.mxu0 %v11730
    %11926 = vmatpush.bf16.msra.mxu0 %v11726
    %11927 = vmatpush.bf16.msra.mxu0 %v11722
    %11928 = vmatpush.bf16.msra.mxu0 %v11718
    %11929 = vmatmul.bf16.gmra.mxu0 %v11393
    %v11930 = vpop.f32.mrf.mxu0
    %v11931 = vadd.f32 0.0, %v11930
    %v11932 = vpop.f32.mrf.mxu0
    %11933 = vdwg.mxu0
    %11934 = vmatpush.bf16.msra.mxu0 %v11778
    %11935 = vmatpush.bf16.msra.mxu0 %v11774
    %11936 = vmatpush.bf16.msra.mxu0 %v11770
    %11937 = vmatpush.bf16.msra.mxu0 %v11766
    %11938 = vmatpush.bf16.msra.mxu0 %v11762
    %11939 = vmatpush.bf16.msra.mxu0 %v11758
    %11940 = vmatpush.bf16.msra.mxu0 %v11754
    %11941 = vmatpush.bf16.msra.mxu0 %v11750
    %11942 = vmatmul.bf16.gmra.mxu0 %v11394
    %v11943 = vpop.f32.mrf.mxu0
    %v11944 = vadd.f32 %v11931, %v11943
    %v11945 = vpop.f32.mrf.mxu0
    %11946 = vdwg.mxu0
    %v12011 = vunpack.c.l.b16 %v11395
    %v12012 = vunpack.c.h.b16 %v11395
    %v12013 = vunpack.c.l.b16 %v11396
    %v12014 = vunpack.c.h.b16 %v11396
    %v12015 = vunpack.c.l.b16 %v11397
    %v12016 = vunpack.c.h.b16 %v11397
    %v12017 = vunpack.c.l.b16 %v11398
    %v12018 = vunpack.c.h.b16 %v11398
    %v12019 = vunpack.c.l.b16 %v11399
    %v12020 = vunpack.c.h.b16 %v11399
    %v12021 = vunpack.c.l.b16 %v11400
    %v12022 = vunpack.c.h.b16 %v11400
    %v12023 = vunpack.c.l.b16 %v11401
    %v12024 = vunpack.c.h.b16 %v11401
    %v12025 = vunpack.c.l.b16 %v11402
    %v12026 = vunpack.c.h.b16 %v11402
    %v12027 = vunpack.c.l.b16 %v11403
    %v12028 = vunpack.c.h.b16 %v11403
    %v12029 = vunpack.c.l.b16 %v11404
    %v12030 = vunpack.c.h.b16 %v11404
    %v12031 = vunpack.c.l.b16 %v11405
    %v12032 = vunpack.c.h.b16 %v11405
    %v12033 = vunpack.c.l.b16 %v11406
    %v12034 = vunpack.c.h.b16 %v11406
    %v12035 = vunpack.c.l.b16 %v11407
    %v12036 = vunpack.c.h.b16 %v11407
    %v12037 = vunpack.c.l.b16 %v11408
    %v12038 = vunpack.c.h.b16 %v11408
    %v12039 = vunpack.c.l.b16 %v11409
    %v12040 = vunpack.c.h.b16 %v11409
    %v12041 = vunpack.c.l.b16 %v11410
    %v12042 = vunpack.c.h.b16 %v11410
    %v12043 = vunpack.c.l.b16 %v11411
    %v12044 = vunpack.c.h.b16 %v11411
    %v12045 = vunpack.c.l.b16 %v11412
    %v12046 = vunpack.c.h.b16 %v11412
    %v12047 = vunpack.c.l.b16 %v11413
    %v12048 = vunpack.c.h.b16 %v11413
    %v12049 = vunpack.c.l.b16 %v11414
    %v12050 = vunpack.c.h.b16 %v11414
    %v12051 = vunpack.c.l.b16 %v11415
    %v12052 = vunpack.c.h.b16 %v11415
    %v12053 = vunpack.c.l.b16 %v11416
    %v12054 = vunpack.c.h.b16 %v11416
    %v12055 = vunpack.c.l.b16 %v11417
    %v12056 = vunpack.c.h.b16 %v11417
    %v12057 = vunpack.c.l.b16 %v11418
    %v12058 = vunpack.c.h.b16 %v11418
    %v12059 = vunpack.c.l.b16 %v11419
    %v12060 = vunpack.c.h.b16 %v11419
    %v12061 = vunpack.c.l.b16 %v11420
    %v12062 = vunpack.c.h.b16 %v11420
    %v12063 = vunpack.c.l.b16 %v11421
    %v12064 = vunpack.c.h.b16 %v11421
    %v12065 = vunpack.c.l.b16 %v11422
    %v12066 = vunpack.c.h.b16 %v11422
    %v12067 = vunpack.c.l.b16 %v11423
    %v12068 = vunpack.c.h.b16 %v11423
    %v12069 = vunpack.c.l.b16 %v11424
    %v12070 = vunpack.c.h.b16 %v11424
    %v12071 = vunpack.c.l.b16 %v11425
    %v12072 = vunpack.c.h.b16 %v11425
    %v12073 = vunpack.c.l.b16 %v11426
    %v12074 = vunpack.c.h.b16 %v11426
    %v12075 = vunpack.c.l.b16 %v11427
    %v12076 = vunpack.c.h.b16 %v11427
    %v12077 = vunpack.c.l.b16 %v11428
    %v12078 = vunpack.c.h.b16 %v11428
    %v12079 = vunpack.c.l.b16 %v11429
    %v12080 = vunpack.c.h.b16 %v11429
    %v12081 = vunpack.c.l.b16 %v11430
    %v12082 = vunpack.c.h.b16 %v11430
    %v12083 = vunpack.c.l.b16 %v11431
    %v12084 = vunpack.c.h.b16 %v11431
    %v12085 = vunpack.c.l.b16 %v11432
    %v12086 = vunpack.c.h.b16 %v11432
    %v12087 = vunpack.c.l.b16 %v11433
    %v12088 = vunpack.c.h.b16 %v11433
    %v12089 = vunpack.c.l.b16 %v11434
    %v12090 = vunpack.c.h.b16 %v11434
    %v12091 = vunpack.c.l.b16 %v11435
    %v12092 = vunpack.c.h.b16 %v11435
    %v12093 = vunpack.c.l.b16 %v11436
    %v12094 = vunpack.c.h.b16 %v11436
    %v12095 = vunpack.c.l.b16 %v11437
    %v12096 = vunpack.c.h.b16 %v11437
    %v12097 = vunpack.c.l.b16 %v11438
    %v12098 = vunpack.c.h.b16 %v11438
    %v12099 = vunpack.c.l.b16 %v11439
    %v12100 = vunpack.c.h.b16 %v11439
    %v12101 = vunpack.c.l.b16 %v11440
    %v12102 = vunpack.c.h.b16 %v11440
    %v12103 = vunpack.c.l.b16 %v11441
    %v12104 = vunpack.c.h.b16 %v11441
    %v12105 = vunpack.c.l.b16 %v11442
    %v12106 = vunpack.c.h.b16 %v11442
    %v12107 = vunpack.c.l.b16 %v11443
    %v12108 = vunpack.c.h.b16 %v11443
    %v12109 = vunpack.c.l.b16 %v11444
    %v12110 = vunpack.c.h.b16 %v11444
    %v12111 = vunpack.c.l.b16 %v11445
    %v12112 = vunpack.c.h.b16 %v11445
    %v12113 = vunpack.c.l.b16 %v11446
    %v12114 = vunpack.c.h.b16 %v11446
    %v12115 = vunpack.c.l.b16 %v11447
    %v12116 = vunpack.c.h.b16 %v11447
    %v12117 = vunpack.c.l.b16 %v11448
    %v12118 = vunpack.c.h.b16 %v11448
    %v12119 = vunpack.c.l.b16 %v11449
    %v12120 = vunpack.c.h.b16 %v11449
    %v12121 = vunpack.c.l.b16 %v11450
    %v12122 = vunpack.c.h.b16 %v11450
    %v12123 = vunpack.c.l.b16 %v11451
    %v12124 = vunpack.c.h.b16 %v11451
    %v12125 = vunpack.c.l.b16 %v11452
    %v12126 = vunpack.c.h.b16 %v11452
    %v12127 = vunpack.c.l.b16 %v11453
    %v12128 = vunpack.c.h.b16 %v11453
    %v12129 = vunpack.c.l.b16 %v11454
    %v12130 = vunpack.c.h.b16 %v11454
    %v12131 = vunpack.c.l.b16 %v11455
    %v12132 = vunpack.c.h.b16 %v11455
    %v12133 = vunpack.c.l.b16 %v11456
    %v12134 = vunpack.c.h.b16 %v11456
    %v12135 = vunpack.c.l.b16 %v11457
    %v12136 = vunpack.c.h.b16 %v11457
    %v12137 = vunpack.c.l.b16 %v11458
    %v12138 = vunpack.c.h.b16 %v11458
    %v12139 = vpack.c.b16 %v12015, %v12011
    %v12140 = vpack.c.b16 %v12016, %v12012
    %v12141 = vpack.c.b16 %v12017, %v12013
    %v12142 = vpack.c.b16 %v12018, %v12014
    %v12143 = vpack.c.b16 %v12023, %v12019
    %v12144 = vpack.c.b16 %v12024, %v12020
    %v12145 = vpack.c.b16 %v12025, %v12021
    %v12146 = vpack.c.b16 %v12026, %v12022
    %v12147 = vpack.c.b16 %v12031, %v12027
    %v12148 = vpack.c.b16 %v12032, %v12028
    %v12149 = vpack.c.b16 %v12033, %v12029
    %v12150 = vpack.c.b16 %v12034, %v12030
    %v12151 = vpack.c.b16 %v12039, %v12035
    %v12152 = vpack.c.b16 %v12040, %v12036
    %v12153 = vpack.c.b16 %v12041, %v12037
    %v12154 = vpack.c.b16 %v12042, %v12038
    %v12155 = vpack.c.b16 %v12047, %v12043
    %v12156 = vpack.c.b16 %v12048, %v12044
    %v12157 = vpack.c.b16 %v12049, %v12045
    %v12158 = vpack.c.b16 %v12050, %v12046
    %v12159 = vpack.c.b16 %v12055, %v12051
    %v12160 = vpack.c.b16 %v12056, %v12052
    %v12161 = vpack.c.b16 %v12057, %v12053
    %v12162 = vpack.c.b16 %v12058, %v12054
    %v12163 = vpack.c.b16 %v12063, %v12059
    %v12164 = vpack.c.b16 %v12064, %v12060
    %v12165 = vpack.c.b16 %v12065, %v12061
    %v12166 = vpack.c.b16 %v12066, %v12062
    %v12167 = vpack.c.b16 %v12071, %v12067
    %v12168 = vpack.c.b16 %v12072, %v12068
    %v12169 = vpack.c.b16 %v12073, %v12069
    %v12170 = vpack.c.b16 %v12074, %v12070
    %v12171 = vpack.c.b16 %v12079, %v12075
    %v12172 = vpack.c.b16 %v12080, %v12076
    %v12173 = vpack.c.b16 %v12081, %v12077
    %v12174 = vpack.c.b16 %v12082, %v12078
    %v12175 = vpack.c.b16 %v12087, %v12083
    %v12176 = vpack.c.b16 %v12088, %v12084
    %v12177 = vpack.c.b16 %v12089, %v12085
    %v12178 = vpack.c.b16 %v12090, %v12086
    %v12179 = vpack.c.b16 %v12095, %v12091
    %v12180 = vpack.c.b16 %v12096, %v12092
    %v12181 = vpack.c.b16 %v12097, %v12093
    %v12182 = vpack.c.b16 %v12098, %v12094
    %v12183 = vpack.c.b16 %v12103, %v12099
    %v12184 = vpack.c.b16 %v12104, %v12100
    %v12185 = vpack.c.b16 %v12105, %v12101
    %v12186 = vpack.c.b16 %v12106, %v12102
    %v12187 = vpack.c.b16 %v12111, %v12107
    %v12188 = vpack.c.b16 %v12112, %v12108
    %v12189 = vpack.c.b16 %v12113, %v12109
    %v12190 = vpack.c.b16 %v12114, %v12110
    %v12191 = vpack.c.b16 %v12119, %v12115
    %v12192 = vpack.c.b16 %v12120, %v12116
    %v12193 = vpack.c.b16 %v12121, %v12117
    %v12194 = vpack.c.b16 %v12122, %v12118
    %v12195 = vpack.c.b16 %v12127, %v12123
    %v12196 = vpack.c.b16 %v12128, %v12124
    %v12197 = vpack.c.b16 %v12129, %v12125
    %v12198 = vpack.c.b16 %v12130, %v12126
    %v12199 = vpack.c.b16 %v12135, %v12131
    %v12200 = vpack.c.b16 %v12136, %v12132
    %v12201 = vpack.c.b16 %v12137, %v12133
    %v12202 = vpack.c.b16 %v12138, %v12134
    %12267 = vmatpush.bf16.msra.mxu0 %v12167
    %12268 = vmatpush.bf16.msra.mxu0 %v12163
    %12269 = vmatpush.bf16.msra.mxu0 %v12159
    %12270 = vmatpush.bf16.msra.mxu0 %v12155
    %12271 = vmatpush.bf16.msra.mxu0 %v12151
    %12272 = vmatpush.bf16.msra.mxu0 %v12147
    %12273 = vmatpush.bf16.msra.mxu0 %v12143
    %12274 = vmatpush.bf16.msra.mxu0 %v12139
    %12275 = vmatmul.bf16.gmra.mxu0 %v11391
    %v12276 = vpop.f32.mrf.mxu0
    %v12277 = vadd.f32 %v11866, %v12276
    %v12278 = vpop.f32.mrf.mxu0
    %12279 = vdwg.mxu0
    %12280 = vmatpush.bf16.msra.mxu0 %v12199
    %12281 = vmatpush.bf16.msra.mxu0 %v12195
    %12282 = vmatpush.bf16.msra.mxu0 %v12191
    %12283 = vmatpush.bf16.msra.mxu0 %v12187
    %12284 = vmatpush.bf16.msra.mxu0 %v12183
    %12285 = vmatpush.bf16.msra.mxu0 %v12179
    %12286 = vmatpush.bf16.msra.mxu0 %v12175
    %12287 = vmatpush.bf16.msra.mxu0 %v12171
    %12288 = vmatmul.bf16.gmra.mxu0 %v11392
    %v12289 = vpop.f32.mrf.mxu0
    %v12290 = vadd.f32 %v12277, %v12289
    %v12291 = vpop.f32.mrf.mxu0
    %12292 = vdwg.mxu0
    %12293 = vmatpush.bf16.msra.mxu0 %v12168
    %12294 = vmatpush.bf16.msra.mxu0 %v12164
    %12295 = vmatpush.bf16.msra.mxu0 %v12160
    %12296 = vmatpush.bf16.msra.mxu0 %v12156
    %12297 = vmatpush.bf16.msra.mxu0 %v12152
    %12298 = vmatpush.bf16.msra.mxu0 %v12148
    %12299 = vmatpush.bf16.msra.mxu0 %v12144
    %12300 = vmatpush.bf16.msra.mxu0 %v12140
    %12301 = vmatmul.bf16.gmra.mxu0 %v11391
    %v12302 = vpop.f32.mrf.mxu0
    %v12303 = vadd.f32 %v11892, %v12302
    %v12304 = vpop.f32.mrf.mxu0
    %12305 = vdwg.mxu0
    %12306 = vmatpush.bf16.msra.mxu0 %v12200
    %12307 = vmatpush.bf16.msra.mxu0 %v12196
    %12308 = vmatpush.bf16.msra.mxu0 %v12192
    %12309 = vmatpush.bf16.msra.mxu0 %v12188
    %12310 = vmatpush.bf16.msra.mxu0 %v12184
    %12311 = vmatpush.bf16.msra.mxu0 %v12180
    %12312 = vmatpush.bf16.msra.mxu0 %v12176
    %12313 = vmatpush.bf16.msra.mxu0 %v12172
    %12314 = vmatmul.bf16.gmra.mxu0 %v11392
    %v12315 = vpop.f32.mrf.mxu0
    %v12316 = vadd.f32 %v12303, %v12315
    %v12317 = vpop.f32.mrf.mxu0
    %12318 = vdwg.mxu0
    %12319 = vmatpush.bf16.msra.mxu0 %v12169
    %12320 = vmatpush.bf16.msra.mxu0 %v12165
    %12321 = vmatpush.bf16.msra.mxu0 %v12161
    %12322 = vmatpush.bf16.msra.mxu0 %v12157
    %12323 = vmatpush.bf16.msra.mxu0 %v12153
    %12324 = vmatpush.bf16.msra.mxu0 %v12149
    %12325 = vmatpush.bf16.msra.mxu0 %v12145
    %12326 = vmatpush.bf16.msra.mxu0 %v12141
    %12327 = vmatmul.bf16.gmra.mxu0 %v11391
    %v12328 = vpop.f32.mrf.mxu0
    %v12329 = vadd.f32 %v11918, %v12328
    %v12330 = vpop.f32.mrf.mxu0
    %12331 = vdwg.mxu0
    %12332 = vmatpush.bf16.msra.mxu0 %v12201
    %12333 = vmatpush.bf16.msra.mxu0 %v12197
    %12334 = vmatpush.bf16.msra.mxu0 %v12193
    %12335 = vmatpush.bf16.msra.mxu0 %v12189
    %12336 = vmatpush.bf16.msra.mxu0 %v12185
    %12337 = vmatpush.bf16.msra.mxu0 %v12181
    %12338 = vmatpush.bf16.msra.mxu0 %v12177
    %12339 = vmatpush.bf16.msra.mxu0 %v12173
    %12340 = vmatmul.bf16.gmra.mxu0 %v11392
    %v12341 = vpop.f32.mrf.mxu0
    %v12342 = vadd.f32 %v12329, %v12341
    %v12343 = vpop.f32.mrf.mxu0
    %12344 = vdwg.mxu0
    %12345 = vmatpush.bf16.msra.mxu0 %v12170
    %12346 = vmatpush.bf16.msra.mxu0 %v12166
    %12347 = vmatpush.bf16.msra.mxu0 %v12162
    %12348 = vmatpush.bf16.msra.mxu0 %v12158
    %12349 = vmatpush.bf16.msra.mxu0 %v12154
    %12350 = vmatpush.bf16.msra.mxu0 %v12150
    %12351 = vmatpush.bf16.msra.mxu0 %v12146
    %12352 = vmatpush.bf16.msra.mxu0 %v12142
    %12353 = vmatmul.bf16.gmra.mxu0 %v11391
    %v12354 = vpop.f32.mrf.mxu0
    %v12355 = vadd.f32 %v11944, %v12354
    %v12356 = vpop.f32.mrf.mxu0
    %12357 = vdwg.mxu0
    %12358 = vmatpush.bf16.msra.mxu0 %v12202
    %12359 = vmatpush.bf16.msra.mxu0 %v12198
    %12360 = vmatpush.bf16.msra.mxu0 %v12194
    %12361 = vmatpush.bf16.msra.mxu0 %v12190
    %12362 = vmatpush.bf16.msra.mxu0 %v12186
    %12363 = vmatpush.bf16.msra.mxu0 %v12182
    %12364 = vmatpush.bf16.msra.mxu0 %v12178
    %12365 = vmatpush.bf16.msra.mxu0 %v12174
    %12366 = vmatmul.bf16.gmra.mxu0 %v11392
    %v12367 = vpop.f32.mrf.mxu0
    %v12368 = vadd.f32 %v12355, %v12367
    %v12369 = vpop.f32.mrf.mxu0
    %12370 = vdwg.mxu0
    %v12371 = vld [vmem:[#allocation11] sm:$0xf]
    %v12373 = vperm.slane %v12371, 0
    %v12374 = vperm.slane %v12371, 1
    %v12375 = vperm.slane %v12371, 2
    %v12376 = vperm.slane %v12371, 3
    %v12381 = vadd.f32 %v12290, %v12373
    %v12382 = vadd.f32 %v12316, %v12374
    %v12383 = vadd.f32 %v12342, %v12375
    %v12384 = vadd.f32 %v12368, %v12376
    %v12385 = vxor.u32 %v12381, 2147483648
    %v12386 = vxor.u32 %v12382, 2147483648
    %v12387 = vxor.u32 %v12383, 2147483648
    %v12388 = vxor.u32 %v12384, 2147483648
    %v12389 = vmul.f32 %v12385, 1.442695
    %v12390 = vpow.pop %v12389
    %v12391 = vmul.f32 %v12386, 1.442695
    %v12392 = vpow.pop %v12391
    %v12393 = vmul.f32 %v12387, 1.442695
    %v12394 = vpow.pop %v12393
    %v12395 = vmul.f32 %v12388, 1.442695
    %v12396 = vpow.pop %v12395
    %v12397 = vadd.f32 %v12390, 1.0
    %v12398 = vadd.f32 %v12392, 1.0
    %v12399 = vadd.f32 %v12394, 1.0
    %v12400 = vadd.f32 %v12396, 1.0
    %v12401 = vrcp.pop %v12397
    %v12402 = vmul.f32 %v12397, %v12401
    %v12403 = vsub.f32 1.0, %v12402
    %v12404 = vmul.f32 %v12401, %v12403
    %v12405 = vadd.f32 %v12401, %v12404
    %vm12406 = vweird.f32 %v12397
    %vm12407 = vweird.f32 %v12401
    %vm12408 = vmor %vm12406, %vm12407
    %v12409 = vsel %vm12408, %v12401, %v12405
    %v12410 = vand.u32 2147483647, %v12397
    %vm12411 = vcmp.eq.f32.partialorder %v12410, 8.507059e+37
    %v12412 = vand.u32 %v12397, 2147483648
    %v12413 = vor.u32 1.1754944e-38, %v12412
    %v12414 = vsel %vm12411, %v12413, %v12409
    %v12415 = vmul.f32 1.0, %v12414
    %v12416 = vrcp.pop %v12398
    %v12417 = vmul.f32 %v12398, %v12416
    %v12418 = vsub.f32 1.0, %v12417
    %v12419 = vmul.f32 %v12416, %v12418
    %v12420 = vadd.f32 %v12416, %v12419
    %vm12421 = vweird.f32 %v12398
    %vm12422 = vweird.f32 %v12416
    %vm12423 = vmor %vm12421, %vm12422
    %v12424 = vsel %vm12423, %v12416, %v12420
    %v12425 = vand.u32 2147483647, %v12398
    %vm12426 = vcmp.eq.f32.partialorder %v12425, 8.507059e+37
    %v12427 = vand.u32 %v12398, 2147483648
    %v12428 = vor.u32 1.1754944e-38, %v12427
    %v12429 = vsel %vm12426, %v12428, %v12424
    %v12430 = vmul.f32 1.0, %v12429
    %v12431 = vrcp.pop %v12399
    %v12432 = vmul.f32 %v12399, %v12431
    %v12433 = vsub.f32 1.0, %v12432
    %v12434 = vmul.f32 %v12431, %v12433
    %v12435 = vadd.f32 %v12431, %v12434
    %vm12436 = vweird.f32 %v12399
    %vm12437 = vweird.f32 %v12431
    %vm12438 = vmor %vm12436, %vm12437
    %v12439 = vsel %vm12438, %v12431, %v12435
    %v12440 = vand.u32 2147483647, %v12399
    %vm12441 = vcmp.eq.f32.partialorder %v12440, 8.507059e+37
    %v12442 = vand.u32 %v12399, 2147483648
    %v12443 = vor.u32 1.1754944e-38, %v12442
    %v12444 = vsel %vm12441, %v12443, %v12439
    %v12445 = vmul.f32 1.0, %v12444
    %v12446 = vrcp.pop %v12400
    %v12447 = vmul.f32 %v12400, %v12446
    %v12448 = vsub.f32 1.0, %v12447
    %v12449 = vmul.f32 %v12446, %v12448
    %v12450 = vadd.f32 %v12446, %v12449
    %vm12451 = vweird.f32 %v12400
    %vm12452 = vweird.f32 %v12446
    %vm12453 = vmor %vm12451, %vm12452
    %v12454 = vsel %vm12453, %v12446, %v12450
    %v12455 = vand.u32 2147483647, %v12400
    %vm12456 = vcmp.eq.f32.partialorder %v12455, 8.507059e+37
    %v12457 = vand.u32 %v12400, 2147483648
    %v12458 = vor.u32 1.1754944e-38, %v12457
    %v12459 = vsel %vm12456, %v12458, %v12454
    %v12460 = vmul.f32 1.0, %v12459
    %v12461 = vld [vmem:[#allocation12] sm:$0xff]
    %v12462 = vld [vmem:[#allocation12 + $0x8] sm:$0xff]
    %v12463 = vld [vmem:[#allocation12 + $0x10] sm:$0xff]
    %v12464 = vld [vmem:[#allocation12 + $0x18] sm:$0xff]
    %v12465 = vld [vmem:[#allocation12 + $0x20] sm:$0xff]
    %v12466 = vld [vmem:[#allocation12 + $0x28] sm:$0xff]
    %v12467 = vld [vmem:[#allocation12 + $0x30] sm:$0xff]
    %v12468 = vld [vmem:[#allocation12 + $0x38] sm:$0xff]
    %v12469 = vld [vmem:[#allocation12 + $0x40] sm:$0xff]
    %v12470 = vld [vmem:[#allocation12 + $0x48] sm:$0xff]
    %v12471 = vld [vmem:[#allocation12 + $0x50] sm:$0xff]
    %v12472 = vld [vmem:[#allocation12 + $0x58] sm:$0xff]
    %v12473 = vld [vmem:[#allocation12 + $0x60] sm:$0xff]
    %v12474 = vld [vmem:[#allocation12 + $0x68] sm:$0xff]
    %v12475 = vld [vmem:[#allocation12 + $0x70] sm:$0xff]
    %v12476 = vld [vmem:[#allocation12 + $0x78] sm:$0xff]
    %v12477 = vld [vmem:[#allocation12 + $0x80] sm:$0xff]
    %v12478 = vld [vmem:[#allocation12 + $0x88] sm:$0xff]
    %v12479 = vld [vmem:[#allocation12 + $0x90] sm:$0xff]
    %v12480 = vld [vmem:[#allocation12 + $0x98] sm:$0xff]
    %v12481 = vld [vmem:[#allocation12 + $0xa0] sm:$0xff]
    %v12482 = vld [vmem:[#allocation12 + $0xa8] sm:$0xff]
    %v12483 = vld [vmem:[#allocation12 + $0xb0] sm:$0xff]
    %v12484 = vld [vmem:[#allocation12 + $0xb8] sm:$0xff]
    %v12485 = vld [vmem:[#allocation12 + $0xc0] sm:$0xff]
    %v12486 = vld [vmem:[#allocation12 + $0xc8] sm:$0xff]
    %v12487 = vld [vmem:[#allocation12 + $0xd0] sm:$0xff]
    %v12488 = vld [vmem:[#allocation12 + $0xd8] sm:$0xff]
    %v12489 = vld [vmem:[#allocation12 + $0xe0] sm:$0xff]
    %v12490 = vld [vmem:[#allocation12 + $0xe8] sm:$0xff]
    %v12491 = vld [vmem:[#allocation12 + $0xf0] sm:$0xff]
    %v12492 = vld [vmem:[#allocation12 + $0xf8] sm:$0xff]
    %v12493 = vld [vmem:[%s7] sm:$0x3]
    %v12526 = vunpack.c.l.b16 %v12461
    %v12527 = vunpack.c.h.b16 %v12461
    %v12528 = vunpack.c.l.b16 %v12462
    %v12529 = vunpack.c.h.b16 %v12462
    %v12530 = vunpack.c.l.b16 %v12463
    %v12531 = vunpack.c.h.b16 %v12463
    %v12532 = vunpack.c.l.b16 %v12464
    %v12533 = vunpack.c.h.b16 %v12464
    %v12534 = vunpack.c.l.b16 %v12465
    %v12535 = vunpack.c.h.b16 %v12465
    %v12536 = vunpack.c.l.b16 %v12466
    %v12537 = vunpack.c.h.b16 %v12466
    %v12538 = vunpack.c.l.b16 %v12467
    %v12539 = vunpack.c.h.b16 %v12467
    %v12540 = vunpack.c.l.b16 %v12468
    %v12541 = vunpack.c.h.b16 %v12468
    %v12542 = vunpack.c.l.b16 %v12469
    %v12543 = vunpack.c.h.b16 %v12469
    %v12544 = vunpack.c.l.b16 %v12470
    %v12545 = vunpack.c.h.b16 %v12470
    %v12546 = vunpack.c.l.b16 %v12471
    %v12547 = vunpack.c.h.b16 %v12471
    %v12548 = vunpack.c.l.b16 %v12472
    %v12549 = vunpack.c.h.b16 %v12472
    %v12550 = vunpack.c.l.b16 %v12473
    %v12551 = vunpack.c.h.b16 %v12473
    %v12552 = vunpack.c.l.b16 %v12474
    %v12553 = vunpack.c.h.b16 %v12474
    %v12554 = vunpack.c.l.b16 %v12475
    %v12555 = vunpack.c.h.b16 %v12475
    %v12556 = vunpack.c.l.b16 %v12476
    %v12557 = vunpack.c.h.b16 %v12476
    %v12558 = vunpack.c.l.b16 %v12477
    %v12559 = vunpack.c.h.b16 %v12477
    %v12560 = vunpack.c.l.b16 %v12478
    %v12561 = vunpack.c.h.b16 %v12478
    %v12562 = vunpack.c.l.b16 %v12479
    %v12563 = vunpack.c.h.b16 %v12479
    %v12564 = vunpack.c.l.b16 %v12480
    %v12565 = vunpack.c.h.b16 %v12480
    %v12566 = vunpack.c.l.b16 %v12481
    %v12567 = vunpack.c.h.b16 %v12481
    %v12568 = vunpack.c.l.b16 %v12482
    %v12569 = vunpack.c.h.b16 %v12482
    %v12570 = vunpack.c.l.b16 %v12483
    %v12571 = vunpack.c.h.b16 %v12483
    %v12572 = vunpack.c.l.b16 %v12484
    %v12573 = vunpack.c.h.b16 %v12484
    %v12574 = vunpack.c.l.b16 %v12485
    %v12575 = vunpack.c.h.b16 %v12485
    %v12576 = vunpack.c.l.b16 %v12486
    %v12577 = vunpack.c.h.b16 %v12486
    %v12578 = vunpack.c.l.b16 %v12487
    %v12579 = vunpack.c.h.b16 %v12487
    %v12580 = vunpack.c.l.b16 %v12488
    %v12581 = vunpack.c.h.b16 %v12488
    %v12582 = vunpack.c.l.b16 %v12489
    %v12583 = vunpack.c.h.b16 %v12489
    %v12584 = vunpack.c.l.b16 %v12490
    %v12585 = vunpack.c.h.b16 %v12490
    %v12586 = vunpack.c.l.b16 %v12491
    %v12587 = vunpack.c.h.b16 %v12491
    %v12588 = vunpack.c.l.b16 %v12492
    %v12589 = vunpack.c.h.b16 %v12492
    %v12590 = vpack.c.b16 %v12528, %v12526
    %v12591 = vpack.c.b16 %v12529, %v12527
    %v12592 = vpack.c.b16 %v12532, %v12530
    %v12593 = vpack.c.b16 %v12533, %v12531
    %v12594 = vpack.c.b16 %v12536, %v12534
    %v12595 = vpack.c.b16 %v12537, %v12535
    %v12596 = vpack.c.b16 %v12540, %v12538
    %v12597 = vpack.c.b16 %v12541, %v12539
    %v12598 = vpack.c.b16 %v12544, %v12542
    %v12599 = vpack.c.b16 %v12545, %v12543
    %v12600 = vpack.c.b16 %v12548, %v12546
    %v12601 = vpack.c.b16 %v12549, %v12547
    %v12602 = vpack.c.b16 %v12552, %v12550
    %v12603 = vpack.c.b16 %v12553, %v12551
    %v12604 = vpack.c.b16 %v12556, %v12554
    %v12605 = vpack.c.b16 %v12557, %v12555
    %v12606 = vpack.c.b16 %v12560, %v12558
    %v12607 = vpack.c.b16 %v12561, %v12559
    %v12608 = vpack.c.b16 %v12564, %v12562
    %v12609 = vpack.c.b16 %v12565, %v12563
    %v12610 = vpack.c.b16 %v12568, %v12566
    %v12611 = vpack.c.b16 %v12569, %v12567
    %v12612 = vpack.c.b16 %v12572, %v12570
    %v12613 = vpack.c.b16 %v12573, %v12571
    %v12614 = vpack.c.b16 %v12576, %v12574
    %v12615 = vpack.c.b16 %v12577, %v12575
    %v12616 = vpack.c.b16 %v12580, %v12578
    %v12617 = vpack.c.b16 %v12581, %v12579
    %v12618 = vpack.c.b16 %v12584, %v12582
    %v12619 = vpack.c.b16 %v12585, %v12583
    %v12620 = vpack.c.b16 %v12588, %v12586
    %v12621 = vpack.c.b16 %v12589, %v12587
    %v12655 = vperm.slane %v12493, 0
    %v12656 = vperm.slane %v12493, 1
    %12659 = vmatpush.bf16.msra.mxu0 %v12604
    %12660 = vmatpush.bf16.msra.mxu0 %v12602
    %12661 = vmatpush.bf16.msra.mxu0 %v12600
    %12662 = vmatpush.bf16.msra.mxu0 %v12598
    %12663 = vmatpush.bf16.msra.mxu0 %v12596
    %12664 = vmatpush.bf16.msra.mxu0 %v12594
    %12665 = vmatpush.bf16.msra.mxu0 %v12592
    %12666 = vmatpush.bf16.msra.mxu0 %v12590
    %12667 = vmatmul.bf16.gmra.mxu0 %v11391
    %v12668 = vpop.f32.mrf.mxu0
    %v12669 = vadd.f32 %v12655, %v12668
    %v12670 = vpop.f32.mrf.mxu0
    %12671 = vdwg.mxu0
    %12672 = vmatpush.bf16.msra.mxu0 %v12620
    %12673 = vmatpush.bf16.msra.mxu0 %v12618
    %12674 = vmatpush.bf16.msra.mxu0 %v12616
    %12675 = vmatpush.bf16.msra.mxu0 %v12614
    %12676 = vmatpush.bf16.msra.mxu0 %v12612
    %12677 = vmatpush.bf16.msra.mxu0 %v12610
    %12678 = vmatpush.bf16.msra.mxu0 %v12608
    %12679 = vmatpush.bf16.msra.mxu0 %v12606
    %12680 = vmatmul.bf16.gmra.mxu0 %v11392
    %v12681 = vpop.f32.mrf.mxu0
    %v12682 = vadd.f32 %v12669, %v12681
    %v12683 = vpop.f32.mrf.mxu0
    %12684 = vdwg.mxu0
    %12685 = vmatpush.bf16.msra.mxu0 %v12605
    %12686 = vmatpush.bf16.msra.mxu0 %v12603
    %12687 = vmatpush.bf16.msra.mxu0 %v12601
    %12688 = vmatpush.bf16.msra.mxu0 %v12599
    %12689 = vmatpush.bf16.msra.mxu0 %v12597
    %12690 = vmatpush.bf16.msra.mxu0 %v12595
    %12691 = vmatpush.bf16.msra.mxu0 %v12593
    %12692 = vmatpush.bf16.msra.mxu0 %v12591
    %12693 = vmatmul.bf16.gmra.mxu0 %v11391
    %v12694 = vpop.f32.mrf.mxu0
    %v12695 = vadd.f32 %v12656, %v12694
    %v12696 = vpop.f32.mrf.mxu0
    %12697 = vdwg.mxu0
    %12698 = vmatpush.bf16.msra.mxu0 %v12621
    %12699 = vmatpush.bf16.msra.mxu0 %v12619
    %12700 = vmatpush.bf16.msra.mxu0 %v12617
    %12701 = vmatpush.bf16.msra.mxu0 %v12615
    %12702 = vmatpush.bf16.msra.mxu0 %v12613
    %12703 = vmatpush.bf16.msra.mxu0 %v12611
    %12704 = vmatpush.bf16.msra.mxu0 %v12609
    %12705 = vmatpush.bf16.msra.mxu0 %v12607
    %12706 = vmatmul.bf16.gmra.mxu0 %v11392
    %v12707 = vpop.f32.mrf.mxu0
    %v12708 = vadd.f32 %v12695, %v12707
    %v12709 = vpop.f32.mrf.mxu0
    %12710 = vdwg.mxu0
    %v12711 = vld [vmem:[#allocation14] sm:$0xff]
    %v12712 = vld [vmem:[#allocation14 + $0x8] sm:$0xff]
    %v12713 = vld [vmem:[#allocation14 + $0x10] sm:$0xff]
    %v12714 = vld [vmem:[#allocation14 + $0x18] sm:$0xff]
    %v12715 = vld [vmem:[#allocation14 + $0x20] sm:$0xff]
    %v12716 = vld [vmem:[#allocation14 + $0x28] sm:$0xff]
    %v12717 = vld [vmem:[#allocation14 + $0x30] sm:$0xff]
    %v12718 = vld [vmem:[#allocation14 + $0x38] sm:$0xff]
    %v12719 = vld [vmem:[#allocation14 + $0x40] sm:$0xff]
    %v12720 = vld [vmem:[#allocation14 + $0x48] sm:$0xff]
    %v12721 = vld [vmem:[#allocation14 + $0x50] sm:$0xff]
    %v12722 = vld [vmem:[#allocation14 + $0x58] sm:$0xff]
    %v12723 = vld [vmem:[#allocation14 + $0x60] sm:$0xff]
    %v12724 = vld [vmem:[#allocation14 + $0x68] sm:$0xff]
    %v12725 = vld [vmem:[#allocation14 + $0x70] sm:$0xff]
    %v12726 = vld [vmem:[#allocation14 + $0x78] sm:$0xff]
    %v12727 = vld [vmem:[#allocation14 + $0x80] sm:$0xff]
    %v12728 = vld [vmem:[#allocation14 + $0x88] sm:$0xff]
    %v12729 = vld [vmem:[#allocation14 + $0x90] sm:$0xff]
    %v12730 = vld [vmem:[#allocation14 + $0x98] sm:$0xff]
    %v12731 = vld [vmem:[#allocation14 + $0xa0] sm:$0xff]
    %v12732 = vld [vmem:[#allocation14 + $0xa8] sm:$0xff]
    %v12733 = vld [vmem:[#allocation14 + $0xb0] sm:$0xff]
    %v12734 = vld [vmem:[#allocation14 + $0xb8] sm:$0xff]
    %v12735 = vld [vmem:[#allocation14 + $0xc0] sm:$0xff]
    %v12736 = vld [vmem:[#allocation14 + $0xc8] sm:$0xff]
    %v12737 = vld [vmem:[#allocation14 + $0xd0] sm:$0xff]
    %v12738 = vld [vmem:[#allocation14 + $0xd8] sm:$0xff]
    %v12739 = vld [vmem:[#allocation14 + $0xe0] sm:$0xff]
    %v12740 = vld [vmem:[#allocation14 + $0xe8] sm:$0xff]
    %v12741 = vld [vmem:[#allocation14 + $0xf0] sm:$0xff]
    %v12742 = vld [vmem:[#allocation14 + $0xf8] sm:$0xff]
    %v12743 = vld [vmem:[#allocation15] sm:$0x3]
    %v12776 = vunpack.c.l.b16 %v12711
    %v12777 = vunpack.c.h.b16 %v12711
    %v12778 = vunpack.c.l.b16 %v12712
    %v12779 = vunpack.c.h.b16 %v12712
    %v12780 = vunpack.c.l.b16 %v12713
    %v12781 = vunpack.c.h.b16 %v12713
    %v12782 = vunpack.c.l.b16 %v12714
    %v12783 = vunpack.c.h.b16 %v12714
    %v12784 = vunpack.c.l.b16 %v12715
    %v12785 = vunpack.c.h.b16 %v12715
    %v12786 = vunpack.c.l.b16 %v12716
    %v12787 = vunpack.c.h.b16 %v12716
    %v12788 = vunpack.c.l.b16 %v12717
    %v12789 = vunpack.c.h.b16 %v12717
    %v12790 = vunpack.c.l.b16 %v12718
    %v12791 = vunpack.c.h.b16 %v12718
    %v12792 = vunpack.c.l.b16 %v12719
    %v12793 = vunpack.c.h.b16 %v12719
    %v12794 = vunpack.c.l.b16 %v12720
    %v12795 = vunpack.c.h.b16 %v12720
    %v12796 = vunpack.c.l.b16 %v12721
    %v12797 = vunpack.c.h.b16 %v12721
    %v12798 = vunpack.c.l.b16 %v12722
    %v12799 = vunpack.c.h.b16 %v12722
    %v12800 = vunpack.c.l.b16 %v12723
    %v12801 = vunpack.c.h.b16 %v12723
    %v12802 = vunpack.c.l.b16 %v12724
    %v12803 = vunpack.c.h.b16 %v12724
    %v12804 = vunpack.c.l.b16 %v12725
    %v12805 = vunpack.c.h.b16 %v12725
    %v12806 = vunpack.c.l.b16 %v12726
    %v12807 = vunpack.c.h.b16 %v12726
    %v12808 = vunpack.c.l.b16 %v12727
    %v12809 = vunpack.c.h.b16 %v12727
    %v12810 = vunpack.c.l.b16 %v12728
    %v12811 = vunpack.c.h.b16 %v12728
    %v12812 = vunpack.c.l.b16 %v12729
    %v12813 = vunpack.c.h.b16 %v12729
    %v12814 = vunpack.c.l.b16 %v12730
    %v12815 = vunpack.c.h.b16 %v12730
    %v12816 = vunpack.c.l.b16 %v12731
    %v12817 = vunpack.c.h.b16 %v12731
    %v12818 = vunpack.c.l.b16 %v12732
    %v12819 = vunpack.c.h.b16 %v12732
    %v12820 = vunpack.c.l.b16 %v12733
    %v12821 = vunpack.c.h.b16 %v12733
    %v12822 = vunpack.c.l.b16 %v12734
    %v12823 = vunpack.c.h.b16 %v12734
    %v12824 = vunpack.c.l.b16 %v12735
    %v12825 = vunpack.c.h.b16 %v12735
    %v12826 = vunpack.c.l.b16 %v12736
    %v12827 = vunpack.c.h.b16 %v12736
    %v12828 = vunpack.c.l.b16 %v12737
    %v12829 = vunpack.c.h.b16 %v12737
    %v12830 = vunpack.c.l.b16 %v12738
    %v12831 = vunpack.c.h.b16 %v12738
    %v12832 = vunpack.c.l.b16 %v12739
    %v12833 = vunpack.c.h.b16 %v12739
    %v12834 = vunpack.c.l.b16 %v12740
    %v12835 = vunpack.c.h.b16 %v12740
    %v12836 = vunpack.c.l.b16 %v12741
    %v12837 = vunpack.c.h.b16 %v12741
    %v12838 = vunpack.c.l.b16 %v12742
    %v12839 = vunpack.c.h.b16 %v12742
    %v12840 = vpack.c.b16 %v12778, %v12776
    %v12841 = vpack.c.b16 %v12779, %v12777
    %v12842 = vpack.c.b16 %v12782, %v12780
    %v12843 = vpack.c.b16 %v12783, %v12781
    %v12844 = vpack.c.b16 %v12786, %v12784
    %v12845 = vpack.c.b16 %v12787, %v12785
    %v12846 = vpack.c.b16 %v12790, %v12788
    %v12847 = vpack.c.b16 %v12791, %v12789
    %v12848 = vpack.c.b16 %v12794, %v12792
    %v12849 = vpack.c.b16 %v12795, %v12793
    %v12850 = vpack.c.b16 %v12798, %v12796
    %v12851 = vpack.c.b16 %v12799, %v12797
    %v12852 = vpack.c.b16 %v12802, %v12800
    %v12853 = vpack.c.b16 %v12803, %v12801
    %v12854 = vpack.c.b16 %v12806, %v12804
    %v12855 = vpack.c.b16 %v12807, %v12805
    %v12856 = vpack.c.b16 %v12810, %v12808
    %v12857 = vpack.c.b16 %v12811, %v12809
    %v12858 = vpack.c.b16 %v12814, %v12812
    %v12859 = vpack.c.b16 %v12815, %v12813
    %v12860 = vpack.c.b16 %v12818, %v12816
    %v12861 = vpack.c.b16 %v12819, %v12817
    %v12862 = vpack.c.b16 %v12822, %v12820
    %v12863 = vpack.c.b16 %v12823, %v12821
    %v12864 = vpack.c.b16 %v12826, %v12824
    %v12865 = vpack.c.b16 %v12827, %v12825
    %v12866 = vpack.c.b16 %v12830, %v12828
    %v12867 = vpack.c.b16 %v12831, %v12829
    %v12868 = vpack.c.b16 %v12834, %v12832
    %v12869 = vpack.c.b16 %v12835, %v12833
    %v12870 = vpack.c.b16 %v12838, %v12836
    %v12871 = vpack.c.b16 %v12839, %v12837
    %v12905 = vperm.slane %v12743, 0
    %v12906 = vperm.slane %v12743, 1
    %12909 = vmatpush.bf16.msra.mxu0 %v12854
    %12910 = vmatpush.bf16.msra.mxu0 %v12852
    %12911 = vmatpush.bf16.msra.mxu0 %v12850
    %12912 = vmatpush.bf16.msra.mxu0 %v12848
    %12913 = vmatpush.bf16.msra.mxu0 %v12846
    %12914 = vmatpush.bf16.msra.mxu0 %v12844
    %12915 = vmatpush.bf16.msra.mxu0 %v12842
    %12916 = vmatpush.bf16.msra.mxu0 %v12840
    %12917 = vmatmul.bf16.gmra.mxu0 %v11393
    %v12918 = vpop.f32.mrf.mxu0
    %v12919 = vadd.f32 %v12905, %v12918
    %v12920 = vpop.f32.mrf.mxu0
    %12921 = vdwg.mxu0
    %12922 = vmatpush.bf16.msra.mxu0 %v12870
    %12923 = vmatpush.bf16.msra.mxu0 %v12868
    %12924 = vmatpush.bf16.msra.mxu0 %v12866
    %12925 = vmatpush.bf16.msra.mxu0 %v12864
    %12926 = vmatpush.bf16.msra.mxu0 %v12862
    %12927 = vmatpush.bf16.msra.mxu0 %v12860
    %12928 = vmatpush.bf16.msra.mxu0 %v12858
    %12929 = vmatpush.bf16.msra.mxu0 %v12856
    %12930 = vmatmul.bf16.gmra.mxu0 %v11394
    %v12931 = vpop.f32.mrf.mxu0
    %v12932 = vadd.f32 %v12919, %v12931
    %v12933 = vpop.f32.mrf.mxu0
    %12934 = vdwg.mxu0
    %12935 = vmatpush.bf16.msra.mxu0 %v12855
    %12936 = vmatpush.bf16.msra.mxu0 %v12853
    %12937 = vmatpush.bf16.msra.mxu0 %v12851
    %12938 = vmatpush.bf16.msra.mxu0 %v12849
    %12939 = vmatpush.bf16.msra.mxu0 %v12847
    %12940 = vmatpush.bf16.msra.mxu0 %v12845
    %12941 = vmatpush.bf16.msra.mxu0 %v12843
    %12942 = vmatpush.bf16.msra.mxu0 %v12841
    %12943 = vmatmul.bf16.gmra.mxu0 %v11393
    %v12944 = vpop.f32.mrf.mxu0
    %v12945 = vadd.f32 %v12906, %v12944
    %v12946 = vpop.f32.mrf.mxu0
    %12947 = vdwg.mxu0
    %12948 = vmatpush.bf16.msra.mxu0 %v12871
    %12949 = vmatpush.bf16.msra.mxu0 %v12869
    %12950 = vmatpush.bf16.msra.mxu0 %v12867
    %12951 = vmatpush.bf16.msra.mxu0 %v12865
    %12952 = vmatpush.bf16.msra.mxu0 %v12863
    %12953 = vmatpush.bf16.msra.mxu0 %v12861
    %12954 = vmatpush.bf16.msra.mxu0 %v12859
    %12955 = vmatpush.bf16.msra.mxu0 %v12857
    %12956 = vmatmul.bf16.gmra.mxu0 %v11394
    %v12957 = vpop.f32.mrf.mxu0
    %v12958 = vadd.f32 %v12945, %v12957
    %v12959 = vpop.f32.mrf.mxu0
    %12960 = vdwg.mxu0
    %v12961 = vmul.f32 %v12415, %v12932
    %v12962 = vmul.f32 %v12430, %v12958
    %v12963 = vadd.f32 %v12682, %v12961
    %v12964 = vadd.f32 %v12708, %v12962
    %v12965 = vtanh.pop %v12963
    %v12966 = vtanh.pop %v12964
    %v12967 = vsub.f32 1.0, %v12445
    %v12968 = vsub.f32 1.0, %v12460
    %v12969 = vmul.f32 %v12967, %v12965
    %v12970 = vmul.f32 %v12968, %v12966
    %v12971 = vmul.f32 %v12445, %v11373
    %v12972 = vmul.f32 %v12460, %v11374
    %v12973 = vadd.f32 %v12969, %v12971
    %v12974 = vadd.f32 %v12970, %v12972
    %v12977 = vrot.slane %v12974, 7
    %v12978 = vsel %vm1774, %v12973, %v12977
    %s12980 = scalar_lea.vmem [#allocation2], 7
    %12981 = vst.msk [vmem:[%s12980] ss:$8 sm:$0x3] %vm1780, %v12978
    %12982 = vst.msk [vmem:[%s12980] ss:$8 sm:$0x0] %vm1780, %v12978
    %12983 = vst.msk [vmem:[#allocation19] sm:$0x3] %vm1780, %v12978
    %v12984 = vld [vmem:[#allocation2] sm:$0xff]
    %v12985 = vld [vmem:[#allocation2 + $0x8] sm:$0xff]
    %v12986 = vpack.c.bf16 %v12984, %v12984
    %v12987 = vpack.c.bf16 %v12985, %v12985
    %v12988 = vld [vmem:[#allocation17] sm:$0xff]
    %v12989 = vld [vmem:[#allocation17 + $0x8] sm:$0xff]
    %v12990 = vld [vmem:[#allocation17 + $0x10] sm:$0xff]
    %v12991 = vld [vmem:[#allocation17 + $0x18] sm:$0xff]
    %v12992 = vld [vmem:[#allocation17 + $0x20] sm:$0xff]
    %v12993 = vld [vmem:[#allocation17 + $0x28] sm:$0xff]
    %v12994 = vld [vmem:[#allocation17 + $0x30] sm:$0xff]
    %v12995 = vld [vmem:[#allocation17 + $0x38] sm:$0xff]
    %v12996 = vld [vmem:[#allocation17 + $0x40] sm:$0xff]
    %v12997 = vld [vmem:[#allocation17 + $0x48] sm:$0xff]
    %v12998 = vld [vmem:[#allocation17 + $0x50] sm:$0xff]
    %v12999 = vld [vmem:[#allocation17 + $0x58] sm:$0xff]
    %v13000 = vld [vmem:[#allocation17 + $0x60] sm:$0xff]
    %v13001 = vld [vmem:[#allocation17 + $0x68] sm:$0xff]
    %v13002 = vld [vmem:[#allocation17 + $0x70] sm:$0xff]
    %v13003 = vld [vmem:[#allocation17 + $0x78] sm:$0xff]
    %v13004 = vld [vmem:[#allocation17 + $0x80] sm:$0xff]
    %v13005 = vld [vmem:[#allocation17 + $0x88] sm:$0xff]
    %v13006 = vld [vmem:[#allocation17 + $0x90] sm:$0xff]
    %v13007 = vld [vmem:[#allocation17 + $0x98] sm:$0xff]
    %v13008 = vld [vmem:[#allocation17 + $0xa0] sm:$0xff]
    %v13009 = vld [vmem:[#allocation17 + $0xa8] sm:$0xff]
    %v13010 = vld [vmem:[#allocation17 + $0xb0] sm:$0xff]
    %v13011 = vld [vmem:[#allocation17 + $0xb8] sm:$0xff]
    %v13012 = vld [vmem:[#allocation17 + $0xc0] sm:$0xff]
    %v13013 = vld [vmem:[#allocation17 + $0xc8] sm:$0xff]
    %v13014 = vld [vmem:[#allocation17 + $0xd0] sm:$0xff]
    %v13015 = vld [vmem:[#allocation17 + $0xd8] sm:$0xff]
    %v13016 = vld [vmem:[#allocation17 + $0xe0] sm:$0xff]
    %v13017 = vld [vmem:[#allocation17 + $0xe8] sm:$0xff]
    %v13018 = vld [vmem:[#allocation17 + $0xf0] sm:$0xff]
    %v13019 = vld [vmem:[#allocation17 + $0xf8] sm:$0xff]
    %v13020 = vld [vmem:[#allocation17 + $0x100] sm:$0xff]
    %v13021 = vld [vmem:[#allocation17 + $0x108] sm:$0xff]
    %v13022 = vld [vmem:[#allocation17 + $0x110] sm:$0xff]
    %v13023 = vld [vmem:[#allocation17 + $0x118] sm:$0xff]
    %v13024 = vld [vmem:[#allocation17 + $0x120] sm:$0xff]
    %v13025 = vld [vmem:[#allocation17 + $0x128] sm:$0xff]
    %v13026 = vld [vmem:[#allocation17 + $0x130] sm:$0xff]
    %v13027 = vld [vmem:[#allocation17 + $0x138] sm:$0xff]
    %v13028 = vld [vmem:[#allocation17 + $0x140] sm:$0xff]
    %v13029 = vld [vmem:[#allocation17 + $0x148] sm:$0xff]
    %v13030 = vld [vmem:[#allocation17 + $0x150] sm:$0xff]
    %v13031 = vld [vmem:[#allocation17 + $0x158] sm:$0xff]
    %v13032 = vld [vmem:[#allocation17 + $0x160] sm:$0xff]
    %v13033 = vld [vmem:[#allocation17 + $0x168] sm:$0xff]
    %v13034 = vld [vmem:[#allocation17 + $0x170] sm:$0xff]
    %v13035 = vld [vmem:[#allocation17 + $0x178] sm:$0xff]
    %v13036 = vld [vmem:[#allocation17 + $0x180] sm:$0xff]
    %v13037 = vld [vmem:[#allocation17 + $0x188] sm:$0xff]
    %v13038 = vld [vmem:[#allocation17 + $0x190] sm:$0xff]
    %v13039 = vld [vmem:[#allocation17 + $0x198] sm:$0xff]
    %v13040 = vld [vmem:[#allocation17 + $0x1a0] sm:$0xff]
    %v13041 = vld [vmem:[#allocation17 + $0x1a8] sm:$0xff]
    %v13042 = vld [vmem:[#allocation17 + $0x1b0] sm:$0xff]
    %v13043 = vld [vmem:[#allocation17 + $0x1b8] sm:$0xff]
    %v13044 = vld [vmem:[#allocation17 + $0x1c0] sm:$0xff]
    %v13045 = vld [vmem:[#allocation17 + $0x1c8] sm:$0xff]
    %v13046 = vld [vmem:[#allocation17 + $0x1d0] sm:$0xff]
    %v13047 = vld [vmem:[#allocation17 + $0x1d8] sm:$0xff]
    %v13048 = vld [vmem:[#allocation17 + $0x1e0] sm:$0xff]
    %v13049 = vld [vmem:[#allocation17 + $0x1e8] sm:$0xff]
    %v13050 = vld [vmem:[#allocation17 + $0x1f0] sm:$0xff]
    %v13051 = vld [vmem:[#allocation17 + $0x1f8] sm:$0xff]
    %v13052 = vld [vmem:[%s10] sm:$0xf]
    %v13054 = vperm.slane %v13052, 0
    %v13055 = vperm.slane %v13052, 1
    %v13056 = vperm.slane %v13052, 2
    %v13057 = vperm.slane %v13052, 3
    %v13126 = vunpack.c.l.b16 %v12988
    %v13127 = vunpack.c.h.b16 %v12988
    %v13128 = vunpack.c.l.b16 %v12989
    %v13129 = vunpack.c.h.b16 %v12989
    %v13130 = vunpack.c.l.b16 %v12990
    %v13131 = vunpack.c.h.b16 %v12990
    %v13132 = vunpack.c.l.b16 %v12991
    %v13133 = vunpack.c.h.b16 %v12991
    %v13134 = vunpack.c.l.b16 %v12992
    %v13135 = vunpack.c.h.b16 %v12992
    %v13136 = vunpack.c.l.b16 %v12993
    %v13137 = vunpack.c.h.b16 %v12993
    %v13138 = vunpack.c.l.b16 %v12994
    %v13139 = vunpack.c.h.b16 %v12994
    %v13140 = vunpack.c.l.b16 %v12995
    %v13141 = vunpack.c.h.b16 %v12995
    %v13142 = vunpack.c.l.b16 %v12996
    %v13143 = vunpack.c.h.b16 %v12996
    %v13144 = vunpack.c.l.b16 %v12997
    %v13145 = vunpack.c.h.b16 %v12997
    %v13146 = vunpack.c.l.b16 %v12998
    %v13147 = vunpack.c.h.b16 %v12998
    %v13148 = vunpack.c.l.b16 %v12999
    %v13149 = vunpack.c.h.b16 %v12999
    %v13150 = vunpack.c.l.b16 %v13000
    %v13151 = vunpack.c.h.b16 %v13000
    %v13152 = vunpack.c.l.b16 %v13001
    %v13153 = vunpack.c.h.b16 %v13001
    %v13154 = vunpack.c.l.b16 %v13002
    %v13155 = vunpack.c.h.b16 %v13002
    %v13156 = vunpack.c.l.b16 %v13003
    %v13157 = vunpack.c.h.b16 %v13003
    %v13158 = vunpack.c.l.b16 %v13004
    %v13159 = vunpack.c.h.b16 %v13004
    %v13160 = vunpack.c.l.b16 %v13005
    %v13161 = vunpack.c.h.b16 %v13005
    %v13162 = vunpack.c.l.b16 %v13006
    %v13163 = vunpack.c.h.b16 %v13006
    %v13164 = vunpack.c.l.b16 %v13007
    %v13165 = vunpack.c.h.b16 %v13007
    %v13166 = vunpack.c.l.b16 %v13008
    %v13167 = vunpack.c.h.b16 %v13008
    %v13168 = vunpack.c.l.b16 %v13009
    %v13169 = vunpack.c.h.b16 %v13009
    %v13170 = vunpack.c.l.b16 %v13010
    %v13171 = vunpack.c.h.b16 %v13010
    %v13172 = vunpack.c.l.b16 %v13011
    %v13173 = vunpack.c.h.b16 %v13011
    %v13174 = vunpack.c.l.b16 %v13012
    %v13175 = vunpack.c.h.b16 %v13012
    %v13176 = vunpack.c.l.b16 %v13013
    %v13177 = vunpack.c.h.b16 %v13013
    %v13178 = vunpack.c.l.b16 %v13014
    %v13179 = vunpack.c.h.b16 %v13014
    %v13180 = vunpack.c.l.b16 %v13015
    %v13181 = vunpack.c.h.b16 %v13015
    %v13182 = vunpack.c.l.b16 %v13016
    %v13183 = vunpack.c.h.b16 %v13016
    %v13184 = vunpack.c.l.b16 %v13017
    %v13185 = vunpack.c.h.b16 %v13017
    %v13186 = vunpack.c.l.b16 %v13018
    %v13187 = vunpack.c.h.b16 %v13018
    %v13188 = vunpack.c.l.b16 %v13019
    %v13189 = vunpack.c.h.b16 %v13019
    %v13190 = vunpack.c.l.b16 %v13020
    %v13191 = vunpack.c.h.b16 %v13020
    %v13192 = vunpack.c.l.b16 %v13021
    %v13193 = vunpack.c.h.b16 %v13021
    %v13194 = vunpack.c.l.b16 %v13022
    %v13195 = vunpack.c.h.b16 %v13022
    %v13196 = vunpack.c.l.b16 %v13023
    %v13197 = vunpack.c.h.b16 %v13023
    %v13198 = vunpack.c.l.b16 %v13024
    %v13199 = vunpack.c.h.b16 %v13024
    %v13200 = vunpack.c.l.b16 %v13025
    %v13201 = vunpack.c.h.b16 %v13025
    %v13202 = vunpack.c.l.b16 %v13026
    %v13203 = vunpack.c.h.b16 %v13026
    %v13204 = vunpack.c.l.b16 %v13027
    %v13205 = vunpack.c.h.b16 %v13027
    %v13206 = vunpack.c.l.b16 %v13028
    %v13207 = vunpack.c.h.b16 %v13028
    %v13208 = vunpack.c.l.b16 %v13029
    %v13209 = vunpack.c.h.b16 %v13029
    %v13210 = vunpack.c.l.b16 %v13030
    %v13211 = vunpack.c.h.b16 %v13030
    %v13212 = vunpack.c.l.b16 %v13031
    %v13213 = vunpack.c.h.b16 %v13031
    %v13214 = vunpack.c.l.b16 %v13032
    %v13215 = vunpack.c.h.b16 %v13032
    %v13216 = vunpack.c.l.b16 %v13033
    %v13217 = vunpack.c.h.b16 %v13033
    %v13218 = vunpack.c.l.b16 %v13034
    %v13219 = vunpack.c.h.b16 %v13034
    %v13220 = vunpack.c.l.b16 %v13035
    %v13221 = vunpack.c.h.b16 %v13035
    %v13222 = vunpack.c.l.b16 %v13036
    %v13223 = vunpack.c.h.b16 %v13036
    %v13224 = vunpack.c.l.b16 %v13037
    %v13225 = vunpack.c.h.b16 %v13037
    %v13226 = vunpack.c.l.b16 %v13038
    %v13227 = vunpack.c.h.b16 %v13038
    %v13228 = vunpack.c.l.b16 %v13039
    %v13229 = vunpack.c.h.b16 %v13039
    %v13230 = vunpack.c.l.b16 %v13040
    %v13231 = vunpack.c.h.b16 %v13040
    %v13232 = vunpack.c.l.b16 %v13041
    %v13233 = vunpack.c.h.b16 %v13041
    %v13234 = vunpack.c.l.b16 %v13042
    %v13235 = vunpack.c.h.b16 %v13042
    %v13236 = vunpack.c.l.b16 %v13043
    %v13237 = vunpack.c.h.b16 %v13043
    %v13238 = vunpack.c.l.b16 %v13044
    %v13239 = vunpack.c.h.b16 %v13044
    %v13240 = vunpack.c.l.b16 %v13045
    %v13241 = vunpack.c.h.b16 %v13045
    %v13242 = vunpack.c.l.b16 %v13046
    %v13243 = vunpack.c.h.b16 %v13046
    %v13244 = vunpack.c.l.b16 %v13047
    %v13245 = vunpack.c.h.b16 %v13047
    %v13246 = vunpack.c.l.b16 %v13048
    %v13247 = vunpack.c.h.b16 %v13048
    %v13248 = vunpack.c.l.b16 %v13049
    %v13249 = vunpack.c.h.b16 %v13049
    %v13250 = vunpack.c.l.b16 %v13050
    %v13251 = vunpack.c.h.b16 %v13050
    %v13252 = vunpack.c.l.b16 %v13051
    %v13253 = vunpack.c.h.b16 %v13051
    %v13254 = vpack.c.b16 %v13130, %v13126
    %v13255 = vpack.c.b16 %v13131, %v13127
    %v13256 = vpack.c.b16 %v13132, %v13128
    %v13257 = vpack.c.b16 %v13133, %v13129
    %v13258 = vpack.c.b16 %v13138, %v13134
    %v13259 = vpack.c.b16 %v13139, %v13135
    %v13260 = vpack.c.b16 %v13140, %v13136
    %v13261 = vpack.c.b16 %v13141, %v13137
    %v13262 = vpack.c.b16 %v13146, %v13142
    %v13263 = vpack.c.b16 %v13147, %v13143
    %v13264 = vpack.c.b16 %v13148, %v13144
    %v13265 = vpack.c.b16 %v13149, %v13145
    %v13266 = vpack.c.b16 %v13154, %v13150
    %v13267 = vpack.c.b16 %v13155, %v13151
    %v13268 = vpack.c.b16 %v13156, %v13152
    %v13269 = vpack.c.b16 %v13157, %v13153
    %v13270 = vpack.c.b16 %v13162, %v13158
    %v13271 = vpack.c.b16 %v13163, %v13159
    %v13272 = vpack.c.b16 %v13164, %v13160
    %v13273 = vpack.c.b16 %v13165, %v13161
    %v13274 = vpack.c.b16 %v13170, %v13166
    %v13275 = vpack.c.b16 %v13171, %v13167
    %v13276 = vpack.c.b16 %v13172, %v13168
    %v13277 = vpack.c.b16 %v13173, %v13169
    %v13278 = vpack.c.b16 %v13178, %v13174
    %v13279 = vpack.c.b16 %v13179, %v13175
    %v13280 = vpack.c.b16 %v13180, %v13176
    %v13281 = vpack.c.b16 %v13181, %v13177
    %v13282 = vpack.c.b16 %v13186, %v13182
    %v13283 = vpack.c.b16 %v13187, %v13183
    %v13284 = vpack.c.b16 %v13188, %v13184
    %v13285 = vpack.c.b16 %v13189, %v13185
    %v13286 = vpack.c.b16 %v13194, %v13190
    %v13287 = vpack.c.b16 %v13195, %v13191
    %v13288 = vpack.c.b16 %v13196, %v13192
    %v13289 = vpack.c.b16 %v13197, %v13193
    %v13290 = vpack.c.b16 %v13202, %v13198
    %v13291 = vpack.c.b16 %v13203, %v13199
    %v13292 = vpack.c.b16 %v13204, %v13200
    %v13293 = vpack.c.b16 %v13205, %v13201
    %v13294 = vpack.c.b16 %v13210, %v13206
    %v13295 = vpack.c.b16 %v13211, %v13207
    %v13296 = vpack.c.b16 %v13212, %v13208
    %v13297 = vpack.c.b16 %v13213, %v13209
    %v13298 = vpack.c.b16 %v13218, %v13214
    %v13299 = vpack.c.b16 %v13219, %v13215
    %v13300 = vpack.c.b16 %v13220, %v13216
    %v13301 = vpack.c.b16 %v13221, %v13217
    %v13302 = vpack.c.b16 %v13226, %v13222
    %v13303 = vpack.c.b16 %v13227, %v13223
    %v13304 = vpack.c.b16 %v13228, %v13224
    %v13305 = vpack.c.b16 %v13229, %v13225
    %v13306 = vpack.c.b16 %v13234, %v13230
    %v13307 = vpack.c.b16 %v13235, %v13231
    %v13308 = vpack.c.b16 %v13236, %v13232
    %v13309 = vpack.c.b16 %v13237, %v13233
    %v13310 = vpack.c.b16 %v13242, %v13238
    %v13311 = vpack.c.b16 %v13243, %v13239
    %v13312 = vpack.c.b16 %v13244, %v13240
    %v13313 = vpack.c.b16 %v13245, %v13241
    %v13314 = vpack.c.b16 %v13250, %v13246
    %v13315 = vpack.c.b16 %v13251, %v13247
    %v13316 = vpack.c.b16 %v13252, %v13248
    %v13317 = vpack.c.b16 %v13253, %v13249
    %13382 = vmatpush.bf16.msra.mxu0 %v13282
    %13383 = vmatpush.bf16.msra.mxu0 %v13278
    %13384 = vmatpush.bf16.msra.mxu0 %v13274
    %13385 = vmatpush.bf16.msra.mxu0 %v13270
    %13386 = vmatpush.bf16.msra.mxu0 %v13266
    %13387 = vmatpush.bf16.msra.mxu0 %v13262
    %13388 = vmatpush.bf16.msra.mxu0 %v13258
    %13389 = vmatpush.bf16.msra.mxu0 %v13254
    %13390 = vmatmul.bf16.gmra.mxu0 %v12986
    %v13391 = vpop.f32.mrf.mxu0
    %v13392 = vadd.f32 %v13054, %v13391
    %v13393 = vpop.f32.mrf.mxu0
    %13394 = vdwg.mxu0
    %13395 = vmatpush.bf16.msra.mxu0 %v13314
    %13396 = vmatpush.bf16.msra.mxu0 %v13310
    %13397 = vmatpush.bf16.msra.mxu0 %v13306
    %13398 = vmatpush.bf16.msra.mxu0 %v13302
    %13399 = vmatpush.bf16.msra.mxu0 %v13298
    %13400 = vmatpush.bf16.msra.mxu0 %v13294
    %13401 = vmatpush.bf16.msra.mxu0 %v13290
    %13402 = vmatpush.bf16.msra.mxu0 %v13286
    %13403 = vmatmul.bf16.gmra.mxu0 %v12987
    %v13404 = vpop.f32.mrf.mxu0
    %v13405 = vadd.f32 %v13392, %v13404
    %v13406 = vpop.f32.mrf.mxu0
    %13407 = vdwg.mxu0
    %13408 = vmatpush.bf16.msra.mxu0 %v13283
    %13409 = vmatpush.bf16.msra.mxu0 %v13279
    %13410 = vmatpush.bf16.msra.mxu0 %v13275
    %13411 = vmatpush.bf16.msra.mxu0 %v13271
    %13412 = vmatpush.bf16.msra.mxu0 %v13267
    %13413 = vmatpush.bf16.msra.mxu0 %v13263
    %13414 = vmatpush.bf16.msra.mxu0 %v13259
    %13415 = vmatpush.bf16.msra.mxu0 %v13255
    %13416 = vmatmul.bf16.gmra.mxu0 %v12986
    %v13417 = vpop.f32.mrf.mxu0
    %v13418 = vadd.f32 %v13055, %v13417
    %v13419 = vpop.f32.mrf.mxu0
    %13420 = vdwg.mxu0
    %13421 = vmatpush.bf16.msra.mxu0 %v13315
    %13422 = vmatpush.bf16.msra.mxu0 %v13311
    %13423 = vmatpush.bf16.msra.mxu0 %v13307
    %13424 = vmatpush.bf16.msra.mxu0 %v13303
    %13425 = vmatpush.bf16.msra.mxu0 %v13299
    %13426 = vmatpush.bf16.msra.mxu0 %v13295
    %13427 = vmatpush.bf16.msra.mxu0 %v13291
    %13428 = vmatpush.bf16.msra.mxu0 %v13287
    %13429 = vmatmul.bf16.gmra.mxu0 %v12987
    %v13430 = vpop.f32.mrf.mxu0
    %v13431 = vadd.f32 %v13418, %v13430
    %v13432 = vpop.f32.mrf.mxu0
    %13433 = vdwg.mxu0
    %13434 = vmatpush.bf16.msra.mxu0 %v13284
    %13435 = vmatpush.bf16.msra.mxu0 %v13280
    %13436 = vmatpush.bf16.msra.mxu0 %v13276
    %13437 = vmatpush.bf16.msra.mxu0 %v13272
    %13438 = vmatpush.bf16.msra.mxu0 %v13268
    %13439 = vmatpush.bf16.msra.mxu0 %v13264
    %13440 = vmatpush.bf16.msra.mxu0 %v13260
    %13441 = vmatpush.bf16.msra.mxu0 %v13256
    %13442 = vmatmul.bf16.gmra.mxu0 %v12986
    %v13443 = vpop.f32.mrf.mxu0
    %v13444 = vadd.f32 %v13056, %v13443
    %v13445 = vpop.f32.mrf.mxu0
    %13446 = vdwg.mxu0
    %13447 = vmatpush.bf16.msra.mxu0 %v13316
    %13448 = vmatpush.bf16.msra.mxu0 %v13312
    %13449 = vmatpush.bf16.msra.mxu0 %v13308
    %13450 = vmatpush.bf16.msra.mxu0 %v13304
    %13451 = vmatpush.bf16.msra.mxu0 %v13300
    %13452 = vmatpush.bf16.msra.mxu0 %v13296
    %13453 = vmatpush.bf16.msra.mxu0 %v13292
    %13454 = vmatpush.bf16.msra.mxu0 %v13288
    %13455 = vmatmul.bf16.gmra.mxu0 %v12987
    %v13456 = vpop.f32.mrf.mxu0
    %v13457 = vadd.f32 %v13444, %v13456
    %v13458 = vpop.f32.mrf.mxu0
    %13459 = vdwg.mxu0
    %13460 = vmatpush.bf16.msra.mxu0 %v13285
    %13461 = vmatpush.bf16.msra.mxu0 %v13281
    %13462 = vmatpush.bf16.msra.mxu0 %v13277
    %13463 = vmatpush.bf16.msra.mxu0 %v13273
    %13464 = vmatpush.bf16.msra.mxu0 %v13269
    %13465 = vmatpush.bf16.msra.mxu0 %v13265
    %13466 = vmatpush.bf16.msra.mxu0 %v13261
    %13467 = vmatpush.bf16.msra.mxu0 %v13257
    %13468 = vmatmul.bf16.gmra.mxu0 %v12986
    %v13469 = vpop.f32.mrf.mxu0
    %v13470 = vadd.f32 %v13057, %v13469
    %v13471 = vpop.f32.mrf.mxu0
    %13472 = vdwg.mxu0
    %13473 = vmatpush.bf16.msra.mxu0 %v13317
    %13474 = vmatpush.bf16.msra.mxu0 %v13313
    %13475 = vmatpush.bf16.msra.mxu0 %v13309
    %13476 = vmatpush.bf16.msra.mxu0 %v13305
    %13477 = vmatpush.bf16.msra.mxu0 %v13301
    %13478 = vmatpush.bf16.msra.mxu0 %v13297
    %13479 = vmatpush.bf16.msra.mxu0 %v13293
    %13480 = vmatpush.bf16.msra.mxu0 %v13289
    %13481 = vmatmul.bf16.gmra.mxu0 %v12987
    %v13482 = vpop.f32.mrf.mxu0
    %v13483 = vadd.f32 %v13470, %v13482
    %v13484 = vpop.f32.mrf.mxu0
    %13485 = vdwg.mxu0
    %v13486 = vmax.f32 %v13405, %v13431
    %v13487 = vmax.f32 %v13457, %v13483
    %v13488 = vmax.f32 %v13486, %v13487
    %13489 = vmax.xlane.f32.xlu0 %v13488
    %v13490 = vpop.xlane.xlu0 %13489
    %v13491 = vsub.f32 %v13405, %v13490
    %v13492 = vsub.f32 %v13431, %v13490
    %v13493 = vsub.f32 %v13457, %v13490
    %v13494 = vsub.f32 %v13483, %v13490
    %v13495 = vmul.f32 %v13491, 1.442695
    %v13496 = vpow.pop %v13495
    %v13497 = vmul.f32 %v13492, 1.442695
    %v13498 = vpow.pop %v13497
    %v13499 = vmul.f32 %v13493, 1.442695
    %v13500 = vpow.pop %v13499
    %v13501 = vmul.f32 %v13494, 1.442695
    %v13502 = vpow.pop %v13501
    %v13503 = vadd.f32 %v13496, %v13498
    %v13504 = vadd.f32 %v13503, %v13500
    %v13505 = vadd.f32 %v13504, %v13502
    %13506 = vadd.xlane.f32.xlu0 %v13505
    %v13507 = vpop.xlane.xlu0 %13506
    %v13508 = vlog2.pop %v13507
    %v13509 = vmul.f32 %v13508, 0.6931472
    %v13510 = vsub.f32 %v13491, %v13509
    %v13511 = vsub.f32 %v13492, %v13509
    %v13512 = vsub.f32 %v13493, %v13509
    %v13513 = vsub.f32 %v13494, %v13509
    %13514 = vst [vmem:[#allocation18] sm:$0xff] %v13510
    %13515 = vst [vmem:[#allocation18 + $0x8] sm:$0xff] %v13511
    %13516 = vst [vmem:[#allocation18 + $0x10] sm:$0xff] %v13512
    %13517 = vst [vmem:[#allocation18 + $0x18] sm:$0xff] %v13513
    // Predicated region
    $region82: #{tpu_custom_call.1} parent=1 // pred_check
      _
    $region83: #{tpu_custom_call.1} parent=1 // pred_check_branch
      %13519 = sbr.rel (0) target = $region85
    $region84: #{tpu_custom_call.1} parent=1 // pred_region
      %13521 = vsyncadd [#allocation5], 0
      %s13523 = sshll.u32 [#allocation18], 4
      %s13524 = int_to_ptr.vmem [resolvable:$true] %s13523
      %s13525 = sshll.u32 %s11, 4
      %s13526 = int_to_ptr.hbm [resolvable:$true] %s13525
      %13528 = dma.vmem_to_hbm [thread:$0]  %s13524, 512, %s13526, [#allocation5]
    $region85: #{tpu_custom_call.1} parent=1 // pred_fallthru
      _
    // Predicated region
    $region86: #{tpu_custom_call.1} parent=1 // pred_check
      _
    $region87: #{tpu_custom_call.1} parent=1 // pred_check_branch
      %13530 = sbr.rel (0) target = $region89
    $region88: #{tpu_custom_call.1} parent=1 // pred_region
      %13532 = vsyncadd [#allocation20], 0
      %s13534 = sshll.u32 [#allocation19], 4
      %s13535 = int_to_ptr.vmem [resolvable:$true] %s13534
      %s13536 = sshll.u32 %s12, 4
      %s13537 = int_to_ptr.hbm [resolvable:$true] %s13536
      %13539 = dma.vmem_to_hbm [thread:$0]  %s13535, 32, %s13537, [#allocation20]
    $region89: #{tpu_custom_call.1} parent=1 // pred_fallthru
      _
    // Predicated region
    $region90: #{tpu_custom_call.1} parent=1 // pred_check
      _
    $region91: #{tpu_custom_call.1} parent=1 // pred_check_branch
      %13541 = sbr.rel (0) target = $region93
    $region92: #{tpu_custom_call.1} parent=1 // pred_region
      %13543 = dma.done [#allocation5], 512
    $region93: #{tpu_custom_call.1} parent=1 // pred_fallthru
      _
    // Predicated region
    $region94: #{tpu_custom_call.1} parent=1 // pred_check
      _
    $region95: #{tpu_custom_call.1} parent=1 // pred_check_branch
      %13545 = sbr.rel (0) target = $region97
    $region96: #{tpu_custom_call.1} parent=1 // pred_region
      %13547 = dma.done [#allocation20], 32
    $region97: #{tpu_custom_call.1} parent=1 // pred_fallthru
      _
    %13548 = vsyncpa [#allocation4], 1
    %13549 = vsyncpa [#allocation7], 1
    %13550 = vsyncpa [#allocation10], 1
    %13551 = vsyncpa [#allocation13], 1
    %13552 = vsyncpa [#allocation16], 1
    %13553 = vsyncpa [#allocation5], 1
    %13554 = vsyncpa [#allocation20], 1

</llo_original>
